<compile_context>
chip_gen: v5e
topology: v5e:2x2
jax: 0.10.0
libtpu: 0.0.40
codegen_flags: <defaults>
</compile_context>

<pallas_src>
import functools
import jax
import jax.numpy as jnp
from jax.experimental import pallas as pl
from jax.experimental.pallas import tpu as pltpu

BN_EPS = 1e-5


# --------------------------------------------------------------------------
# Pallas kernel: fused  Y = act( A @ W + shift )    (BN scale pre-folded in W)
# --------------------------------------------------------------------------
def _fused_matmul_kernel(a_ref, w_ref, shift_ref, o_ref, *, act):
    y = jnp.dot(a_ref[...], w_ref[...], preferred_element_type=jnp.float32)
    y = y + shift_ref[...]                       # (1, Np) f32 broadcast
    if act == "relu":
        y = jnp.maximum(y, 0.0)
    elif act == "sigmoid":
        y = jax.nn.sigmoid(y)                    # applied in f32
    o_ref[...] = y.astype(o_ref.dtype)


def fused_matmul(a, packed, act="none", out_dtype=jnp.bfloat16):
    """a: (M, K) bf16.  packed: dict(w=(K, Np) bf16, shift=(1, Np) f32, n=N).

    Returns act(a @ w + shift)[:, :N] in out_dtype.  No K tiling (K fits VMEM
    for every layer of this model); M is tiled by 256 when it divides M.
    """
    M, K = a.shape
    w, shift, N = packed["w"], packed["shift"], packed["n"]
    Np = w.shape[1]

    # M in this model is one of {2, 8, 32, 128, 512}; use 256-row tiles when
    # they divide M (2 "parallel" grid steps for M=512 -> both v7x TCs busy),
    # otherwise one full-M block (block dim == full dim is always legal).
    tm = 256 if (M > 256 and M % 256 == 0) else M
    grid = (M // tm,)

    out = pl.pallas_call(
        functools.partial(_fused_matmul_kernel, act=act),
        out_shape=jax.ShapeDtypeStruct((M, Np), out_dtype),
        grid_spec=pltpu.PrefetchScalarGridSpec(
            num_scalar_prefetch=0,
            grid=grid,
            in_specs=[
                pl.BlockSpec((tm, K), lambda i: (i, 0)),
                pl.BlockSpec((K, Np), lambda i: (0, 0)),
                pl.BlockSpec((1, Np), lambda i: (0, 0)),
            ],
            out_specs=pl.BlockSpec((tm, Np), lambda i: (i, 0)),
        ),
        compiler_params=pltpu.CompilerParams(
            dimension_semantics=("parallel",)),
    )(a, w, shift)
    if Np != N:
        out = out[:, :N]
    return out


# --------------------------------------------------------------------------
# Glue: im2col (plain JAX, layout plumbing only)
# --------------------------------------------------------------------------
def _im2col(x, k, s):
    """x: (B, H, W, C) -> (B*Ho*Wo, k*k*C), patch flattened as (kh, kw, C)."""
    B, H, W, C = x.shape
    Ho = (H - k) // s + 1
    Wo = (W - k) // s + 1
    cols = []
    for i in range(k):
        for j in range(k):
            cols.append(x[:, i:i + (Ho - 1) * s + 1:s,
                           j:j + (Wo - 1) * s + 1:s, :])
    p = jnp.stack(cols, axis=3)                       # (B, Ho, Wo, k*k, C)
    return p.reshape(B * Ho * Wo, k * k * C), Ho, Wo


# --------------------------------------------------------------------------
# Layer wrappers (consume pre-packed weights)
# --------------------------------------------------------------------------
def conv2d_bn_relu(x, packed):
    """Conv2d(k=4, s=2, p=1) + BatchNorm(eval) + ReLU. x: NHWC bf16."""
    B = x.shape[0]
    xp = jnp.pad(x, ((0, 0), (1, 1), (1, 1), (0, 0)))
    cols, Ho, Wo = _im2col(xp, 4, 2)
    y = fused_matmul(cols, packed, act="relu")
    return y.reshape(B, Ho, Wo, packed["n"])


def conv_transpose2d(x, packed, act, out_dtype=jnp.bfloat16):
    """ConvTranspose2d(k=4, s=2, p=1) [+ BN eval] + act, via the sub-pixel
    (pixel-shuffle) form: one 3x3 stride-1 conv producing 4*Cout channels
    (one per output phase), then interleave the phases."""
    B, H, W, _ = x.shape
    Cout = packed["n"] // 4
    xp = jnp.pad(x, ((0, 0), (1, 1), (1, 1), (0, 0)))
    cols, Ho, Wo = _im2col(xp, 3, 1)                  # Ho == H, Wo == W
    y = fused_matmul(cols, packed, act=act, out_dtype=out_dtype)
    y = y.reshape(B, H, W, 2, 2, Cout)                # (..., ry, rx, c)
    y = jnp.transpose(y, (0, 1, 3, 2, 4, 5)).reshape(B, 2 * H, 2 * W, Cout)
    return y


# --------------------------------------------------------------------------
# Parameters (deterministic synthetic init; shapes match the PyTorch module)
# --------------------------------------------------------------------------
def init_params(key, input_channels=3, latent_dim=128, num_classes=10):
    keys = jax.random.split(key, 16)

    def w(k, shape, s=0.05):
        return jax.random.normal(k, shape, jnp.float32) * s

    def bn(c):
        return (jnp.ones((c,), jnp.float32), jnp.zeros((c,), jnp.float32),
                jnp.zeros((c,), jnp.float32), jnp.ones((c,), jnp.float32))

    enc_ch = [input_channels, 32, 64, 128, 256]
    enc = []
    for li in range(4):
        enc.append(dict(w=w(keys[li], (enc_ch[li + 1], enc_ch[li], 4, 4)),
                        b=jnp.zeros((enc_ch[li + 1],), jnp.float32),
                        bn=bn(enc_ch[li + 1])))
    enc_out = 256 * 2 * 2
    params = dict(
        encoder=enc,
        embedding=w(keys[4], (num_classes, 50), 0.1),
        fc_mu_w=w(keys[5], (enc_out + 50, latent_dim)),
        fc_mu_b=jnp.zeros((latent_dim,), jnp.float32),
        fc_logvar_w=w(keys[6], (enc_out + 50, latent_dim)),
        fc_logvar_b=jnp.zeros((latent_dim,), jnp.float32),
        fc_decode_w=w(keys[7], (latent_dim + 50, enc_out)),
        fc_decode_b=jnp.zeros((enc_out,), jnp.float32),
    )
    dec_ch = [256, 128, 64, 32, input_channels]
    dec = []
    for li in range(4):
        dec.append(dict(w=w(keys[8 + li], (dec_ch[li], dec_ch[li + 1], 4, 4)),
                        b=jnp.zeros((dec_ch[li + 1],), jnp.float32),
                        bn=bn(dec_ch[li + 1]) if li < 3 else None))
    params["decoder"] = dec
    return params


# --------------------------------------------------------------------------
# One-time weight prep (hoisted out of the per-forward path)
# --------------------------------------------------------------------------
def _bn_fold(bias, bn):
    gamma, beta, rm, rv = bn
    scale = gamma / jnp.sqrt(rv + BN_EPS)
    shift = (bias - rm) * scale + beta
    return scale, shift


def _pack(wm, shift):
    """wm: (K, N) f32 with any BN scale already folded in; shift: (N,) f32.
    Pads N to a multiple of 128, casts W to bf16, keeps shift in f32."""
    K, N = wm.shape
    Np = ((N + 127) // 128) * 128
    wp = jnp.zeros((K, Np), jnp.float32).at[:, :N].set(wm).astype(jnp.bfloat16)
    sp = jnp.zeros((1, Np), jnp.float32).at[:, :N].set(shift.reshape(1, N))
    return dict(w=wp, shift=sp, n=N)


def _prep_conv(w, b, bn):
    Cout, Cin = w.shape[0], w.shape[1]
    wm = jnp.transpose(w, (2, 3, 1, 0)).reshape(16 * Cin, Cout)  # (kh,kw,Cin)xCout
    scale, shift = _bn_fold(b, bn)
    return _pack(wm * scale[None, :], shift)


# Sub-pixel taps: output phase r in {0,1} along an axis reads the (pad=1) input
# at patch rows {0,1} (r=0) / {1,2} (r=1) with transposed-conv kernel taps
# {3,1} / {2,0}.  (o[2m]   = x[m-1]*w3 + x[m]*w1,
#                  o[2m+1] = x[m]  *w2 + x[m+1]*w0)
_ROW_TAPS = {0: ((0, 3), (1, 1)), 1: ((1, 2), (2, 0))}


def _prep_deconv(w_t, b, bn):
    """Repack ConvTranspose2d(4,2,1) weights (Cin,Cout,4,4) as one 3x3 conv
    with 4*Cout output channels (one Cout block per pixel-shuffle phase)."""
    Cin, Cout = w_t.shape[0], w_t.shape[1]
    W3 = jnp.zeros((3, 3, Cin, 4, Cout), jnp.float32)
    for ry in (0, 1):
        for rx in (0, 1):
            ph = ry * 2 + rx
            for pr, ky in _ROW_TAPS[ry]:
                for pc, kx in _ROW_TAPS[rx]:
                    W3 = W3.at[pr, pc, :, ph, :].set(w_t[:, :, ky, kx])
    wm = W3.reshape(9 * Cin, 4 * Cout)
    if bn is not None:
        scale, shift = _bn_fold(b, bn)
    else:
        scale = jnp.ones((Cout,), jnp.float32)
        shift = b
    return _pack(wm * jnp.tile(scale, 4)[None, :], jnp.tile(shift, 4))


def prepare_params(params):
    return dict(
        encoder=[_prep_conv(l["w"], l["b"], l["bn"]) for l in params["encoder"]],
        decoder=[_prep_deconv(l["w"], l["b"], l["bn"]) for l in params["decoder"]],
        embedding=params["embedding"].astype(jnp.bfloat16),
        # fc_mu and fc_logvar fused along N -> one matmul with N=256
        fc_mulogvar=_pack(
            jnp.concatenate([params["fc_mu_w"], params["fc_logvar_w"]], axis=1),
            jnp.concatenate([params["fc_mu_b"], params["fc_logvar_b"]])),
        fc_decode=_pack(params["fc_decode_w"], params["fc_decode_b"]),
    )


# --------------------------------------------------------------------------
# Forward pass
# --------------------------------------------------------------------------
def cvae_forward(prep, x_nchw, labels):
    B = x_nchw.shape[0]
    x = jnp.transpose(x_nchw, (0, 2, 3, 1)).astype(jnp.bfloat16)  # NCHW -> NHWC

    # ---- encode ----
    h = x
    for packed in prep["encoder"]:
        h = conv2d_bn_relu(h, packed)
    # flatten in PyTorch (NCHW) order
    h_flat = jnp.transpose(h, (0, 3, 1, 2)).reshape(B, -1)        # (B, 1024)
    label_embed = prep["embedding"][labels]                       # (B, 50) gather glue
    h_cat = jnp.concatenate([h_flat, label_embed], axis=1)        # (B, 1074)

    latent = prep["fc_mulogvar"]["n"] // 2
    mulogvar = fused_matmul(h_cat, prep["fc_mulogvar"], out_dtype=jnp.float32)
    mu, logvar = mulogvar[:, :latent], mulogvar[:, latent:]

    # ---- reparameterize (eval mode) ----
    # TODO(synk): training-mode reparameterization uses torch.randn_like; exact
    #             stochastic equivalence across frameworks is not reproducible.
    z = mu

    # ---- decode ----
    z_cat = jnp.concatenate([z.astype(jnp.bfloat16), label_embed], axis=1)  # (B, 178)
    hd = fused_matmul(z_cat, prep["fc_decode"])                   # (B, 1024) bf16
    hd = hd.reshape(B, 256, 2, 2)                                 # PyTorch NCHW view
    hd = jnp.transpose(hd, (0, 2, 3, 1))                          # -> NHWC (B,2,2,256)

    n_dec = len(prep["decoder"])
    for li, packed in enumerate(prep["decoder"]):
        last = li == n_dec - 1
        hd = conv_transpose2d(hd, packed,
                              act="sigmoid" if last else "relu",
                              out_dtype=jnp.float32 if last else jnp.bfloat16)

    x_recon = jnp.transpose(hd, (0, 3, 1, 2))                     # NHWC -> NCHW
    return x_recon, mu, logvar


# --------------------------------------------------------------------------
if __name__ == "__main__":
    key = jax.random.PRNGKey(0)
    k_param, k_x, k_lbl = jax.random.split(key, 3)

    B, C, H, W = 2, 3, 32, 32          # img_size=32 is required by the arch
    x = jax.random.normal(k_x, (B, C, H, W), jnp.float32)
    labels = jax.random.randint(k_lbl, (B,), 0, 10)

    params = init_params(k_param, input_channels=C, latent_dim=128, num_classes=10)
    prep = prepare_params(params)       # one-time weight prep (hoisted)

    # prep is closed over (weights become compile-time constants; "n" stays a
    # Python int so output slicing / reshapes remain static under jit).
    fwd = jax.jit(lambda xx, ll: cvae_forward(prep, xx, ll))
    x_recon, mu, logvar = fwd(x, labels)
    jax.block_until_ready((x_recon, mu, logvar))

    assert x_recon.shape == (B, C, H, W), x_recon.shape
    assert mu.shape == (B, 128) and logvar.shape == (B, 128)
    assert bool(jnp.all(jnp.isfinite(x_recon)))
    print("KERNEL_OK")
</pallas_src>

<mosaic_0001>
module attributes {stable_mosaic.version = 11 : i64} {
  func.func @_fused_matmul_kernel(%arg0: i32, %arg1: memref<256x48xbf16, #tpu.memory_space<vmem>>, %arg2: memref<48x128xbf16, #tpu.memory_space<vmem>>, %arg3: memref<1x128xf32, #tpu.memory_space<vmem>>, %arg4: memref<256x128xbf16, #tpu.memory_space<vmem>>) attributes {dimension_semantics = [#tpu.dimension_semantics<parallel>], iteration_bounds = array<i64: 2>, scalar_prefetch = 0 : i64, scratch_operands = 0 : i64, tpu.core_type = #tpu.core_type<tc>, window_params = [{transform_indices = @transform_0, window_bounds = array<i64: 256, 48>}, {pipeline_mode = #tpu.pipeline_mode<synchronous>, transform_indices = @transform_1, window_bounds = array<i64: 48, 128>}, {pipeline_mode = #tpu.pipeline_mode<synchronous>, transform_indices = @transform_2, window_bounds = array<i64: 1, 128>}, {transform_indices = @transform_3, window_bounds = array<i64: 256, 128>}]} {
    %c0 = arith.constant 0 : index
    %c0_0 = arith.constant 0 : index
    %0 = vector.load %arg1[%c0, %c0_0] : memref<256x48xbf16, #tpu.memory_space<vmem>>, vector<256x48xbf16>
    %c0_1 = arith.constant 0 : index
    %c0_2 = arith.constant 0 : index
    %1 = vector.load %arg2[%c0_1, %c0_2] : memref<48x128xbf16, #tpu.memory_space<vmem>>, vector<48x128xbf16>
    %cst = arith.constant dense<0.000000e+00> : vector<256x128xf32>
    %2 = tpu.matmul %0, %1, %cst {dimension_numbers = #tpu.dot_dimension_numbers<[1], [0], [0], [1], [0, 0, 1, 1], [], []>} : vector<256x48xbf16>, vector<48x128xbf16>, vector<256x128xf32> -> vector<256x128xf32>
    %c0_3 = arith.constant 0 : index
    %c0_4 = arith.constant 0 : index
    %3 = vector.load %arg3[%c0_3, %c0_4] : memref<1x128xf32, #tpu.memory_space<vmem>>, vector<1x128xf32>
    %4 = vector.broadcast %3 : vector<1x128xf32> to vector<256x128xf32>
    %5 = arith.addf %2, %4 : vector<256x128xf32>
    %cst_5 = arith.constant 0.000000e+00 : f32
    %6 = vector.broadcast %cst_5 : f32 to vector<256x128xf32>
    %7 = arith.maximumf %5, %6 : vector<256x128xf32>
    %8 = arith.truncf %7 : vector<256x128xf32> to vector<256x128xbf16>
    %c0_6 = arith.constant 0 : index
    %c0_7 = arith.constant 0 : index
    %9 = vector.load %arg4[%c0_6, %c0_7] : memref<256x128xbf16, #tpu.memory_space<vmem>>, vector<256x128xbf16>
    tpu.vector_store %arg4[%c0_6, %c0_7], %8 {strides = array<i32>} : memref<256x128xbf16, #tpu.memory_space<vmem>>, vector<256x128xbf16>,
    return
  }
  func.func @transform_0(%arg0: i32) -> (i32, i32) {
    %c0_i32 = arith.constant 0 : i32
    %c0_i32_0 = arith.constant 0 : i32
    return %arg0, %c0_i32 : i32, i32
  }
  func.func @transform_1(%arg0: i32) -> (i32, i32) {
    %c0_i32 = arith.constant 0 : i32
    %c0_i32_0 = arith.constant 0 : i32
    %c0_i32_1 = arith.constant 0 : i32
    return %c0_i32, %c0_i32_0 : i32, i32
  }
  func.func @transform_2(%arg0: i32) -> (i32, i32) {
    %c0_i32 = arith.constant 0 : i32
    %c0_i32_0 = arith.constant 0 : i32
    %c0_i32_1 = arith.constant 0 : i32
    return %c0_i32, %c0_i32_0 : i32, i32
  }
  func.func @transform_3(%arg0: i32) -> (i32, i32) {
    %c0_i32 = arith.constant 0 : i32
    %c0_i32_0 = arith.constant 0 : i32
    return %arg0, %c0_i32 : i32, i32
  }
}

module attributes {stable_mosaic.version = 11 : i64} {
  func.func @_fused_matmul_kernel(%arg0: i32, %arg1: memref<128x512xbf16, #tpu.memory_space<vmem>>, %arg2: memref<512x128xbf16, #tpu.memory_space<vmem>>, %arg3: memref<1x128xf32, #tpu.memory_space<vmem>>, %arg4: memref<128x128xbf16, #tpu.memory_space<vmem>>) attributes {dimension_semantics = [#tpu.dimension_semantics<parallel>], iteration_bounds = array<i64: 1>, scalar_prefetch = 0 : i64, scratch_operands = 0 : i64, tpu.core_type = #tpu.core_type<tc>, window_params = [{transform_indices = @transform_0, window_bounds = array<i64: 128, 512>}, {pipeline_mode = #tpu.pipeline_mode<synchronous>, transform_indices = @transform_1, window_bounds = array<i64: 512, 128>}, {pipeline_mode = #tpu.pipeline_mode<synchronous>, transform_indices = @transform_2, window_bounds = array<i64: 1, 128>}, {transform_indices = @transform_3, window_bounds = array<i64: 128, 128>}]} {
    %c0 = arith.constant 0 : index
    %c0_0 = arith.constant 0 : index
    %0 = vector.load %arg1[%c0, %c0_0] : memref<128x512xbf16, #tpu.memory_space<vmem>>, vector<128x512xbf16>
    %c0_1 = arith.constant 0 : index
    %c0_2 = arith.constant 0 : index
    %1 = vector.load %arg2[%c0_1, %c0_2] : memref<512x128xbf16, #tpu.memory_space<vmem>>, vector<512x128xbf16>
    %cst = arith.constant dense<0.000000e+00> : vector<128x128xf32>
    %2 = tpu.matmul %0, %1, %cst {dimension_numbers = #tpu.dot_dimension_numbers<[1], [0], [0], [1], [0, 0, 1, 1], [], []>} : vector<128x512xbf16>, vector<512x128xbf16>, vector<128x128xf32> -> vector<128x128xf32>
    %c0_3 = arith.constant 0 : index
    %c0_4 = arith.constant 0 : index
    %3 = vector.load %arg3[%c0_3, %c0_4] : memref<1x128xf32, #tpu.memory_space<vmem>>, vector<1x128xf32>
    %4 = vector.broadcast %3 : vector<1x128xf32> to vector<128x128xf32>
    %5 = arith.addf %2, %4 : vector<128x128xf32>
    %cst_5 = arith.constant 0.000000e+00 : f32
    %6 = vector.broadcast %cst_5 : f32 to vector<128x128xf32>
    %7 = arith.maximumf %5, %6 : vector<128x128xf32>
    %8 = arith.truncf %7 : vector<128x128xf32> to vector<128x128xbf16>
    %c0_6 = arith.constant 0 : index
    %c0_7 = arith.constant 0 : index
    %9 = vector.load %arg4[%c0_6, %c0_7] : memref<128x128xbf16, #tpu.memory_space<vmem>>, vector<128x128xbf16>
    tpu.vector_store %arg4[%c0_6, %c0_7], %8 {strides = array<i32>} : memref<128x128xbf16, #tpu.memory_space<vmem>>, vector<128x128xbf16>,
    return
  }
  func.func @transform_0(%arg0: i32) -> (i32, i32) {
    %c0_i32 = arith.constant 0 : i32
    %c0_i32_0 = arith.constant 0 : i32
    return %arg0, %c0_i32 : i32, i32
  }
  func.func @transform_1(%arg0: i32) -> (i32, i32) {
    %c0_i32 = arith.constant 0 : i32
    %c0_i32_0 = arith.constant 0 : i32
    %c0_i32_1 = arith.constant 0 : i32
    return %c0_i32, %c0_i32_0 : i32, i32
  }
  func.func @transform_2(%arg0: i32) -> (i32, i32) {
    %c0_i32 = arith.constant 0 : i32
    %c0_i32_0 = arith.constant 0 : i32
    %c0_i32_1 = arith.constant 0 : i32
    return %c0_i32, %c0_i32_0 : i32, i32
  }
  func.func @transform_3(%arg0: i32) -> (i32, i32) {
    %c0_i32 = arith.constant 0 : i32
    %c0_i32_0 = arith.constant 0 : i32
    return %arg0, %c0_i32 : i32, i32
  }
}

module attributes {stable_mosaic.version = 11 : i64} {
  func.func @_fused_matmul_kernel(%arg0: i32, %arg1: memref<32x1024xbf16, #tpu.memory_space<vmem>>, %arg2: memref<1024x128xbf16, #tpu.memory_space<vmem>>, %arg3: memref<1x128xf32, #tpu.memory_space<vmem>>, %arg4: memref<32x128xbf16, #tpu.memory_space<vmem>>) attributes {dimension_semantics = [#tpu.dimension_semantics<parallel>], iteration_bounds = array<i64: 1>, scalar_prefetch = 0 : i64, scratch_operands = 0 : i64, tpu.core_type = #tpu.core_type<tc>, window_params = [{transform_indices = @transform_0, window_bounds = array<i64: 32, 1024>}, {pipeline_mode = #tpu.pipeline_mode<synchronous>, transform_indices = @transform_1, window_bounds = array<i64: 1024, 128>}, {pipeline_mode = #tpu.pipeline_mode<synchronous>, transform_indices = @transform_2, window_bounds = array<i64: 1, 128>}, {transform_indices = @transform_3, window_bounds = array<i64: 32, 128>}]} {
    %c0 = arith.constant 0 : index
    %c0_0 = arith.constant 0 : index
    %0 = vector.load %arg1[%c0, %c0_0] : memref<32x1024xbf16, #tpu.memory_space<vmem>>, vector<32x1024xbf16>
    %c0_1 = arith.constant 0 : index
    %c0_2 = arith.constant 0 : index
    %1 = vector.load %arg2[%c0_1, %c0_2] : memref<1024x128xbf16, #tpu.memory_space<vmem>>, vector<1024x128xbf16>
    %cst = arith.constant dense<0.000000e+00> : vector<32x128xf32>
    %2 = tpu.matmul %0, %1, %cst {dimension_numbers = #tpu.dot_dimension_numbers<[1], [0], [0], [1], [0, 0, 1, 1], [], []>} : vector<32x1024xbf16>, vector<1024x128xbf16>, vector<32x128xf32> -> vector<32x128xf32>
    %c0_3 = arith.constant 0 : index
    %c0_4 = arith.constant 0 : index
    %3 = vector.load %arg3[%c0_3, %c0_4] : memref<1x128xf32, #tpu.memory_space<vmem>>, vector<1x128xf32>
    %4 = vector.broadcast %3 : vector<1x128xf32> to vector<32x128xf32>
    %5 = arith.addf %2, %4 : vector<32x128xf32>
    %cst_5 = arith.constant 0.000000e+00 : f32
    %6 = vector.broadcast %cst_5 : f32 to vector<32x128xf32>
    %7 = arith.maximumf %5, %6 : vector<32x128xf32>
    %8 = arith.truncf %7 : vector<32x128xf32> to vector<32x128xbf16>
    %c0_6 = arith.constant 0 : index
    %c0_7 = arith.constant 0 : index
    %9 = vector.load %arg4[%c0_6, %c0_7] : memref<32x128xbf16, #tpu.memory_space<vmem>>, vector<32x128xbf16>
    tpu.vector_store %arg4[%c0_6, %c0_7], %8 {strides = array<i32>} : memref<32x128xbf16, #tpu.memory_space<vmem>>, vector<32x128xbf16>,
    return
  }
  func.func @transform_0(%arg0: i32) -> (i32, i32) {
    %c0_i32 = arith.constant 0 : i32
    %c0_i32_0 = arith.constant 0 : i32
    return %arg0, %c0_i32 : i32, i32
  }
  func.func @transform_1(%arg0: i32) -> (i32, i32) {
    %c0_i32 = arith.constant 0 : i32
    %c0_i32_0 = arith.constant 0 : i32
    %c0_i32_1 = arith.constant 0 : i32
    return %c0_i32, %c0_i32_0 : i32, i32
  }
  func.func @transform_2(%arg0: i32) -> (i32, i32) {
    %c0_i32 = arith.constant 0 : i32
    %c0_i32_0 = arith.constant 0 : i32
    %c0_i32_1 = arith.constant 0 : i32
    return %c0_i32, %c0_i32_0 : i32, i32
  }
  func.func @transform_3(%arg0: i32) -> (i32, i32) {
    %c0_i32 = arith.constant 0 : i32
    %c0_i32_0 = arith.constant 0 : i32
    return %arg0, %c0_i32 : i32, i32
  }
}

module attributes {stable_mosaic.version = 11 : i64} {
  func.func @_fused_matmul_kernel(%arg0: i32, %arg1: memref<8x2048xbf16, #tpu.memory_space<vmem>>, %arg2: memref<2048x256xbf16, #tpu.memory_space<vmem>>, %arg3: memref<1x256xf32, #tpu.memory_space<vmem>>, %arg4: memref<8x256xbf16, #tpu.memory_space<vmem>>) attributes {dimension_semantics = [#tpu.dimension_semantics<parallel>], iteration_bounds = array<i64: 1>, scalar_prefetch = 0 : i64, scratch_operands = 0 : i64, tpu.core_type = #tpu.core_type<tc>, window_params = [{transform_indices = @transform_0, window_bounds = array<i64: 8, 2048>}, {pipeline_mode = #tpu.pipeline_mode<synchronous>, transform_indices = @transform_1, window_bounds = array<i64: 2048, 256>}, {pipeline_mode = #tpu.pipeline_mode<synchronous>, transform_indices = @transform_2, window_bounds = array<i64: 1, 256>}, {transform_indices = @transform_3, window_bounds = array<i64: 8, 256>}]} {
    %c0 = arith.constant 0 : index
    %c0_0 = arith.constant 0 : index
    %0 = vector.load %arg1[%c0, %c0_0] : memref<8x2048xbf16, #tpu.memory_space<vmem>>, vector<8x2048xbf16>
    %c0_1 = arith.constant 0 : index
    %c0_2 = arith.constant 0 : index
    %1 = vector.load %arg2[%c0_1, %c0_2] : memref<2048x256xbf16, #tpu.memory_space<vmem>>, vector<2048x256xbf16>
    %cst = arith.constant dense<0.000000e+00> : vector<8x256xf32>
    %2 = tpu.matmul %0, %1, %cst {dimension_numbers = #tpu.dot_dimension_numbers<[1], [0], [0], [1], [0, 0, 1, 1], [], []>} : vector<8x2048xbf16>, vector<2048x256xbf16>, vector<8x256xf32> -> vector<8x256xf32>
    %c0_3 = arith.constant 0 : index
    %c0_4 = arith.constant 0 : index
    %3 = vector.load %arg3[%c0_3, %c0_4] : memref<1x256xf32, #tpu.memory_space<vmem>>, vector<1x256xf32>
    %4 = vector.broadcast %3 : vector<1x256xf32> to vector<8x256xf32>
    %5 = arith.addf %2, %4 : vector<8x256xf32>
    %cst_5 = arith.constant 0.000000e+00 : f32
    %6 = vector.broadcast %cst_5 : f32 to vector<8x256xf32>
    %7 = arith.maximumf %5, %6 : vector<8x256xf32>
    %8 = arith.truncf %7 : vector<8x256xf32> to vector<8x256xbf16>
    %c0_6 = arith.constant 0 : index
    %c0_7 = arith.constant 0 : index
    %9 = vector.load %arg4[%c0_6, %c0_7] : memref<8x256xbf16, #tpu.memory_space<vmem>>, vector<8x256xbf16>
    tpu.vector_store %arg4[%c0_6, %c0_7], %8 {strides = array<i32>} : memref<8x256xbf16, #tpu.memory_space<vmem>>, vector<8x256xbf16>,
    return
  }
  func.func @transform_0(%arg0: i32) -> (i32, i32) {
    %c0_i32 = arith.constant 0 : i32
    %c0_i32_0 = arith.constant 0 : i32
    return %arg0, %c0_i32 : i32, i32
  }
  func.func @transform_1(%arg0: i32) -> (i32, i32) {
    %c0_i32 = arith.constant 0 : i32
    %c0_i32_0 = arith.constant 0 : i32
    %c0_i32_1 = arith.constant 0 : i32
    return %c0_i32, %c0_i32_0 : i32, i32
  }
  func.func @transform_2(%arg0: i32) -> (i32, i32) {
    %c0_i32 = arith.constant 0 : i32
    %c0_i32_0 = arith.constant 0 : i32
    %c0_i32_1 = arith.constant 0 : i32
    return %c0_i32, %c0_i32_0 : i32, i32
  }
  func.func @transform_3(%arg0: i32) -> (i32, i32) {
    %c0_i32 = arith.constant 0 : i32
    %c0_i32_0 = arith.constant 0 : i32
    return %arg0, %c0_i32 : i32, i32
  }
}

module attributes {stable_mosaic.version = 11 : i64} {
  func.func @_fused_matmul_kernel(%arg0: i32, %arg1: memref<2x1074xbf16, #tpu.memory_space<vmem>>, %arg2: memref<1074x256xbf16, #tpu.memory_space<vmem>>, %arg3: memref<1x256xf32, #tpu.memory_space<vmem>>, %arg4: memref<2x256xf32, #tpu.memory_space<vmem>>) attributes {dimension_semantics = [#tpu.dimension_semantics<parallel>], iteration_bounds = array<i64: 1>, scalar_prefetch = 0 : i64, scratch_operands = 0 : i64, tpu.core_type = #tpu.core_type<tc>, window_params = [{transform_indices = @transform_0, window_bounds = array<i64: 2, 1074>}, {pipeline_mode = #tpu.pipeline_mode<synchronous>, transform_indices = @transform_1, window_bounds = array<i64: 1074, 256>}, {pipeline_mode = #tpu.pipeline_mode<synchronous>, transform_indices = @transform_2, window_bounds = array<i64: 1, 256>}, {transform_indices = @transform_3, window_bounds = array<i64: 2, 256>}]} {
    %c0 = arith.constant 0 : index
    %c0_0 = arith.constant 0 : index
    %0 = vector.load %arg1[%c0, %c0_0] : memref<2x1074xbf16, #tpu.memory_space<vmem>>, vector<2x1074xbf16>
    %c0_1 = arith.constant 0 : index
    %c0_2 = arith.constant 0 : index
    %1 = vector.load %arg2[%c0_1, %c0_2] : memref<1074x256xbf16, #tpu.memory_space<vmem>>, vector<1074x256xbf16>
    %cst = arith.constant dense<0.000000e+00> : vector<2x256xf32>
    %2 = tpu.matmul %0, %1, %cst {dimension_numbers = #tpu.dot_dimension_numbers<[1], [0], [0], [1], [0, 0, 1, 1], [], []>} : vector<2x1074xbf16>, vector<1074x256xbf16>, vector<2x256xf32> -> vector<2x256xf32>
    %c0_3 = arith.constant 0 : index
    %c0_4 = arith.constant 0 : index
    %3 = vector.load %arg3[%c0_3, %c0_4] : memref<1x256xf32, #tpu.memory_space<vmem>>, vector<1x256xf32>
    %4 = vector.broadcast %3 : vector<1x256xf32> to vector<2x256xf32>
    %5 = arith.addf %2, %4 : vector<2x256xf32>
    %c0_5 = arith.constant 0 : index
    %c0_6 = arith.constant 0 : index
    %6 = vector.load %arg4[%c0_5, %c0_6] : memref<2x256xf32, #tpu.memory_space<vmem>>, vector<2x256xf32>
    tpu.vector_store %arg4[%c0_5, %c0_6], %5 {strides = array<i32>} : memref<2x256xf32, #tpu.memory_space<vmem>>, vector<2x256xf32>,
    return
  }
  func.func @transform_0(%arg0: i32) -> (i32, i32) {
    %c0_i32 = arith.constant 0 : i32
    %c0_i32_0 = arith.constant 0 : i32
    return %arg0, %c0_i32 : i32, i32
  }
  func.func @transform_1(%arg0: i32) -> (i32, i32) {
    %c0_i32 = arith.constant 0 : i32
    %c0_i32_0 = arith.constant 0 : i32
    %c0_i32_1 = arith.constant 0 : i32
    return %c0_i32, %c0_i32_0 : i32, i32
  }
  func.func @transform_2(%arg0: i32) -> (i32, i32) {
    %c0_i32 = arith.constant 0 : i32
    %c0_i32_0 = arith.constant 0 : i32
    %c0_i32_1 = arith.constant 0 : i32
    return %c0_i32, %c0_i32_0 : i32, i32
  }
  func.func @transform_3(%arg0: i32) -> (i32, i32) {
    %c0_i32 = arith.constant 0 : i32
    %c0_i32_0 = arith.constant 0 : i32
    return %arg0, %c0_i32 : i32, i32
  }
}

module attributes {stable_mosaic.version = 11 : i64} {
  func.func @_fused_matmul_kernel(%arg0: i32, %arg1: memref<2x178xbf16, #tpu.memory_space<vmem>>, %arg2: memref<178x1024xbf16, #tpu.memory_space<vmem>>, %arg3: memref<1x1024xf32, #tpu.memory_space<vmem>>, %arg4: memref<2x1024xbf16, #tpu.memory_space<vmem>>) attributes {dimension_semantics = [#tpu.dimension_semantics<parallel>], iteration_bounds = array<i64: 1>, scalar_prefetch = 0 : i64, scratch_operands = 0 : i64, tpu.core_type = #tpu.core_type<tc>, window_params = [{transform_indices = @transform_0, window_bounds = array<i64: 2, 178>}, {pipeline_mode = #tpu.pipeline_mode<synchronous>, transform_indices = @transform_1, window_bounds = array<i64: 178, 1024>}, {pipeline_mode = #tpu.pipeline_mode<synchronous>, transform_indices = @transform_2, window_bounds = array<i64: 1, 1024>}, {transform_indices = @transform_3, window_bounds = array<i64: 2, 1024>}]} {
    %c0 = arith.constant 0 : index
    %c0_0 = arith.constant 0 : index
    %0 = vector.load %arg1[%c0, %c0_0] : memref<2x178xbf16, #tpu.memory_space<vmem>>, vector<2x178xbf16>
    %c0_1 = arith.constant 0 : index
    %c0_2 = arith.constant 0 : index
    %1 = vector.load %arg2[%c0_1, %c0_2] : memref<178x1024xbf16, #tpu.memory_space<vmem>>, vector<178x1024xbf16>
    %cst = arith.constant dense<0.000000e+00> : vector<2x1024xf32>
    %2 = tpu.matmul %0, %1, %cst {dimension_numbers = #tpu.dot_dimension_numbers<[1], [0], [0], [1], [0, 0, 1, 1], [], []>} : vector<2x178xbf16>, vector<178x1024xbf16>, vector<2x1024xf32> -> vector<2x1024xf32>
    %c0_3 = arith.constant 0 : index
    %c0_4 = arith.constant 0 : index
    %3 = vector.load %arg3[%c0_3, %c0_4] : memref<1x1024xf32, #tpu.memory_space<vmem>>, vector<1x1024xf32>
    %4 = vector.broadcast %3 : vector<1x1024xf32> to vector<2x1024xf32>
    %5 = arith.addf %2, %4 : vector<2x1024xf32>
    %6 = arith.truncf %5 : vector<2x1024xf32> to vector<2x1024xbf16>
    %c0_5 = arith.constant 0 : index
    %c0_6 = arith.constant 0 : index
    %7 = vector.load %arg4[%c0_5, %c0_6] : memref<2x1024xbf16, #tpu.memory_space<vmem>>, vector<2x1024xbf16>
    tpu.vector_store %arg4[%c0_5, %c0_6], %6 {strides = array<i32>} : memref<2x1024xbf16, #tpu.memory_space<vmem>>, vector<2x1024xbf16>,
    return
  }
  func.func @transform_0(%arg0: i32) -> (i32, i32) {
    %c0_i32 = arith.constant 0 : i32
    %c0_i32_0 = arith.constant 0 : i32
    return %arg0, %c0_i32 : i32, i32
  }
  func.func @transform_1(%arg0: i32) -> (i32, i32) {
    %c0_i32 = arith.constant 0 : i32
    %c0_i32_0 = arith.constant 0 : i32
    %c0_i32_1 = arith.constant 0 : i32
    return %c0_i32, %c0_i32_0 : i32, i32
  }
  func.func @transform_2(%arg0: i32) -> (i32, i32) {
    %c0_i32 = arith.constant 0 : i32
    %c0_i32_0 = arith.constant 0 : i32
    %c0_i32_1 = arith.constant 0 : i32
    return %c0_i32, %c0_i32_0 : i32, i32
  }
  func.func @transform_3(%arg0: i32) -> (i32, i32) {
    %c0_i32 = arith.constant 0 : i32
    %c0_i32_0 = arith.constant 0 : i32
    return %arg0, %c0_i32 : i32, i32
  }
}

module attributes {stable_mosaic.version = 11 : i64} {
  func.func @_fused_matmul_kernel(%arg0: i32, %arg1: memref<8x2304xbf16, #tpu.memory_space<vmem>>, %arg2: memref<2304x512xbf16, #tpu.memory_space<vmem>>, %arg3: memref<1x512xf32, #tpu.memory_space<vmem>>, %arg4: memref<8x512xbf16, #tpu.memory_space<vmem>>) attributes {dimension_semantics = [#tpu.dimension_semantics<parallel>], iteration_bounds = array<i64: 1>, scalar_prefetch = 0 : i64, scratch_operands = 0 : i64, tpu.core_type = #tpu.core_type<tc>, window_params = [{transform_indices = @transform_0, window_bounds = array<i64: 8, 2304>}, {pipeline_mode = #tpu.pipeline_mode<synchronous>, transform_indices = @transform_1, window_bounds = array<i64: 2304, 512>}, {pipeline_mode = #tpu.pipeline_mode<synchronous>, transform_indices = @transform_2, window_bounds = array<i64: 1, 512>}, {transform_indices = @transform_3, window_bounds = array<i64: 8, 512>}]} {
    %c0 = arith.constant 0 : index
    %c0_0 = arith.constant 0 : index
    %0 = vector.load %arg1[%c0, %c0_0] : memref<8x2304xbf16, #tpu.memory_space<vmem>>, vector<8x2304xbf16>
    %c0_1 = arith.constant 0 : index
    %c0_2 = arith.constant 0 : index
    %1 = vector.load %arg2[%c0_1, %c0_2] : memref<2304x512xbf16, #tpu.memory_space<vmem>>, vector<2304x512xbf16>
    %cst = arith.constant dense<0.000000e+00> : vector<8x512xf32>
    %2 = tpu.matmul %0, %1, %cst {dimension_numbers = #tpu.dot_dimension_numbers<[1], [0], [0], [1], [0, 0, 1, 1], [], []>} : vector<8x2304xbf16>, vector<2304x512xbf16>, vector<8x512xf32> -> vector<8x512xf32>
    %c0_3 = arith.constant 0 : index
    %c0_4 = arith.constant 0 : index
    %3 = vector.load %arg3[%c0_3, %c0_4] : memref<1x512xf32, #tpu.memory_space<vmem>>, vector<1x512xf32>
    %4 = vector.broadcast %3 : vector<1x512xf32> to vector<8x512xf32>
    %5 = arith.addf %2, %4 : vector<8x512xf32>
    %cst_5 = arith.constant 0.000000e+00 : f32
    %6 = vector.broadcast %cst_5 : f32 to vector<8x512xf32>
    %7 = arith.maximumf %5, %6 : vector<8x512xf32>
    %8 = arith.truncf %7 : vector<8x512xf32> to vector<8x512xbf16>
    %c0_6 = arith.constant 0 : index
    %c0_7 = arith.constant 0 : index
    %9 = vector.load %arg4[%c0_6, %c0_7] : memref<8x512xbf16, #tpu.memory_space<vmem>>, vector<8x512xbf16>
    tpu.vector_store %arg4[%c0_6, %c0_7], %8 {strides = array<i32>} : memref<8x512xbf16, #tpu.memory_space<vmem>>, vector<8x512xbf16>,
    return
  }
  func.func @transform_0(%arg0: i32) -> (i32, i32) {
    %c0_i32 = arith.constant 0 : i32
    %c0_i32_0 = arith.constant 0 : i32
    return %arg0, %c0_i32 : i32, i32
  }
  func.func @transform_1(%arg0: i32) -> (i32, i32) {
    %c0_i32 = arith.constant 0 : i32
    %c0_i32_0 = arith.constant 0 : i32
    %c0_i32_1 = arith.constant 0 : i32
    return %c0_i32, %c0_i32_0 : i32, i32
  }
  func.func @transform_2(%arg0: i32) -> (i32, i32) {
    %c0_i32 = arith.constant 0 : i32
    %c0_i32_0 = arith.constant 0 : i32
    %c0_i32_1 = arith.constant 0 : i32
    return %c0_i32, %c0_i32_0 : i32, i32
  }
  func.func @transform_3(%arg0: i32) -> (i32, i32) {
    %c0_i32 = arith.constant 0 : i32
    %c0_i32_0 = arith.constant 0 : i32
    return %arg0, %c0_i32 : i32, i32
  }
}

module attributes {stable_mosaic.version = 11 : i64} {
  func.func @_fused_matmul_kernel(%arg0: i32, %arg1: memref<32x1152xbf16, #tpu.memory_space<vmem>>, %arg2: memref<1152x256xbf16, #tpu.memory_space<vmem>>, %arg3: memref<1x256xf32, #tpu.memory_space<vmem>>, %arg4: memref<32x256xbf16, #tpu.memory_space<vmem>>) attributes {dimension_semantics = [#tpu.dimension_semantics<parallel>], iteration_bounds = array<i64: 1>, scalar_prefetch = 0 : i64, scratch_operands = 0 : i64, tpu.core_type = #tpu.core_type<tc>, window_params = [{transform_indices = @transform_0, window_bounds = array<i64: 32, 1152>}, {pipeline_mode = #tpu.pipeline_mode<synchronous>, transform_indices = @transform_1, window_bounds = array<i64: 1152, 256>}, {pipeline_mode = #tpu.pipeline_mode<synchronous>, transform_indices = @transform_2, window_bounds = array<i64: 1, 256>}, {transform_indices = @transform_3, window_bounds = array<i64: 32, 256>}]} {
    %c0 = arith.constant 0 : index
    %c0_0 = arith.constant 0 : index
    %0 = vector.load %arg1[%c0, %c0_0] : memref<32x1152xbf16, #tpu.memory_space<vmem>>, vector<32x1152xbf16>
    %c0_1 = arith.constant 0 : index
    %c0_2 = arith.constant 0 : index
    %1 = vector.load %arg2[%c0_1, %c0_2] : memref<1152x256xbf16, #tpu.memory_space<vmem>>, vector<1152x256xbf16>
    %cst = arith.constant dense<0.000000e+00> : vector<32x256xf32>
    %2 = tpu.matmul %0, %1, %cst {dimension_numbers = #tpu.dot_dimension_numbers<[1], [0], [0], [1], [0, 0, 1, 1], [], []>} : vector<32x1152xbf16>, vector<1152x256xbf16>, vector<32x256xf32> -> vector<32x256xf32>
    %c0_3 = arith.constant 0 : index
    %c0_4 = arith.constant 0 : index
    %3 = vector.load %arg3[%c0_3, %c0_4] : memref<1x256xf32, #tpu.memory_space<vmem>>, vector<1x256xf32>
    %4 = vector.broadcast %3 : vector<1x256xf32> to vector<32x256xf32>
    %5 = arith.addf %2, %4 : vector<32x256xf32>
    %cst_5 = arith.constant 0.000000e+00 : f32
    %6 = vector.broadcast %cst_5 : f32 to vector<32x256xf32>
    %7 = arith.maximumf %5, %6 : vector<32x256xf32>
    %8 = arith.truncf %7 : vector<32x256xf32> to vector<32x256xbf16>
    %c0_6 = arith.constant 0 : index
    %c0_7 = arith.constant 0 : index
    %9 = vector.load %arg4[%c0_6, %c0_7] : memref<32x256xbf16, #tpu.memory_space<vmem>>, vector<32x256xbf16>
    tpu.vector_store %arg4[%c0_6, %c0_7], %8 {strides = array<i32>} : memref<32x256xbf16, #tpu.memory_space<vmem>>, vector<32x256xbf16>,
    return
  }
  func.func @transform_0(%arg0: i32) -> (i32, i32) {
    %c0_i32 = arith.constant 0 : i32
    %c0_i32_0 = arith.constant 0 : i32
    return %arg0, %c0_i32 : i32, i32
  }
  func.func @transform_1(%arg0: i32) -> (i32, i32) {
    %c0_i32 = arith.constant 0 : i32
    %c0_i32_0 = arith.constant 0 : i32
    %c0_i32_1 = arith.constant 0 : i32
    return %c0_i32, %c0_i32_0 : i32, i32
  }
  func.func @transform_2(%arg0: i32) -> (i32, i32) {
    %c0_i32 = arith.constant 0 : i32
    %c0_i32_0 = arith.constant 0 : i32
    %c0_i32_1 = arith.constant 0 : i32
    return %c0_i32, %c0_i32_0 : i32, i32
  }
  func.func @transform_3(%arg0: i32) -> (i32, i32) {
    %c0_i32 = arith.constant 0 : i32
    %c0_i32_0 = arith.constant 0 : i32
    return %arg0, %c0_i32 : i32, i32
  }
}

module attributes {stable_mosaic.version = 11 : i64} {
  func.func @_fused_matmul_kernel(%arg0: i32, %arg1: memref<128x576xbf16, #tpu.memory_space<vmem>>, %arg2: memref<576x128xbf16, #tpu.memory_space<vmem>>, %arg3: memref<1x128xf32, #tpu.memory_space<vmem>>, %arg4: memref<128x128xbf16, #tpu.memory_space<vmem>>) attributes {dimension_semantics = [#tpu.dimension_semantics<parallel>], iteration_bounds = array<i64: 1>, scalar_prefetch = 0 : i64, scratch_operands = 0 : i64, tpu.core_type = #tpu.core_type<tc>, window_params = [{transform_indices = @transform_0, window_bounds = array<i64: 128, 576>}, {pipeline_mode = #tpu.pipeline_mode<synchronous>, transform_indices = @transform_1, window_bounds = array<i64: 576, 128>}, {pipeline_mode = #tpu.pipeline_mode<synchronous>, transform_indices = @transform_2, window_bounds = array<i64: 1, 128>}, {transform_indices = @transform_3, window_bounds = array<i64: 128, 128>}]} {
    %c0 = arith.constant 0 : index
    %c0_0 = arith.constant 0 : index
    %0 = vector.load %arg1[%c0, %c0_0] : memref<128x576xbf16, #tpu.memory_space<vmem>>, vector<128x576xbf16>
    %c0_1 = arith.constant 0 : index
    %c0_2 = arith.constant 0 : index
    %1 = vector.load %arg2[%c0_1, %c0_2] : memref<576x128xbf16, #tpu.memory_space<vmem>>, vector<576x128xbf16>
    %cst = arith.constant dense<0.000000e+00> : vector<128x128xf32>
    %2 = tpu.matmul %0, %1, %cst {dimension_numbers = #tpu.dot_dimension_numbers<[1], [0], [0], [1], [0, 0, 1, 1], [], []>} : vector<128x576xbf16>, vector<576x128xbf16>, vector<128x128xf32> -> vector<128x128xf32>
    %c0_3 = arith.constant 0 : index
    %c0_4 = arith.constant 0 : index
    %3 = vector.load %arg3[%c0_3, %c0_4] : memref<1x128xf32, #tpu.memory_space<vmem>>, vector<1x128xf32>
    %4 = vector.broadcast %3 : vector<1x128xf32> to vector<128x128xf32>
    %5 = arith.addf %2, %4 : vector<128x128xf32>
    %cst_5 = arith.constant 0.000000e+00 : f32
    %6 = vector.broadcast %cst_5 : f32 to vector<128x128xf32>
    %7 = arith.maximumf %5, %6 : vector<128x128xf32>
    %8 = arith.truncf %7 : vector<128x128xf32> to vector<128x128xbf16>
    %c0_6 = arith.constant 0 : index
    %c0_7 = arith.constant 0 : index
    %9 = vector.load %arg4[%c0_6, %c0_7] : memref<128x128xbf16, #tpu.memory_space<vmem>>, vector<128x128xbf16>
    tpu.vector_store %arg4[%c0_6, %c0_7], %8 {strides = array<i32>} : memref<128x128xbf16, #tpu.memory_space<vmem>>, vector<128x128xbf16>,
    return
  }
  func.func @transform_0(%arg0: i32) -> (i32, i32) {
    %c0_i32 = arith.constant 0 : i32
    %c0_i32_0 = arith.constant 0 : i32
    return %arg0, %c0_i32 : i32, i32
  }
  func.func @transform_1(%arg0: i32) -> (i32, i32) {
    %c0_i32 = arith.constant 0 : i32
    %c0_i32_0 = arith.constant 0 : i32
    %c0_i32_1 = arith.constant 0 : i32
    return %c0_i32, %c0_i32_0 : i32, i32
  }
  func.func @transform_2(%arg0: i32) -> (i32, i32) {
    %c0_i32 = arith.constant 0 : i32
    %c0_i32_0 = arith.constant 0 : i32
    %c0_i32_1 = arith.constant 0 : i32
    return %c0_i32, %c0_i32_0 : i32, i32
  }
  func.func @transform_3(%arg0: i32) -> (i32, i32) {
    %c0_i32 = arith.constant 0 : i32
    %c0_i32_0 = arith.constant 0 : i32
    return %arg0, %c0_i32 : i32, i32
  }
}

module attributes {stable_mosaic.version = 11 : i64} {
  func.func @_fused_matmul_kernel(%arg0: i32, %arg1: memref<256x288xbf16, #tpu.memory_space<vmem>>, %arg2: memref<288x128xbf16, #tpu.memory_space<vmem>>, %arg3: memref<1x128xf32, #tpu.memory_space<vmem>>, %arg4: memref<256x128xf32, #tpu.memory_space<vmem>>) attributes {dimension_semantics = [#tpu.dimension_semantics<parallel>], iteration_bounds = array<i64: 2>, scalar_prefetch = 0 : i64, scratch_operands = 0 : i64, tpu.core_type = #tpu.core_type<tc>, window_params = [{transform_indices = @transform_0, window_bounds = array<i64: 256, 288>}, {pipeline_mode = #tpu.pipeline_mode<synchronous>, transform_indices = @transform_1, window_bounds = array<i64: 288, 128>}, {pipeline_mode = #tpu.pipeline_mode<synchronous>, transform_indices = @transform_2, window_bounds = array<i64: 1, 128>}, {transform_indices = @transform_3, window_bounds = array<i64: 256, 128>}]} {
    %c0 = arith.constant 0 : index
    %c0_0 = arith.constant 0 : index
    %0 = vector.load %arg1[%c0, %c0_0] : memref<256x288xbf16, #tpu.memory_space<vmem>>, vector<256x288xbf16>
    %c0_1 = arith.constant 0 : index
    %c0_2 = arith.constant 0 : index
    %1 = vector.load %arg2[%c0_1, %c0_2] : memref<288x128xbf16, #tpu.memory_space<vmem>>, vector<288x128xbf16>
    %cst = arith.constant dense<0.000000e+00> : vector<256x128xf32>
    %2 = tpu.matmul %0, %1, %cst {dimension_numbers = #tpu.dot_dimension_numbers<[1], [0], [0], [1], [0, 0, 1, 1], [], []>} : vector<256x288xbf16>, vector<288x128xbf16>, vector<256x128xf32> -> vector<256x128xf32>
    %c0_3 = arith.constant 0 : index
    %c0_4 = arith.constant 0 : index
    %3 = vector.load %arg3[%c0_3, %c0_4] : memref<1x128xf32, #tpu.memory_space<vmem>>, vector<1x128xf32>
    %4 = vector.broadcast %3 : vector<1x128xf32> to vector<256x128xf32>
    %5 = arith.addf %2, %4 : vector<256x128xf32>
    %6 = arith.negf %5 : vector<256x128xf32>
    %7 = math.exp %6 : vector<256x128xf32>
    %cst_5 = arith.constant 1.000000e+00 : f32
    %8 = vector.broadcast %cst_5 : f32 to vector<256x128xf32>
    %9 = arith.addf %8, %7 : vector<256x128xf32>
    %10 = arith.divf %8, %9 : vector<256x128xf32>
    %c0_6 = arith.constant 0 : index
    %c0_7 = arith.constant 0 : index
    %11 = vector.load %arg4[%c0_6, %c0_7] : memref<256x128xf32, #tpu.memory_space<vmem>>, vector<256x128xf32>
    tpu.vector_store %arg4[%c0_6, %c0_7], %10 {strides = array<i32>} : memref<256x128xf32, #tpu.memory_space<vmem>>, vector<256x128xf32>,
    return
  }
  func.func @transform_0(%arg0: i32) -> (i32, i32) {
    %c0_i32 = arith.constant 0 : i32
    %c0_i32_0 = arith.constant 0 : i32
    return %arg0, %c0_i32 : i32, i32
  }
  func.func @transform_1(%arg0: i32) -> (i32, i32) {
    %c0_i32 = arith.constant 0 : i32
    %c0_i32_0 = arith.constant 0 : i32
    %c0_i32_1 = arith.constant 0 : i32
    return %c0_i32, %c0_i32_0 : i32, i32
  }
  func.func @transform_2(%arg0: i32) -> (i32, i32) {
    %c0_i32 = arith.constant 0 : i32
    %c0_i32_0 = arith.constant 0 : i32
    %c0_i32_1 = arith.constant 0 : i32
    return %c0_i32, %c0_i32_0 : i32, i32
  }
  func.func @transform_3(%arg0: i32) -> (i32, i32) {
    %c0_i32 = arith.constant 0 : i32
    %c0_i32_0 = arith.constant 0 : i32
    return %arg0, %c0_i32 : i32, i32
  }
}

</mosaic_0001>

<llo_original>
// kernel: _lambda_.10
$region0: #{_lambda_.10}
  #allocation0 [shape = 'u32[]', space=smem, size = 0x4, offset = 0x4, fixed_abs, tag = 'smem constant byte address 0x4 - core index']
  #allocation1 [shape = 'u32[72,128]{1,0:T(1,128)}', space=vmem, size = 0x9000, scoped, tag = 'internal scratch']
  %s0 = inlined_call_operand.vmem [shape: bf16[512,48], index: 0, kind: input, shape index: {}]
  %s1 = inlined_call_operand.vmem [shape: bf16[48,128], index: 1, kind: input, shape index: {}]
  %s2 = inlined_call_operand.vmem [shape: f32[1,128], index: 2, kind: input, shape index: {}]
  %s3 = inlined_call_operand.vmem [shape: bf16[512,128], index: 3, kind: output, shape index: {}]
  %s4 = sld [smem:[#allocation0]]
  $region45: #{_lambda_.10} parent=0
    _
  %s6 = ssub.s32 1, %s4
  %s7 = scalar_select 0, %s6, %s4
  loop: start=0, step=1, limit=4
  $region2: #{_lambda_.10} parent=0 // loop_pre_header
    _
  $region3: #{_lambda_.10} parent=0 // loop_header
    %s9 = sphi 0, %s13
    %p10 = scmp.ge.s32.totalorder %s9, 4
    %s19 = sphi 0, %s21
    %s22 = sphi 0, %s19
    %s23 = sphi 0, %s22
    %s39 = sphi 0, %s23
    %s43 = sphi 0, %s43
    %s45 = sphi 0, %s43
    %s46 = sphi 0, %s45
    %s60 = sphi 0, %s46
    %s64 = sphi 0, %s64
    %s66 = sphi 0, %s64
    %s67 = sphi 0, %s66
    %s81 = sphi 0, %s67
    %s87 = sphi 0, %s89
    %s90 = sphi 0, %s87
    %s91 = sphi 0, %s90
    %s107 = sphi 0, %s91
  $region4: #{_lambda_.10} parent=0 // loop_header_branch
    %12 = sbr.rel (%p10) target = $region8
  $region5: #{_lambda_.10} parent=0 // loop_body
    %s14 = ssub.s32 %s9, 1
    %s15 = ssub.s32 %s9, 2
    %s16 = sadd.s32 %s9, 1
    %s17 = ssub.s32 %s9, %s16
    %p18 = scmp.eq.s32.totalorder %s17, 0
    %s20 = sadd.s32 %s19, 1
    %s21 = scalar_select %p18, %s19, %s20
    %p24 = pneg %p18
    %p25 = scmp.eq.s32.totalorder %s9, 1
    %p26 = por %p24, %p25
    %p27 = scmp.ne.s32.totalorder %s19, %s22
    %p28 = scmp.eq.s32.totalorder %s9, 0
    %p29 = por %p27, %p28
    %p30 = scmp.ne.s32.totalorder %s19, %s22
    %p31 = scmp.eq.s32.totalorder %s14, 1
    %p32 = por %p30, %p31
    %p33 = scmp.ne.s32.totalorder %s22, %s23
    %p34 = scmp.eq.s32.totalorder %s14, 0
    %p35 = por %p33, %p34
    %p36 = scmp.ne.s32.totalorder %s22, %s23
    %p37 = scmp.eq.s32.totalorder %s15, 1
    %p38 = por %p36, %p37
    %p40 = scmp.ne.s32.totalorder %s23, %s39
    %p41 = scmp.eq.s32.totalorder %s15, 0
    %p42 = por %p40, %p41
    %s44 = sadd.s32 %s43, 1
    %p47 = scmp.eq.s32.totalorder %s9, 1
    %p48 = scmp.ne.s32.totalorder %s43, %s45
    %p49 = scmp.eq.s32.totalorder %s9, 0
    %p50 = por %p48, %p49
    %p51 = scmp.ne.s32.totalorder %s43, %s45
    %p52 = scmp.eq.s32.totalorder %s14, 1
    %p53 = por %p51, %p52
    %p54 = scmp.ne.s32.totalorder %s45, %s46
    %p55 = scmp.eq.s32.totalorder %s14, 0
    %p56 = por %p54, %p55
    %p57 = scmp.ne.s32.totalorder %s45, %s46
    %p58 = scmp.eq.s32.totalorder %s15, 1
    %p59 = por %p57, %p58
    %p61 = scmp.ne.s32.totalorder %s46, %s60
    %p62 = scmp.eq.s32.totalorder %s15, 0
    %p63 = por %p61, %p62
    %s65 = sadd.s32 %s64, 1
    %p68 = scmp.eq.s32.totalorder %s9, 1
    %p69 = scmp.ne.s32.totalorder %s64, %s66
    %p70 = scmp.eq.s32.totalorder %s9, 0
    %p71 = por %p69, %p70
    %p72 = scmp.ne.s32.totalorder %s64, %s66
    %p73 = scmp.eq.s32.totalorder %s14, 1
    %p74 = por %p72, %p73
    %p75 = scmp.ne.s32.totalorder %s66, %s67
    %p76 = scmp.eq.s32.totalorder %s14, 0
    %p77 = por %p75, %p76
    %p78 = scmp.ne.s32.totalorder %s66, %s67
    %p79 = scmp.eq.s32.totalorder %s15, 1
    %p80 = por %p78, %p79
    %p82 = scmp.ne.s32.totalorder %s67, %s81
    %p83 = scmp.eq.s32.totalorder %s15, 0
    %p84 = por %p82, %p83
    %s85 = ssub.s32 %s9, %s16
    %p86 = scmp.eq.s32.totalorder %s85, 0
    %s88 = sadd.s32 %s87, 1
    %s89 = scalar_select %p86, %s87, %s88
    %p92 = pneg %p86
    %p93 = scmp.eq.s32.totalorder %s9, 1
    %p94 = por %p92, %p93
    %p95 = scmp.ne.s32.totalorder %s87, %s90
    %p96 = scmp.eq.s32.totalorder %s9, 0
    %p97 = por %p95, %p96
    %p98 = scmp.ne.s32.totalorder %s87, %s90
    %p99 = scmp.eq.s32.totalorder %s14, 1
    %p100 = por %p98, %p99
    %p101 = scmp.ne.s32.totalorder %s90, %s91
    %p102 = scmp.eq.s32.totalorder %s14, 0
    %p103 = por %p101, %p102
    %p104 = scmp.ne.s32.totalorder %s90, %s91
    %p105 = scmp.eq.s32.totalorder %s15, 1
    %p106 = por %p104, %p105
    %p108 = scmp.ne.s32.totalorder %s91, %s107
    %p109 = scmp.eq.s32.totalorder %s15, 0
    %p110 = por %p108, %p109
    %p111 = scmp.le.s32.totalorder 1, %s9
    %p112 = scmp.lt.s32.totalorder %s9, 3
    %p113 = pnand %p111, %p112
    %p114 = pneg %p113
    // Predicated region
    $region9: #{_lambda_.10} parent=5 // pred_check
      _
    $region10: #{_lambda_.10} parent=5 // pred_check_branch
      %116 = sbr.rel (%p113) target = $region12
    $region11: #{_lambda_.10} parent=5 // pred_region
      %s117 = ssub.s32 %s9, 1
      // Predicated region
      $region13: #{_lambda_.10} parent=11 // pred_check
        %p118 = pneg %p56
      $region14: #{_lambda_.10} parent=11 // pred_check_branch
        %120 = sbr.rel (%p118) target = $region16
      $region15: #{_lambda_.10} parent=11 // pred_region
        _
      $region16: #{_lambda_.10} parent=11 // pred_fallthru
        _
      // Predicated region
      $region17: #{_lambda_.10} parent=11 // pred_check
        %p121 = pneg %p77
      $region18: #{_lambda_.10} parent=11 // pred_check_branch
        %123 = sbr.rel (%p121) target = $region20
      $region19: #{_lambda_.10} parent=11 // pred_region
        _
      $region20: #{_lambda_.10} parent=11 // pred_fallthru
        _
    $region12: #{_lambda_.10} parent=5 // pred_fallthru
      _
    %p124 = scmp.lt.s32.totalorder %s9, 2
    // Predicated region
    $region21: #{_lambda_.10} parent=5 // pred_check
      %p125 = pneg %p124
    $region22: #{_lambda_.10} parent=5 // pred_check_branch
      %127 = sbr.rel (%p125) target = $region24
    $region23: #{_lambda_.10} parent=5 // pred_region
      // Predicated region
      $region25: #{_lambda_.10} parent=23 // pred_check
        %p128 = pneg %p29
      $region26: #{_lambda_.10} parent=23 // pred_check_branch
        %130 = sbr.rel (%p128) target = $region28
      $region27: #{_lambda_.10} parent=23 // pred_region
        %s131 = smul.u32 32, %s9
        %p132 = scmp.lt.s32.totalorder %s131, 63
        %s133 = scalar_select %p132, %s131, 63
        %s134 = smul.addr %s133, 4
        %s135 = scalar_lea.vmem %s0, %s134
        %s136 = smul.u32 32, %s9
      $region28: #{_lambda_.10} parent=23 // pred_fallthru
        _
    $region24: #{_lambda_.10} parent=5 // pred_fallthru
      _
    %p137 = scmp.le.s32.totalorder 1, %s9
    %p138 = scmp.lt.s32.totalorder %s9, 3
    %p139 = pnand %p137, %p138
    %p140 = pneg %p139
    // Predicated region
    $region29: #{_lambda_.10} parent=5 // pred_check
      _
    $region30: #{_lambda_.10} parent=5 // pred_check_branch
      %142 = sbr.rel (%p139) target = $region32
    $region31: #{_lambda_.10} parent=5 // pred_region
      %s143 = ssub.s32 %s9, 1
      %s144 = smul.u32 32, %s14
      %p145 = scmp.lt.s32.totalorder %s144, 63
      %s146 = scalar_select %p145, %s144, 63
      %s147 = smul.addr %s146, 4
      %s148 = scalar_lea.vmem %s0, %s147
      %p149 = pneg %p35
      %p150 = pneg %p32
      %p151 = pneg %p56
      %p152 = pneg %p53
      %p153 = pneg %p77
      %p154 = pneg %p74
      %p155 = pneg %p103
      %p156 = pneg %p100
      %s157 = smul.u32 32, %s14
      %p158 = scmp.lt.s32.totalorder %s157, 63
      %s159 = scalar_select %p158, %s157, 63
      %s160 = smul.addr %s159, 4
      %s161 = scalar_lea.vmem %s3, %s160
      %s162 = smul.u32 32, %s14
      %p163 = scmp.lt.s32.totalorder %s162, 63
      %s164 = scalar_select %p163, %s162, 63
      %s165 = smul.addr %s164, 4
      %s166 = scalar_lea.vmem %s0, %s165
      %s167 = smul.u32 32, %s14
      %s168 = smul.u32 32, %s14
      %p169 = scmp.lt.s32.totalorder %s168, 63
      %s170 = scalar_select %p169, %s168, 63
      %s171 = smul.addr %s170, 4
      %s172 = scalar_lea.vmem %s3, %s171
      %s173 = smul.u32 32, %s14
      %v175 = vld [vmem:[%s166] sm:$0xf]
      %v176 = vld [vmem:[%s166 + $0x4] sm:$0xf]
      %v177 = vld [vmem:[%s166 + $0x8] sm:$0xf]
      %v178 = vld [vmem:[%s166 + $0xc] sm:$0xf]
      %v179 = vld [vmem:[%s166 + $0x10] sm:$0xf]
      %v180 = vld [vmem:[%s166 + $0x14] sm:$0xf]
      %v181 = vld [vmem:[%s166 + $0x18] sm:$0xf]
      %v182 = vld [vmem:[%s166 + $0x1c] sm:$0xf]
      %v183 = vld [vmem:[%s166 + $0x20] sm:$0xf]
      %v184 = vld [vmem:[%s166 + $0x24] sm:$0xf]
      %v185 = vld [vmem:[%s166 + $0x28] sm:$0xf]
      %v186 = vld [vmem:[%s166 + $0x2c] sm:$0xf]
      %v187 = vld [vmem:[%s166 + $0x30] sm:$0xf]
      %v188 = vld [vmem:[%s166 + $0x34] sm:$0xf]
      %v189 = vld [vmem:[%s166 + $0x38] sm:$0xf]
      %v190 = vld [vmem:[%s166 + $0x3c] sm:$0xf]
      %v191 = vld [vmem:[%s166 + $0x40] sm:$0xf]
      %v192 = vld [vmem:[%s166 + $0x44] sm:$0xf]
      %v193 = vld [vmem:[%s166 + $0x48] sm:$0xf]
      %v194 = vld [vmem:[%s166 + $0x4c] sm:$0xf]
      %v195 = vld [vmem:[%s166 + $0x50] sm:$0xf]
      %v196 = vld [vmem:[%s166 + $0x54] sm:$0xf]
      %v197 = vld [vmem:[%s166 + $0x58] sm:$0xf]
      %v198 = vld [vmem:[%s166 + $0x5c] sm:$0xf]
      %v199 = vld [vmem:[%s166 + $0x60] sm:$0xf]
      %v200 = vld [vmem:[%s166 + $0x64] sm:$0xf]
      %v201 = vld [vmem:[%s166 + $0x68] sm:$0xf]
      %v202 = vld [vmem:[%s166 + $0x6c] sm:$0xf]
      %v203 = vld [vmem:[%s166 + $0x70] sm:$0xf]
      %v204 = vld [vmem:[%s166 + $0x74] sm:$0xf]
      %v205 = vld [vmem:[%s166 + $0x78] sm:$0xf]
      %v206 = vld [vmem:[%s166 + $0x7c] sm:$0xf]
      %v207 = vld [vmem:[%s1] sm:$0xf]
      %v208 = vld [vmem:[%s1 + $0x4] sm:$0xf]
      %v209 = vld [vmem:[%s1 + $0x8] sm:$0xf]
      %v210 = vld [vmem:[%s1 + $0xc] sm:$0xf]
      %v211 = vld [vmem:[%s1 + $0x10] sm:$0xf]
      %v212 = vld [vmem:[%s1 + $0x14] sm:$0xf]
      %v213 = vld [vmem:[%s2] sm:$0x1]
      %v215 = vperm.slane %v213, 0
      %v249 = vunpack.c.l.b16 %v175
      %v250 = vunpack.c.l.b16 %v176
      %v251 = vunpack.c.l.b16 %v177
      %v252 = vunpack.c.l.b16 %v178
      %v253 = vunpack.c.l.b16 %v179
      %v254 = vunpack.c.l.b16 %v180
      %v255 = vunpack.c.l.b16 %v181
      %v256 = vunpack.c.l.b16 %v182
      %v257 = vunpack.c.l.b16 %v183
      %v258 = vunpack.c.l.b16 %v184
      %v259 = vunpack.c.l.b16 %v185
      %v260 = vunpack.c.l.b16 %v186
      %v261 = vunpack.c.l.b16 %v187
      %v262 = vunpack.c.l.b16 %v188
      %v263 = vunpack.c.l.b16 %v189
      %v264 = vunpack.c.l.b16 %v190
      %v265 = vunpack.c.l.b16 %v191
      %v266 = vunpack.c.l.b16 %v192
      %v267 = vunpack.c.l.b16 %v193
      %v268 = vunpack.c.l.b16 %v194
      %v269 = vunpack.c.l.b16 %v195
      %v270 = vunpack.c.l.b16 %v196
      %v271 = vunpack.c.l.b16 %v197
      %v272 = vunpack.c.l.b16 %v198
      %v273 = vunpack.c.l.b16 %v199
      %v274 = vunpack.c.l.b16 %v200
      %v275 = vunpack.c.l.b16 %v201
      %v276 = vunpack.c.l.b16 %v202
      %v277 = vunpack.c.l.b16 %v203
      %v278 = vunpack.c.l.b16 %v204
      %v279 = vunpack.c.l.b16 %v205
      %v280 = vunpack.c.l.b16 %v206
      %v281 = vpack.c.b16 %v250, %v249
      %v282 = vpack.c.b16 %v252, %v251
      %v283 = vpack.c.b16 %v254, %v253
      %v284 = vpack.c.b16 %v256, %v255
      %v285 = vpack.c.b16 %v258, %v257
      %v286 = vpack.c.b16 %v260, %v259
      %v287 = vpack.c.b16 %v262, %v261
      %v288 = vpack.c.b16 %v264, %v263
      %v289 = vpack.c.b16 %v266, %v265
      %v290 = vpack.c.b16 %v268, %v267
      %v291 = vpack.c.b16 %v270, %v269
      %v292 = vpack.c.b16 %v272, %v271
      %v293 = vpack.c.b16 %v274, %v273
      %v294 = vpack.c.b16 %v276, %v275
      %v295 = vpack.c.b16 %v278, %v277
      %v296 = vpack.c.b16 %v280, %v279
      %v303 = vunpack.c.l.b16 %v207
      %v304 = vunpack.c.l.b16 %v208
      %v305 = vunpack.c.l.b16 %v209
      %v306 = vunpack.c.l.b16 %v210
      %v307 = vunpack.c.l.b16 %v211
      %v308 = vunpack.c.l.b16 %v212
      %v309 = vpack.c.b16 %v304, %v303
      %v310 = vpack.c.b16 %v306, %v305
      %v311 = vpack.c.b16 %v308, %v307
      %vm315 = vcmask 392192
      %v317 = vsel %vm315, %v281, 0
      %v320 = vsel %vm315, %v282, 0
      %v323 = vsel %vm315, %v283, 0
      %v326 = vsel %vm315, %v284, 0
      %v329 = vsel %vm315, %v285, 0
      %v332 = vsel %vm315, %v286, 0
      %v335 = vsel %vm315, %v287, 0
      %v338 = vsel %vm315, %v288, 0
      %v341 = vsel %vm315, %v289, 0
      %v344 = vsel %vm315, %v290, 0
      %v347 = vsel %vm315, %v291, 0
      %v350 = vsel %vm315, %v292, 0
      %v353 = vsel %vm315, %v293, 0
      %v356 = vsel %vm315, %v294, 0
      %v359 = vsel %vm315, %v295, 0
      %v362 = vsel %vm315, %v296, 0
      %364 = vmatpush.bf16.msra.mxu0 0
      %365 = vmatpush.bf16.msra.mxu0 0
      %366 = vmatpush.bf16.msra.mxu0 0
      %367 = vmatpush.bf16.msra.mxu0 0
      %368 = vmatpush.bf16.msra.mxu0 0
      %369 = vmatpush.bf16.msra.mxu0 %v311
      %370 = vmatpush.bf16.msra.mxu0 %v310
      %371 = vmatpush.bf16.msra.mxu0 %v309
      %372 = vmatmul.bf16.gmra.mxu0 %v317
      %v373 = vpop.f32.mrf.mxu0
      %v374 = vadd.f32 %v215, %v373
      %v375 = vpop.f32.mrf.mxu0
      %v376 = vadd.f32 %v215, %v375
      %377 = vmatmul.bf16.gmra.mxu0 %v320
      %v378 = vpop.f32.mrf.mxu0
      %v379 = vadd.f32 %v215, %v378
      %v380 = vpop.f32.mrf.mxu0
      %v381 = vadd.f32 %v215, %v380
      %382 = vmatmul.bf16.gmra.mxu0 %v323
      %v383 = vpop.f32.mrf.mxu0
      %v384 = vadd.f32 %v215, %v383
      %v385 = vpop.f32.mrf.mxu0
      %v386 = vadd.f32 %v215, %v385
      %387 = vmatmul.bf16.gmra.mxu0 %v326
      %v388 = vpop.f32.mrf.mxu0
      %v389 = vadd.f32 %v215, %v388
      %v390 = vpop.f32.mrf.mxu0
      %v391 = vadd.f32 %v215, %v390
      %392 = vmatmul.bf16.gmra.mxu0 %v329
      %v393 = vpop.f32.mrf.mxu0
      %v394 = vadd.f32 %v215, %v393
      %v395 = vpop.f32.mrf.mxu0
      %v396 = vadd.f32 %v215, %v395
      %397 = vmatmul.bf16.gmra.mxu0 %v332
      %v398 = vpop.f32.mrf.mxu0
      %v399 = vadd.f32 %v215, %v398
      %v400 = vpop.f32.mrf.mxu0
      %v401 = vadd.f32 %v215, %v400
      %402 = vmatmul.bf16.gmra.mxu0 %v335
      %v403 = vpop.f32.mrf.mxu0
      %v404 = vadd.f32 %v215, %v403
      %v405 = vpop.f32.mrf.mxu0
      %v406 = vadd.f32 %v215, %v405
      %407 = vmatmul.bf16.gmra.mxu0 %v338
      %v408 = vpop.f32.mrf.mxu0
      %v409 = vadd.f32 %v215, %v408
      %v410 = vpop.f32.mrf.mxu0
      %v411 = vadd.f32 %v215, %v410
      %412 = vmatmul.bf16.gmra.mxu0 %v341
      %v413 = vpop.f32.mrf.mxu0
      %v414 = vadd.f32 %v215, %v413
      %v415 = vpop.f32.mrf.mxu0
      %v416 = vadd.f32 %v215, %v415
      %417 = vmatmul.bf16.gmra.mxu0 %v344
      %v418 = vpop.f32.mrf.mxu0
      %v419 = vadd.f32 %v215, %v418
      %v420 = vpop.f32.mrf.mxu0
      %v421 = vadd.f32 %v215, %v420
      %422 = vmatmul.bf16.gmra.mxu0 %v347
      %v423 = vpop.f32.mrf.mxu0
      %v424 = vadd.f32 %v215, %v423
      %v425 = vpop.f32.mrf.mxu0
      %v426 = vadd.f32 %v215, %v425
      %427 = vmatmul.bf16.gmra.mxu0 %v350
      %v428 = vpop.f32.mrf.mxu0
      %v429 = vadd.f32 %v215, %v428
      %v430 = vpop.f32.mrf.mxu0
      %v431 = vadd.f32 %v215, %v430
      %432 = vmatmul.bf16.gmra.mxu0 %v353
      %v433 = vpop.f32.mrf.mxu0
      %v434 = vadd.f32 %v215, %v433
      %v435 = vpop.f32.mrf.mxu0
      %v436 = vadd.f32 %v215, %v435
      %437 = vmatmul.bf16.gmra.mxu0 %v356
      %v438 = vpop.f32.mrf.mxu0
      %v439 = vadd.f32 %v215, %v438
      %v440 = vpop.f32.mrf.mxu0
      %v441 = vadd.f32 %v215, %v440
      %442 = vmatmul.bf16.gmra.mxu0 %v359
      %v443 = vpop.f32.mrf.mxu0
      %v444 = vadd.f32 %v215, %v443
      %v445 = vpop.f32.mrf.mxu0
      %v446 = vadd.f32 %v215, %v445
      %447 = vmatmul.bf16.gmra.mxu0 %v362
      %v448 = vpop.f32.mrf.mxu0
      %v449 = vadd.f32 %v215, %v448
      %v450 = vpop.f32.mrf.mxu0
      %v451 = vadd.f32 %v215, %v450
      %452 = vdwg.mxu0
      %v453 = vmax.f32 %v374, 0.0
      %v454 = vmax.f32 %v376, 0.0
      %v455 = vmax.f32 %v379, 0.0
      %v456 = vmax.f32 %v381, 0.0
      %v457 = vmax.f32 %v384, 0.0
      %v458 = vmax.f32 %v386, 0.0
      %v459 = vmax.f32 %v389, 0.0
      %v460 = vmax.f32 %v391, 0.0
      %v461 = vmax.f32 %v394, 0.0
      %v462 = vmax.f32 %v396, 0.0
      %v463 = vmax.f32 %v399, 0.0
      %v464 = vmax.f32 %v401, 0.0
      %v465 = vmax.f32 %v404, 0.0
      %v466 = vmax.f32 %v406, 0.0
      %v467 = vmax.f32 %v409, 0.0
      %v468 = vmax.f32 %v411, 0.0
      %v469 = vmax.f32 %v414, 0.0
      %v470 = vmax.f32 %v416, 0.0
      %v471 = vmax.f32 %v419, 0.0
      %v472 = vmax.f32 %v421, 0.0
      %v473 = vmax.f32 %v424, 0.0
      %v474 = vmax.f32 %v426, 0.0
      %v475 = vmax.f32 %v429, 0.0
      %v476 = vmax.f32 %v431, 0.0
      %v477 = vmax.f32 %v434, 0.0
      %v478 = vmax.f32 %v436, 0.0
      %v479 = vmax.f32 %v439, 0.0
      %v480 = vmax.f32 %v441, 0.0
      %v481 = vmax.f32 %v444, 0.0
      %v482 = vmax.f32 %v446, 0.0
      %v483 = vmax.f32 %v449, 0.0
      %v484 = vmax.f32 %v451, 0.0
      %v485 = vpack.c.bf16 %v453, %v453
      %v486 = vpack.c.bf16 %v454, %v454
      %v487 = vpack.c.bf16 %v455, %v455
      %v488 = vpack.c.bf16 %v456, %v456
      %v489 = vpack.c.bf16 %v457, %v457
      %v490 = vpack.c.bf16 %v458, %v458
      %v491 = vpack.c.bf16 %v459, %v459
      %v492 = vpack.c.bf16 %v460, %v460
      %v493 = vpack.c.bf16 %v461, %v461
      %v494 = vpack.c.bf16 %v462, %v462
      %v495 = vpack.c.bf16 %v463, %v463
      %v496 = vpack.c.bf16 %v464, %v464
      %v497 = vpack.c.bf16 %v465, %v465
      %v498 = vpack.c.bf16 %v466, %v466
      %v499 = vpack.c.bf16 %v467, %v467
      %v500 = vpack.c.bf16 %v468, %v468
      %v501 = vpack.c.bf16 %v469, %v469
      %v502 = vpack.c.bf16 %v470, %v470
      %v503 = vpack.c.bf16 %v471, %v471
      %v504 = vpack.c.bf16 %v472, %v472
      %v505 = vpack.c.bf16 %v473, %v473
      %v506 = vpack.c.bf16 %v474, %v474
      %v507 = vpack.c.bf16 %v475, %v475
      %v508 = vpack.c.bf16 %v476, %v476
      %v509 = vpack.c.bf16 %v477, %v477
      %v510 = vpack.c.bf16 %v478, %v478
      %v511 = vpack.c.bf16 %v479, %v479
      %v512 = vpack.c.bf16 %v480, %v480
      %v513 = vpack.c.bf16 %v481, %v481
      %v514 = vpack.c.bf16 %v482, %v482
      %v515 = vpack.c.bf16 %v483, %v483
      %v516 = vpack.c.bf16 %v484, %v484
      %517 = vst [vmem:[%s172] sm:$0xf] %v485
      %518 = vst [vmem:[%s172 + $0x4] sm:$0xf] %v486
      %519 = vst [vmem:[%s172 + $0x8] sm:$0xf] %v487
      %520 = vst [vmem:[%s172 + $0xc] sm:$0xf] %v488
      %521 = vst [vmem:[%s172 + $0x10] sm:$0xf] %v489
      %522 = vst [vmem:[%s172 + $0x14] sm:$0xf] %v490
      %523 = vst [vmem:[%s172 + $0x18] sm:$0xf] %v491
      %524 = vst [vmem:[%s172 + $0x1c] sm:$0xf] %v492
      %525 = vst [vmem:[%s172 + $0x20] sm:$0xf] %v493
      %526 = vst [vmem:[%s172 + $0x24] sm:$0xf] %v494
      %527 = vst [vmem:[%s172 + $0x28] sm:$0xf] %v495
      %528 = vst [vmem:[%s172 + $0x2c] sm:$0xf] %v496
      %529 = vst [vmem:[%s172 + $0x30] sm:$0xf] %v497
      %530 = vst [vmem:[%s172 + $0x34] sm:$0xf] %v498
      %531 = vst [vmem:[%s172 + $0x38] sm:$0xf] %v499
      %532 = vst [vmem:[%s172 + $0x3c] sm:$0xf] %v500
      %533 = vst [vmem:[%s172 + $0x40] sm:$0xf] %v501
      %534 = vst [vmem:[%s172 + $0x44] sm:$0xf] %v502
      %535 = vst [vmem:[%s172 + $0x48] sm:$0xf] %v503
      %536 = vst [vmem:[%s172 + $0x4c] sm:$0xf] %v504
      %537 = vst [vmem:[%s172 + $0x50] sm:$0xf] %v505
      %538 = vst [vmem:[%s172 + $0x54] sm:$0xf] %v506
      %539 = vst [vmem:[%s172 + $0x58] sm:$0xf] %v507
      %540 = vst [vmem:[%s172 + $0x5c] sm:$0xf] %v508
      %541 = vst [vmem:[%s172 + $0x60] sm:$0xf] %v509
      %542 = vst [vmem:[%s172 + $0x64] sm:$0xf] %v510
      %543 = vst [vmem:[%s172 + $0x68] sm:$0xf] %v511
      %544 = vst [vmem:[%s172 + $0x6c] sm:$0xf] %v512
      %545 = vst [vmem:[%s172 + $0x70] sm:$0xf] %v513
      %546 = vst [vmem:[%s172 + $0x74] sm:$0xf] %v514
      %547 = vst [vmem:[%s172 + $0x78] sm:$0xf] %v515
      %548 = vst [vmem:[%s172 + $0x7c] sm:$0xf] %v516
      %s549 = smul.u32 32, %s14
      %p550 = scmp.lt.s32.totalorder %s549, 63
      %s551 = scalar_select %p550, %s549, 63
      %s552 = smul.addr %s551, 4
      %s553 = scalar_lea.vmem %s3, %s552
      // Predicated region
      $region33: #{_lambda_.10} parent=31 // pred_check
        %p554 = pneg %p100
      $region34: #{_lambda_.10} parent=31 // pred_check_branch
        %556 = sbr.rel (%p554) target = $region36
      $region35: #{_lambda_.10} parent=31 // pred_region
        %s557 = smul.u32 32, %s14
      $region36: #{_lambda_.10} parent=31 // pred_fallthru
        _
    $region32: #{_lambda_.10} parent=5 // pred_fallthru
      _
    %p558 = scmp.le.s32.totalorder 2, %s9
    // Predicated region
    $region37: #{_lambda_.10} parent=5 // pred_check
      %p559 = pneg %p558
    $region38: #{_lambda_.10} parent=5 // pred_check_branch
      %561 = sbr.rel (%p559) target = $region40
    $region39: #{_lambda_.10} parent=5 // pred_region
      %s562 = ssub.s32 %s9, 2
      // Predicated region
      $region41: #{_lambda_.10} parent=39 // pred_check
        %p563 = pneg %p106
      $region42: #{_lambda_.10} parent=39 // pred_check_branch
        %565 = sbr.rel (%p563) target = $region44
      $region43: #{_lambda_.10} parent=39 // pred_region
        %s566 = smul.u32 32, %s15
        %p567 = scmp.lt.s32.totalorder %s566, 63
        %s568 = scalar_select %p567, %s566, 63
        %s569 = smul.addr %s568, 4
        %s570 = scalar_lea.vmem %s3, %s569
      $region44: #{_lambda_.10} parent=39 // pred_fallthru
        _
    $region40: #{_lambda_.10} parent=5 // pred_fallthru
      _
  $region6: #{_lambda_.10} parent=0 // loop_footer
    %s13 = sadd.s32 1, %s9
  $region7: #{_lambda_.10} parent=0 // loop_footer_branch
    %8 = sbr.rel target = $region3
  $region8: #{_lambda_.10} parent=0 // loop_exit
    _

// kernel: _lambda_.11
$region0: #{_lambda_.11}
  #allocation0 [shape = 'u32[]', space=smem, size = 0x4, offset = 0x4, fixed_abs, tag = 'smem constant byte address 0x4 - core index']
  #allocation1 [shape = 'u32[72,128]{1,0:T(1,128)}', space=vmem, size = 0x9000, scoped, tag = 'internal scratch']
  %s0 = inlined_call_operand.vmem [shape: bf16[128,512], index: 0, kind: input, shape index: {}]
  %s1 = inlined_call_operand.vmem [shape: bf16[512,128], index: 1, kind: input, shape index: {}]
  %s2 = inlined_call_operand.vmem [shape: f32[1,128], index: 2, kind: input, shape index: {}]
  %s3 = inlined_call_operand.vmem [shape: bf16[128,128], index: 3, kind: output, shape index: {}]
  %s4 = sld [smem:[#allocation0]]
  $region22: #{_lambda_.11} parent=0
    _
  %s6 = ssub.s32 1, %s4
  %s7 = scalar_select 0, %s6, %s4
  // Predicated region
  $region2: #{_lambda_.11} parent=0 // pred_check
    _
  $region3: #{_lambda_.11} parent=0 // pred_check_branch
    %9 = sbr.rel (0) target = $region5
  $region4: #{_lambda_.11} parent=0 // pred_region
    _
  $region5: #{_lambda_.11} parent=0 // pred_fallthru
    _
  // Predicated region
  $region6: #{_lambda_.11} parent=0 // pred_check
    _
  $region7: #{_lambda_.11} parent=0 // pred_check_branch
    %11 = sbr.rel (0) target = $region9
  $region8: #{_lambda_.11} parent=0 // pred_region
    _
  $region9: #{_lambda_.11} parent=0 // pred_fallthru
    _
  // Predicated region
  $region10: #{_lambda_.11} parent=0 // pred_check
    _
  $region11: #{_lambda_.11} parent=0 // pred_check_branch
    %13 = sbr.rel (0) target = $region13
  $region12: #{_lambda_.11} parent=0 // pred_region
    _
  $region13: #{_lambda_.11} parent=0 // pred_fallthru
    _
  %v14 = vld [vmem:[%s0] sm:$0xff]
  %v15 = vld [vmem:[%s0 + $0x8] sm:$0xff]
  %v16 = vld [vmem:[%s0 + $0x10] sm:$0xff]
  %v17 = vld [vmem:[%s0 + $0x18] sm:$0xff]
  %v18 = vld [vmem:[%s0 + $0x20] sm:$0xff]
  %v19 = vld [vmem:[%s0 + $0x28] sm:$0xff]
  %v20 = vld [vmem:[%s0 + $0x30] sm:$0xff]
  %v21 = vld [vmem:[%s0 + $0x38] sm:$0xff]
  %v22 = vld [vmem:[%s0 + $0x40] sm:$0xff]
  %v23 = vld [vmem:[%s0 + $0x48] sm:$0xff]
  %v24 = vld [vmem:[%s0 + $0x50] sm:$0xff]
  %v25 = vld [vmem:[%s0 + $0x58] sm:$0xff]
  %v26 = vld [vmem:[%s0 + $0x60] sm:$0xff]
  %v27 = vld [vmem:[%s0 + $0x68] sm:$0xff]
  %v28 = vld [vmem:[%s0 + $0x70] sm:$0xff]
  %v29 = vld [vmem:[%s0 + $0x78] sm:$0xff]
  %v30 = vld [vmem:[%s0 + $0x80] sm:$0xff]
  %v31 = vld [vmem:[%s0 + $0x88] sm:$0xff]
  %v32 = vld [vmem:[%s0 + $0x90] sm:$0xff]
  %v33 = vld [vmem:[%s0 + $0x98] sm:$0xff]
  %v34 = vld [vmem:[%s0 + $0xa0] sm:$0xff]
  %v35 = vld [vmem:[%s0 + $0xa8] sm:$0xff]
  %v36 = vld [vmem:[%s0 + $0xb0] sm:$0xff]
  %v37 = vld [vmem:[%s0 + $0xb8] sm:$0xff]
  %v38 = vld [vmem:[%s0 + $0xc0] sm:$0xff]
  %v39 = vld [vmem:[%s0 + $0xc8] sm:$0xff]
  %v40 = vld [vmem:[%s0 + $0xd0] sm:$0xff]
  %v41 = vld [vmem:[%s0 + $0xd8] sm:$0xff]
  %v42 = vld [vmem:[%s0 + $0xe0] sm:$0xff]
  %v43 = vld [vmem:[%s0 + $0xe8] sm:$0xff]
  %v44 = vld [vmem:[%s0 + $0xf0] sm:$0xff]
  %v45 = vld [vmem:[%s0 + $0xf8] sm:$0xff]
  %v46 = vld [vmem:[%s1] sm:$0xf]
  %v47 = vld [vmem:[%s1 + $0x4] sm:$0xf]
  %v48 = vld [vmem:[%s1 + $0x8] sm:$0xf]
  %v49 = vld [vmem:[%s1 + $0xc] sm:$0xf]
  %v50 = vld [vmem:[%s1 + $0x10] sm:$0xf]
  %v51 = vld [vmem:[%s1 + $0x14] sm:$0xf]
  %v52 = vld [vmem:[%s1 + $0x18] sm:$0xf]
  %v53 = vld [vmem:[%s1 + $0x1c] sm:$0xf]
  %v54 = vld [vmem:[%s1 + $0x20] sm:$0xf]
  %v55 = vld [vmem:[%s1 + $0x24] sm:$0xf]
  %v56 = vld [vmem:[%s1 + $0x28] sm:$0xf]
  %v57 = vld [vmem:[%s1 + $0x2c] sm:$0xf]
  %v58 = vld [vmem:[%s1 + $0x30] sm:$0xf]
  %v59 = vld [vmem:[%s1 + $0x34] sm:$0xf]
  %v60 = vld [vmem:[%s1 + $0x38] sm:$0xf]
  %v61 = vld [vmem:[%s1 + $0x3c] sm:$0xf]
  %v62 = vld [vmem:[%s1 + $0x40] sm:$0xf]
  %v63 = vld [vmem:[%s1 + $0x44] sm:$0xf]
  %v64 = vld [vmem:[%s1 + $0x48] sm:$0xf]
  %v65 = vld [vmem:[%s1 + $0x4c] sm:$0xf]
  %v66 = vld [vmem:[%s1 + $0x50] sm:$0xf]
  %v67 = vld [vmem:[%s1 + $0x54] sm:$0xf]
  %v68 = vld [vmem:[%s1 + $0x58] sm:$0xf]
  %v69 = vld [vmem:[%s1 + $0x5c] sm:$0xf]
  %v70 = vld [vmem:[%s1 + $0x60] sm:$0xf]
  %v71 = vld [vmem:[%s1 + $0x64] sm:$0xf]
  %v72 = vld [vmem:[%s1 + $0x68] sm:$0xf]
  %v73 = vld [vmem:[%s1 + $0x6c] sm:$0xf]
  %v74 = vld [vmem:[%s1 + $0x70] sm:$0xf]
  %v75 = vld [vmem:[%s1 + $0x74] sm:$0xf]
  %v76 = vld [vmem:[%s1 + $0x78] sm:$0xf]
  %v77 = vld [vmem:[%s1 + $0x7c] sm:$0xf]
  %v78 = vld [vmem:[%s1 + $0x80] sm:$0xf]
  %v79 = vld [vmem:[%s1 + $0x84] sm:$0xf]
  %v80 = vld [vmem:[%s1 + $0x88] sm:$0xf]
  %v81 = vld [vmem:[%s1 + $0x8c] sm:$0xf]
  %v82 = vld [vmem:[%s1 + $0x90] sm:$0xf]
  %v83 = vld [vmem:[%s1 + $0x94] sm:$0xf]
  %v84 = vld [vmem:[%s1 + $0x98] sm:$0xf]
  %v85 = vld [vmem:[%s1 + $0x9c] sm:$0xf]
  %v86 = vld [vmem:[%s1 + $0xa0] sm:$0xf]
  %v87 = vld [vmem:[%s1 + $0xa4] sm:$0xf]
  %v88 = vld [vmem:[%s1 + $0xa8] sm:$0xf]
  %v89 = vld [vmem:[%s1 + $0xac] sm:$0xf]
  %v90 = vld [vmem:[%s1 + $0xb0] sm:$0xf]
  %v91 = vld [vmem:[%s1 + $0xb4] sm:$0xf]
  %v92 = vld [vmem:[%s1 + $0xb8] sm:$0xf]
  %v93 = vld [vmem:[%s1 + $0xbc] sm:$0xf]
  %v94 = vld [vmem:[%s1 + $0xc0] sm:$0xf]
  %v95 = vld [vmem:[%s1 + $0xc4] sm:$0xf]
  %v96 = vld [vmem:[%s1 + $0xc8] sm:$0xf]
  %v97 = vld [vmem:[%s1 + $0xcc] sm:$0xf]
  %v98 = vld [vmem:[%s1 + $0xd0] sm:$0xf]
  %v99 = vld [vmem:[%s1 + $0xd4] sm:$0xf]
  %v100 = vld [vmem:[%s1 + $0xd8] sm:$0xf]
  %v101 = vld [vmem:[%s1 + $0xdc] sm:$0xf]
  %v102 = vld [vmem:[%s1 + $0xe0] sm:$0xf]
  %v103 = vld [vmem:[%s1 + $0xe4] sm:$0xf]
  %v104 = vld [vmem:[%s1 + $0xe8] sm:$0xf]
  %v105 = vld [vmem:[%s1 + $0xec] sm:$0xf]
  %v106 = vld [vmem:[%s1 + $0xf0] sm:$0xf]
  %v107 = vld [vmem:[%s1 + $0xf4] sm:$0xf]
  %v108 = vld [vmem:[%s1 + $0xf8] sm:$0xf]
  %v109 = vld [vmem:[%s1 + $0xfc] sm:$0xf]
  %v110 = vld [vmem:[%s2] sm:$0x1]
  %v112 = vperm.slane %v110, 0
  %v146 = vunpack.c.l.b16 %v14
  %v147 = vunpack.c.h.b16 %v14
  %v148 = vunpack.c.l.b16 %v15
  %v149 = vunpack.c.h.b16 %v15
  %v150 = vunpack.c.l.b16 %v16
  %v151 = vunpack.c.h.b16 %v16
  %v152 = vunpack.c.l.b16 %v17
  %v153 = vunpack.c.h.b16 %v17
  %v154 = vunpack.c.l.b16 %v18
  %v155 = vunpack.c.h.b16 %v18
  %v156 = vunpack.c.l.b16 %v19
  %v157 = vunpack.c.h.b16 %v19
  %v158 = vunpack.c.l.b16 %v20
  %v159 = vunpack.c.h.b16 %v20
  %v160 = vunpack.c.l.b16 %v21
  %v161 = vunpack.c.h.b16 %v21
  %v162 = vunpack.c.l.b16 %v22
  %v163 = vunpack.c.h.b16 %v22
  %v164 = vunpack.c.l.b16 %v23
  %v165 = vunpack.c.h.b16 %v23
  %v166 = vunpack.c.l.b16 %v24
  %v167 = vunpack.c.h.b16 %v24
  %v168 = vunpack.c.l.b16 %v25
  %v169 = vunpack.c.h.b16 %v25
  %v170 = vunpack.c.l.b16 %v26
  %v171 = vunpack.c.h.b16 %v26
  %v172 = vunpack.c.l.b16 %v27
  %v173 = vunpack.c.h.b16 %v27
  %v174 = vunpack.c.l.b16 %v28
  %v175 = vunpack.c.h.b16 %v28
  %v176 = vunpack.c.l.b16 %v29
  %v177 = vunpack.c.h.b16 %v29
  %v178 = vunpack.c.l.b16 %v30
  %v179 = vunpack.c.h.b16 %v30
  %v180 = vunpack.c.l.b16 %v31
  %v181 = vunpack.c.h.b16 %v31
  %v182 = vunpack.c.l.b16 %v32
  %v183 = vunpack.c.h.b16 %v32
  %v184 = vunpack.c.l.b16 %v33
  %v185 = vunpack.c.h.b16 %v33
  %v186 = vunpack.c.l.b16 %v34
  %v187 = vunpack.c.h.b16 %v34
  %v188 = vunpack.c.l.b16 %v35
  %v189 = vunpack.c.h.b16 %v35
  %v190 = vunpack.c.l.b16 %v36
  %v191 = vunpack.c.h.b16 %v36
  %v192 = vunpack.c.l.b16 %v37
  %v193 = vunpack.c.h.b16 %v37
  %v194 = vunpack.c.l.b16 %v38
  %v195 = vunpack.c.h.b16 %v38
  %v196 = vunpack.c.l.b16 %v39
  %v197 = vunpack.c.h.b16 %v39
  %v198 = vunpack.c.l.b16 %v40
  %v199 = vunpack.c.h.b16 %v40
  %v200 = vunpack.c.l.b16 %v41
  %v201 = vunpack.c.h.b16 %v41
  %v202 = vunpack.c.l.b16 %v42
  %v203 = vunpack.c.h.b16 %v42
  %v204 = vunpack.c.l.b16 %v43
  %v205 = vunpack.c.h.b16 %v43
  %v206 = vunpack.c.l.b16 %v44
  %v207 = vunpack.c.h.b16 %v44
  %v208 = vunpack.c.l.b16 %v45
  %v209 = vunpack.c.h.b16 %v45
  %v210 = vpack.c.b16 %v150, %v146
  %v211 = vpack.c.b16 %v151, %v147
  %v212 = vpack.c.b16 %v152, %v148
  %v213 = vpack.c.b16 %v153, %v149
  %v214 = vpack.c.b16 %v158, %v154
  %v215 = vpack.c.b16 %v159, %v155
  %v216 = vpack.c.b16 %v160, %v156
  %v217 = vpack.c.b16 %v161, %v157
  %v218 = vpack.c.b16 %v166, %v162
  %v219 = vpack.c.b16 %v167, %v163
  %v220 = vpack.c.b16 %v168, %v164
  %v221 = vpack.c.b16 %v169, %v165
  %v222 = vpack.c.b16 %v174, %v170
  %v223 = vpack.c.b16 %v175, %v171
  %v224 = vpack.c.b16 %v176, %v172
  %v225 = vpack.c.b16 %v177, %v173
  %v226 = vpack.c.b16 %v182, %v178
  %v227 = vpack.c.b16 %v183, %v179
  %v228 = vpack.c.b16 %v184, %v180
  %v229 = vpack.c.b16 %v185, %v181
  %v230 = vpack.c.b16 %v190, %v186
  %v231 = vpack.c.b16 %v191, %v187
  %v232 = vpack.c.b16 %v192, %v188
  %v233 = vpack.c.b16 %v193, %v189
  %v234 = vpack.c.b16 %v198, %v194
  %v235 = vpack.c.b16 %v199, %v195
  %v236 = vpack.c.b16 %v200, %v196
  %v237 = vpack.c.b16 %v201, %v197
  %v238 = vpack.c.b16 %v206, %v202
  %v239 = vpack.c.b16 %v207, %v203
  %v240 = vpack.c.b16 %v208, %v204
  %v241 = vpack.c.b16 %v209, %v205
  %v338 = vunpack.c.l.b16 %v46
  %v339 = vunpack.c.l.b16 %v47
  %v340 = vunpack.c.l.b16 %v48
  %v341 = vunpack.c.l.b16 %v49
  %v342 = vunpack.c.l.b16 %v50
  %v343 = vunpack.c.l.b16 %v51
  %v344 = vunpack.c.l.b16 %v52
  %v345 = vunpack.c.l.b16 %v53
  %v346 = vunpack.c.l.b16 %v54
  %v347 = vunpack.c.l.b16 %v55
  %v348 = vunpack.c.l.b16 %v56
  %v349 = vunpack.c.l.b16 %v57
  %v350 = vunpack.c.l.b16 %v58
  %v351 = vunpack.c.l.b16 %v59
  %v352 = vunpack.c.l.b16 %v60
  %v353 = vunpack.c.l.b16 %v61
  %v354 = vunpack.c.l.b16 %v62
  %v355 = vunpack.c.l.b16 %v63
  %v356 = vunpack.c.l.b16 %v64
  %v357 = vunpack.c.l.b16 %v65
  %v358 = vunpack.c.l.b16 %v66
  %v359 = vunpack.c.l.b16 %v67
  %v360 = vunpack.c.l.b16 %v68
  %v361 = vunpack.c.l.b16 %v69
  %v362 = vunpack.c.l.b16 %v70
  %v363 = vunpack.c.l.b16 %v71
  %v364 = vunpack.c.l.b16 %v72
  %v365 = vunpack.c.l.b16 %v73
  %v366 = vunpack.c.l.b16 %v74
  %v367 = vunpack.c.l.b16 %v75
  %v368 = vunpack.c.l.b16 %v76
  %v369 = vunpack.c.l.b16 %v77
  %v370 = vunpack.c.l.b16 %v78
  %v371 = vunpack.c.l.b16 %v79
  %v372 = vunpack.c.l.b16 %v80
  %v373 = vunpack.c.l.b16 %v81
  %v374 = vunpack.c.l.b16 %v82
  %v375 = vunpack.c.l.b16 %v83
  %v376 = vunpack.c.l.b16 %v84
  %v377 = vunpack.c.l.b16 %v85
  %v378 = vunpack.c.l.b16 %v86
  %v379 = vunpack.c.l.b16 %v87
  %v380 = vunpack.c.l.b16 %v88
  %v381 = vunpack.c.l.b16 %v89
  %v382 = vunpack.c.l.b16 %v90
  %v383 = vunpack.c.l.b16 %v91
  %v384 = vunpack.c.l.b16 %v92
  %v385 = vunpack.c.l.b16 %v93
  %v386 = vunpack.c.l.b16 %v94
  %v387 = vunpack.c.l.b16 %v95
  %v388 = vunpack.c.l.b16 %v96
  %v389 = vunpack.c.l.b16 %v97
  %v390 = vunpack.c.l.b16 %v98
  %v391 = vunpack.c.l.b16 %v99
  %v392 = vunpack.c.l.b16 %v100
  %v393 = vunpack.c.l.b16 %v101
  %v394 = vunpack.c.l.b16 %v102
  %v395 = vunpack.c.l.b16 %v103
  %v396 = vunpack.c.l.b16 %v104
  %v397 = vunpack.c.l.b16 %v105
  %v398 = vunpack.c.l.b16 %v106
  %v399 = vunpack.c.l.b16 %v107
  %v400 = vunpack.c.l.b16 %v108
  %v401 = vunpack.c.l.b16 %v109
  %v402 = vpack.c.b16 %v339, %v338
  %v403 = vpack.c.b16 %v341, %v340
  %v404 = vpack.c.b16 %v343, %v342
  %v405 = vpack.c.b16 %v345, %v344
  %v406 = vpack.c.b16 %v347, %v346
  %v407 = vpack.c.b16 %v349, %v348
  %v408 = vpack.c.b16 %v351, %v350
  %v409 = vpack.c.b16 %v353, %v352
  %v410 = vpack.c.b16 %v355, %v354
  %v411 = vpack.c.b16 %v357, %v356
  %v412 = vpack.c.b16 %v359, %v358
  %v413 = vpack.c.b16 %v361, %v360
  %v414 = vpack.c.b16 %v363, %v362
  %v415 = vpack.c.b16 %v365, %v364
  %v416 = vpack.c.b16 %v367, %v366
  %v417 = vpack.c.b16 %v369, %v368
  %v418 = vpack.c.b16 %v371, %v370
  %v419 = vpack.c.b16 %v373, %v372
  %v420 = vpack.c.b16 %v375, %v374
  %v421 = vpack.c.b16 %v377, %v376
  %v422 = vpack.c.b16 %v379, %v378
  %v423 = vpack.c.b16 %v381, %v380
  %v424 = vpack.c.b16 %v383, %v382
  %v425 = vpack.c.b16 %v385, %v384
  %v426 = vpack.c.b16 %v387, %v386
  %v427 = vpack.c.b16 %v389, %v388
  %v428 = vpack.c.b16 %v391, %v390
  %v429 = vpack.c.b16 %v393, %v392
  %v430 = vpack.c.b16 %v395, %v394
  %v431 = vpack.c.b16 %v397, %v396
  %v432 = vpack.c.b16 %v399, %v398
  %v433 = vpack.c.b16 %v401, %v400
  %466 = vmatpush.bf16.msra.mxu0 %v409
  %467 = vmatpush.bf16.msra.mxu0 %v408
  %468 = vmatpush.bf16.msra.mxu0 %v407
  %469 = vmatpush.bf16.msra.mxu0 %v406
  %470 = vmatpush.bf16.msra.mxu0 %v405
  %471 = vmatpush.bf16.msra.mxu0 %v404
  %472 = vmatpush.bf16.msra.mxu0 %v403
  %473 = vmatpush.bf16.msra.mxu0 %v402
  %474 = vmatmul.bf16.gmra.mxu0 %v210
  %v475 = vpop.f32.mrf.mxu0
  %v476 = vadd.f32 %v112, %v475
  %v477 = vpop.f32.mrf.mxu0
  %v478 = vadd.f32 %v112, %v477
  %479 = vmatmul.bf16.gmra.mxu0 %v214
  %v480 = vpop.f32.mrf.mxu0
  %v481 = vadd.f32 %v112, %v480
  %v482 = vpop.f32.mrf.mxu0
  %v483 = vadd.f32 %v112, %v482
  %484 = vmatmul.bf16.gmra.mxu0 %v218
  %v485 = vpop.f32.mrf.mxu0
  %v486 = vadd.f32 %v112, %v485
  %v487 = vpop.f32.mrf.mxu0
  %v488 = vadd.f32 %v112, %v487
  %489 = vmatmul.bf16.gmra.mxu0 %v222
  %v490 = vpop.f32.mrf.mxu0
  %v491 = vadd.f32 %v112, %v490
  %v492 = vpop.f32.mrf.mxu0
  %v493 = vadd.f32 %v112, %v492
  %494 = vmatmul.bf16.gmra.mxu0 %v226
  %v495 = vpop.f32.mrf.mxu0
  %v496 = vadd.f32 %v112, %v495
  %v497 = vpop.f32.mrf.mxu0
  %v498 = vadd.f32 %v112, %v497
  %499 = vmatmul.bf16.gmra.mxu0 %v230
  %v500 = vpop.f32.mrf.mxu0
  %v501 = vadd.f32 %v112, %v500
  %v502 = vpop.f32.mrf.mxu0
  %v503 = vadd.f32 %v112, %v502
  %504 = vmatmul.bf16.gmra.mxu0 %v234
  %v505 = vpop.f32.mrf.mxu0
  %v506 = vadd.f32 %v112, %v505
  %v507 = vpop.f32.mrf.mxu0
  %v508 = vadd.f32 %v112, %v507
  %509 = vmatmul.bf16.gmra.mxu0 %v238
  %v510 = vpop.f32.mrf.mxu0
  %v511 = vadd.f32 %v112, %v510
  %v512 = vpop.f32.mrf.mxu0
  %v513 = vadd.f32 %v112, %v512
  %514 = vdwg.mxu0
  %515 = vmatpush.bf16.msra.mxu0 %v417
  %516 = vmatpush.bf16.msra.mxu0 %v416
  %517 = vmatpush.bf16.msra.mxu0 %v415
  %518 = vmatpush.bf16.msra.mxu0 %v414
  %519 = vmatpush.bf16.msra.mxu0 %v413
  %520 = vmatpush.bf16.msra.mxu0 %v412
  %521 = vmatpush.bf16.msra.mxu0 %v411
  %522 = vmatpush.bf16.msra.mxu0 %v410
  %523 = vmatmul.bf16.gmra.mxu0 %v211
  %v524 = vpop.f32.mrf.mxu0
  %v525 = vadd.f32 %v476, %v524
  %v526 = vpop.f32.mrf.mxu0
  %v527 = vadd.f32 %v478, %v526
  %528 = vmatmul.bf16.gmra.mxu0 %v215
  %v529 = vpop.f32.mrf.mxu0
  %v530 = vadd.f32 %v481, %v529
  %v531 = vpop.f32.mrf.mxu0
  %v532 = vadd.f32 %v483, %v531
  %533 = vmatmul.bf16.gmra.mxu0 %v219
  %v534 = vpop.f32.mrf.mxu0
  %v535 = vadd.f32 %v486, %v534
  %v536 = vpop.f32.mrf.mxu0
  %v537 = vadd.f32 %v488, %v536
  %538 = vmatmul.bf16.gmra.mxu0 %v223
  %v539 = vpop.f32.mrf.mxu0
  %v540 = vadd.f32 %v491, %v539
  %v541 = vpop.f32.mrf.mxu0
  %v542 = vadd.f32 %v493, %v541
  %543 = vmatmul.bf16.gmra.mxu0 %v227
  %v544 = vpop.f32.mrf.mxu0
  %v545 = vadd.f32 %v496, %v544
  %v546 = vpop.f32.mrf.mxu0
  %v547 = vadd.f32 %v498, %v546
  %548 = vmatmul.bf16.gmra.mxu0 %v231
  %v549 = vpop.f32.mrf.mxu0
  %v550 = vadd.f32 %v501, %v549
  %v551 = vpop.f32.mrf.mxu0
  %v552 = vadd.f32 %v503, %v551
  %553 = vmatmul.bf16.gmra.mxu0 %v235
  %v554 = vpop.f32.mrf.mxu0
  %v555 = vadd.f32 %v506, %v554
  %v556 = vpop.f32.mrf.mxu0
  %v557 = vadd.f32 %v508, %v556
  %558 = vmatmul.bf16.gmra.mxu0 %v239
  %v559 = vpop.f32.mrf.mxu0
  %v560 = vadd.f32 %v511, %v559
  %v561 = vpop.f32.mrf.mxu0
  %v562 = vadd.f32 %v513, %v561
  %563 = vdwg.mxu0
  %564 = vmatpush.bf16.msra.mxu0 %v425
  %565 = vmatpush.bf16.msra.mxu0 %v424
  %566 = vmatpush.bf16.msra.mxu0 %v423
  %567 = vmatpush.bf16.msra.mxu0 %v422
  %568 = vmatpush.bf16.msra.mxu0 %v421
  %569 = vmatpush.bf16.msra.mxu0 %v420
  %570 = vmatpush.bf16.msra.mxu0 %v419
  %571 = vmatpush.bf16.msra.mxu0 %v418
  %572 = vmatmul.bf16.gmra.mxu0 %v212
  %v573 = vpop.f32.mrf.mxu0
  %v574 = vadd.f32 %v525, %v573
  %v575 = vpop.f32.mrf.mxu0
  %v576 = vadd.f32 %v527, %v575
  %577 = vmatmul.bf16.gmra.mxu0 %v216
  %v578 = vpop.f32.mrf.mxu0
  %v579 = vadd.f32 %v530, %v578
  %v580 = vpop.f32.mrf.mxu0
  %v581 = vadd.f32 %v532, %v580
  %582 = vmatmul.bf16.gmra.mxu0 %v220
  %v583 = vpop.f32.mrf.mxu0
  %v584 = vadd.f32 %v535, %v583
  %v585 = vpop.f32.mrf.mxu0
  %v586 = vadd.f32 %v537, %v585
  %587 = vmatmul.bf16.gmra.mxu0 %v224
  %v588 = vpop.f32.mrf.mxu0
  %v589 = vadd.f32 %v540, %v588
  %v590 = vpop.f32.mrf.mxu0
  %v591 = vadd.f32 %v542, %v590
  %592 = vmatmul.bf16.gmra.mxu0 %v228
  %v593 = vpop.f32.mrf.mxu0
  %v594 = vadd.f32 %v545, %v593
  %v595 = vpop.f32.mrf.mxu0
  %v596 = vadd.f32 %v547, %v595
  %597 = vmatmul.bf16.gmra.mxu0 %v232
  %v598 = vpop.f32.mrf.mxu0
  %v599 = vadd.f32 %v550, %v598
  %v600 = vpop.f32.mrf.mxu0
  %v601 = vadd.f32 %v552, %v600
  %602 = vmatmul.bf16.gmra.mxu0 %v236
  %v603 = vpop.f32.mrf.mxu0
  %v604 = vadd.f32 %v555, %v603
  %v605 = vpop.f32.mrf.mxu0
  %v606 = vadd.f32 %v557, %v605
  %607 = vmatmul.bf16.gmra.mxu0 %v240
  %v608 = vpop.f32.mrf.mxu0
  %v609 = vadd.f32 %v560, %v608
  %v610 = vpop.f32.mrf.mxu0
  %v611 = vadd.f32 %v562, %v610
  %612 = vdwg.mxu0
  %613 = vmatpush.bf16.msra.mxu0 %v433
  %614 = vmatpush.bf16.msra.mxu0 %v432
  %615 = vmatpush.bf16.msra.mxu0 %v431
  %616 = vmatpush.bf16.msra.mxu0 %v430
  %617 = vmatpush.bf16.msra.mxu0 %v429
  %618 = vmatpush.bf16.msra.mxu0 %v428
  %619 = vmatpush.bf16.msra.mxu0 %v427
  %620 = vmatpush.bf16.msra.mxu0 %v426
  %621 = vmatmul.bf16.gmra.mxu0 %v213
  %v622 = vpop.f32.mrf.mxu0
  %v623 = vadd.f32 %v574, %v622
  %v624 = vpop.f32.mrf.mxu0
  %v625 = vadd.f32 %v576, %v624
  %626 = vmatmul.bf16.gmra.mxu0 %v217
  %v627 = vpop.f32.mrf.mxu0
  %v628 = vadd.f32 %v579, %v627
  %v629 = vpop.f32.mrf.mxu0
  %v630 = vadd.f32 %v581, %v629
  %631 = vmatmul.bf16.gmra.mxu0 %v221
  %v632 = vpop.f32.mrf.mxu0
  %v633 = vadd.f32 %v584, %v632
  %v634 = vpop.f32.mrf.mxu0
  %v635 = vadd.f32 %v586, %v634
  %636 = vmatmul.bf16.gmra.mxu0 %v225
  %v637 = vpop.f32.mrf.mxu0
  %v638 = vadd.f32 %v589, %v637
  %v639 = vpop.f32.mrf.mxu0
  %v640 = vadd.f32 %v591, %v639
  %641 = vmatmul.bf16.gmra.mxu0 %v229
  %v642 = vpop.f32.mrf.mxu0
  %v643 = vadd.f32 %v594, %v642
  %v644 = vpop.f32.mrf.mxu0
  %v645 = vadd.f32 %v596, %v644
  %646 = vmatmul.bf16.gmra.mxu0 %v233
  %v647 = vpop.f32.mrf.mxu0
  %v648 = vadd.f32 %v599, %v647
  %v649 = vpop.f32.mrf.mxu0
  %v650 = vadd.f32 %v601, %v649
  %651 = vmatmul.bf16.gmra.mxu0 %v237
  %v652 = vpop.f32.mrf.mxu0
  %v653 = vadd.f32 %v604, %v652
  %v654 = vpop.f32.mrf.mxu0
  %v655 = vadd.f32 %v606, %v654
  %656 = vmatmul.bf16.gmra.mxu0 %v241
  %v657 = vpop.f32.mrf.mxu0
  %v658 = vadd.f32 %v609, %v657
  %v659 = vpop.f32.mrf.mxu0
  %v660 = vadd.f32 %v611, %v659
  %661 = vdwg.mxu0
  %v662 = vmax.f32 %v623, 0.0
  %v663 = vmax.f32 %v625, 0.0
  %v664 = vmax.f32 %v628, 0.0
  %v665 = vmax.f32 %v630, 0.0
  %v666 = vmax.f32 %v633, 0.0
  %v667 = vmax.f32 %v635, 0.0
  %v668 = vmax.f32 %v638, 0.0
  %v669 = vmax.f32 %v640, 0.0
  %v670 = vmax.f32 %v643, 0.0
  %v671 = vmax.f32 %v645, 0.0
  %v672 = vmax.f32 %v648, 0.0
  %v673 = vmax.f32 %v650, 0.0
  %v674 = vmax.f32 %v653, 0.0
  %v675 = vmax.f32 %v655, 0.0
  %v676 = vmax.f32 %v658, 0.0
  %v677 = vmax.f32 %v660, 0.0
  %v678 = vpack.c.bf16 %v662, %v662
  %v679 = vpack.c.bf16 %v663, %v663
  %v680 = vpack.c.bf16 %v664, %v664
  %v681 = vpack.c.bf16 %v665, %v665
  %v682 = vpack.c.bf16 %v666, %v666
  %v683 = vpack.c.bf16 %v667, %v667
  %v684 = vpack.c.bf16 %v668, %v668
  %v685 = vpack.c.bf16 %v669, %v669
  %v686 = vpack.c.bf16 %v670, %v670
  %v687 = vpack.c.bf16 %v671, %v671
  %v688 = vpack.c.bf16 %v672, %v672
  %v689 = vpack.c.bf16 %v673, %v673
  %v690 = vpack.c.bf16 %v674, %v674
  %v691 = vpack.c.bf16 %v675, %v675
  %v692 = vpack.c.bf16 %v676, %v676
  %v693 = vpack.c.bf16 %v677, %v677
  %694 = vst [vmem:[%s3] sm:$0xf] %v678
  %695 = vst [vmem:[%s3 + $0x4] sm:$0xf] %v679
  %696 = vst [vmem:[%s3 + $0x8] sm:$0xf] %v680
  %697 = vst [vmem:[%s3 + $0xc] sm:$0xf] %v681
  %698 = vst [vmem:[%s3 + $0x10] sm:$0xf] %v682
  %699 = vst [vmem:[%s3 + $0x14] sm:$0xf] %v683
  %700 = vst [vmem:[%s3 + $0x18] sm:$0xf] %v684
  %701 = vst [vmem:[%s3 + $0x1c] sm:$0xf] %v685
  %702 = vst [vmem:[%s3 + $0x20] sm:$0xf] %v686
  %703 = vst [vmem:[%s3 + $0x24] sm:$0xf] %v687
  %704 = vst [vmem:[%s3 + $0x28] sm:$0xf] %v688
  %705 = vst [vmem:[%s3 + $0x2c] sm:$0xf] %v689
  %706 = vst [vmem:[%s3 + $0x30] sm:$0xf] %v690
  %707 = vst [vmem:[%s3 + $0x34] sm:$0xf] %v691
  %708 = vst [vmem:[%s3 + $0x38] sm:$0xf] %v692
  %709 = vst [vmem:[%s3 + $0x3c] sm:$0xf] %v693
  // Predicated region
  $region14: #{_lambda_.11} parent=0 // pred_check
    _
  $region15: #{_lambda_.11} parent=0 // pred_check_branch
    %711 = sbr.rel (0) target = $region17
  $region16: #{_lambda_.11} parent=0 // pred_region
    _
  $region17: #{_lambda_.11} parent=0 // pred_fallthru
    _
  // Predicated region
  $region18: #{_lambda_.11} parent=0 // pred_check
    _
  $region19: #{_lambda_.11} parent=0 // pred_check_branch
    %713 = sbr.rel (0) target = $region21
  $region20: #{_lambda_.11} parent=0 // pred_region
    _
  $region21: #{_lambda_.11} parent=0 // pred_fallthru
    _

// kernel: _lambda_.12
$region0: #{_lambda_.12}
  #allocation0 [shape = 'u32[]', space=smem, size = 0x4, offset = 0x4, fixed_abs, tag = 'smem constant byte address 0x4 - core index']
  #allocation1 [shape = 'u32[72,128]{1,0:T(1,128)}', space=vmem, size = 0x9000, scoped, tag = 'internal scratch']
  %s0 = inlined_call_operand.vmem [shape: bf16[32,1024], index: 0, kind: input, shape index: {}]
  %s1 = inlined_call_operand.vmem [shape: bf16[1024,128], index: 1, kind: input, shape index: {}]
  %s2 = inlined_call_operand.vmem [shape: f32[1,128], index: 2, kind: input, shape index: {}]
  %s3 = inlined_call_operand.vmem [shape: bf16[32,128], index: 3, kind: output, shape index: {}]
  %s4 = sld [smem:[#allocation0]]
  $region22: #{_lambda_.12} parent=0
    _
  %s6 = ssub.s32 1, %s4
  %s7 = scalar_select 0, %s6, %s4
  // Predicated region
  $region2: #{_lambda_.12} parent=0 // pred_check
    _
  $region3: #{_lambda_.12} parent=0 // pred_check_branch
    %9 = sbr.rel (0) target = $region5
  $region4: #{_lambda_.12} parent=0 // pred_region
    _
  $region5: #{_lambda_.12} parent=0 // pred_fallthru
    _
  // Predicated region
  $region6: #{_lambda_.12} parent=0 // pred_check
    _
  $region7: #{_lambda_.12} parent=0 // pred_check_branch
    %11 = sbr.rel (0) target = $region9
  $region8: #{_lambda_.12} parent=0 // pred_region
    _
  $region9: #{_lambda_.12} parent=0 // pred_fallthru
    _
  // Predicated region
  $region10: #{_lambda_.12} parent=0 // pred_check
    _
  $region11: #{_lambda_.12} parent=0 // pred_check_branch
    %13 = sbr.rel (0) target = $region13
  $region12: #{_lambda_.12} parent=0 // pred_region
    _
  $region13: #{_lambda_.12} parent=0 // pred_fallthru
    _
  %v14 = vld [vmem:[%s0] sm:$0xff]
  %v15 = vld [vmem:[%s0 + $0x8] sm:$0xff]
  %v16 = vld [vmem:[%s0 + $0x10] sm:$0xff]
  %v17 = vld [vmem:[%s0 + $0x18] sm:$0xff]
  %v18 = vld [vmem:[%s0 + $0x20] sm:$0xff]
  %v19 = vld [vmem:[%s0 + $0x28] sm:$0xff]
  %v20 = vld [vmem:[%s0 + $0x30] sm:$0xff]
  %v21 = vld [vmem:[%s0 + $0x38] sm:$0xff]
  %v22 = vld [vmem:[%s0 + $0x40] sm:$0xff]
  %v23 = vld [vmem:[%s0 + $0x48] sm:$0xff]
  %v24 = vld [vmem:[%s0 + $0x50] sm:$0xff]
  %v25 = vld [vmem:[%s0 + $0x58] sm:$0xff]
  %v26 = vld [vmem:[%s0 + $0x60] sm:$0xff]
  %v27 = vld [vmem:[%s0 + $0x68] sm:$0xff]
  %v28 = vld [vmem:[%s0 + $0x70] sm:$0xff]
  %v29 = vld [vmem:[%s0 + $0x78] sm:$0xff]
  %v30 = vld [vmem:[%s1] sm:$0xf]
  %v31 = vld [vmem:[%s1 + $0x4] sm:$0xf]
  %v32 = vld [vmem:[%s1 + $0x8] sm:$0xf]
  %v33 = vld [vmem:[%s1 + $0xc] sm:$0xf]
  %v34 = vld [vmem:[%s1 + $0x10] sm:$0xf]
  %v35 = vld [vmem:[%s1 + $0x14] sm:$0xf]
  %v36 = vld [vmem:[%s1 + $0x18] sm:$0xf]
  %v37 = vld [vmem:[%s1 + $0x1c] sm:$0xf]
  %v38 = vld [vmem:[%s1 + $0x20] sm:$0xf]
  %v39 = vld [vmem:[%s1 + $0x24] sm:$0xf]
  %v40 = vld [vmem:[%s1 + $0x28] sm:$0xf]
  %v41 = vld [vmem:[%s1 + $0x2c] sm:$0xf]
  %v42 = vld [vmem:[%s1 + $0x30] sm:$0xf]
  %v43 = vld [vmem:[%s1 + $0x34] sm:$0xf]
  %v44 = vld [vmem:[%s1 + $0x38] sm:$0xf]
  %v45 = vld [vmem:[%s1 + $0x3c] sm:$0xf]
  %v46 = vld [vmem:[%s1 + $0x40] sm:$0xf]
  %v47 = vld [vmem:[%s1 + $0x44] sm:$0xf]
  %v48 = vld [vmem:[%s1 + $0x48] sm:$0xf]
  %v49 = vld [vmem:[%s1 + $0x4c] sm:$0xf]
  %v50 = vld [vmem:[%s1 + $0x50] sm:$0xf]
  %v51 = vld [vmem:[%s1 + $0x54] sm:$0xf]
  %v52 = vld [vmem:[%s1 + $0x58] sm:$0xf]
  %v53 = vld [vmem:[%s1 + $0x5c] sm:$0xf]
  %v54 = vld [vmem:[%s1 + $0x60] sm:$0xf]
  %v55 = vld [vmem:[%s1 + $0x64] sm:$0xf]
  %v56 = vld [vmem:[%s1 + $0x68] sm:$0xf]
  %v57 = vld [vmem:[%s1 + $0x6c] sm:$0xf]
  %v58 = vld [vmem:[%s1 + $0x70] sm:$0xf]
  %v59 = vld [vmem:[%s1 + $0x74] sm:$0xf]
  %v60 = vld [vmem:[%s1 + $0x78] sm:$0xf]
  %v61 = vld [vmem:[%s1 + $0x7c] sm:$0xf]
  %v62 = vld [vmem:[%s1 + $0x80] sm:$0xf]
  %v63 = vld [vmem:[%s1 + $0x84] sm:$0xf]
  %v64 = vld [vmem:[%s1 + $0x88] sm:$0xf]
  %v65 = vld [vmem:[%s1 + $0x8c] sm:$0xf]
  %v66 = vld [vmem:[%s1 + $0x90] sm:$0xf]
  %v67 = vld [vmem:[%s1 + $0x94] sm:$0xf]
  %v68 = vld [vmem:[%s1 + $0x98] sm:$0xf]
  %v69 = vld [vmem:[%s1 + $0x9c] sm:$0xf]
  %v70 = vld [vmem:[%s1 + $0xa0] sm:$0xf]
  %v71 = vld [vmem:[%s1 + $0xa4] sm:$0xf]
  %v72 = vld [vmem:[%s1 + $0xa8] sm:$0xf]
  %v73 = vld [vmem:[%s1 + $0xac] sm:$0xf]
  %v74 = vld [vmem:[%s1 + $0xb0] sm:$0xf]
  %v75 = vld [vmem:[%s1 + $0xb4] sm:$0xf]
  %v76 = vld [vmem:[%s1 + $0xb8] sm:$0xf]
  %v77 = vld [vmem:[%s1 + $0xbc] sm:$0xf]
  %v78 = vld [vmem:[%s1 + $0xc0] sm:$0xf]
  %v79 = vld [vmem:[%s1 + $0xc4] sm:$0xf]
  %v80 = vld [vmem:[%s1 + $0xc8] sm:$0xf]
  %v81 = vld [vmem:[%s1 + $0xcc] sm:$0xf]
  %v82 = vld [vmem:[%s1 + $0xd0] sm:$0xf]
  %v83 = vld [vmem:[%s1 + $0xd4] sm:$0xf]
  %v84 = vld [vmem:[%s1 + $0xd8] sm:$0xf]
  %v85 = vld [vmem:[%s1 + $0xdc] sm:$0xf]
  %v86 = vld [vmem:[%s1 + $0xe0] sm:$0xf]
  %v87 = vld [vmem:[%s1 + $0xe4] sm:$0xf]
  %v88 = vld [vmem:[%s1 + $0xe8] sm:$0xf]
  %v89 = vld [vmem:[%s1 + $0xec] sm:$0xf]
  %v90 = vld [vmem:[%s1 + $0xf0] sm:$0xf]
  %v91 = vld [vmem:[%s1 + $0xf4] sm:$0xf]
  %v92 = vld [vmem:[%s1 + $0xf8] sm:$0xf]
  %v93 = vld [vmem:[%s1 + $0xfc] sm:$0xf]
  %v94 = vld [vmem:[%s1 + $0x100] sm:$0xf]
  %v95 = vld [vmem:[%s1 + $0x104] sm:$0xf]
  %v96 = vld [vmem:[%s1 + $0x108] sm:$0xf]
  %v97 = vld [vmem:[%s1 + $0x10c] sm:$0xf]
  %v98 = vld [vmem:[%s1 + $0x110] sm:$0xf]
  %v99 = vld [vmem:[%s1 + $0x114] sm:$0xf]
  %v100 = vld [vmem:[%s1 + $0x118] sm:$0xf]
  %v101 = vld [vmem:[%s1 + $0x11c] sm:$0xf]
  %v102 = vld [vmem:[%s1 + $0x120] sm:$0xf]
  %v103 = vld [vmem:[%s1 + $0x124] sm:$0xf]
  %v104 = vld [vmem:[%s1 + $0x128] sm:$0xf]
  %v105 = vld [vmem:[%s1 + $0x12c] sm:$0xf]
  %v106 = vld [vmem:[%s1 + $0x130] sm:$0xf]
  %v107 = vld [vmem:[%s1 + $0x134] sm:$0xf]
  %v108 = vld [vmem:[%s1 + $0x138] sm:$0xf]
  %v109 = vld [vmem:[%s1 + $0x13c] sm:$0xf]
  %v110 = vld [vmem:[%s1 + $0x140] sm:$0xf]
  %v111 = vld [vmem:[%s1 + $0x144] sm:$0xf]
  %v112 = vld [vmem:[%s1 + $0x148] sm:$0xf]
  %v113 = vld [vmem:[%s1 + $0x14c] sm:$0xf]
  %v114 = vld [vmem:[%s1 + $0x150] sm:$0xf]
  %v115 = vld [vmem:[%s1 + $0x154] sm:$0xf]
  %v116 = vld [vmem:[%s1 + $0x158] sm:$0xf]
  %v117 = vld [vmem:[%s1 + $0x15c] sm:$0xf]
  %v118 = vld [vmem:[%s1 + $0x160] sm:$0xf]
  %v119 = vld [vmem:[%s1 + $0x164] sm:$0xf]
  %v120 = vld [vmem:[%s1 + $0x168] sm:$0xf]
  %v121 = vld [vmem:[%s1 + $0x16c] sm:$0xf]
  %v122 = vld [vmem:[%s1 + $0x170] sm:$0xf]
  %v123 = vld [vmem:[%s1 + $0x174] sm:$0xf]
  %v124 = vld [vmem:[%s1 + $0x178] sm:$0xf]
  %v125 = vld [vmem:[%s1 + $0x17c] sm:$0xf]
  %v126 = vld [vmem:[%s1 + $0x180] sm:$0xf]
  %v127 = vld [vmem:[%s1 + $0x184] sm:$0xf]
  %v128 = vld [vmem:[%s1 + $0x188] sm:$0xf]
  %v129 = vld [vmem:[%s1 + $0x18c] sm:$0xf]
  %v130 = vld [vmem:[%s1 + $0x190] sm:$0xf]
  %v131 = vld [vmem:[%s1 + $0x194] sm:$0xf]
  %v132 = vld [vmem:[%s1 + $0x198] sm:$0xf]
  %v133 = vld [vmem:[%s1 + $0x19c] sm:$0xf]
  %v134 = vld [vmem:[%s1 + $0x1a0] sm:$0xf]
  %v135 = vld [vmem:[%s1 + $0x1a4] sm:$0xf]
  %v136 = vld [vmem:[%s1 + $0x1a8] sm:$0xf]
  %v137 = vld [vmem:[%s1 + $0x1ac] sm:$0xf]
  %v138 = vld [vmem:[%s1 + $0x1b0] sm:$0xf]
  %v139 = vld [vmem:[%s1 + $0x1b4] sm:$0xf]
  %v140 = vld [vmem:[%s1 + $0x1b8] sm:$0xf]
  %v141 = vld [vmem:[%s1 + $0x1bc] sm:$0xf]
  %v142 = vld [vmem:[%s1 + $0x1c0] sm:$0xf]
  %v143 = vld [vmem:[%s1 + $0x1c4] sm:$0xf]
  %v144 = vld [vmem:[%s1 + $0x1c8] sm:$0xf]
  %v145 = vld [vmem:[%s1 + $0x1cc] sm:$0xf]
  %v146 = vld [vmem:[%s1 + $0x1d0] sm:$0xf]
  %v147 = vld [vmem:[%s1 + $0x1d4] sm:$0xf]
  %v148 = vld [vmem:[%s1 + $0x1d8] sm:$0xf]
  %v149 = vld [vmem:[%s1 + $0x1dc] sm:$0xf]
  %v150 = vld [vmem:[%s1 + $0x1e0] sm:$0xf]
  %v151 = vld [vmem:[%s1 + $0x1e4] sm:$0xf]
  %v152 = vld [vmem:[%s1 + $0x1e8] sm:$0xf]
  %v153 = vld [vmem:[%s1 + $0x1ec] sm:$0xf]
  %v154 = vld [vmem:[%s1 + $0x1f0] sm:$0xf]
  %v155 = vld [vmem:[%s1 + $0x1f4] sm:$0xf]
  %v156 = vld [vmem:[%s1 + $0x1f8] sm:$0xf]
  %v157 = vld [vmem:[%s1 + $0x1fc] sm:$0xf]
  %v158 = vld [vmem:[%s2] sm:$0x1]
  %v160 = vperm.slane %v158, 0
  %v178 = vunpack.c.l.b16 %v14
  %v179 = vunpack.c.h.b16 %v14
  %v180 = vunpack.c.l.b16 %v15
  %v181 = vunpack.c.h.b16 %v15
  %v182 = vunpack.c.l.b16 %v16
  %v183 = vunpack.c.h.b16 %v16
  %v184 = vunpack.c.l.b16 %v17
  %v185 = vunpack.c.h.b16 %v17
  %v186 = vunpack.c.l.b16 %v18
  %v187 = vunpack.c.h.b16 %v18
  %v188 = vunpack.c.l.b16 %v19
  %v189 = vunpack.c.h.b16 %v19
  %v190 = vunpack.c.l.b16 %v20
  %v191 = vunpack.c.h.b16 %v20
  %v192 = vunpack.c.l.b16 %v21
  %v193 = vunpack.c.h.b16 %v21
  %v194 = vunpack.c.l.b16 %v22
  %v195 = vunpack.c.h.b16 %v22
  %v196 = vunpack.c.l.b16 %v23
  %v197 = vunpack.c.h.b16 %v23
  %v198 = vunpack.c.l.b16 %v24
  %v199 = vunpack.c.h.b16 %v24
  %v200 = vunpack.c.l.b16 %v25
  %v201 = vunpack.c.h.b16 %v25
  %v202 = vunpack.c.l.b16 %v26
  %v203 = vunpack.c.h.b16 %v26
  %v204 = vunpack.c.l.b16 %v27
  %v205 = vunpack.c.h.b16 %v27
  %v206 = vunpack.c.l.b16 %v28
  %v207 = vunpack.c.h.b16 %v28
  %v208 = vunpack.c.l.b16 %v29
  %v209 = vunpack.c.h.b16 %v29
  %v210 = vpack.c.b16 %v186, %v178
  %v211 = vpack.c.b16 %v187, %v179
  %v212 = vpack.c.b16 %v188, %v180
  %v213 = vpack.c.b16 %v189, %v181
  %v214 = vpack.c.b16 %v190, %v182
  %v215 = vpack.c.b16 %v191, %v183
  %v216 = vpack.c.b16 %v192, %v184
  %v217 = vpack.c.b16 %v193, %v185
  %v218 = vpack.c.b16 %v202, %v194
  %v219 = vpack.c.b16 %v203, %v195
  %v220 = vpack.c.b16 %v204, %v196
  %v221 = vpack.c.b16 %v205, %v197
  %v222 = vpack.c.b16 %v206, %v198
  %v223 = vpack.c.b16 %v207, %v199
  %v224 = vpack.c.b16 %v208, %v200
  %v225 = vpack.c.b16 %v209, %v201
  %v370 = vunpack.c.l.b16 %v30
  %v371 = vunpack.c.l.b16 %v31
  %v372 = vunpack.c.l.b16 %v32
  %v373 = vunpack.c.l.b16 %v33
  %v374 = vunpack.c.l.b16 %v34
  %v375 = vunpack.c.l.b16 %v35
  %v376 = vunpack.c.l.b16 %v36
  %v377 = vunpack.c.l.b16 %v37
  %v378 = vunpack.c.l.b16 %v38
  %v379 = vunpack.c.l.b16 %v39
  %v380 = vunpack.c.l.b16 %v40
  %v381 = vunpack.c.l.b16 %v41
  %v382 = vunpack.c.l.b16 %v42
  %v383 = vunpack.c.l.b16 %v43
  %v384 = vunpack.c.l.b16 %v44
  %v385 = vunpack.c.l.b16 %v45
  %v386 = vunpack.c.l.b16 %v46
  %v387 = vunpack.c.l.b16 %v47
  %v388 = vunpack.c.l.b16 %v48
  %v389 = vunpack.c.l.b16 %v49
  %v390 = vunpack.c.l.b16 %v50
  %v391 = vunpack.c.l.b16 %v51
  %v392 = vunpack.c.l.b16 %v52
  %v393 = vunpack.c.l.b16 %v53
  %v394 = vunpack.c.l.b16 %v54
  %v395 = vunpack.c.l.b16 %v55
  %v396 = vunpack.c.l.b16 %v56
  %v397 = vunpack.c.l.b16 %v57
  %v398 = vunpack.c.l.b16 %v58
  %v399 = vunpack.c.l.b16 %v59
  %v400 = vunpack.c.l.b16 %v60
  %v401 = vunpack.c.l.b16 %v61
  %v402 = vunpack.c.l.b16 %v62
  %v403 = vunpack.c.l.b16 %v63
  %v404 = vunpack.c.l.b16 %v64
  %v405 = vunpack.c.l.b16 %v65
  %v406 = vunpack.c.l.b16 %v66
  %v407 = vunpack.c.l.b16 %v67
  %v408 = vunpack.c.l.b16 %v68
  %v409 = vunpack.c.l.b16 %v69
  %v410 = vunpack.c.l.b16 %v70
  %v411 = vunpack.c.l.b16 %v71
  %v412 = vunpack.c.l.b16 %v72
  %v413 = vunpack.c.l.b16 %v73
  %v414 = vunpack.c.l.b16 %v74
  %v415 = vunpack.c.l.b16 %v75
  %v416 = vunpack.c.l.b16 %v76
  %v417 = vunpack.c.l.b16 %v77
  %v418 = vunpack.c.l.b16 %v78
  %v419 = vunpack.c.l.b16 %v79
  %v420 = vunpack.c.l.b16 %v80
  %v421 = vunpack.c.l.b16 %v81
  %v422 = vunpack.c.l.b16 %v82
  %v423 = vunpack.c.l.b16 %v83
  %v424 = vunpack.c.l.b16 %v84
  %v425 = vunpack.c.l.b16 %v85
  %v426 = vunpack.c.l.b16 %v86
  %v427 = vunpack.c.l.b16 %v87
  %v428 = vunpack.c.l.b16 %v88
  %v429 = vunpack.c.l.b16 %v89
  %v430 = vunpack.c.l.b16 %v90
  %v431 = vunpack.c.l.b16 %v91
  %v432 = vunpack.c.l.b16 %v92
  %v433 = vunpack.c.l.b16 %v93
  %v434 = vunpack.c.l.b16 %v94
  %v435 = vunpack.c.l.b16 %v95
  %v436 = vunpack.c.l.b16 %v96
  %v437 = vunpack.c.l.b16 %v97
  %v438 = vunpack.c.l.b16 %v98
  %v439 = vunpack.c.l.b16 %v99
  %v440 = vunpack.c.l.b16 %v100
  %v441 = vunpack.c.l.b16 %v101
  %v442 = vunpack.c.l.b16 %v102
  %v443 = vunpack.c.l.b16 %v103
  %v444 = vunpack.c.l.b16 %v104
  %v445 = vunpack.c.l.b16 %v105
  %v446 = vunpack.c.l.b16 %v106
  %v447 = vunpack.c.l.b16 %v107
  %v448 = vunpack.c.l.b16 %v108
  %v449 = vunpack.c.l.b16 %v109
  %v450 = vunpack.c.l.b16 %v110
  %v451 = vunpack.c.l.b16 %v111
  %v452 = vunpack.c.l.b16 %v112
  %v453 = vunpack.c.l.b16 %v113
  %v454 = vunpack.c.l.b16 %v114
  %v455 = vunpack.c.l.b16 %v115
  %v456 = vunpack.c.l.b16 %v116
  %v457 = vunpack.c.l.b16 %v117
  %v458 = vunpack.c.l.b16 %v118
  %v459 = vunpack.c.l.b16 %v119
  %v460 = vunpack.c.l.b16 %v120
  %v461 = vunpack.c.l.b16 %v121
  %v462 = vunpack.c.l.b16 %v122
  %v463 = vunpack.c.l.b16 %v123
  %v464 = vunpack.c.l.b16 %v124
  %v465 = vunpack.c.l.b16 %v125
  %v466 = vunpack.c.l.b16 %v126
  %v467 = vunpack.c.l.b16 %v127
  %v468 = vunpack.c.l.b16 %v128
  %v469 = vunpack.c.l.b16 %v129
  %v470 = vunpack.c.l.b16 %v130
  %v471 = vunpack.c.l.b16 %v131
  %v472 = vunpack.c.l.b16 %v132
  %v473 = vunpack.c.l.b16 %v133
  %v474 = vunpack.c.l.b16 %v134
  %v475 = vunpack.c.l.b16 %v135
  %v476 = vunpack.c.l.b16 %v136
  %v477 = vunpack.c.l.b16 %v137
  %v478 = vunpack.c.l.b16 %v138
  %v479 = vunpack.c.l.b16 %v139
  %v480 = vunpack.c.l.b16 %v140
  %v481 = vunpack.c.l.b16 %v141
  %v482 = vunpack.c.l.b16 %v142
  %v483 = vunpack.c.l.b16 %v143
  %v484 = vunpack.c.l.b16 %v144
  %v485 = vunpack.c.l.b16 %v145
  %v486 = vunpack.c.l.b16 %v146
  %v487 = vunpack.c.l.b16 %v147
  %v488 = vunpack.c.l.b16 %v148
  %v489 = vunpack.c.l.b16 %v149
  %v490 = vunpack.c.l.b16 %v150
  %v491 = vunpack.c.l.b16 %v151
  %v492 = vunpack.c.l.b16 %v152
  %v493 = vunpack.c.l.b16 %v153
  %v494 = vunpack.c.l.b16 %v154
  %v495 = vunpack.c.l.b16 %v155
  %v496 = vunpack.c.l.b16 %v156
  %v497 = vunpack.c.l.b16 %v157
  %v498 = vpack.c.b16 %v371, %v370
  %v499 = vpack.c.b16 %v373, %v372
  %v500 = vpack.c.b16 %v375, %v374
  %v501 = vpack.c.b16 %v377, %v376
  %v502 = vpack.c.b16 %v379, %v378
  %v503 = vpack.c.b16 %v381, %v380
  %v504 = vpack.c.b16 %v383, %v382
  %v505 = vpack.c.b16 %v385, %v384
  %v506 = vpack.c.b16 %v387, %v386
  %v507 = vpack.c.b16 %v389, %v388
  %v508 = vpack.c.b16 %v391, %v390
  %v509 = vpack.c.b16 %v393, %v392
  %v510 = vpack.c.b16 %v395, %v394
  %v511 = vpack.c.b16 %v397, %v396
  %v512 = vpack.c.b16 %v399, %v398
  %v513 = vpack.c.b16 %v401, %v400
  %v514 = vpack.c.b16 %v403, %v402
  %v515 = vpack.c.b16 %v405, %v404
  %v516 = vpack.c.b16 %v407, %v406
  %v517 = vpack.c.b16 %v409, %v408
  %v518 = vpack.c.b16 %v411, %v410
  %v519 = vpack.c.b16 %v413, %v412
  %v520 = vpack.c.b16 %v415, %v414
  %v521 = vpack.c.b16 %v417, %v416
  %v522 = vpack.c.b16 %v419, %v418
  %v523 = vpack.c.b16 %v421, %v420
  %v524 = vpack.c.b16 %v423, %v422
  %v525 = vpack.c.b16 %v425, %v424
  %v526 = vpack.c.b16 %v427, %v426
  %v527 = vpack.c.b16 %v429, %v428
  %v528 = vpack.c.b16 %v431, %v430
  %v529 = vpack.c.b16 %v433, %v432
  %v530 = vpack.c.b16 %v435, %v434
  %v531 = vpack.c.b16 %v437, %v436
  %v532 = vpack.c.b16 %v439, %v438
  %v533 = vpack.c.b16 %v441, %v440
  %v534 = vpack.c.b16 %v443, %v442
  %v535 = vpack.c.b16 %v445, %v444
  %v536 = vpack.c.b16 %v447, %v446
  %v537 = vpack.c.b16 %v449, %v448
  %v538 = vpack.c.b16 %v451, %v450
  %v539 = vpack.c.b16 %v453, %v452
  %v540 = vpack.c.b16 %v455, %v454
  %v541 = vpack.c.b16 %v457, %v456
  %v542 = vpack.c.b16 %v459, %v458
  %v543 = vpack.c.b16 %v461, %v460
  %v544 = vpack.c.b16 %v463, %v462
  %v545 = vpack.c.b16 %v465, %v464
  %v546 = vpack.c.b16 %v467, %v466
  %v547 = vpack.c.b16 %v469, %v468
  %v548 = vpack.c.b16 %v471, %v470
  %v549 = vpack.c.b16 %v473, %v472
  %v550 = vpack.c.b16 %v475, %v474
  %v551 = vpack.c.b16 %v477, %v476
  %v552 = vpack.c.b16 %v479, %v478
  %v553 = vpack.c.b16 %v481, %v480
  %v554 = vpack.c.b16 %v483, %v482
  %v555 = vpack.c.b16 %v485, %v484
  %v556 = vpack.c.b16 %v487, %v486
  %v557 = vpack.c.b16 %v489, %v488
  %v558 = vpack.c.b16 %v491, %v490
  %v559 = vpack.c.b16 %v493, %v492
  %v560 = vpack.c.b16 %v495, %v494
  %v561 = vpack.c.b16 %v497, %v496
  %626 = vmatpush.bf16.msra.mxu0 %v505
  %627 = vmatpush.bf16.msra.mxu0 %v504
  %628 = vmatpush.bf16.msra.mxu0 %v503
  %629 = vmatpush.bf16.msra.mxu0 %v502
  %630 = vmatpush.bf16.msra.mxu0 %v501
  %631 = vmatpush.bf16.msra.mxu0 %v500
  %632 = vmatpush.bf16.msra.mxu0 %v499
  %633 = vmatpush.bf16.msra.mxu0 %v498
  %634 = vmatmul.bf16.gmra.mxu0 %v210
  %v635 = vpop.f32.mrf.mxu0
  %v636 = vadd.f32 %v160, %v635
  %v637 = vpop.f32.mrf.mxu0
  %v638 = vadd.f32 %v160, %v637
  %639 = vmatmul.bf16.gmra.mxu0 %v218
  %v640 = vpop.f32.mrf.mxu0
  %v641 = vadd.f32 %v160, %v640
  %v642 = vpop.f32.mrf.mxu0
  %v643 = vadd.f32 %v160, %v642
  %644 = vdwg.mxu0
  %645 = vmatpush.bf16.msra.mxu0 %v513
  %646 = vmatpush.bf16.msra.mxu0 %v512
  %647 = vmatpush.bf16.msra.mxu0 %v511
  %648 = vmatpush.bf16.msra.mxu0 %v510
  %649 = vmatpush.bf16.msra.mxu0 %v509
  %650 = vmatpush.bf16.msra.mxu0 %v508
  %651 = vmatpush.bf16.msra.mxu0 %v507
  %652 = vmatpush.bf16.msra.mxu0 %v506
  %653 = vmatmul.bf16.gmra.mxu0 %v211
  %v654 = vpop.f32.mrf.mxu0
  %v655 = vadd.f32 %v636, %v654
  %v656 = vpop.f32.mrf.mxu0
  %v657 = vadd.f32 %v638, %v656
  %658 = vmatmul.bf16.gmra.mxu0 %v219
  %v659 = vpop.f32.mrf.mxu0
  %v660 = vadd.f32 %v641, %v659
  %v661 = vpop.f32.mrf.mxu0
  %v662 = vadd.f32 %v643, %v661
  %663 = vdwg.mxu0
  %664 = vmatpush.bf16.msra.mxu0 %v521
  %665 = vmatpush.bf16.msra.mxu0 %v520
  %666 = vmatpush.bf16.msra.mxu0 %v519
  %667 = vmatpush.bf16.msra.mxu0 %v518
  %668 = vmatpush.bf16.msra.mxu0 %v517
  %669 = vmatpush.bf16.msra.mxu0 %v516
  %670 = vmatpush.bf16.msra.mxu0 %v515
  %671 = vmatpush.bf16.msra.mxu0 %v514
  %672 = vmatmul.bf16.gmra.mxu0 %v212
  %v673 = vpop.f32.mrf.mxu0
  %v674 = vadd.f32 %v655, %v673
  %v675 = vpop.f32.mrf.mxu0
  %v676 = vadd.f32 %v657, %v675
  %677 = vmatmul.bf16.gmra.mxu0 %v220
  %v678 = vpop.f32.mrf.mxu0
  %v679 = vadd.f32 %v660, %v678
  %v680 = vpop.f32.mrf.mxu0
  %v681 = vadd.f32 %v662, %v680
  %682 = vdwg.mxu0
  %683 = vmatpush.bf16.msra.mxu0 %v529
  %684 = vmatpush.bf16.msra.mxu0 %v528
  %685 = vmatpush.bf16.msra.mxu0 %v527
  %686 = vmatpush.bf16.msra.mxu0 %v526
  %687 = vmatpush.bf16.msra.mxu0 %v525
  %688 = vmatpush.bf16.msra.mxu0 %v524
  %689 = vmatpush.bf16.msra.mxu0 %v523
  %690 = vmatpush.bf16.msra.mxu0 %v522
  %691 = vmatmul.bf16.gmra.mxu0 %v213
  %v692 = vpop.f32.mrf.mxu0
  %v693 = vadd.f32 %v674, %v692
  %v694 = vpop.f32.mrf.mxu0
  %v695 = vadd.f32 %v676, %v694
  %696 = vmatmul.bf16.gmra.mxu0 %v221
  %v697 = vpop.f32.mrf.mxu0
  %v698 = vadd.f32 %v679, %v697
  %v699 = vpop.f32.mrf.mxu0
  %v700 = vadd.f32 %v681, %v699
  %701 = vdwg.mxu0
  %702 = vmatpush.bf16.msra.mxu0 %v537
  %703 = vmatpush.bf16.msra.mxu0 %v536
  %704 = vmatpush.bf16.msra.mxu0 %v535
  %705 = vmatpush.bf16.msra.mxu0 %v534
  %706 = vmatpush.bf16.msra.mxu0 %v533
  %707 = vmatpush.bf16.msra.mxu0 %v532
  %708 = vmatpush.bf16.msra.mxu0 %v531
  %709 = vmatpush.bf16.msra.mxu0 %v530
  %710 = vmatmul.bf16.gmra.mxu0 %v214
  %v711 = vpop.f32.mrf.mxu0
  %v712 = vadd.f32 %v693, %v711
  %v713 = vpop.f32.mrf.mxu0
  %v714 = vadd.f32 %v695, %v713
  %715 = vmatmul.bf16.gmra.mxu0 %v222
  %v716 = vpop.f32.mrf.mxu0
  %v717 = vadd.f32 %v698, %v716
  %v718 = vpop.f32.mrf.mxu0
  %v719 = vadd.f32 %v700, %v718
  %720 = vdwg.mxu0
  %721 = vmatpush.bf16.msra.mxu0 %v545
  %722 = vmatpush.bf16.msra.mxu0 %v544
  %723 = vmatpush.bf16.msra.mxu0 %v543
  %724 = vmatpush.bf16.msra.mxu0 %v542
  %725 = vmatpush.bf16.msra.mxu0 %v541
  %726 = vmatpush.bf16.msra.mxu0 %v540
  %727 = vmatpush.bf16.msra.mxu0 %v539
  %728 = vmatpush.bf16.msra.mxu0 %v538
  %729 = vmatmul.bf16.gmra.mxu0 %v215
  %v730 = vpop.f32.mrf.mxu0
  %v731 = vadd.f32 %v712, %v730
  %v732 = vpop.f32.mrf.mxu0
  %v733 = vadd.f32 %v714, %v732
  %734 = vmatmul.bf16.gmra.mxu0 %v223
  %v735 = vpop.f32.mrf.mxu0
  %v736 = vadd.f32 %v717, %v735
  %v737 = vpop.f32.mrf.mxu0
  %v738 = vadd.f32 %v719, %v737
  %739 = vdwg.mxu0
  %740 = vmatpush.bf16.msra.mxu0 %v553
  %741 = vmatpush.bf16.msra.mxu0 %v552
  %742 = vmatpush.bf16.msra.mxu0 %v551
  %743 = vmatpush.bf16.msra.mxu0 %v550
  %744 = vmatpush.bf16.msra.mxu0 %v549
  %745 = vmatpush.bf16.msra.mxu0 %v548
  %746 = vmatpush.bf16.msra.mxu0 %v547
  %747 = vmatpush.bf16.msra.mxu0 %v546
  %748 = vmatmul.bf16.gmra.mxu0 %v216
  %v749 = vpop.f32.mrf.mxu0
  %v750 = vadd.f32 %v731, %v749
  %v751 = vpop.f32.mrf.mxu0
  %v752 = vadd.f32 %v733, %v751
  %753 = vmatmul.bf16.gmra.mxu0 %v224
  %v754 = vpop.f32.mrf.mxu0
  %v755 = vadd.f32 %v736, %v754
  %v756 = vpop.f32.mrf.mxu0
  %v757 = vadd.f32 %v738, %v756
  %758 = vdwg.mxu0
  %759 = vmatpush.bf16.msra.mxu0 %v561
  %760 = vmatpush.bf16.msra.mxu0 %v560
  %761 = vmatpush.bf16.msra.mxu0 %v559
  %762 = vmatpush.bf16.msra.mxu0 %v558
  %763 = vmatpush.bf16.msra.mxu0 %v557
  %764 = vmatpush.bf16.msra.mxu0 %v556
  %765 = vmatpush.bf16.msra.mxu0 %v555
  %766 = vmatpush.bf16.msra.mxu0 %v554
  %767 = vmatmul.bf16.gmra.mxu0 %v217
  %v768 = vpop.f32.mrf.mxu0
  %v769 = vadd.f32 %v750, %v768
  %v770 = vpop.f32.mrf.mxu0
  %v771 = vadd.f32 %v752, %v770
  %772 = vmatmul.bf16.gmra.mxu0 %v225
  %v773 = vpop.f32.mrf.mxu0
  %v774 = vadd.f32 %v755, %v773
  %v775 = vpop.f32.mrf.mxu0
  %v776 = vadd.f32 %v757, %v775
  %777 = vdwg.mxu0
  %v778 = vmax.f32 %v769, 0.0
  %v779 = vmax.f32 %v771, 0.0
  %v780 = vmax.f32 %v774, 0.0
  %v781 = vmax.f32 %v776, 0.0
  %v782 = vpack.c.bf16 %v778, %v778
  %v783 = vpack.c.bf16 %v779, %v779
  %v784 = vpack.c.bf16 %v780, %v780
  %v785 = vpack.c.bf16 %v781, %v781
  %786 = vst [vmem:[%s3] sm:$0xf] %v782
  %787 = vst [vmem:[%s3 + $0x4] sm:$0xf] %v783
  %788 = vst [vmem:[%s3 + $0x8] sm:$0xf] %v784
  %789 = vst [vmem:[%s3 + $0xc] sm:$0xf] %v785
  // Predicated region
  $region14: #{_lambda_.12} parent=0 // pred_check
    _
  $region15: #{_lambda_.12} parent=0 // pred_check_branch
    %791 = sbr.rel (0) target = $region17
  $region16: #{_lambda_.12} parent=0 // pred_region
    _
  $region17: #{_lambda_.12} parent=0 // pred_fallthru
    _
  // Predicated region
  $region18: #{_lambda_.12} parent=0 // pred_check
    _
  $region19: #{_lambda_.12} parent=0 // pred_check_branch
    %793 = sbr.rel (0) target = $region21
  $region20: #{_lambda_.12} parent=0 // pred_region
    _
  $region21: #{_lambda_.12} parent=0 // pred_fallthru
    _

// kernel: _lambda_.13
$region0: #{_lambda_.13}
  #allocation0 [shape = 'u32[]', space=smem, size = 0x4, offset = 0x4, fixed_abs, tag = 'smem constant byte address 0x4 - core index']
  #allocation1 [shape = 'u32[72,128]{1,0:T(1,128)}', space=vmem, size = 0x9000, scoped, tag = 'internal scratch']
  %s0 = inlined_call_operand.vmem [shape: bf16[8,2048], index: 0, kind: input, shape index: {}]
  %s1 = inlined_call_operand.vmem [shape: bf16[2048,256], index: 1, kind: input, shape index: {}]
  %s2 = inlined_call_operand.vmem [shape: f32[1,256], index: 2, kind: input, shape index: {}]
  %s3 = inlined_call_operand.vmem [shape: bf16[8,256], index: 3, kind: output, shape index: {}]
  %s4 = sld [smem:[#allocation0]]
  $region22: #{_lambda_.13} parent=0
    _
  %s6 = ssub.s32 1, %s4
  %s7 = scalar_select 0, %s6, %s4
  // Predicated region
  $region2: #{_lambda_.13} parent=0 // pred_check
    _
  $region3: #{_lambda_.13} parent=0 // pred_check_branch
    %9 = sbr.rel (0) target = $region5
  $region4: #{_lambda_.13} parent=0 // pred_region
    _
  $region5: #{_lambda_.13} parent=0 // pred_fallthru
    _
  // Predicated region
  $region6: #{_lambda_.13} parent=0 // pred_check
    _
  $region7: #{_lambda_.13} parent=0 // pred_check_branch
    %11 = sbr.rel (0) target = $region9
  $region8: #{_lambda_.13} parent=0 // pred_region
    _
  $region9: #{_lambda_.13} parent=0 // pred_fallthru
    _
  // Predicated region
  $region10: #{_lambda_.13} parent=0 // pred_check
    _
  $region11: #{_lambda_.13} parent=0 // pred_check_branch
    %13 = sbr.rel (0) target = $region13
  $region12: #{_lambda_.13} parent=0 // pred_region
    _
  $region13: #{_lambda_.13} parent=0 // pred_fallthru
    _
  %v14 = vld [vmem:[%s0] sm:$0xff]
  %v15 = vld [vmem:[%s0 + $0x8] sm:$0xff]
  %v16 = vld [vmem:[%s0 + $0x10] sm:$0xff]
  %v17 = vld [vmem:[%s0 + $0x18] sm:$0xff]
  %v18 = vld [vmem:[%s0 + $0x20] sm:$0xff]
  %v19 = vld [vmem:[%s0 + $0x28] sm:$0xff]
  %v20 = vld [vmem:[%s0 + $0x30] sm:$0xff]
  %v21 = vld [vmem:[%s0 + $0x38] sm:$0xff]
  %v22 = vld [vmem:[%s1] sm:$0xff]
  %v23 = vld [vmem:[%s1 + $0x8] sm:$0xff]
  %v24 = vld [vmem:[%s1 + $0x10] sm:$0xff]
  %v25 = vld [vmem:[%s1 + $0x18] sm:$0xff]
  %v26 = vld [vmem:[%s1 + $0x20] sm:$0xff]
  %v27 = vld [vmem:[%s1 + $0x28] sm:$0xff]
  %v28 = vld [vmem:[%s1 + $0x30] sm:$0xff]
  %v29 = vld [vmem:[%s1 + $0x38] sm:$0xff]
  %v30 = vld [vmem:[%s1 + $0x40] sm:$0xff]
  %v31 = vld [vmem:[%s1 + $0x48] sm:$0xff]
  %v32 = vld [vmem:[%s1 + $0x50] sm:$0xff]
  %v33 = vld [vmem:[%s1 + $0x58] sm:$0xff]
  %v34 = vld [vmem:[%s1 + $0x60] sm:$0xff]
  %v35 = vld [vmem:[%s1 + $0x68] sm:$0xff]
  %v36 = vld [vmem:[%s1 + $0x70] sm:$0xff]
  %v37 = vld [vmem:[%s1 + $0x78] sm:$0xff]
  %v38 = vld [vmem:[%s1 + $0x80] sm:$0xff]
  %v39 = vld [vmem:[%s1 + $0x88] sm:$0xff]
  %v40 = vld [vmem:[%s1 + $0x90] sm:$0xff]
  %v41 = vld [vmem:[%s1 + $0x98] sm:$0xff]
  %v42 = vld [vmem:[%s1 + $0xa0] sm:$0xff]
  %v43 = vld [vmem:[%s1 + $0xa8] sm:$0xff]
  %v44 = vld [vmem:[%s1 + $0xb0] sm:$0xff]
  %v45 = vld [vmem:[%s1 + $0xb8] sm:$0xff]
  %v46 = vld [vmem:[%s1 + $0xc0] sm:$0xff]
  %v47 = vld [vmem:[%s1 + $0xc8] sm:$0xff]
  %v48 = vld [vmem:[%s1 + $0xd0] sm:$0xff]
  %v49 = vld [vmem:[%s1 + $0xd8] sm:$0xff]
  %v50 = vld [vmem:[%s1 + $0xe0] sm:$0xff]
  %v51 = vld [vmem:[%s1 + $0xe8] sm:$0xff]
  %v52 = vld [vmem:[%s1 + $0xf0] sm:$0xff]
  %v53 = vld [vmem:[%s1 + $0xf8] sm:$0xff]
  %v54 = vld [vmem:[%s1 + $0x100] sm:$0xff]
  %v55 = vld [vmem:[%s1 + $0x108] sm:$0xff]
  %v56 = vld [vmem:[%s1 + $0x110] sm:$0xff]
  %v57 = vld [vmem:[%s1 + $0x118] sm:$0xff]
  %v58 = vld [vmem:[%s1 + $0x120] sm:$0xff]
  %v59 = vld [vmem:[%s1 + $0x128] sm:$0xff]
  %v60 = vld [vmem:[%s1 + $0x130] sm:$0xff]
  %v61 = vld [vmem:[%s1 + $0x138] sm:$0xff]
  %v62 = vld [vmem:[%s1 + $0x140] sm:$0xff]
  %v63 = vld [vmem:[%s1 + $0x148] sm:$0xff]
  %v64 = vld [vmem:[%s1 + $0x150] sm:$0xff]
  %v65 = vld [vmem:[%s1 + $0x158] sm:$0xff]
  %v66 = vld [vmem:[%s1 + $0x160] sm:$0xff]
  %v67 = vld [vmem:[%s1 + $0x168] sm:$0xff]
  %v68 = vld [vmem:[%s1 + $0x170] sm:$0xff]
  %v69 = vld [vmem:[%s1 + $0x178] sm:$0xff]
  %v70 = vld [vmem:[%s1 + $0x180] sm:$0xff]
  %v71 = vld [vmem:[%s1 + $0x188] sm:$0xff]
  %v72 = vld [vmem:[%s1 + $0x190] sm:$0xff]
  %v73 = vld [vmem:[%s1 + $0x198] sm:$0xff]
  %v74 = vld [vmem:[%s1 + $0x1a0] sm:$0xff]
  %v75 = vld [vmem:[%s1 + $0x1a8] sm:$0xff]
  %v76 = vld [vmem:[%s1 + $0x1b0] sm:$0xff]
  %v77 = vld [vmem:[%s1 + $0x1b8] sm:$0xff]
  %v78 = vld [vmem:[%s1 + $0x1c0] sm:$0xff]
  %v79 = vld [vmem:[%s1 + $0x1c8] sm:$0xff]
  %v80 = vld [vmem:[%s1 + $0x1d0] sm:$0xff]
  %v81 = vld [vmem:[%s1 + $0x1d8] sm:$0xff]
  %v82 = vld [vmem:[%s1 + $0x1e0] sm:$0xff]
  %v83 = vld [vmem:[%s1 + $0x1e8] sm:$0xff]
  %v84 = vld [vmem:[%s1 + $0x1f0] sm:$0xff]
  %v85 = vld [vmem:[%s1 + $0x1f8] sm:$0xff]
  %v86 = vld [vmem:[%s1 + $0x200] sm:$0xff]
  %v87 = vld [vmem:[%s1 + $0x208] sm:$0xff]
  %v88 = vld [vmem:[%s1 + $0x210] sm:$0xff]
  %v89 = vld [vmem:[%s1 + $0x218] sm:$0xff]
  %v90 = vld [vmem:[%s1 + $0x220] sm:$0xff]
  %v91 = vld [vmem:[%s1 + $0x228] sm:$0xff]
  %v92 = vld [vmem:[%s1 + $0x230] sm:$0xff]
  %v93 = vld [vmem:[%s1 + $0x238] sm:$0xff]
  %v94 = vld [vmem:[%s1 + $0x240] sm:$0xff]
  %v95 = vld [vmem:[%s1 + $0x248] sm:$0xff]
  %v96 = vld [vmem:[%s1 + $0x250] sm:$0xff]
  %v97 = vld [vmem:[%s1 + $0x258] sm:$0xff]
  %v98 = vld [vmem:[%s1 + $0x260] sm:$0xff]
  %v99 = vld [vmem:[%s1 + $0x268] sm:$0xff]
  %v100 = vld [vmem:[%s1 + $0x270] sm:$0xff]
  %v101 = vld [vmem:[%s1 + $0x278] sm:$0xff]
  %v102 = vld [vmem:[%s1 + $0x280] sm:$0xff]
  %v103 = vld [vmem:[%s1 + $0x288] sm:$0xff]
  %v104 = vld [vmem:[%s1 + $0x290] sm:$0xff]
  %v105 = vld [vmem:[%s1 + $0x298] sm:$0xff]
  %v106 = vld [vmem:[%s1 + $0x2a0] sm:$0xff]
  %v107 = vld [vmem:[%s1 + $0x2a8] sm:$0xff]
  %v108 = vld [vmem:[%s1 + $0x2b0] sm:$0xff]
  %v109 = vld [vmem:[%s1 + $0x2b8] sm:$0xff]
  %v110 = vld [vmem:[%s1 + $0x2c0] sm:$0xff]
  %v111 = vld [vmem:[%s1 + $0x2c8] sm:$0xff]
  %v112 = vld [vmem:[%s1 + $0x2d0] sm:$0xff]
  %v113 = vld [vmem:[%s1 + $0x2d8] sm:$0xff]
  %v114 = vld [vmem:[%s1 + $0x2e0] sm:$0xff]
  %v115 = vld [vmem:[%s1 + $0x2e8] sm:$0xff]
  %v116 = vld [vmem:[%s1 + $0x2f0] sm:$0xff]
  %v117 = vld [vmem:[%s1 + $0x2f8] sm:$0xff]
  %v118 = vld [vmem:[%s1 + $0x300] sm:$0xff]
  %v119 = vld [vmem:[%s1 + $0x308] sm:$0xff]
  %v120 = vld [vmem:[%s1 + $0x310] sm:$0xff]
  %v121 = vld [vmem:[%s1 + $0x318] sm:$0xff]
  %v122 = vld [vmem:[%s1 + $0x320] sm:$0xff]
  %v123 = vld [vmem:[%s1 + $0x328] sm:$0xff]
  %v124 = vld [vmem:[%s1 + $0x330] sm:$0xff]
  %v125 = vld [vmem:[%s1 + $0x338] sm:$0xff]
  %v126 = vld [vmem:[%s1 + $0x340] sm:$0xff]
  %v127 = vld [vmem:[%s1 + $0x348] sm:$0xff]
  %v128 = vld [vmem:[%s1 + $0x350] sm:$0xff]
  %v129 = vld [vmem:[%s1 + $0x358] sm:$0xff]
  %v130 = vld [vmem:[%s1 + $0x360] sm:$0xff]
  %v131 = vld [vmem:[%s1 + $0x368] sm:$0xff]
  %v132 = vld [vmem:[%s1 + $0x370] sm:$0xff]
  %v133 = vld [vmem:[%s1 + $0x378] sm:$0xff]
  %v134 = vld [vmem:[%s1 + $0x380] sm:$0xff]
  %v135 = vld [vmem:[%s1 + $0x388] sm:$0xff]
  %v136 = vld [vmem:[%s1 + $0x390] sm:$0xff]
  %v137 = vld [vmem:[%s1 + $0x398] sm:$0xff]
  %v138 = vld [vmem:[%s1 + $0x3a0] sm:$0xff]
  %v139 = vld [vmem:[%s1 + $0x3a8] sm:$0xff]
  %v140 = vld [vmem:[%s1 + $0x3b0] sm:$0xff]
  %v141 = vld [vmem:[%s1 + $0x3b8] sm:$0xff]
  %v142 = vld [vmem:[%s1 + $0x3c0] sm:$0xff]
  %v143 = vld [vmem:[%s1 + $0x3c8] sm:$0xff]
  %v144 = vld [vmem:[%s1 + $0x3d0] sm:$0xff]
  %v145 = vld [vmem:[%s1 + $0x3d8] sm:$0xff]
  %v146 = vld [vmem:[%s1 + $0x3e0] sm:$0xff]
  %v147 = vld [vmem:[%s1 + $0x3e8] sm:$0xff]
  %v148 = vld [vmem:[%s1 + $0x3f0] sm:$0xff]
  %v149 = vld [vmem:[%s1 + $0x3f8] sm:$0xff]
  %v150 = vld [vmem:[%s1 + $0x400] sm:$0xff]
  %v151 = vld [vmem:[%s1 + $0x408] sm:$0xff]
  %v152 = vld [vmem:[%s1 + $0x410] sm:$0xff]
  %v153 = vld [vmem:[%s1 + $0x418] sm:$0xff]
  %v154 = vld [vmem:[%s1 + $0x420] sm:$0xff]
  %v155 = vld [vmem:[%s1 + $0x428] sm:$0xff]
  %v156 = vld [vmem:[%s1 + $0x430] sm:$0xff]
  %v157 = vld [vmem:[%s1 + $0x438] sm:$0xff]
  %v158 = vld [vmem:[%s1 + $0x440] sm:$0xff]
  %v159 = vld [vmem:[%s1 + $0x448] sm:$0xff]
  %v160 = vld [vmem:[%s1 + $0x450] sm:$0xff]
  %v161 = vld [vmem:[%s1 + $0x458] sm:$0xff]
  %v162 = vld [vmem:[%s1 + $0x460] sm:$0xff]
  %v163 = vld [vmem:[%s1 + $0x468] sm:$0xff]
  %v164 = vld [vmem:[%s1 + $0x470] sm:$0xff]
  %v165 = vld [vmem:[%s1 + $0x478] sm:$0xff]
  %v166 = vld [vmem:[%s1 + $0x480] sm:$0xff]
  %v167 = vld [vmem:[%s1 + $0x488] sm:$0xff]
  %v168 = vld [vmem:[%s1 + $0x490] sm:$0xff]
  %v169 = vld [vmem:[%s1 + $0x498] sm:$0xff]
  %v170 = vld [vmem:[%s1 + $0x4a0] sm:$0xff]
  %v171 = vld [vmem:[%s1 + $0x4a8] sm:$0xff]
  %v172 = vld [vmem:[%s1 + $0x4b0] sm:$0xff]
  %v173 = vld [vmem:[%s1 + $0x4b8] sm:$0xff]
  %v174 = vld [vmem:[%s1 + $0x4c0] sm:$0xff]
  %v175 = vld [vmem:[%s1 + $0x4c8] sm:$0xff]
  %v176 = vld [vmem:[%s1 + $0x4d0] sm:$0xff]
  %v177 = vld [vmem:[%s1 + $0x4d8] sm:$0xff]
  %v178 = vld [vmem:[%s1 + $0x4e0] sm:$0xff]
  %v179 = vld [vmem:[%s1 + $0x4e8] sm:$0xff]
  %v180 = vld [vmem:[%s1 + $0x4f0] sm:$0xff]
  %v181 = vld [vmem:[%s1 + $0x4f8] sm:$0xff]
  %v182 = vld [vmem:[%s1 + $0x500] sm:$0xff]
  %v183 = vld [vmem:[%s1 + $0x508] sm:$0xff]
  %v184 = vld [vmem:[%s1 + $0x510] sm:$0xff]
  %v185 = vld [vmem:[%s1 + $0x518] sm:$0xff]
  %v186 = vld [vmem:[%s1 + $0x520] sm:$0xff]
  %v187 = vld [vmem:[%s1 + $0x528] sm:$0xff]
  %v188 = vld [vmem:[%s1 + $0x530] sm:$0xff]
  %v189 = vld [vmem:[%s1 + $0x538] sm:$0xff]
  %v190 = vld [vmem:[%s1 + $0x540] sm:$0xff]
  %v191 = vld [vmem:[%s1 + $0x548] sm:$0xff]
  %v192 = vld [vmem:[%s1 + $0x550] sm:$0xff]
  %v193 = vld [vmem:[%s1 + $0x558] sm:$0xff]
  %v194 = vld [vmem:[%s1 + $0x560] sm:$0xff]
  %v195 = vld [vmem:[%s1 + $0x568] sm:$0xff]
  %v196 = vld [vmem:[%s1 + $0x570] sm:$0xff]
  %v197 = vld [vmem:[%s1 + $0x578] sm:$0xff]
  %v198 = vld [vmem:[%s1 + $0x580] sm:$0xff]
  %v199 = vld [vmem:[%s1 + $0x588] sm:$0xff]
  %v200 = vld [vmem:[%s1 + $0x590] sm:$0xff]
  %v201 = vld [vmem:[%s1 + $0x598] sm:$0xff]
  %v202 = vld [vmem:[%s1 + $0x5a0] sm:$0xff]
  %v203 = vld [vmem:[%s1 + $0x5a8] sm:$0xff]
  %v204 = vld [vmem:[%s1 + $0x5b0] sm:$0xff]
  %v205 = vld [vmem:[%s1 + $0x5b8] sm:$0xff]
  %v206 = vld [vmem:[%s1 + $0x5c0] sm:$0xff]
  %v207 = vld [vmem:[%s1 + $0x5c8] sm:$0xff]
  %v208 = vld [vmem:[%s1 + $0x5d0] sm:$0xff]
  %v209 = vld [vmem:[%s1 + $0x5d8] sm:$0xff]
  %v210 = vld [vmem:[%s1 + $0x5e0] sm:$0xff]
  %v211 = vld [vmem:[%s1 + $0x5e8] sm:$0xff]
  %v212 = vld [vmem:[%s1 + $0x5f0] sm:$0xff]
  %v213 = vld [vmem:[%s1 + $0x5f8] sm:$0xff]
  %v214 = vld [vmem:[%s1 + $0x600] sm:$0xff]
  %v215 = vld [vmem:[%s1 + $0x608] sm:$0xff]
  %v216 = vld [vmem:[%s1 + $0x610] sm:$0xff]
  %v217 = vld [vmem:[%s1 + $0x618] sm:$0xff]
  %v218 = vld [vmem:[%s1 + $0x620] sm:$0xff]
  %v219 = vld [vmem:[%s1 + $0x628] sm:$0xff]
  %v220 = vld [vmem:[%s1 + $0x630] sm:$0xff]
  %v221 = vld [vmem:[%s1 + $0x638] sm:$0xff]
  %v222 = vld [vmem:[%s1 + $0x640] sm:$0xff]
  %v223 = vld [vmem:[%s1 + $0x648] sm:$0xff]
  %v224 = vld [vmem:[%s1 + $0x650] sm:$0xff]
  %v225 = vld [vmem:[%s1 + $0x658] sm:$0xff]
  %v226 = vld [vmem:[%s1 + $0x660] sm:$0xff]
  %v227 = vld [vmem:[%s1 + $0x668] sm:$0xff]
  %v228 = vld [vmem:[%s1 + $0x670] sm:$0xff]
  %v229 = vld [vmem:[%s1 + $0x678] sm:$0xff]
  %v230 = vld [vmem:[%s1 + $0x680] sm:$0xff]
  %v231 = vld [vmem:[%s1 + $0x688] sm:$0xff]
  %v232 = vld [vmem:[%s1 + $0x690] sm:$0xff]
  %v233 = vld [vmem:[%s1 + $0x698] sm:$0xff]
  %v234 = vld [vmem:[%s1 + $0x6a0] sm:$0xff]
  %v235 = vld [vmem:[%s1 + $0x6a8] sm:$0xff]
  %v236 = vld [vmem:[%s1 + $0x6b0] sm:$0xff]
  %v237 = vld [vmem:[%s1 + $0x6b8] sm:$0xff]
  %v238 = vld [vmem:[%s1 + $0x6c0] sm:$0xff]
  %v239 = vld [vmem:[%s1 + $0x6c8] sm:$0xff]
  %v240 = vld [vmem:[%s1 + $0x6d0] sm:$0xff]
  %v241 = vld [vmem:[%s1 + $0x6d8] sm:$0xff]
  %v242 = vld [vmem:[%s1 + $0x6e0] sm:$0xff]
  %v243 = vld [vmem:[%s1 + $0x6e8] sm:$0xff]
  %v244 = vld [vmem:[%s1 + $0x6f0] sm:$0xff]
  %v245 = vld [vmem:[%s1 + $0x6f8] sm:$0xff]
  %v246 = vld [vmem:[%s1 + $0x700] sm:$0xff]
  %v247 = vld [vmem:[%s1 + $0x708] sm:$0xff]
  %v248 = vld [vmem:[%s1 + $0x710] sm:$0xff]
  %v249 = vld [vmem:[%s1 + $0x718] sm:$0xff]
  %v250 = vld [vmem:[%s1 + $0x720] sm:$0xff]
  %v251 = vld [vmem:[%s1 + $0x728] sm:$0xff]
  %v252 = vld [vmem:[%s1 + $0x730] sm:$0xff]
  %v253 = vld [vmem:[%s1 + $0x738] sm:$0xff]
  %v254 = vld [vmem:[%s1 + $0x740] sm:$0xff]
  %v255 = vld [vmem:[%s1 + $0x748] sm:$0xff]
  %v256 = vld [vmem:[%s1 + $0x750] sm:$0xff]
  %v257 = vld [vmem:[%s1 + $0x758] sm:$0xff]
  %v258 = vld [vmem:[%s1 + $0x760] sm:$0xff]
  %v259 = vld [vmem:[%s1 + $0x768] sm:$0xff]
  %v260 = vld [vmem:[%s1 + $0x770] sm:$0xff]
  %v261 = vld [vmem:[%s1 + $0x778] sm:$0xff]
  %v262 = vld [vmem:[%s1 + $0x780] sm:$0xff]
  %v263 = vld [vmem:[%s1 + $0x788] sm:$0xff]
  %v264 = vld [vmem:[%s1 + $0x790] sm:$0xff]
  %v265 = vld [vmem:[%s1 + $0x798] sm:$0xff]
  %v266 = vld [vmem:[%s1 + $0x7a0] sm:$0xff]
  %v267 = vld [vmem:[%s1 + $0x7a8] sm:$0xff]
  %v268 = vld [vmem:[%s1 + $0x7b0] sm:$0xff]
  %v269 = vld [vmem:[%s1 + $0x7b8] sm:$0xff]
  %v270 = vld [vmem:[%s1 + $0x7c0] sm:$0xff]
  %v271 = vld [vmem:[%s1 + $0x7c8] sm:$0xff]
  %v272 = vld [vmem:[%s1 + $0x7d0] sm:$0xff]
  %v273 = vld [vmem:[%s1 + $0x7d8] sm:$0xff]
  %v274 = vld [vmem:[%s1 + $0x7e0] sm:$0xff]
  %v275 = vld [vmem:[%s1 + $0x7e8] sm:$0xff]
  %v276 = vld [vmem:[%s1 + $0x7f0] sm:$0xff]
  %v277 = vld [vmem:[%s1 + $0x7f8] sm:$0xff]
  %v278 = vld [vmem:[%s2] sm:$0x3]
  %v280 = vperm.slane %v278, 0
  %v281 = vperm.slane %v278, 1
  %v292 = vunpack.c.l.b16 %v14
  %v293 = vunpack.c.h.b16 %v14
  %v294 = vunpack.c.l.b16 %v15
  %v295 = vunpack.c.h.b16 %v15
  %v296 = vunpack.c.l.b16 %v16
  %v297 = vunpack.c.h.b16 %v16
  %v298 = vunpack.c.l.b16 %v17
  %v299 = vunpack.c.h.b16 %v17
  %v300 = vunpack.c.l.b16 %v18
  %v301 = vunpack.c.h.b16 %v18
  %v302 = vunpack.c.l.b16 %v19
  %v303 = vunpack.c.h.b16 %v19
  %v304 = vunpack.c.l.b16 %v20
  %v305 = vunpack.c.h.b16 %v20
  %v306 = vunpack.c.l.b16 %v21
  %v307 = vunpack.c.h.b16 %v21
  %v308 = vpack.c.b16 %v292, %v292
  %v309 = vpack.c.b16 %v293, %v293
  %v310 = vpack.c.b16 %v294, %v294
  %v311 = vpack.c.b16 %v295, %v295
  %v312 = vpack.c.b16 %v296, %v296
  %v313 = vpack.c.b16 %v297, %v297
  %v314 = vpack.c.b16 %v298, %v298
  %v315 = vpack.c.b16 %v299, %v299
  %v316 = vpack.c.b16 %v300, %v300
  %v317 = vpack.c.b16 %v301, %v301
  %v318 = vpack.c.b16 %v302, %v302
  %v319 = vpack.c.b16 %v303, %v303
  %v320 = vpack.c.b16 %v304, %v304
  %v321 = vpack.c.b16 %v305, %v305
  %v322 = vpack.c.b16 %v306, %v306
  %v323 = vpack.c.b16 %v307, %v307
  %v596 = vunpack.c.l.b16 %v22
  %v597 = vunpack.c.h.b16 %v22
  %v598 = vunpack.c.l.b16 %v23
  %v599 = vunpack.c.h.b16 %v23
  %v600 = vunpack.c.l.b16 %v24
  %v601 = vunpack.c.h.b16 %v24
  %v602 = vunpack.c.l.b16 %v25
  %v603 = vunpack.c.h.b16 %v25
  %v604 = vunpack.c.l.b16 %v26
  %v605 = vunpack.c.h.b16 %v26
  %v606 = vunpack.c.l.b16 %v27
  %v607 = vunpack.c.h.b16 %v27
  %v608 = vunpack.c.l.b16 %v28
  %v609 = vunpack.c.h.b16 %v28
  %v610 = vunpack.c.l.b16 %v29
  %v611 = vunpack.c.h.b16 %v29
  %v612 = vunpack.c.l.b16 %v30
  %v613 = vunpack.c.h.b16 %v30
  %v614 = vunpack.c.l.b16 %v31
  %v615 = vunpack.c.h.b16 %v31
  %v616 = vunpack.c.l.b16 %v32
  %v617 = vunpack.c.h.b16 %v32
  %v618 = vunpack.c.l.b16 %v33
  %v619 = vunpack.c.h.b16 %v33
  %v620 = vunpack.c.l.b16 %v34
  %v621 = vunpack.c.h.b16 %v34
  %v622 = vunpack.c.l.b16 %v35
  %v623 = vunpack.c.h.b16 %v35
  %v624 = vunpack.c.l.b16 %v36
  %v625 = vunpack.c.h.b16 %v36
  %v626 = vunpack.c.l.b16 %v37
  %v627 = vunpack.c.h.b16 %v37
  %v628 = vunpack.c.l.b16 %v38
  %v629 = vunpack.c.h.b16 %v38
  %v630 = vunpack.c.l.b16 %v39
  %v631 = vunpack.c.h.b16 %v39
  %v632 = vunpack.c.l.b16 %v40
  %v633 = vunpack.c.h.b16 %v40
  %v634 = vunpack.c.l.b16 %v41
  %v635 = vunpack.c.h.b16 %v41
  %v636 = vunpack.c.l.b16 %v42
  %v637 = vunpack.c.h.b16 %v42
  %v638 = vunpack.c.l.b16 %v43
  %v639 = vunpack.c.h.b16 %v43
  %v640 = vunpack.c.l.b16 %v44
  %v641 = vunpack.c.h.b16 %v44
  %v642 = vunpack.c.l.b16 %v45
  %v643 = vunpack.c.h.b16 %v45
  %v644 = vunpack.c.l.b16 %v46
  %v645 = vunpack.c.h.b16 %v46
  %v646 = vunpack.c.l.b16 %v47
  %v647 = vunpack.c.h.b16 %v47
  %v648 = vunpack.c.l.b16 %v48
  %v649 = vunpack.c.h.b16 %v48
  %v650 = vunpack.c.l.b16 %v49
  %v651 = vunpack.c.h.b16 %v49
  %v652 = vunpack.c.l.b16 %v50
  %v653 = vunpack.c.h.b16 %v50
  %v654 = vunpack.c.l.b16 %v51
  %v655 = vunpack.c.h.b16 %v51
  %v656 = vunpack.c.l.b16 %v52
  %v657 = vunpack.c.h.b16 %v52
  %v658 = vunpack.c.l.b16 %v53
  %v659 = vunpack.c.h.b16 %v53
  %v660 = vunpack.c.l.b16 %v54
  %v661 = vunpack.c.h.b16 %v54
  %v662 = vunpack.c.l.b16 %v55
  %v663 = vunpack.c.h.b16 %v55
  %v664 = vunpack.c.l.b16 %v56
  %v665 = vunpack.c.h.b16 %v56
  %v666 = vunpack.c.l.b16 %v57
  %v667 = vunpack.c.h.b16 %v57
  %v668 = vunpack.c.l.b16 %v58
  %v669 = vunpack.c.h.b16 %v58
  %v670 = vunpack.c.l.b16 %v59
  %v671 = vunpack.c.h.b16 %v59
  %v672 = vunpack.c.l.b16 %v60
  %v673 = vunpack.c.h.b16 %v60
  %v674 = vunpack.c.l.b16 %v61
  %v675 = vunpack.c.h.b16 %v61
  %v676 = vunpack.c.l.b16 %v62
  %v677 = vunpack.c.h.b16 %v62
  %v678 = vunpack.c.l.b16 %v63
  %v679 = vunpack.c.h.b16 %v63
  %v680 = vunpack.c.l.b16 %v64
  %v681 = vunpack.c.h.b16 %v64
  %v682 = vunpack.c.l.b16 %v65
  %v683 = vunpack.c.h.b16 %v65
  %v684 = vunpack.c.l.b16 %v66
  %v685 = vunpack.c.h.b16 %v66
  %v686 = vunpack.c.l.b16 %v67
  %v687 = vunpack.c.h.b16 %v67
  %v688 = vunpack.c.l.b16 %v68
  %v689 = vunpack.c.h.b16 %v68
  %v690 = vunpack.c.l.b16 %v69
  %v691 = vunpack.c.h.b16 %v69
  %v692 = vunpack.c.l.b16 %v70
  %v693 = vunpack.c.h.b16 %v70
  %v694 = vunpack.c.l.b16 %v71
  %v695 = vunpack.c.h.b16 %v71
  %v696 = vunpack.c.l.b16 %v72
  %v697 = vunpack.c.h.b16 %v72
  %v698 = vunpack.c.l.b16 %v73
  %v699 = vunpack.c.h.b16 %v73
  %v700 = vunpack.c.l.b16 %v74
  %v701 = vunpack.c.h.b16 %v74
  %v702 = vunpack.c.l.b16 %v75
  %v703 = vunpack.c.h.b16 %v75
  %v704 = vunpack.c.l.b16 %v76
  %v705 = vunpack.c.h.b16 %v76
  %v706 = vunpack.c.l.b16 %v77
  %v707 = vunpack.c.h.b16 %v77
  %v708 = vunpack.c.l.b16 %v78
  %v709 = vunpack.c.h.b16 %v78
  %v710 = vunpack.c.l.b16 %v79
  %v711 = vunpack.c.h.b16 %v79
  %v712 = vunpack.c.l.b16 %v80
  %v713 = vunpack.c.h.b16 %v80
  %v714 = vunpack.c.l.b16 %v81
  %v715 = vunpack.c.h.b16 %v81
  %v716 = vunpack.c.l.b16 %v82
  %v717 = vunpack.c.h.b16 %v82
  %v718 = vunpack.c.l.b16 %v83
  %v719 = vunpack.c.h.b16 %v83
  %v720 = vunpack.c.l.b16 %v84
  %v721 = vunpack.c.h.b16 %v84
  %v722 = vunpack.c.l.b16 %v85
  %v723 = vunpack.c.h.b16 %v85
  %v724 = vunpack.c.l.b16 %v86
  %v725 = vunpack.c.h.b16 %v86
  %v726 = vunpack.c.l.b16 %v87
  %v727 = vunpack.c.h.b16 %v87
  %v728 = vunpack.c.l.b16 %v88
  %v729 = vunpack.c.h.b16 %v88
  %v730 = vunpack.c.l.b16 %v89
  %v731 = vunpack.c.h.b16 %v89
  %v732 = vunpack.c.l.b16 %v90
  %v733 = vunpack.c.h.b16 %v90
  %v734 = vunpack.c.l.b16 %v91
  %v735 = vunpack.c.h.b16 %v91
  %v736 = vunpack.c.l.b16 %v92
  %v737 = vunpack.c.h.b16 %v92
  %v738 = vunpack.c.l.b16 %v93
  %v739 = vunpack.c.h.b16 %v93
  %v740 = vunpack.c.l.b16 %v94
  %v741 = vunpack.c.h.b16 %v94
  %v742 = vunpack.c.l.b16 %v95
  %v743 = vunpack.c.h.b16 %v95
  %v744 = vunpack.c.l.b16 %v96
  %v745 = vunpack.c.h.b16 %v96
  %v746 = vunpack.c.l.b16 %v97
  %v747 = vunpack.c.h.b16 %v97
  %v748 = vunpack.c.l.b16 %v98
  %v749 = vunpack.c.h.b16 %v98
  %v750 = vunpack.c.l.b16 %v99
  %v751 = vunpack.c.h.b16 %v99
  %v752 = vunpack.c.l.b16 %v100
  %v753 = vunpack.c.h.b16 %v100
  %v754 = vunpack.c.l.b16 %v101
  %v755 = vunpack.c.h.b16 %v101
  %v756 = vunpack.c.l.b16 %v102
  %v757 = vunpack.c.h.b16 %v102
  %v758 = vunpack.c.l.b16 %v103
  %v759 = vunpack.c.h.b16 %v103
  %v760 = vunpack.c.l.b16 %v104
  %v761 = vunpack.c.h.b16 %v104
  %v762 = vunpack.c.l.b16 %v105
  %v763 = vunpack.c.h.b16 %v105
  %v764 = vunpack.c.l.b16 %v106
  %v765 = vunpack.c.h.b16 %v106
  %v766 = vunpack.c.l.b16 %v107
  %v767 = vunpack.c.h.b16 %v107
  %v768 = vunpack.c.l.b16 %v108
  %v769 = vunpack.c.h.b16 %v108
  %v770 = vunpack.c.l.b16 %v109
  %v771 = vunpack.c.h.b16 %v109
  %v772 = vunpack.c.l.b16 %v110
  %v773 = vunpack.c.h.b16 %v110
  %v774 = vunpack.c.l.b16 %v111
  %v775 = vunpack.c.h.b16 %v111
  %v776 = vunpack.c.l.b16 %v112
  %v777 = vunpack.c.h.b16 %v112
  %v778 = vunpack.c.l.b16 %v113
  %v779 = vunpack.c.h.b16 %v113
  %v780 = vunpack.c.l.b16 %v114
  %v781 = vunpack.c.h.b16 %v114
  %v782 = vunpack.c.l.b16 %v115
  %v783 = vunpack.c.h.b16 %v115
  %v784 = vunpack.c.l.b16 %v116
  %v785 = vunpack.c.h.b16 %v116
  %v786 = vunpack.c.l.b16 %v117
  %v787 = vunpack.c.h.b16 %v117
  %v788 = vunpack.c.l.b16 %v118
  %v789 = vunpack.c.h.b16 %v118
  %v790 = vunpack.c.l.b16 %v119
  %v791 = vunpack.c.h.b16 %v119
  %v792 = vunpack.c.l.b16 %v120
  %v793 = vunpack.c.h.b16 %v120
  %v794 = vunpack.c.l.b16 %v121
  %v795 = vunpack.c.h.b16 %v121
  %v796 = vunpack.c.l.b16 %v122
  %v797 = vunpack.c.h.b16 %v122
  %v798 = vunpack.c.l.b16 %v123
  %v799 = vunpack.c.h.b16 %v123
  %v800 = vunpack.c.l.b16 %v124
  %v801 = vunpack.c.h.b16 %v124
  %v802 = vunpack.c.l.b16 %v125
  %v803 = vunpack.c.h.b16 %v125
  %v804 = vunpack.c.l.b16 %v126
  %v805 = vunpack.c.h.b16 %v126
  %v806 = vunpack.c.l.b16 %v127
  %v807 = vunpack.c.h.b16 %v127
  %v808 = vunpack.c.l.b16 %v128
  %v809 = vunpack.c.h.b16 %v128
  %v810 = vunpack.c.l.b16 %v129
  %v811 = vunpack.c.h.b16 %v129
  %v812 = vunpack.c.l.b16 %v130
  %v813 = vunpack.c.h.b16 %v130
  %v814 = vunpack.c.l.b16 %v131
  %v815 = vunpack.c.h.b16 %v131
  %v816 = vunpack.c.l.b16 %v132
  %v817 = vunpack.c.h.b16 %v132
  %v818 = vunpack.c.l.b16 %v133
  %v819 = vunpack.c.h.b16 %v133
  %v820 = vunpack.c.l.b16 %v134
  %v821 = vunpack.c.h.b16 %v134
  %v822 = vunpack.c.l.b16 %v135
  %v823 = vunpack.c.h.b16 %v135
  %v824 = vunpack.c.l.b16 %v136
  %v825 = vunpack.c.h.b16 %v136
  %v826 = vunpack.c.l.b16 %v137
  %v827 = vunpack.c.h.b16 %v137
  %v828 = vunpack.c.l.b16 %v138
  %v829 = vunpack.c.h.b16 %v138
  %v830 = vunpack.c.l.b16 %v139
  %v831 = vunpack.c.h.b16 %v139
  %v832 = vunpack.c.l.b16 %v140
  %v833 = vunpack.c.h.b16 %v140
  %v834 = vunpack.c.l.b16 %v141
  %v835 = vunpack.c.h.b16 %v141
  %v836 = vunpack.c.l.b16 %v142
  %v837 = vunpack.c.h.b16 %v142
  %v838 = vunpack.c.l.b16 %v143
  %v839 = vunpack.c.h.b16 %v143
  %v840 = vunpack.c.l.b16 %v144
  %v841 = vunpack.c.h.b16 %v144
  %v842 = vunpack.c.l.b16 %v145
  %v843 = vunpack.c.h.b16 %v145
  %v844 = vunpack.c.l.b16 %v146
  %v845 = vunpack.c.h.b16 %v146
  %v846 = vunpack.c.l.b16 %v147
  %v847 = vunpack.c.h.b16 %v147
  %v848 = vunpack.c.l.b16 %v148
  %v849 = vunpack.c.h.b16 %v148
  %v850 = vunpack.c.l.b16 %v149
  %v851 = vunpack.c.h.b16 %v149
  %v852 = vunpack.c.l.b16 %v150
  %v853 = vunpack.c.h.b16 %v150
  %v854 = vunpack.c.l.b16 %v151
  %v855 = vunpack.c.h.b16 %v151
  %v856 = vunpack.c.l.b16 %v152
  %v857 = vunpack.c.h.b16 %v152
  %v858 = vunpack.c.l.b16 %v153
  %v859 = vunpack.c.h.b16 %v153
  %v860 = vunpack.c.l.b16 %v154
  %v861 = vunpack.c.h.b16 %v154
  %v862 = vunpack.c.l.b16 %v155
  %v863 = vunpack.c.h.b16 %v155
  %v864 = vunpack.c.l.b16 %v156
  %v865 = vunpack.c.h.b16 %v156
  %v866 = vunpack.c.l.b16 %v157
  %v867 = vunpack.c.h.b16 %v157
  %v868 = vunpack.c.l.b16 %v158
  %v869 = vunpack.c.h.b16 %v158
  %v870 = vunpack.c.l.b16 %v159
  %v871 = vunpack.c.h.b16 %v159
  %v872 = vunpack.c.l.b16 %v160
  %v873 = vunpack.c.h.b16 %v160
  %v874 = vunpack.c.l.b16 %v161
  %v875 = vunpack.c.h.b16 %v161
  %v876 = vunpack.c.l.b16 %v162
  %v877 = vunpack.c.h.b16 %v162
  %v878 = vunpack.c.l.b16 %v163
  %v879 = vunpack.c.h.b16 %v163
  %v880 = vunpack.c.l.b16 %v164
  %v881 = vunpack.c.h.b16 %v164
  %v882 = vunpack.c.l.b16 %v165
  %v883 = vunpack.c.h.b16 %v165
  %v884 = vunpack.c.l.b16 %v166
  %v885 = vunpack.c.h.b16 %v166
  %v886 = vunpack.c.l.b16 %v167
  %v887 = vunpack.c.h.b16 %v167
  %v888 = vunpack.c.l.b16 %v168
  %v889 = vunpack.c.h.b16 %v168
  %v890 = vunpack.c.l.b16 %v169
  %v891 = vunpack.c.h.b16 %v169
  %v892 = vunpack.c.l.b16 %v170
  %v893 = vunpack.c.h.b16 %v170
  %v894 = vunpack.c.l.b16 %v171
  %v895 = vunpack.c.h.b16 %v171
  %v896 = vunpack.c.l.b16 %v172
  %v897 = vunpack.c.h.b16 %v172
  %v898 = vunpack.c.l.b16 %v173
  %v899 = vunpack.c.h.b16 %v173
  %v900 = vunpack.c.l.b16 %v174
  %v901 = vunpack.c.h.b16 %v174
  %v902 = vunpack.c.l.b16 %v175
  %v903 = vunpack.c.h.b16 %v175
  %v904 = vunpack.c.l.b16 %v176
  %v905 = vunpack.c.h.b16 %v176
  %v906 = vunpack.c.l.b16 %v177
  %v907 = vunpack.c.h.b16 %v177
  %v908 = vunpack.c.l.b16 %v178
  %v909 = vunpack.c.h.b16 %v178
  %v910 = vunpack.c.l.b16 %v179
  %v911 = vunpack.c.h.b16 %v179
  %v912 = vunpack.c.l.b16 %v180
  %v913 = vunpack.c.h.b16 %v180
  %v914 = vunpack.c.l.b16 %v181
  %v915 = vunpack.c.h.b16 %v181
  %v916 = vunpack.c.l.b16 %v182
  %v917 = vunpack.c.h.b16 %v182
  %v918 = vunpack.c.l.b16 %v183
  %v919 = vunpack.c.h.b16 %v183
  %v920 = vunpack.c.l.b16 %v184
  %v921 = vunpack.c.h.b16 %v184
  %v922 = vunpack.c.l.b16 %v185
  %v923 = vunpack.c.h.b16 %v185
  %v924 = vunpack.c.l.b16 %v186
  %v925 = vunpack.c.h.b16 %v186
  %v926 = vunpack.c.l.b16 %v187
  %v927 = vunpack.c.h.b16 %v187
  %v928 = vunpack.c.l.b16 %v188
  %v929 = vunpack.c.h.b16 %v188
  %v930 = vunpack.c.l.b16 %v189
  %v931 = vunpack.c.h.b16 %v189
  %v932 = vunpack.c.l.b16 %v190
  %v933 = vunpack.c.h.b16 %v190
  %v934 = vunpack.c.l.b16 %v191
  %v935 = vunpack.c.h.b16 %v191
  %v936 = vunpack.c.l.b16 %v192
  %v937 = vunpack.c.h.b16 %v192
  %v938 = vunpack.c.l.b16 %v193
  %v939 = vunpack.c.h.b16 %v193
  %v940 = vunpack.c.l.b16 %v194
  %v941 = vunpack.c.h.b16 %v194
  %v942 = vunpack.c.l.b16 %v195
  %v943 = vunpack.c.h.b16 %v195
  %v944 = vunpack.c.l.b16 %v196
  %v945 = vunpack.c.h.b16 %v196
  %v946 = vunpack.c.l.b16 %v197
  %v947 = vunpack.c.h.b16 %v197
  %v948 = vunpack.c.l.b16 %v198
  %v949 = vunpack.c.h.b16 %v198
  %v950 = vunpack.c.l.b16 %v199
  %v951 = vunpack.c.h.b16 %v199
  %v952 = vunpack.c.l.b16 %v200
  %v953 = vunpack.c.h.b16 %v200
  %v954 = vunpack.c.l.b16 %v201
  %v955 = vunpack.c.h.b16 %v201
  %v956 = vunpack.c.l.b16 %v202
  %v957 = vunpack.c.h.b16 %v202
  %v958 = vunpack.c.l.b16 %v203
  %v959 = vunpack.c.h.b16 %v203
  %v960 = vunpack.c.l.b16 %v204
  %v961 = vunpack.c.h.b16 %v204
  %v962 = vunpack.c.l.b16 %v205
  %v963 = vunpack.c.h.b16 %v205
  %v964 = vunpack.c.l.b16 %v206
  %v965 = vunpack.c.h.b16 %v206
  %v966 = vunpack.c.l.b16 %v207
  %v967 = vunpack.c.h.b16 %v207
  %v968 = vunpack.c.l.b16 %v208
  %v969 = vunpack.c.h.b16 %v208
  %v970 = vunpack.c.l.b16 %v209
  %v971 = vunpack.c.h.b16 %v209
  %v972 = vunpack.c.l.b16 %v210
  %v973 = vunpack.c.h.b16 %v210
  %v974 = vunpack.c.l.b16 %v211
  %v975 = vunpack.c.h.b16 %v211
  %v976 = vunpack.c.l.b16 %v212
  %v977 = vunpack.c.h.b16 %v212
  %v978 = vunpack.c.l.b16 %v213
  %v979 = vunpack.c.h.b16 %v213
  %v980 = vunpack.c.l.b16 %v214
  %v981 = vunpack.c.h.b16 %v214
  %v982 = vunpack.c.l.b16 %v215
  %v983 = vunpack.c.h.b16 %v215
  %v984 = vunpack.c.l.b16 %v216
  %v985 = vunpack.c.h.b16 %v216
  %v986 = vunpack.c.l.b16 %v217
  %v987 = vunpack.c.h.b16 %v217
  %v988 = vunpack.c.l.b16 %v218
  %v989 = vunpack.c.h.b16 %v218
  %v990 = vunpack.c.l.b16 %v219
  %v991 = vunpack.c.h.b16 %v219
  %v992 = vunpack.c.l.b16 %v220
  %v993 = vunpack.c.h.b16 %v220
  %v994 = vunpack.c.l.b16 %v221
  %v995 = vunpack.c.h.b16 %v221
  %v996 = vunpack.c.l.b16 %v222
  %v997 = vunpack.c.h.b16 %v222
  %v998 = vunpack.c.l.b16 %v223
  %v999 = vunpack.c.h.b16 %v223
  %v1000 = vunpack.c.l.b16 %v224
  %v1001 = vunpack.c.h.b16 %v224
  %v1002 = vunpack.c.l.b16 %v225
  %v1003 = vunpack.c.h.b16 %v225
  %v1004 = vunpack.c.l.b16 %v226
  %v1005 = vunpack.c.h.b16 %v226
  %v1006 = vunpack.c.l.b16 %v227
  %v1007 = vunpack.c.h.b16 %v227
  %v1008 = vunpack.c.l.b16 %v228
  %v1009 = vunpack.c.h.b16 %v228
  %v1010 = vunpack.c.l.b16 %v229
  %v1011 = vunpack.c.h.b16 %v229
  %v1012 = vunpack.c.l.b16 %v230
  %v1013 = vunpack.c.h.b16 %v230
  %v1014 = vunpack.c.l.b16 %v231
  %v1015 = vunpack.c.h.b16 %v231
  %v1016 = vunpack.c.l.b16 %v232
  %v1017 = vunpack.c.h.b16 %v232
  %v1018 = vunpack.c.l.b16 %v233
  %v1019 = vunpack.c.h.b16 %v233
  %v1020 = vunpack.c.l.b16 %v234
  %v1021 = vunpack.c.h.b16 %v234
  %v1022 = vunpack.c.l.b16 %v235
  %v1023 = vunpack.c.h.b16 %v235
  %v1024 = vunpack.c.l.b16 %v236
  %v1025 = vunpack.c.h.b16 %v236
  %v1026 = vunpack.c.l.b16 %v237
  %v1027 = vunpack.c.h.b16 %v237
  %v1028 = vunpack.c.l.b16 %v238
  %v1029 = vunpack.c.h.b16 %v238
  %v1030 = vunpack.c.l.b16 %v239
  %v1031 = vunpack.c.h.b16 %v239
  %v1032 = vunpack.c.l.b16 %v240
  %v1033 = vunpack.c.h.b16 %v240
  %v1034 = vunpack.c.l.b16 %v241
  %v1035 = vunpack.c.h.b16 %v241
  %v1036 = vunpack.c.l.b16 %v242
  %v1037 = vunpack.c.h.b16 %v242
  %v1038 = vunpack.c.l.b16 %v243
  %v1039 = vunpack.c.h.b16 %v243
  %v1040 = vunpack.c.l.b16 %v244
  %v1041 = vunpack.c.h.b16 %v244
  %v1042 = vunpack.c.l.b16 %v245
  %v1043 = vunpack.c.h.b16 %v245
  %v1044 = vunpack.c.l.b16 %v246
  %v1045 = vunpack.c.h.b16 %v246
  %v1046 = vunpack.c.l.b16 %v247
  %v1047 = vunpack.c.h.b16 %v247
  %v1048 = vunpack.c.l.b16 %v248
  %v1049 = vunpack.c.h.b16 %v248
  %v1050 = vunpack.c.l.b16 %v249
  %v1051 = vunpack.c.h.b16 %v249
  %v1052 = vunpack.c.l.b16 %v250
  %v1053 = vunpack.c.h.b16 %v250
  %v1054 = vunpack.c.l.b16 %v251
  %v1055 = vunpack.c.h.b16 %v251
  %v1056 = vunpack.c.l.b16 %v252
  %v1057 = vunpack.c.h.b16 %v252
  %v1058 = vunpack.c.l.b16 %v253
  %v1059 = vunpack.c.h.b16 %v253
  %v1060 = vunpack.c.l.b16 %v254
  %v1061 = vunpack.c.h.b16 %v254
  %v1062 = vunpack.c.l.b16 %v255
  %v1063 = vunpack.c.h.b16 %v255
  %v1064 = vunpack.c.l.b16 %v256
  %v1065 = vunpack.c.h.b16 %v256
  %v1066 = vunpack.c.l.b16 %v257
  %v1067 = vunpack.c.h.b16 %v257
  %v1068 = vunpack.c.l.b16 %v258
  %v1069 = vunpack.c.h.b16 %v258
  %v1070 = vunpack.c.l.b16 %v259
  %v1071 = vunpack.c.h.b16 %v259
  %v1072 = vunpack.c.l.b16 %v260
  %v1073 = vunpack.c.h.b16 %v260
  %v1074 = vunpack.c.l.b16 %v261
  %v1075 = vunpack.c.h.b16 %v261
  %v1076 = vunpack.c.l.b16 %v262
  %v1077 = vunpack.c.h.b16 %v262
  %v1078 = vunpack.c.l.b16 %v263
  %v1079 = vunpack.c.h.b16 %v263
  %v1080 = vunpack.c.l.b16 %v264
  %v1081 = vunpack.c.h.b16 %v264
  %v1082 = vunpack.c.l.b16 %v265
  %v1083 = vunpack.c.h.b16 %v265
  %v1084 = vunpack.c.l.b16 %v266
  %v1085 = vunpack.c.h.b16 %v266
  %v1086 = vunpack.c.l.b16 %v267
  %v1087 = vunpack.c.h.b16 %v267
  %v1088 = vunpack.c.l.b16 %v268
  %v1089 = vunpack.c.h.b16 %v268
  %v1090 = vunpack.c.l.b16 %v269
  %v1091 = vunpack.c.h.b16 %v269
  %v1092 = vunpack.c.l.b16 %v270
  %v1093 = vunpack.c.h.b16 %v270
  %v1094 = vunpack.c.l.b16 %v271
  %v1095 = vunpack.c.h.b16 %v271
  %v1096 = vunpack.c.l.b16 %v272
  %v1097 = vunpack.c.h.b16 %v272
  %v1098 = vunpack.c.l.b16 %v273
  %v1099 = vunpack.c.h.b16 %v273
  %v1100 = vunpack.c.l.b16 %v274
  %v1101 = vunpack.c.h.b16 %v274
  %v1102 = vunpack.c.l.b16 %v275
  %v1103 = vunpack.c.h.b16 %v275
  %v1104 = vunpack.c.l.b16 %v276
  %v1105 = vunpack.c.h.b16 %v276
  %v1106 = vunpack.c.l.b16 %v277
  %v1107 = vunpack.c.h.b16 %v277
  %v1108 = vpack.c.b16 %v598, %v596
  %v1109 = vpack.c.b16 %v599, %v597
  %v1110 = vpack.c.b16 %v602, %v600
  %v1111 = vpack.c.b16 %v603, %v601
  %v1112 = vpack.c.b16 %v606, %v604
  %v1113 = vpack.c.b16 %v607, %v605
  %v1114 = vpack.c.b16 %v610, %v608
  %v1115 = vpack.c.b16 %v611, %v609
  %v1116 = vpack.c.b16 %v614, %v612
  %v1117 = vpack.c.b16 %v615, %v613
  %v1118 = vpack.c.b16 %v618, %v616
  %v1119 = vpack.c.b16 %v619, %v617
  %v1120 = vpack.c.b16 %v622, %v620
  %v1121 = vpack.c.b16 %v623, %v621
  %v1122 = vpack.c.b16 %v626, %v624
  %v1123 = vpack.c.b16 %v627, %v625
  %v1124 = vpack.c.b16 %v630, %v628
  %v1125 = vpack.c.b16 %v631, %v629
  %v1126 = vpack.c.b16 %v634, %v632
  %v1127 = vpack.c.b16 %v635, %v633
  %v1128 = vpack.c.b16 %v638, %v636
  %v1129 = vpack.c.b16 %v639, %v637
  %v1130 = vpack.c.b16 %v642, %v640
  %v1131 = vpack.c.b16 %v643, %v641
  %v1132 = vpack.c.b16 %v646, %v644
  %v1133 = vpack.c.b16 %v647, %v645
  %v1134 = vpack.c.b16 %v650, %v648
  %v1135 = vpack.c.b16 %v651, %v649
  %v1136 = vpack.c.b16 %v654, %v652
  %v1137 = vpack.c.b16 %v655, %v653
  %v1138 = vpack.c.b16 %v658, %v656
  %v1139 = vpack.c.b16 %v659, %v657
  %v1140 = vpack.c.b16 %v662, %v660
  %v1141 = vpack.c.b16 %v663, %v661
  %v1142 = vpack.c.b16 %v666, %v664
  %v1143 = vpack.c.b16 %v667, %v665
  %v1144 = vpack.c.b16 %v670, %v668
  %v1145 = vpack.c.b16 %v671, %v669
  %v1146 = vpack.c.b16 %v674, %v672
  %v1147 = vpack.c.b16 %v675, %v673
  %v1148 = vpack.c.b16 %v678, %v676
  %v1149 = vpack.c.b16 %v679, %v677
  %v1150 = vpack.c.b16 %v682, %v680
  %v1151 = vpack.c.b16 %v683, %v681
  %v1152 = vpack.c.b16 %v686, %v684
  %v1153 = vpack.c.b16 %v687, %v685
  %v1154 = vpack.c.b16 %v690, %v688
  %v1155 = vpack.c.b16 %v691, %v689
  %v1156 = vpack.c.b16 %v694, %v692
  %v1157 = vpack.c.b16 %v695, %v693
  %v1158 = vpack.c.b16 %v698, %v696
  %v1159 = vpack.c.b16 %v699, %v697
  %v1160 = vpack.c.b16 %v702, %v700
  %v1161 = vpack.c.b16 %v703, %v701
  %v1162 = vpack.c.b16 %v706, %v704
  %v1163 = vpack.c.b16 %v707, %v705
  %v1164 = vpack.c.b16 %v710, %v708
  %v1165 = vpack.c.b16 %v711, %v709
  %v1166 = vpack.c.b16 %v714, %v712
  %v1167 = vpack.c.b16 %v715, %v713
  %v1168 = vpack.c.b16 %v718, %v716
  %v1169 = vpack.c.b16 %v719, %v717
  %v1170 = vpack.c.b16 %v722, %v720
  %v1171 = vpack.c.b16 %v723, %v721
  %v1172 = vpack.c.b16 %v726, %v724
  %v1173 = vpack.c.b16 %v727, %v725
  %v1174 = vpack.c.b16 %v730, %v728
  %v1175 = vpack.c.b16 %v731, %v729
  %v1176 = vpack.c.b16 %v734, %v732
  %v1177 = vpack.c.b16 %v735, %v733
  %v1178 = vpack.c.b16 %v738, %v736
  %v1179 = vpack.c.b16 %v739, %v737
  %v1180 = vpack.c.b16 %v742, %v740
  %v1181 = vpack.c.b16 %v743, %v741
  %v1182 = vpack.c.b16 %v746, %v744
  %v1183 = vpack.c.b16 %v747, %v745
  %v1184 = vpack.c.b16 %v750, %v748
  %v1185 = vpack.c.b16 %v751, %v749
  %v1186 = vpack.c.b16 %v754, %v752
  %v1187 = vpack.c.b16 %v755, %v753
  %v1188 = vpack.c.b16 %v758, %v756
  %v1189 = vpack.c.b16 %v759, %v757
  %v1190 = vpack.c.b16 %v762, %v760
  %v1191 = vpack.c.b16 %v763, %v761
  %v1192 = vpack.c.b16 %v766, %v764
  %v1193 = vpack.c.b16 %v767, %v765
  %v1194 = vpack.c.b16 %v770, %v768
  %v1195 = vpack.c.b16 %v771, %v769
  %v1196 = vpack.c.b16 %v774, %v772
  %v1197 = vpack.c.b16 %v775, %v773
  %v1198 = vpack.c.b16 %v778, %v776
  %v1199 = vpack.c.b16 %v779, %v777
  %v1200 = vpack.c.b16 %v782, %v780
  %v1201 = vpack.c.b16 %v783, %v781
  %v1202 = vpack.c.b16 %v786, %v784
  %v1203 = vpack.c.b16 %v787, %v785
  %v1204 = vpack.c.b16 %v790, %v788
  %v1205 = vpack.c.b16 %v791, %v789
  %v1206 = vpack.c.b16 %v794, %v792
  %v1207 = vpack.c.b16 %v795, %v793
  %v1208 = vpack.c.b16 %v798, %v796
  %v1209 = vpack.c.b16 %v799, %v797
  %v1210 = vpack.c.b16 %v802, %v800
  %v1211 = vpack.c.b16 %v803, %v801
  %v1212 = vpack.c.b16 %v806, %v804
  %v1213 = vpack.c.b16 %v807, %v805
  %v1214 = vpack.c.b16 %v810, %v808
  %v1215 = vpack.c.b16 %v811, %v809
  %v1216 = vpack.c.b16 %v814, %v812
  %v1217 = vpack.c.b16 %v815, %v813
  %v1218 = vpack.c.b16 %v818, %v816
  %v1219 = vpack.c.b16 %v819, %v817
  %v1220 = vpack.c.b16 %v822, %v820
  %v1221 = vpack.c.b16 %v823, %v821
  %v1222 = vpack.c.b16 %v826, %v824
  %v1223 = vpack.c.b16 %v827, %v825
  %v1224 = vpack.c.b16 %v830, %v828
  %v1225 = vpack.c.b16 %v831, %v829
  %v1226 = vpack.c.b16 %v834, %v832
  %v1227 = vpack.c.b16 %v835, %v833
  %v1228 = vpack.c.b16 %v838, %v836
  %v1229 = vpack.c.b16 %v839, %v837
  %v1230 = vpack.c.b16 %v842, %v840
  %v1231 = vpack.c.b16 %v843, %v841
  %v1232 = vpack.c.b16 %v846, %v844
  %v1233 = vpack.c.b16 %v847, %v845
  %v1234 = vpack.c.b16 %v850, %v848
  %v1235 = vpack.c.b16 %v851, %v849
  %v1236 = vpack.c.b16 %v854, %v852
  %v1237 = vpack.c.b16 %v855, %v853
  %v1238 = vpack.c.b16 %v858, %v856
  %v1239 = vpack.c.b16 %v859, %v857
  %v1240 = vpack.c.b16 %v862, %v860
  %v1241 = vpack.c.b16 %v863, %v861
  %v1242 = vpack.c.b16 %v866, %v864
  %v1243 = vpack.c.b16 %v867, %v865
  %v1244 = vpack.c.b16 %v870, %v868
  %v1245 = vpack.c.b16 %v871, %v869
  %v1246 = vpack.c.b16 %v874, %v872
  %v1247 = vpack.c.b16 %v875, %v873
  %v1248 = vpack.c.b16 %v878, %v876
  %v1249 = vpack.c.b16 %v879, %v877
  %v1250 = vpack.c.b16 %v882, %v880
  %v1251 = vpack.c.b16 %v883, %v881
  %v1252 = vpack.c.b16 %v886, %v884
  %v1253 = vpack.c.b16 %v887, %v885
  %v1254 = vpack.c.b16 %v890, %v888
  %v1255 = vpack.c.b16 %v891, %v889
  %v1256 = vpack.c.b16 %v894, %v892
  %v1257 = vpack.c.b16 %v895, %v893
  %v1258 = vpack.c.b16 %v898, %v896
  %v1259 = vpack.c.b16 %v899, %v897
  %v1260 = vpack.c.b16 %v902, %v900
  %v1261 = vpack.c.b16 %v903, %v901
  %v1262 = vpack.c.b16 %v906, %v904
  %v1263 = vpack.c.b16 %v907, %v905
  %v1264 = vpack.c.b16 %v910, %v908
  %v1265 = vpack.c.b16 %v911, %v909
  %v1266 = vpack.c.b16 %v914, %v912
  %v1267 = vpack.c.b16 %v915, %v913
  %v1268 = vpack.c.b16 %v918, %v916
  %v1269 = vpack.c.b16 %v919, %v917
  %v1270 = vpack.c.b16 %v922, %v920
  %v1271 = vpack.c.b16 %v923, %v921
  %v1272 = vpack.c.b16 %v926, %v924
  %v1273 = vpack.c.b16 %v927, %v925
  %v1274 = vpack.c.b16 %v930, %v928
  %v1275 = vpack.c.b16 %v931, %v929
  %v1276 = vpack.c.b16 %v934, %v932
  %v1277 = vpack.c.b16 %v935, %v933
  %v1278 = vpack.c.b16 %v938, %v936
  %v1279 = vpack.c.b16 %v939, %v937
  %v1280 = vpack.c.b16 %v942, %v940
  %v1281 = vpack.c.b16 %v943, %v941
  %v1282 = vpack.c.b16 %v946, %v944
  %v1283 = vpack.c.b16 %v947, %v945
  %v1284 = vpack.c.b16 %v950, %v948
  %v1285 = vpack.c.b16 %v951, %v949
  %v1286 = vpack.c.b16 %v954, %v952
  %v1287 = vpack.c.b16 %v955, %v953
  %v1288 = vpack.c.b16 %v958, %v956
  %v1289 = vpack.c.b16 %v959, %v957
  %v1290 = vpack.c.b16 %v962, %v960
  %v1291 = vpack.c.b16 %v963, %v961
  %v1292 = vpack.c.b16 %v966, %v964
  %v1293 = vpack.c.b16 %v967, %v965
  %v1294 = vpack.c.b16 %v970, %v968
  %v1295 = vpack.c.b16 %v971, %v969
  %v1296 = vpack.c.b16 %v974, %v972
  %v1297 = vpack.c.b16 %v975, %v973
  %v1298 = vpack.c.b16 %v978, %v976
  %v1299 = vpack.c.b16 %v979, %v977
  %v1300 = vpack.c.b16 %v982, %v980
  %v1301 = vpack.c.b16 %v983, %v981
  %v1302 = vpack.c.b16 %v986, %v984
  %v1303 = vpack.c.b16 %v987, %v985
  %v1304 = vpack.c.b16 %v990, %v988
  %v1305 = vpack.c.b16 %v991, %v989
  %v1306 = vpack.c.b16 %v994, %v992
  %v1307 = vpack.c.b16 %v995, %v993
  %v1308 = vpack.c.b16 %v998, %v996
  %v1309 = vpack.c.b16 %v999, %v997
  %v1310 = vpack.c.b16 %v1002, %v1000
  %v1311 = vpack.c.b16 %v1003, %v1001
  %v1312 = vpack.c.b16 %v1006, %v1004
  %v1313 = vpack.c.b16 %v1007, %v1005
  %v1314 = vpack.c.b16 %v1010, %v1008
  %v1315 = vpack.c.b16 %v1011, %v1009
  %v1316 = vpack.c.b16 %v1014, %v1012
  %v1317 = vpack.c.b16 %v1015, %v1013
  %v1318 = vpack.c.b16 %v1018, %v1016
  %v1319 = vpack.c.b16 %v1019, %v1017
  %v1320 = vpack.c.b16 %v1022, %v1020
  %v1321 = vpack.c.b16 %v1023, %v1021
  %v1322 = vpack.c.b16 %v1026, %v1024
  %v1323 = vpack.c.b16 %v1027, %v1025
  %v1324 = vpack.c.b16 %v1030, %v1028
  %v1325 = vpack.c.b16 %v1031, %v1029
  %v1326 = vpack.c.b16 %v1034, %v1032
  %v1327 = vpack.c.b16 %v1035, %v1033
  %v1328 = vpack.c.b16 %v1038, %v1036
  %v1329 = vpack.c.b16 %v1039, %v1037
  %v1330 = vpack.c.b16 %v1042, %v1040
  %v1331 = vpack.c.b16 %v1043, %v1041
  %v1332 = vpack.c.b16 %v1046, %v1044
  %v1333 = vpack.c.b16 %v1047, %v1045
  %v1334 = vpack.c.b16 %v1050, %v1048
  %v1335 = vpack.c.b16 %v1051, %v1049
  %v1336 = vpack.c.b16 %v1054, %v1052
  %v1337 = vpack.c.b16 %v1055, %v1053
  %v1338 = vpack.c.b16 %v1058, %v1056
  %v1339 = vpack.c.b16 %v1059, %v1057
  %v1340 = vpack.c.b16 %v1062, %v1060
  %v1341 = vpack.c.b16 %v1063, %v1061
  %v1342 = vpack.c.b16 %v1066, %v1064
  %v1343 = vpack.c.b16 %v1067, %v1065
  %v1344 = vpack.c.b16 %v1070, %v1068
  %v1345 = vpack.c.b16 %v1071, %v1069
  %v1346 = vpack.c.b16 %v1074, %v1072
  %v1347 = vpack.c.b16 %v1075, %v1073
  %v1348 = vpack.c.b16 %v1078, %v1076
  %v1349 = vpack.c.b16 %v1079, %v1077
  %v1350 = vpack.c.b16 %v1082, %v1080
  %v1351 = vpack.c.b16 %v1083, %v1081
  %v1352 = vpack.c.b16 %v1086, %v1084
  %v1353 = vpack.c.b16 %v1087, %v1085
  %v1354 = vpack.c.b16 %v1090, %v1088
  %v1355 = vpack.c.b16 %v1091, %v1089
  %v1356 = vpack.c.b16 %v1094, %v1092
  %v1357 = vpack.c.b16 %v1095, %v1093
  %v1358 = vpack.c.b16 %v1098, %v1096
  %v1359 = vpack.c.b16 %v1099, %v1097
  %v1360 = vpack.c.b16 %v1102, %v1100
  %v1361 = vpack.c.b16 %v1103, %v1101
  %v1362 = vpack.c.b16 %v1106, %v1104
  %v1363 = vpack.c.b16 %v1107, %v1105
  %1620 = vmatpush.bf16.msra.mxu0 %v1122
  %1621 = vmatpush.bf16.msra.mxu0 %v1120
  %1622 = vmatpush.bf16.msra.mxu0 %v1118
  %1623 = vmatpush.bf16.msra.mxu0 %v1116
  %1624 = vmatpush.bf16.msra.mxu0 %v1114
  %1625 = vmatpush.bf16.msra.mxu0 %v1112
  %1626 = vmatpush.bf16.msra.mxu0 %v1110
  %1627 = vmatpush.bf16.msra.mxu0 %v1108
  %1628 = vmatmul.bf16.gmra.mxu0 %v308
  %v1629 = vpop.f32.mrf.mxu0
  %v1630 = vadd.f32 %v280, %v1629
  %v1631 = vpop.f32.mrf.mxu0
  %1632 = vdwg.mxu0
  %1633 = vmatpush.bf16.msra.mxu0 %v1138
  %1634 = vmatpush.bf16.msra.mxu0 %v1136
  %1635 = vmatpush.bf16.msra.mxu0 %v1134
  %1636 = vmatpush.bf16.msra.mxu0 %v1132
  %1637 = vmatpush.bf16.msra.mxu0 %v1130
  %1638 = vmatpush.bf16.msra.mxu0 %v1128
  %1639 = vmatpush.bf16.msra.mxu0 %v1126
  %1640 = vmatpush.bf16.msra.mxu0 %v1124
  %1641 = vmatmul.bf16.gmra.mxu0 %v309
  %v1642 = vpop.f32.mrf.mxu0
  %v1643 = vadd.f32 %v1630, %v1642
  %v1644 = vpop.f32.mrf.mxu0
  %1645 = vdwg.mxu0
  %1646 = vmatpush.bf16.msra.mxu0 %v1154
  %1647 = vmatpush.bf16.msra.mxu0 %v1152
  %1648 = vmatpush.bf16.msra.mxu0 %v1150
  %1649 = vmatpush.bf16.msra.mxu0 %v1148
  %1650 = vmatpush.bf16.msra.mxu0 %v1146
  %1651 = vmatpush.bf16.msra.mxu0 %v1144
  %1652 = vmatpush.bf16.msra.mxu0 %v1142
  %1653 = vmatpush.bf16.msra.mxu0 %v1140
  %1654 = vmatmul.bf16.gmra.mxu0 %v310
  %v1655 = vpop.f32.mrf.mxu0
  %v1656 = vadd.f32 %v1643, %v1655
  %v1657 = vpop.f32.mrf.mxu0
  %1658 = vdwg.mxu0
  %1659 = vmatpush.bf16.msra.mxu0 %v1170
  %1660 = vmatpush.bf16.msra.mxu0 %v1168
  %1661 = vmatpush.bf16.msra.mxu0 %v1166
  %1662 = vmatpush.bf16.msra.mxu0 %v1164
  %1663 = vmatpush.bf16.msra.mxu0 %v1162
  %1664 = vmatpush.bf16.msra.mxu0 %v1160
  %1665 = vmatpush.bf16.msra.mxu0 %v1158
  %1666 = vmatpush.bf16.msra.mxu0 %v1156
  %1667 = vmatmul.bf16.gmra.mxu0 %v311
  %v1668 = vpop.f32.mrf.mxu0
  %v1669 = vadd.f32 %v1656, %v1668
  %v1670 = vpop.f32.mrf.mxu0
  %1671 = vdwg.mxu0
  %1672 = vmatpush.bf16.msra.mxu0 %v1186
  %1673 = vmatpush.bf16.msra.mxu0 %v1184
  %1674 = vmatpush.bf16.msra.mxu0 %v1182
  %1675 = vmatpush.bf16.msra.mxu0 %v1180
  %1676 = vmatpush.bf16.msra.mxu0 %v1178
  %1677 = vmatpush.bf16.msra.mxu0 %v1176
  %1678 = vmatpush.bf16.msra.mxu0 %v1174
  %1679 = vmatpush.bf16.msra.mxu0 %v1172
  %1680 = vmatmul.bf16.gmra.mxu0 %v312
  %v1681 = vpop.f32.mrf.mxu0
  %v1682 = vadd.f32 %v1669, %v1681
  %v1683 = vpop.f32.mrf.mxu0
  %1684 = vdwg.mxu0
  %1685 = vmatpush.bf16.msra.mxu0 %v1202
  %1686 = vmatpush.bf16.msra.mxu0 %v1200
  %1687 = vmatpush.bf16.msra.mxu0 %v1198
  %1688 = vmatpush.bf16.msra.mxu0 %v1196
  %1689 = vmatpush.bf16.msra.mxu0 %v1194
  %1690 = vmatpush.bf16.msra.mxu0 %v1192
  %1691 = vmatpush.bf16.msra.mxu0 %v1190
  %1692 = vmatpush.bf16.msra.mxu0 %v1188
  %1693 = vmatmul.bf16.gmra.mxu0 %v313
  %v1694 = vpop.f32.mrf.mxu0
  %v1695 = vadd.f32 %v1682, %v1694
  %v1696 = vpop.f32.mrf.mxu0
  %1697 = vdwg.mxu0
  %1698 = vmatpush.bf16.msra.mxu0 %v1218
  %1699 = vmatpush.bf16.msra.mxu0 %v1216
  %1700 = vmatpush.bf16.msra.mxu0 %v1214
  %1701 = vmatpush.bf16.msra.mxu0 %v1212
  %1702 = vmatpush.bf16.msra.mxu0 %v1210
  %1703 = vmatpush.bf16.msra.mxu0 %v1208
  %1704 = vmatpush.bf16.msra.mxu0 %v1206
  %1705 = vmatpush.bf16.msra.mxu0 %v1204
  %1706 = vmatmul.bf16.gmra.mxu0 %v314
  %v1707 = vpop.f32.mrf.mxu0
  %v1708 = vadd.f32 %v1695, %v1707
  %v1709 = vpop.f32.mrf.mxu0
  %1710 = vdwg.mxu0
  %1711 = vmatpush.bf16.msra.mxu0 %v1234
  %1712 = vmatpush.bf16.msra.mxu0 %v1232
  %1713 = vmatpush.bf16.msra.mxu0 %v1230
  %1714 = vmatpush.bf16.msra.mxu0 %v1228
  %1715 = vmatpush.bf16.msra.mxu0 %v1226
  %1716 = vmatpush.bf16.msra.mxu0 %v1224
  %1717 = vmatpush.bf16.msra.mxu0 %v1222
  %1718 = vmatpush.bf16.msra.mxu0 %v1220
  %1719 = vmatmul.bf16.gmra.mxu0 %v315
  %v1720 = vpop.f32.mrf.mxu0
  %v1721 = vadd.f32 %v1708, %v1720
  %v1722 = vpop.f32.mrf.mxu0
  %1723 = vdwg.mxu0
  %1724 = vmatpush.bf16.msra.mxu0 %v1250
  %1725 = vmatpush.bf16.msra.mxu0 %v1248
  %1726 = vmatpush.bf16.msra.mxu0 %v1246
  %1727 = vmatpush.bf16.msra.mxu0 %v1244
  %1728 = vmatpush.bf16.msra.mxu0 %v1242
  %1729 = vmatpush.bf16.msra.mxu0 %v1240
  %1730 = vmatpush.bf16.msra.mxu0 %v1238
  %1731 = vmatpush.bf16.msra.mxu0 %v1236
  %1732 = vmatmul.bf16.gmra.mxu0 %v316
  %v1733 = vpop.f32.mrf.mxu0
  %v1734 = vadd.f32 %v1721, %v1733
  %v1735 = vpop.f32.mrf.mxu0
  %1736 = vdwg.mxu0
  %1737 = vmatpush.bf16.msra.mxu0 %v1266
  %1738 = vmatpush.bf16.msra.mxu0 %v1264
  %1739 = vmatpush.bf16.msra.mxu0 %v1262
  %1740 = vmatpush.bf16.msra.mxu0 %v1260
  %1741 = vmatpush.bf16.msra.mxu0 %v1258
  %1742 = vmatpush.bf16.msra.mxu0 %v1256
  %1743 = vmatpush.bf16.msra.mxu0 %v1254
  %1744 = vmatpush.bf16.msra.mxu0 %v1252
  %1745 = vmatmul.bf16.gmra.mxu0 %v317
  %v1746 = vpop.f32.mrf.mxu0
  %v1747 = vadd.f32 %v1734, %v1746
  %v1748 = vpop.f32.mrf.mxu0
  %1749 = vdwg.mxu0
  %1750 = vmatpush.bf16.msra.mxu0 %v1282
  %1751 = vmatpush.bf16.msra.mxu0 %v1280
  %1752 = vmatpush.bf16.msra.mxu0 %v1278
  %1753 = vmatpush.bf16.msra.mxu0 %v1276
  %1754 = vmatpush.bf16.msra.mxu0 %v1274
  %1755 = vmatpush.bf16.msra.mxu0 %v1272
  %1756 = vmatpush.bf16.msra.mxu0 %v1270
  %1757 = vmatpush.bf16.msra.mxu0 %v1268
  %1758 = vmatmul.bf16.gmra.mxu0 %v318
  %v1759 = vpop.f32.mrf.mxu0
  %v1760 = vadd.f32 %v1747, %v1759
  %v1761 = vpop.f32.mrf.mxu0
  %1762 = vdwg.mxu0
  %1763 = vmatpush.bf16.msra.mxu0 %v1298
  %1764 = vmatpush.bf16.msra.mxu0 %v1296
  %1765 = vmatpush.bf16.msra.mxu0 %v1294
  %1766 = vmatpush.bf16.msra.mxu0 %v1292
  %1767 = vmatpush.bf16.msra.mxu0 %v1290
  %1768 = vmatpush.bf16.msra.mxu0 %v1288
  %1769 = vmatpush.bf16.msra.mxu0 %v1286
  %1770 = vmatpush.bf16.msra.mxu0 %v1284
  %1771 = vmatmul.bf16.gmra.mxu0 %v319
  %v1772 = vpop.f32.mrf.mxu0
  %v1773 = vadd.f32 %v1760, %v1772
  %v1774 = vpop.f32.mrf.mxu0
  %1775 = vdwg.mxu0
  %1776 = vmatpush.bf16.msra.mxu0 %v1314
  %1777 = vmatpush.bf16.msra.mxu0 %v1312
  %1778 = vmatpush.bf16.msra.mxu0 %v1310
  %1779 = vmatpush.bf16.msra.mxu0 %v1308
  %1780 = vmatpush.bf16.msra.mxu0 %v1306
  %1781 = vmatpush.bf16.msra.mxu0 %v1304
  %1782 = vmatpush.bf16.msra.mxu0 %v1302
  %1783 = vmatpush.bf16.msra.mxu0 %v1300
  %1784 = vmatmul.bf16.gmra.mxu0 %v320
  %v1785 = vpop.f32.mrf.mxu0
  %v1786 = vadd.f32 %v1773, %v1785
  %v1787 = vpop.f32.mrf.mxu0
  %1788 = vdwg.mxu0
  %1789 = vmatpush.bf16.msra.mxu0 %v1330
  %1790 = vmatpush.bf16.msra.mxu0 %v1328
  %1791 = vmatpush.bf16.msra.mxu0 %v1326
  %1792 = vmatpush.bf16.msra.mxu0 %v1324
  %1793 = vmatpush.bf16.msra.mxu0 %v1322
  %1794 = vmatpush.bf16.msra.mxu0 %v1320
  %1795 = vmatpush.bf16.msra.mxu0 %v1318
  %1796 = vmatpush.bf16.msra.mxu0 %v1316
  %1797 = vmatmul.bf16.gmra.mxu0 %v321
  %v1798 = vpop.f32.mrf.mxu0
  %v1799 = vadd.f32 %v1786, %v1798
  %v1800 = vpop.f32.mrf.mxu0
  %1801 = vdwg.mxu0
  %1802 = vmatpush.bf16.msra.mxu0 %v1346
  %1803 = vmatpush.bf16.msra.mxu0 %v1344
  %1804 = vmatpush.bf16.msra.mxu0 %v1342
  %1805 = vmatpush.bf16.msra.mxu0 %v1340
  %1806 = vmatpush.bf16.msra.mxu0 %v1338
  %1807 = vmatpush.bf16.msra.mxu0 %v1336
  %1808 = vmatpush.bf16.msra.mxu0 %v1334
  %1809 = vmatpush.bf16.msra.mxu0 %v1332
  %1810 = vmatmul.bf16.gmra.mxu0 %v322
  %v1811 = vpop.f32.mrf.mxu0
  %v1812 = vadd.f32 %v1799, %v1811
  %v1813 = vpop.f32.mrf.mxu0
  %1814 = vdwg.mxu0
  %1815 = vmatpush.bf16.msra.mxu0 %v1362
  %1816 = vmatpush.bf16.msra.mxu0 %v1360
  %1817 = vmatpush.bf16.msra.mxu0 %v1358
  %1818 = vmatpush.bf16.msra.mxu0 %v1356
  %1819 = vmatpush.bf16.msra.mxu0 %v1354
  %1820 = vmatpush.bf16.msra.mxu0 %v1352
  %1821 = vmatpush.bf16.msra.mxu0 %v1350
  %1822 = vmatpush.bf16.msra.mxu0 %v1348
  %1823 = vmatmul.bf16.gmra.mxu0 %v323
  %v1824 = vpop.f32.mrf.mxu0
  %v1825 = vadd.f32 %v1812, %v1824
  %v1826 = vpop.f32.mrf.mxu0
  %1827 = vdwg.mxu0
  %1828 = vmatpush.bf16.msra.mxu0 %v1123
  %1829 = vmatpush.bf16.msra.mxu0 %v1121
  %1830 = vmatpush.bf16.msra.mxu0 %v1119
  %1831 = vmatpush.bf16.msra.mxu0 %v1117
  %1832 = vmatpush.bf16.msra.mxu0 %v1115
  %1833 = vmatpush.bf16.msra.mxu0 %v1113
  %1834 = vmatpush.bf16.msra.mxu0 %v1111
  %1835 = vmatpush.bf16.msra.mxu0 %v1109
  %1836 = vmatmul.bf16.gmra.mxu0 %v308
  %v1837 = vpop.f32.mrf.mxu0
  %v1838 = vadd.f32 %v281, %v1837
  %v1839 = vpop.f32.mrf.mxu0
  %1840 = vdwg.mxu0
  %1841 = vmatpush.bf16.msra.mxu0 %v1139
  %1842 = vmatpush.bf16.msra.mxu0 %v1137
  %1843 = vmatpush.bf16.msra.mxu0 %v1135
  %1844 = vmatpush.bf16.msra.mxu0 %v1133
  %1845 = vmatpush.bf16.msra.mxu0 %v1131
  %1846 = vmatpush.bf16.msra.mxu0 %v1129
  %1847 = vmatpush.bf16.msra.mxu0 %v1127
  %1848 = vmatpush.bf16.msra.mxu0 %v1125
  %1849 = vmatmul.bf16.gmra.mxu0 %v309
  %v1850 = vpop.f32.mrf.mxu0
  %v1851 = vadd.f32 %v1838, %v1850
  %v1852 = vpop.f32.mrf.mxu0
  %1853 = vdwg.mxu0
  %1854 = vmatpush.bf16.msra.mxu0 %v1155
  %1855 = vmatpush.bf16.msra.mxu0 %v1153
  %1856 = vmatpush.bf16.msra.mxu0 %v1151
  %1857 = vmatpush.bf16.msra.mxu0 %v1149
  %1858 = vmatpush.bf16.msra.mxu0 %v1147
  %1859 = vmatpush.bf16.msra.mxu0 %v1145
  %1860 = vmatpush.bf16.msra.mxu0 %v1143
  %1861 = vmatpush.bf16.msra.mxu0 %v1141
  %1862 = vmatmul.bf16.gmra.mxu0 %v310
  %v1863 = vpop.f32.mrf.mxu0
  %v1864 = vadd.f32 %v1851, %v1863
  %v1865 = vpop.f32.mrf.mxu0
  %1866 = vdwg.mxu0
  %1867 = vmatpush.bf16.msra.mxu0 %v1171
  %1868 = vmatpush.bf16.msra.mxu0 %v1169
  %1869 = vmatpush.bf16.msra.mxu0 %v1167
  %1870 = vmatpush.bf16.msra.mxu0 %v1165
  %1871 = vmatpush.bf16.msra.mxu0 %v1163
  %1872 = vmatpush.bf16.msra.mxu0 %v1161
  %1873 = vmatpush.bf16.msra.mxu0 %v1159
  %1874 = vmatpush.bf16.msra.mxu0 %v1157
  %1875 = vmatmul.bf16.gmra.mxu0 %v311
  %v1876 = vpop.f32.mrf.mxu0
  %v1877 = vadd.f32 %v1864, %v1876
  %v1878 = vpop.f32.mrf.mxu0
  %1879 = vdwg.mxu0
  %1880 = vmatpush.bf16.msra.mxu0 %v1187
  %1881 = vmatpush.bf16.msra.mxu0 %v1185
  %1882 = vmatpush.bf16.msra.mxu0 %v1183
  %1883 = vmatpush.bf16.msra.mxu0 %v1181
  %1884 = vmatpush.bf16.msra.mxu0 %v1179
  %1885 = vmatpush.bf16.msra.mxu0 %v1177
  %1886 = vmatpush.bf16.msra.mxu0 %v1175
  %1887 = vmatpush.bf16.msra.mxu0 %v1173
  %1888 = vmatmul.bf16.gmra.mxu0 %v312
  %v1889 = vpop.f32.mrf.mxu0
  %v1890 = vadd.f32 %v1877, %v1889
  %v1891 = vpop.f32.mrf.mxu0
  %1892 = vdwg.mxu0
  %1893 = vmatpush.bf16.msra.mxu0 %v1203
  %1894 = vmatpush.bf16.msra.mxu0 %v1201
  %1895 = vmatpush.bf16.msra.mxu0 %v1199
  %1896 = vmatpush.bf16.msra.mxu0 %v1197
  %1897 = vmatpush.bf16.msra.mxu0 %v1195
  %1898 = vmatpush.bf16.msra.mxu0 %v1193
  %1899 = vmatpush.bf16.msra.mxu0 %v1191
  %1900 = vmatpush.bf16.msra.mxu0 %v1189
  %1901 = vmatmul.bf16.gmra.mxu0 %v313
  %v1902 = vpop.f32.mrf.mxu0
  %v1903 = vadd.f32 %v1890, %v1902
  %v1904 = vpop.f32.mrf.mxu0
  %1905 = vdwg.mxu0
  %1906 = vmatpush.bf16.msra.mxu0 %v1219
  %1907 = vmatpush.bf16.msra.mxu0 %v1217
  %1908 = vmatpush.bf16.msra.mxu0 %v1215
  %1909 = vmatpush.bf16.msra.mxu0 %v1213
  %1910 = vmatpush.bf16.msra.mxu0 %v1211
  %1911 = vmatpush.bf16.msra.mxu0 %v1209
  %1912 = vmatpush.bf16.msra.mxu0 %v1207
  %1913 = vmatpush.bf16.msra.mxu0 %v1205
  %1914 = vmatmul.bf16.gmra.mxu0 %v314
  %v1915 = vpop.f32.mrf.mxu0
  %v1916 = vadd.f32 %v1903, %v1915
  %v1917 = vpop.f32.mrf.mxu0
  %1918 = vdwg.mxu0
  %1919 = vmatpush.bf16.msra.mxu0 %v1235
  %1920 = vmatpush.bf16.msra.mxu0 %v1233
  %1921 = vmatpush.bf16.msra.mxu0 %v1231
  %1922 = vmatpush.bf16.msra.mxu0 %v1229
  %1923 = vmatpush.bf16.msra.mxu0 %v1227
  %1924 = vmatpush.bf16.msra.mxu0 %v1225
  %1925 = vmatpush.bf16.msra.mxu0 %v1223
  %1926 = vmatpush.bf16.msra.mxu0 %v1221
  %1927 = vmatmul.bf16.gmra.mxu0 %v315
  %v1928 = vpop.f32.mrf.mxu0
  %v1929 = vadd.f32 %v1916, %v1928
  %v1930 = vpop.f32.mrf.mxu0
  %1931 = vdwg.mxu0
  %1932 = vmatpush.bf16.msra.mxu0 %v1251
  %1933 = vmatpush.bf16.msra.mxu0 %v1249
  %1934 = vmatpush.bf16.msra.mxu0 %v1247
  %1935 = vmatpush.bf16.msra.mxu0 %v1245
  %1936 = vmatpush.bf16.msra.mxu0 %v1243
  %1937 = vmatpush.bf16.msra.mxu0 %v1241
  %1938 = vmatpush.bf16.msra.mxu0 %v1239
  %1939 = vmatpush.bf16.msra.mxu0 %v1237
  %1940 = vmatmul.bf16.gmra.mxu0 %v316
  %v1941 = vpop.f32.mrf.mxu0
  %v1942 = vadd.f32 %v1929, %v1941
  %v1943 = vpop.f32.mrf.mxu0
  %1944 = vdwg.mxu0
  %1945 = vmatpush.bf16.msra.mxu0 %v1267
  %1946 = vmatpush.bf16.msra.mxu0 %v1265
  %1947 = vmatpush.bf16.msra.mxu0 %v1263
  %1948 = vmatpush.bf16.msra.mxu0 %v1261
  %1949 = vmatpush.bf16.msra.mxu0 %v1259
  %1950 = vmatpush.bf16.msra.mxu0 %v1257
  %1951 = vmatpush.bf16.msra.mxu0 %v1255
  %1952 = vmatpush.bf16.msra.mxu0 %v1253
  %1953 = vmatmul.bf16.gmra.mxu0 %v317
  %v1954 = vpop.f32.mrf.mxu0
  %v1955 = vadd.f32 %v1942, %v1954
  %v1956 = vpop.f32.mrf.mxu0
  %1957 = vdwg.mxu0
  %1958 = vmatpush.bf16.msra.mxu0 %v1283
  %1959 = vmatpush.bf16.msra.mxu0 %v1281
  %1960 = vmatpush.bf16.msra.mxu0 %v1279
  %1961 = vmatpush.bf16.msra.mxu0 %v1277
  %1962 = vmatpush.bf16.msra.mxu0 %v1275
  %1963 = vmatpush.bf16.msra.mxu0 %v1273
  %1964 = vmatpush.bf16.msra.mxu0 %v1271
  %1965 = vmatpush.bf16.msra.mxu0 %v1269
  %1966 = vmatmul.bf16.gmra.mxu0 %v318
  %v1967 = vpop.f32.mrf.mxu0
  %v1968 = vadd.f32 %v1955, %v1967
  %v1969 = vpop.f32.mrf.mxu0
  %1970 = vdwg.mxu0
  %1971 = vmatpush.bf16.msra.mxu0 %v1299
  %1972 = vmatpush.bf16.msra.mxu0 %v1297
  %1973 = vmatpush.bf16.msra.mxu0 %v1295
  %1974 = vmatpush.bf16.msra.mxu0 %v1293
  %1975 = vmatpush.bf16.msra.mxu0 %v1291
  %1976 = vmatpush.bf16.msra.mxu0 %v1289
  %1977 = vmatpush.bf16.msra.mxu0 %v1287
  %1978 = vmatpush.bf16.msra.mxu0 %v1285
  %1979 = vmatmul.bf16.gmra.mxu0 %v319
  %v1980 = vpop.f32.mrf.mxu0
  %v1981 = vadd.f32 %v1968, %v1980
  %v1982 = vpop.f32.mrf.mxu0
  %1983 = vdwg.mxu0
  %1984 = vmatpush.bf16.msra.mxu0 %v1315
  %1985 = vmatpush.bf16.msra.mxu0 %v1313
  %1986 = vmatpush.bf16.msra.mxu0 %v1311
  %1987 = vmatpush.bf16.msra.mxu0 %v1309
  %1988 = vmatpush.bf16.msra.mxu0 %v1307
  %1989 = vmatpush.bf16.msra.mxu0 %v1305
  %1990 = vmatpush.bf16.msra.mxu0 %v1303
  %1991 = vmatpush.bf16.msra.mxu0 %v1301
  %1992 = vmatmul.bf16.gmra.mxu0 %v320
  %v1993 = vpop.f32.mrf.mxu0
  %v1994 = vadd.f32 %v1981, %v1993
  %v1995 = vpop.f32.mrf.mxu0
  %1996 = vdwg.mxu0
  %1997 = vmatpush.bf16.msra.mxu0 %v1331
  %1998 = vmatpush.bf16.msra.mxu0 %v1329
  %1999 = vmatpush.bf16.msra.mxu0 %v1327
  %2000 = vmatpush.bf16.msra.mxu0 %v1325
  %2001 = vmatpush.bf16.msra.mxu0 %v1323
  %2002 = vmatpush.bf16.msra.mxu0 %v1321
  %2003 = vmatpush.bf16.msra.mxu0 %v1319
  %2004 = vmatpush.bf16.msra.mxu0 %v1317
  %2005 = vmatmul.bf16.gmra.mxu0 %v321
  %v2006 = vpop.f32.mrf.mxu0
  %v2007 = vadd.f32 %v1994, %v2006
  %v2008 = vpop.f32.mrf.mxu0
  %2009 = vdwg.mxu0
  %2010 = vmatpush.bf16.msra.mxu0 %v1347
  %2011 = vmatpush.bf16.msra.mxu0 %v1345
  %2012 = vmatpush.bf16.msra.mxu0 %v1343
  %2013 = vmatpush.bf16.msra.mxu0 %v1341
  %2014 = vmatpush.bf16.msra.mxu0 %v1339
  %2015 = vmatpush.bf16.msra.mxu0 %v1337
  %2016 = vmatpush.bf16.msra.mxu0 %v1335
  %2017 = vmatpush.bf16.msra.mxu0 %v1333
  %2018 = vmatmul.bf16.gmra.mxu0 %v322
  %v2019 = vpop.f32.mrf.mxu0
  %v2020 = vadd.f32 %v2007, %v2019
  %v2021 = vpop.f32.mrf.mxu0
  %2022 = vdwg.mxu0
  %2023 = vmatpush.bf16.msra.mxu0 %v1363
  %2024 = vmatpush.bf16.msra.mxu0 %v1361
  %2025 = vmatpush.bf16.msra.mxu0 %v1359
  %2026 = vmatpush.bf16.msra.mxu0 %v1357
  %2027 = vmatpush.bf16.msra.mxu0 %v1355
  %2028 = vmatpush.bf16.msra.mxu0 %v1353
  %2029 = vmatpush.bf16.msra.mxu0 %v1351
  %2030 = vmatpush.bf16.msra.mxu0 %v1349
  %2031 = vmatmul.bf16.gmra.mxu0 %v323
  %v2032 = vpop.f32.mrf.mxu0
  %v2033 = vadd.f32 %v2020, %v2032
  %v2034 = vpop.f32.mrf.mxu0
  %2035 = vdwg.mxu0
  %v2036 = vmax.f32 %v1825, 0.0
  %v2037 = vmax.f32 %v2033, 0.0
  %v2038 = vpack.c.bf16 %v2037, %v2036
  %2039 = vst [vmem:[%s3] sm:$0xff] %v2038
  // Predicated region
  $region14: #{_lambda_.13} parent=0 // pred_check
    _
  $region15: #{_lambda_.13} parent=0 // pred_check_branch
    %2041 = sbr.rel (0) target = $region17
  $region16: #{_lambda_.13} parent=0 // pred_region
    _
  $region17: #{_lambda_.13} parent=0 // pred_fallthru
    _
  // Predicated region
  $region18: #{_lambda_.13} parent=0 // pred_check
    _
  $region19: #{_lambda_.13} parent=0 // pred_check_branch
    %2043 = sbr.rel (0) target = $region21
  $region20: #{_lambda_.13} parent=0 // pred_region
    _
  $region21: #{_lambda_.13} parent=0 // pred_fallthru
    _

// kernel: _lambda_.15
$region0: #{_lambda_.15}
  #allocation0 [shape = 'u32[]', space=smem, size = 0x4, offset = 0x4, fixed_abs, tag = 'smem constant byte address 0x4 - core index']
  #allocation1 [shape = 'u32[72,128]{1,0:T(1,128)}', space=vmem, size = 0x9000, scoped, tag = 'internal scratch']
  %s0 = inlined_call_operand.vmem [shape: bf16[2,178], index: 0, kind: input, shape index: {}]
  %s1 = inlined_call_operand.vmem [shape: bf16[178,1024], index: 1, kind: input, shape index: {}]
  %s2 = inlined_call_operand.vmem [shape: f32[1,1024], index: 2, kind: input, shape index: {}]
  %s3 = inlined_call_operand.vmem [shape: bf16[2,1024], index: 3, kind: output, shape index: {}]
  %s4 = sld [smem:[#allocation0]]
  $region22: #{_lambda_.15} parent=0
    _
  %s6 = ssub.s32 1, %s4
  %s7 = scalar_select 0, %s6, %s4
  // Predicated region
  $region2: #{_lambda_.15} parent=0 // pred_check
    _
  $region3: #{_lambda_.15} parent=0 // pred_check_branch
    %9 = sbr.rel (0) target = $region5
  $region4: #{_lambda_.15} parent=0 // pred_region
    _
  $region5: #{_lambda_.15} parent=0 // pred_fallthru
    _
  // Predicated region
  $region6: #{_lambda_.15} parent=0 // pred_check
    _
  $region7: #{_lambda_.15} parent=0 // pred_check_branch
    %11 = sbr.rel (0) target = $region9
  $region8: #{_lambda_.15} parent=0 // pred_region
    _
  $region9: #{_lambda_.15} parent=0 // pred_fallthru
    _
  // Predicated region
  $region10: #{_lambda_.15} parent=0 // pred_check
    _
  $region11: #{_lambda_.15} parent=0 // pred_check_branch
    %13 = sbr.rel (0) target = $region13
  $region12: #{_lambda_.15} parent=0 // pred_region
    _
  $region13: #{_lambda_.15} parent=0 // pred_fallthru
    _
  %v15 = vld [vmem:[%s0] sm:$0x3]
  %v16 = vld [vmem:[%s1] sm:$0xff]
  %v17 = vld [vmem:[%s1 + $0x8] sm:$0xff]
  %v18 = vld [vmem:[%s1 + $0x10] sm:$0xff]
  %v19 = vld [vmem:[%s1 + $0x18] sm:$0xff]
  %v20 = vld [vmem:[%s1 + $0x20] sm:$0xff]
  %v21 = vld [vmem:[%s1 + $0x28] sm:$0xff]
  %v22 = vld [vmem:[%s1 + $0x30] sm:$0xff]
  %v23 = vld [vmem:[%s1 + $0x38] sm:$0xff]
  %v24 = vld [vmem:[%s1 + $0x40] sm:$0xff]
  %v25 = vld [vmem:[%s1 + $0x48] sm:$0xff]
  %v26 = vld [vmem:[%s1 + $0x50] sm:$0xff]
  %v27 = vld [vmem:[%s1 + $0x58] sm:$0xff]
  %v28 = vld [vmem:[%s1 + $0x60] sm:$0xff]
  %v29 = vld [vmem:[%s1 + $0x68] sm:$0xff]
  %v30 = vld [vmem:[%s1 + $0x70] sm:$0xff]
  %v31 = vld [vmem:[%s1 + $0x78] sm:$0xff]
  %v32 = vld [vmem:[%s1 + $0x80] sm:$0xff]
  %v33 = vld [vmem:[%s1 + $0x88] sm:$0xff]
  %v34 = vld [vmem:[%s1 + $0x90] sm:$0xff]
  %v35 = vld [vmem:[%s1 + $0x98] sm:$0xff]
  %v36 = vld [vmem:[%s1 + $0xa0] sm:$0xff]
  %v37 = vld [vmem:[%s1 + $0xa8] sm:$0xff]
  %v38 = vld [vmem:[%s1 + $0xb0] sm:$0xff]
  %v39 = vld [vmem:[%s1 + $0xb8] sm:$0xff]
  %v40 = vld [vmem:[%s1 + $0xc0] sm:$0xff]
  %v41 = vld [vmem:[%s1 + $0xc8] sm:$0xff]
  %v42 = vld [vmem:[%s1 + $0xd0] sm:$0xff]
  %v43 = vld [vmem:[%s1 + $0xd8] sm:$0xff]
  %v44 = vld [vmem:[%s1 + $0xe0] sm:$0xff]
  %v45 = vld [vmem:[%s1 + $0xe8] sm:$0xff]
  %v46 = vld [vmem:[%s1 + $0xf0] sm:$0xff]
  %v47 = vld [vmem:[%s1 + $0xf8] sm:$0xff]
  %v48 = vld [vmem:[%s1 + $0x100] sm:$0xff]
  %v49 = vld [vmem:[%s1 + $0x108] sm:$0xff]
  %v50 = vld [vmem:[%s1 + $0x110] sm:$0xff]
  %v51 = vld [vmem:[%s1 + $0x118] sm:$0xff]
  %v52 = vld [vmem:[%s1 + $0x120] sm:$0xff]
  %v53 = vld [vmem:[%s1 + $0x128] sm:$0xff]
  %v54 = vld [vmem:[%s1 + $0x130] sm:$0xff]
  %v55 = vld [vmem:[%s1 + $0x138] sm:$0xff]
  %v56 = vld [vmem:[%s1 + $0x140] sm:$0xff]
  %v57 = vld [vmem:[%s1 + $0x148] sm:$0xff]
  %v58 = vld [vmem:[%s1 + $0x150] sm:$0xff]
  %v59 = vld [vmem:[%s1 + $0x158] sm:$0xff]
  %v60 = vld [vmem:[%s1 + $0x160] sm:$0xff]
  %v61 = vld [vmem:[%s1 + $0x168] sm:$0xff]
  %v62 = vld [vmem:[%s1 + $0x170] sm:$0xff]
  %v63 = vld [vmem:[%s1 + $0x178] sm:$0xff]
  %v64 = vld [vmem:[%s1 + $0x180] sm:$0xff]
  %v65 = vld [vmem:[%s1 + $0x188] sm:$0xff]
  %v66 = vld [vmem:[%s1 + $0x190] sm:$0xff]
  %v67 = vld [vmem:[%s1 + $0x198] sm:$0xff]
  %v68 = vld [vmem:[%s1 + $0x1a0] sm:$0xff]
  %v69 = vld [vmem:[%s1 + $0x1a8] sm:$0xff]
  %v70 = vld [vmem:[%s1 + $0x1b0] sm:$0xff]
  %v71 = vld [vmem:[%s1 + $0x1b8] sm:$0xff]
  %v72 = vld [vmem:[%s1 + $0x1c0] sm:$0xff]
  %v73 = vld [vmem:[%s1 + $0x1c8] sm:$0xff]
  %v74 = vld [vmem:[%s1 + $0x1d0] sm:$0xff]
  %v75 = vld [vmem:[%s1 + $0x1d8] sm:$0xff]
  %v76 = vld [vmem:[%s1 + $0x1e0] sm:$0xff]
  %v77 = vld [vmem:[%s1 + $0x1e8] sm:$0xff]
  %v78 = vld [vmem:[%s1 + $0x1f0] sm:$0xff]
  %v79 = vld [vmem:[%s1 + $0x1f8] sm:$0xff]
  %v80 = vld [vmem:[%s1 + $0x200] sm:$0xff]
  %v81 = vld [vmem:[%s1 + $0x208] sm:$0xff]
  %v82 = vld [vmem:[%s1 + $0x210] sm:$0xff]
  %v83 = vld [vmem:[%s1 + $0x218] sm:$0xff]
  %v84 = vld [vmem:[%s1 + $0x220] sm:$0xff]
  %v85 = vld [vmem:[%s1 + $0x228] sm:$0xff]
  %v86 = vld [vmem:[%s1 + $0x230] sm:$0xff]
  %v87 = vld [vmem:[%s1 + $0x238] sm:$0xff]
  %v88 = vld [vmem:[%s1 + $0x240] sm:$0xff]
  %v89 = vld [vmem:[%s1 + $0x248] sm:$0xff]
  %v90 = vld [vmem:[%s1 + $0x250] sm:$0xff]
  %v91 = vld [vmem:[%s1 + $0x258] sm:$0xff]
  %v92 = vld [vmem:[%s1 + $0x260] sm:$0xff]
  %v93 = vld [vmem:[%s1 + $0x268] sm:$0xff]
  %v94 = vld [vmem:[%s1 + $0x270] sm:$0xff]
  %v95 = vld [vmem:[%s1 + $0x278] sm:$0xff]
  %v96 = vld [vmem:[%s1 + $0x280] sm:$0xff]
  %v97 = vld [vmem:[%s1 + $0x288] sm:$0xff]
  %v98 = vld [vmem:[%s1 + $0x290] sm:$0xff]
  %v99 = vld [vmem:[%s1 + $0x298] sm:$0xff]
  %v100 = vld [vmem:[%s1 + $0x2a0] sm:$0xff]
  %v101 = vld [vmem:[%s1 + $0x2a8] sm:$0xff]
  %v102 = vld [vmem:[%s1 + $0x2b0] sm:$0xff]
  %v103 = vld [vmem:[%s1 + $0x2b8] sm:$0xff]
  %v104 = vld [vmem:[%s1 + $0x2c0] sm:$0x11]
  %v105 = vld [vmem:[%s1 + $0x2c8] sm:$0x11]
  %v106 = vld [vmem:[%s1 + $0x2d0] sm:$0x11]
  %v107 = vld [vmem:[%s1 + $0x2d8] sm:$0x11]
  %v108 = vld [vmem:[%s2] sm:$0xff]
  %v110 = vperm.slane %v108, 0
  %v111 = vperm.slane %v108, 1
  %v112 = vperm.slane %v108, 2
  %v113 = vperm.slane %v108, 3
  %v114 = vperm.slane %v108, 4
  %v115 = vperm.slane %v108, 5
  %v116 = vperm.slane %v108, 6
  %v117 = vperm.slane %v108, 7
  %127 = vst [vmem:[#allocation1] ss:$9 sm:$0xff] %v15
  %v128 = vld [vmem:[#allocation1] sm:$0xff]
  %v129 = vld [vmem:[#allocation1 + $0x9] sm:$0xff]
  %v223 = vunpack.c.l.b16 %v16
  %v224 = vunpack.c.h.b16 %v16
  %v225 = vunpack.c.l.b16 %v17
  %v226 = vunpack.c.h.b16 %v17
  %v227 = vunpack.c.l.b16 %v18
  %v228 = vunpack.c.h.b16 %v18
  %v229 = vunpack.c.l.b16 %v19
  %v230 = vunpack.c.h.b16 %v19
  %v231 = vunpack.c.l.b16 %v20
  %v232 = vunpack.c.h.b16 %v20
  %v233 = vunpack.c.l.b16 %v21
  %v234 = vunpack.c.h.b16 %v21
  %v235 = vunpack.c.l.b16 %v22
  %v236 = vunpack.c.h.b16 %v22
  %v237 = vunpack.c.l.b16 %v23
  %v238 = vunpack.c.h.b16 %v23
  %v239 = vunpack.c.l.b16 %v24
  %v240 = vunpack.c.h.b16 %v24
  %v241 = vunpack.c.l.b16 %v25
  %v242 = vunpack.c.h.b16 %v25
  %v243 = vunpack.c.l.b16 %v26
  %v244 = vunpack.c.h.b16 %v26
  %v245 = vunpack.c.l.b16 %v27
  %v246 = vunpack.c.h.b16 %v27
  %v247 = vunpack.c.l.b16 %v28
  %v248 = vunpack.c.h.b16 %v28
  %v249 = vunpack.c.l.b16 %v29
  %v250 = vunpack.c.h.b16 %v29
  %v251 = vunpack.c.l.b16 %v30
  %v252 = vunpack.c.h.b16 %v30
  %v253 = vunpack.c.l.b16 %v31
  %v254 = vunpack.c.h.b16 %v31
  %v255 = vunpack.c.l.b16 %v32
  %v256 = vunpack.c.h.b16 %v32
  %v257 = vunpack.c.l.b16 %v33
  %v258 = vunpack.c.h.b16 %v33
  %v259 = vunpack.c.l.b16 %v34
  %v260 = vunpack.c.h.b16 %v34
  %v261 = vunpack.c.l.b16 %v35
  %v262 = vunpack.c.h.b16 %v35
  %v263 = vunpack.c.l.b16 %v36
  %v264 = vunpack.c.h.b16 %v36
  %v265 = vunpack.c.l.b16 %v37
  %v266 = vunpack.c.h.b16 %v37
  %v267 = vunpack.c.l.b16 %v38
  %v268 = vunpack.c.h.b16 %v38
  %v269 = vunpack.c.l.b16 %v39
  %v270 = vunpack.c.h.b16 %v39
  %v271 = vunpack.c.l.b16 %v40
  %v272 = vunpack.c.h.b16 %v40
  %v273 = vunpack.c.l.b16 %v41
  %v274 = vunpack.c.h.b16 %v41
  %v275 = vunpack.c.l.b16 %v42
  %v276 = vunpack.c.h.b16 %v42
  %v277 = vunpack.c.l.b16 %v43
  %v278 = vunpack.c.h.b16 %v43
  %v279 = vunpack.c.l.b16 %v44
  %v280 = vunpack.c.h.b16 %v44
  %v281 = vunpack.c.l.b16 %v45
  %v282 = vunpack.c.h.b16 %v45
  %v283 = vunpack.c.l.b16 %v46
  %v284 = vunpack.c.h.b16 %v46
  %v285 = vunpack.c.l.b16 %v47
  %v286 = vunpack.c.h.b16 %v47
  %v287 = vunpack.c.l.b16 %v48
  %v288 = vunpack.c.h.b16 %v48
  %v289 = vunpack.c.l.b16 %v49
  %v290 = vunpack.c.h.b16 %v49
  %v291 = vunpack.c.l.b16 %v50
  %v292 = vunpack.c.h.b16 %v50
  %v293 = vunpack.c.l.b16 %v51
  %v294 = vunpack.c.h.b16 %v51
  %v295 = vunpack.c.l.b16 %v52
  %v296 = vunpack.c.h.b16 %v52
  %v297 = vunpack.c.l.b16 %v53
  %v298 = vunpack.c.h.b16 %v53
  %v299 = vunpack.c.l.b16 %v54
  %v300 = vunpack.c.h.b16 %v54
  %v301 = vunpack.c.l.b16 %v55
  %v302 = vunpack.c.h.b16 %v55
  %v303 = vunpack.c.l.b16 %v56
  %v304 = vunpack.c.h.b16 %v56
  %v305 = vunpack.c.l.b16 %v57
  %v306 = vunpack.c.h.b16 %v57
  %v307 = vunpack.c.l.b16 %v58
  %v308 = vunpack.c.h.b16 %v58
  %v309 = vunpack.c.l.b16 %v59
  %v310 = vunpack.c.h.b16 %v59
  %v311 = vunpack.c.l.b16 %v60
  %v312 = vunpack.c.h.b16 %v60
  %v313 = vunpack.c.l.b16 %v61
  %v314 = vunpack.c.h.b16 %v61
  %v315 = vunpack.c.l.b16 %v62
  %v316 = vunpack.c.h.b16 %v62
  %v317 = vunpack.c.l.b16 %v63
  %v318 = vunpack.c.h.b16 %v63
  %v319 = vunpack.c.l.b16 %v64
  %v320 = vunpack.c.h.b16 %v64
  %v321 = vunpack.c.l.b16 %v65
  %v322 = vunpack.c.h.b16 %v65
  %v323 = vunpack.c.l.b16 %v66
  %v324 = vunpack.c.h.b16 %v66
  %v325 = vunpack.c.l.b16 %v67
  %v326 = vunpack.c.h.b16 %v67
  %v327 = vunpack.c.l.b16 %v68
  %v328 = vunpack.c.h.b16 %v68
  %v329 = vunpack.c.l.b16 %v69
  %v330 = vunpack.c.h.b16 %v69
  %v331 = vunpack.c.l.b16 %v70
  %v332 = vunpack.c.h.b16 %v70
  %v333 = vunpack.c.l.b16 %v71
  %v334 = vunpack.c.h.b16 %v71
  %v335 = vunpack.c.l.b16 %v72
  %v336 = vunpack.c.h.b16 %v72
  %v337 = vunpack.c.l.b16 %v73
  %v338 = vunpack.c.h.b16 %v73
  %v339 = vunpack.c.l.b16 %v74
  %v340 = vunpack.c.h.b16 %v74
  %v341 = vunpack.c.l.b16 %v75
  %v342 = vunpack.c.h.b16 %v75
  %v343 = vunpack.c.l.b16 %v76
  %v344 = vunpack.c.h.b16 %v76
  %v345 = vunpack.c.l.b16 %v77
  %v346 = vunpack.c.h.b16 %v77
  %v347 = vunpack.c.l.b16 %v78
  %v348 = vunpack.c.h.b16 %v78
  %v349 = vunpack.c.l.b16 %v79
  %v350 = vunpack.c.h.b16 %v79
  %v351 = vunpack.c.l.b16 %v80
  %v352 = vunpack.c.h.b16 %v80
  %v353 = vunpack.c.l.b16 %v81
  %v354 = vunpack.c.h.b16 %v81
  %v355 = vunpack.c.l.b16 %v82
  %v356 = vunpack.c.h.b16 %v82
  %v357 = vunpack.c.l.b16 %v83
  %v358 = vunpack.c.h.b16 %v83
  %v359 = vunpack.c.l.b16 %v84
  %v360 = vunpack.c.h.b16 %v84
  %v361 = vunpack.c.l.b16 %v85
  %v362 = vunpack.c.h.b16 %v85
  %v363 = vunpack.c.l.b16 %v86
  %v364 = vunpack.c.h.b16 %v86
  %v365 = vunpack.c.l.b16 %v87
  %v366 = vunpack.c.h.b16 %v87
  %v367 = vunpack.c.l.b16 %v88
  %v368 = vunpack.c.h.b16 %v88
  %v369 = vunpack.c.l.b16 %v89
  %v370 = vunpack.c.h.b16 %v89
  %v371 = vunpack.c.l.b16 %v90
  %v372 = vunpack.c.h.b16 %v90
  %v373 = vunpack.c.l.b16 %v91
  %v374 = vunpack.c.h.b16 %v91
  %v375 = vunpack.c.l.b16 %v92
  %v376 = vunpack.c.h.b16 %v92
  %v377 = vunpack.c.l.b16 %v93
  %v378 = vunpack.c.h.b16 %v93
  %v379 = vunpack.c.l.b16 %v94
  %v380 = vunpack.c.h.b16 %v94
  %v381 = vunpack.c.l.b16 %v95
  %v382 = vunpack.c.h.b16 %v95
  %v383 = vunpack.c.l.b16 %v96
  %v384 = vunpack.c.h.b16 %v96
  %v385 = vunpack.c.l.b16 %v97
  %v386 = vunpack.c.h.b16 %v97
  %v387 = vunpack.c.l.b16 %v98
  %v388 = vunpack.c.h.b16 %v98
  %v389 = vunpack.c.l.b16 %v99
  %v390 = vunpack.c.h.b16 %v99
  %v391 = vunpack.c.l.b16 %v100
  %v392 = vunpack.c.h.b16 %v100
  %v393 = vunpack.c.l.b16 %v101
  %v394 = vunpack.c.h.b16 %v101
  %v395 = vunpack.c.l.b16 %v102
  %v396 = vunpack.c.h.b16 %v102
  %v397 = vunpack.c.l.b16 %v103
  %v398 = vunpack.c.h.b16 %v103
  %v399 = vunpack.c.l.b16 %v104
  %v400 = vunpack.c.h.b16 %v104
  %v401 = vunpack.c.l.b16 %v105
  %v402 = vunpack.c.h.b16 %v105
  %v403 = vunpack.c.l.b16 %v106
  %v404 = vunpack.c.h.b16 %v106
  %v405 = vunpack.c.l.b16 %v107
  %v406 = vunpack.c.h.b16 %v107
  %v407 = vpack.c.b16 %v231, %v223
  %v408 = vpack.c.b16 %v232, %v224
  %v409 = vpack.c.b16 %v233, %v225
  %v410 = vpack.c.b16 %v234, %v226
  %v411 = vpack.c.b16 %v235, %v227
  %v412 = vpack.c.b16 %v236, %v228
  %v413 = vpack.c.b16 %v237, %v229
  %v414 = vpack.c.b16 %v238, %v230
  %v415 = vpack.c.b16 %v247, %v239
  %v416 = vpack.c.b16 %v248, %v240
  %v417 = vpack.c.b16 %v249, %v241
  %v418 = vpack.c.b16 %v250, %v242
  %v419 = vpack.c.b16 %v251, %v243
  %v420 = vpack.c.b16 %v252, %v244
  %v421 = vpack.c.b16 %v253, %v245
  %v422 = vpack.c.b16 %v254, %v246
  %v423 = vpack.c.b16 %v263, %v255
  %v424 = vpack.c.b16 %v264, %v256
  %v425 = vpack.c.b16 %v265, %v257
  %v426 = vpack.c.b16 %v266, %v258
  %v427 = vpack.c.b16 %v267, %v259
  %v428 = vpack.c.b16 %v268, %v260
  %v429 = vpack.c.b16 %v269, %v261
  %v430 = vpack.c.b16 %v270, %v262
  %v431 = vpack.c.b16 %v279, %v271
  %v432 = vpack.c.b16 %v280, %v272
  %v433 = vpack.c.b16 %v281, %v273
  %v434 = vpack.c.b16 %v282, %v274
  %v435 = vpack.c.b16 %v283, %v275
  %v436 = vpack.c.b16 %v284, %v276
  %v437 = vpack.c.b16 %v285, %v277
  %v438 = vpack.c.b16 %v286, %v278
  %v439 = vpack.c.b16 %v295, %v287
  %v440 = vpack.c.b16 %v296, %v288
  %v441 = vpack.c.b16 %v297, %v289
  %v442 = vpack.c.b16 %v298, %v290
  %v443 = vpack.c.b16 %v299, %v291
  %v444 = vpack.c.b16 %v300, %v292
  %v445 = vpack.c.b16 %v301, %v293
  %v446 = vpack.c.b16 %v302, %v294
  %v447 = vpack.c.b16 %v311, %v303
  %v448 = vpack.c.b16 %v312, %v304
  %v449 = vpack.c.b16 %v313, %v305
  %v450 = vpack.c.b16 %v314, %v306
  %v451 = vpack.c.b16 %v315, %v307
  %v452 = vpack.c.b16 %v316, %v308
  %v453 = vpack.c.b16 %v317, %v309
  %v454 = vpack.c.b16 %v318, %v310
  %v455 = vpack.c.b16 %v327, %v319
  %v456 = vpack.c.b16 %v328, %v320
  %v457 = vpack.c.b16 %v329, %v321
  %v458 = vpack.c.b16 %v330, %v322
  %v459 = vpack.c.b16 %v331, %v323
  %v460 = vpack.c.b16 %v332, %v324
  %v461 = vpack.c.b16 %v333, %v325
  %v462 = vpack.c.b16 %v334, %v326
  %v463 = vpack.c.b16 %v343, %v335
  %v464 = vpack.c.b16 %v344, %v336
  %v465 = vpack.c.b16 %v345, %v337
  %v466 = vpack.c.b16 %v346, %v338
  %v467 = vpack.c.b16 %v347, %v339
  %v468 = vpack.c.b16 %v348, %v340
  %v469 = vpack.c.b16 %v349, %v341
  %v470 = vpack.c.b16 %v350, %v342
  %v471 = vpack.c.b16 %v359, %v351
  %v472 = vpack.c.b16 %v360, %v352
  %v473 = vpack.c.b16 %v361, %v353
  %v474 = vpack.c.b16 %v362, %v354
  %v475 = vpack.c.b16 %v363, %v355
  %v476 = vpack.c.b16 %v364, %v356
  %v477 = vpack.c.b16 %v365, %v357
  %v478 = vpack.c.b16 %v366, %v358
  %v479 = vpack.c.b16 %v375, %v367
  %v480 = vpack.c.b16 %v376, %v368
  %v481 = vpack.c.b16 %v377, %v369
  %v482 = vpack.c.b16 %v378, %v370
  %v483 = vpack.c.b16 %v379, %v371
  %v484 = vpack.c.b16 %v380, %v372
  %v485 = vpack.c.b16 %v381, %v373
  %v486 = vpack.c.b16 %v382, %v374
  %v487 = vpack.c.b16 %v391, %v383
  %v488 = vpack.c.b16 %v392, %v384
  %v489 = vpack.c.b16 %v393, %v385
  %v490 = vpack.c.b16 %v394, %v386
  %v491 = vpack.c.b16 %v395, %v387
  %v492 = vpack.c.b16 %v396, %v388
  %v493 = vpack.c.b16 %v397, %v389
  %v494 = vpack.c.b16 %v398, %v390
  %v495 = vpack.c.b16 %v399, %v399
  %v496 = vpack.c.b16 %v400, %v400
  %v497 = vpack.c.b16 %v401, %v401
  %v498 = vpack.c.b16 %v402, %v402
  %v499 = vpack.c.b16 %v403, %v403
  %v500 = vpack.c.b16 %v404, %v404
  %v501 = vpack.c.b16 %v405, %v405
  %v502 = vpack.c.b16 %v406, %v406
  %vm591 = vcmask 408576
  %v592 = vsel %vm591, %v129, 0
  %vm594 = vcmask 1040384
  %v596 = vsel %vm594, %v495, 0
  %v599 = vsel %vm594, %v496, 0
  %v602 = vsel %vm594, %v497, 0
  %v605 = vsel %vm594, %v498, 0
  %v608 = vsel %vm594, %v499, 0
  %v611 = vsel %vm594, %v500, 0
  %v614 = vsel %vm594, %v501, 0
  %v617 = vsel %vm594, %v502, 0
  %619 = vmatpush.bf16.msra.mxu0 %v463
  %620 = vmatpush.bf16.msra.mxu0 %v455
  %621 = vmatpush.bf16.msra.mxu0 %v447
  %622 = vmatpush.bf16.msra.mxu0 %v439
  %623 = vmatpush.bf16.msra.mxu0 %v431
  %624 = vmatpush.bf16.msra.mxu0 %v423
  %625 = vmatpush.bf16.msra.mxu0 %v415
  %626 = vmatpush.bf16.msra.mxu0 %v407
  %627 = vmatmul.bf16.gmra.mxu0 %v128
  %v628 = vpop.f32.mrf.mxu0
  %v629 = vadd.f32 %v110, %v628
  %v630 = vpop.f32.mrf.mxu0
  %631 = vdwg.mxu0
  %632 = vmatpush.bf16.msra.mxu0 0
  %633 = vmatpush.bf16.msra.mxu0 0
  %634 = vmatpush.bf16.msra.mxu0 0
  %635 = vmatpush.bf16.msra.mxu0 0
  %636 = vmatpush.bf16.msra.mxu0 %v596
  %637 = vmatpush.bf16.msra.mxu0 %v487
  %638 = vmatpush.bf16.msra.mxu0 %v479
  %639 = vmatpush.bf16.msra.mxu0 %v471
  %640 = vmatmul.bf16.gmra.mxu0 %v592
  %v641 = vpop.f32.mrf.mxu0
  %v642 = vadd.f32 %v629, %v641
  %v643 = vpop.f32.mrf.mxu0
  %644 = vdwg.mxu0
  %645 = vmatpush.bf16.msra.mxu0 %v464
  %646 = vmatpush.bf16.msra.mxu0 %v456
  %647 = vmatpush.bf16.msra.mxu0 %v448
  %648 = vmatpush.bf16.msra.mxu0 %v440
  %649 = vmatpush.bf16.msra.mxu0 %v432
  %650 = vmatpush.bf16.msra.mxu0 %v424
  %651 = vmatpush.bf16.msra.mxu0 %v416
  %652 = vmatpush.bf16.msra.mxu0 %v408
  %653 = vmatmul.bf16.gmra.mxu0 %v128
  %v654 = vpop.f32.mrf.mxu0
  %v655 = vadd.f32 %v111, %v654
  %v656 = vpop.f32.mrf.mxu0
  %657 = vdwg.mxu0
  %658 = vmatpush.bf16.msra.mxu0 0
  %659 = vmatpush.bf16.msra.mxu0 0
  %660 = vmatpush.bf16.msra.mxu0 0
  %661 = vmatpush.bf16.msra.mxu0 0
  %662 = vmatpush.bf16.msra.mxu0 %v599
  %663 = vmatpush.bf16.msra.mxu0 %v488
  %664 = vmatpush.bf16.msra.mxu0 %v480
  %665 = vmatpush.bf16.msra.mxu0 %v472
  %666 = vmatmul.bf16.gmra.mxu0 %v592
  %v667 = vpop.f32.mrf.mxu0
  %v668 = vadd.f32 %v655, %v667
  %v669 = vpop.f32.mrf.mxu0
  %670 = vdwg.mxu0
  %671 = vmatpush.bf16.msra.mxu0 %v465
  %672 = vmatpush.bf16.msra.mxu0 %v457
  %673 = vmatpush.bf16.msra.mxu0 %v449
  %674 = vmatpush.bf16.msra.mxu0 %v441
  %675 = vmatpush.bf16.msra.mxu0 %v433
  %676 = vmatpush.bf16.msra.mxu0 %v425
  %677 = vmatpush.bf16.msra.mxu0 %v417
  %678 = vmatpush.bf16.msra.mxu0 %v409
  %679 = vmatmul.bf16.gmra.mxu0 %v128
  %v680 = vpop.f32.mrf.mxu0
  %v681 = vadd.f32 %v112, %v680
  %v682 = vpop.f32.mrf.mxu0
  %683 = vdwg.mxu0
  %684 = vmatpush.bf16.msra.mxu0 0
  %685 = vmatpush.bf16.msra.mxu0 0
  %686 = vmatpush.bf16.msra.mxu0 0
  %687 = vmatpush.bf16.msra.mxu0 0
  %688 = vmatpush.bf16.msra.mxu0 %v602
  %689 = vmatpush.bf16.msra.mxu0 %v489
  %690 = vmatpush.bf16.msra.mxu0 %v481
  %691 = vmatpush.bf16.msra.mxu0 %v473
  %692 = vmatmul.bf16.gmra.mxu0 %v592
  %v693 = vpop.f32.mrf.mxu0
  %v694 = vadd.f32 %v681, %v693
  %v695 = vpop.f32.mrf.mxu0
  %696 = vdwg.mxu0
  %697 = vmatpush.bf16.msra.mxu0 %v466
  %698 = vmatpush.bf16.msra.mxu0 %v458
  %699 = vmatpush.bf16.msra.mxu0 %v450
  %700 = vmatpush.bf16.msra.mxu0 %v442
  %701 = vmatpush.bf16.msra.mxu0 %v434
  %702 = vmatpush.bf16.msra.mxu0 %v426
  %703 = vmatpush.bf16.msra.mxu0 %v418
  %704 = vmatpush.bf16.msra.mxu0 %v410
  %705 = vmatmul.bf16.gmra.mxu0 %v128
  %v706 = vpop.f32.mrf.mxu0
  %v707 = vadd.f32 %v113, %v706
  %v708 = vpop.f32.mrf.mxu0
  %709 = vdwg.mxu0
  %710 = vmatpush.bf16.msra.mxu0 0
  %711 = vmatpush.bf16.msra.mxu0 0
  %712 = vmatpush.bf16.msra.mxu0 0
  %713 = vmatpush.bf16.msra.mxu0 0
  %714 = vmatpush.bf16.msra.mxu0 %v605
  %715 = vmatpush.bf16.msra.mxu0 %v490
  %716 = vmatpush.bf16.msra.mxu0 %v482
  %717 = vmatpush.bf16.msra.mxu0 %v474
  %718 = vmatmul.bf16.gmra.mxu0 %v592
  %v719 = vpop.f32.mrf.mxu0
  %v720 = vadd.f32 %v707, %v719
  %v721 = vpop.f32.mrf.mxu0
  %722 = vdwg.mxu0
  %723 = vmatpush.bf16.msra.mxu0 %v467
  %724 = vmatpush.bf16.msra.mxu0 %v459
  %725 = vmatpush.bf16.msra.mxu0 %v451
  %726 = vmatpush.bf16.msra.mxu0 %v443
  %727 = vmatpush.bf16.msra.mxu0 %v435
  %728 = vmatpush.bf16.msra.mxu0 %v427
  %729 = vmatpush.bf16.msra.mxu0 %v419
  %730 = vmatpush.bf16.msra.mxu0 %v411
  %731 = vmatmul.bf16.gmra.mxu0 %v128
  %v732 = vpop.f32.mrf.mxu0
  %v733 = vadd.f32 %v114, %v732
  %v734 = vpop.f32.mrf.mxu0
  %735 = vdwg.mxu0
  %736 = vmatpush.bf16.msra.mxu0 0
  %737 = vmatpush.bf16.msra.mxu0 0
  %738 = vmatpush.bf16.msra.mxu0 0
  %739 = vmatpush.bf16.msra.mxu0 0
  %740 = vmatpush.bf16.msra.mxu0 %v608
  %741 = vmatpush.bf16.msra.mxu0 %v491
  %742 = vmatpush.bf16.msra.mxu0 %v483
  %743 = vmatpush.bf16.msra.mxu0 %v475
  %744 = vmatmul.bf16.gmra.mxu0 %v592
  %v745 = vpop.f32.mrf.mxu0
  %v746 = vadd.f32 %v733, %v745
  %v747 = vpop.f32.mrf.mxu0
  %748 = vdwg.mxu0
  %749 = vmatpush.bf16.msra.mxu0 %v468
  %750 = vmatpush.bf16.msra.mxu0 %v460
  %751 = vmatpush.bf16.msra.mxu0 %v452
  %752 = vmatpush.bf16.msra.mxu0 %v444
  %753 = vmatpush.bf16.msra.mxu0 %v436
  %754 = vmatpush.bf16.msra.mxu0 %v428
  %755 = vmatpush.bf16.msra.mxu0 %v420
  %756 = vmatpush.bf16.msra.mxu0 %v412
  %757 = vmatmul.bf16.gmra.mxu0 %v128
  %v758 = vpop.f32.mrf.mxu0
  %v759 = vadd.f32 %v115, %v758
  %v760 = vpop.f32.mrf.mxu0
  %761 = vdwg.mxu0
  %762 = vmatpush.bf16.msra.mxu0 0
  %763 = vmatpush.bf16.msra.mxu0 0
  %764 = vmatpush.bf16.msra.mxu0 0
  %765 = vmatpush.bf16.msra.mxu0 0
  %766 = vmatpush.bf16.msra.mxu0 %v611
  %767 = vmatpush.bf16.msra.mxu0 %v492
  %768 = vmatpush.bf16.msra.mxu0 %v484
  %769 = vmatpush.bf16.msra.mxu0 %v476
  %770 = vmatmul.bf16.gmra.mxu0 %v592
  %v771 = vpop.f32.mrf.mxu0
  %v772 = vadd.f32 %v759, %v771
  %v773 = vpop.f32.mrf.mxu0
  %774 = vdwg.mxu0
  %775 = vmatpush.bf16.msra.mxu0 %v469
  %776 = vmatpush.bf16.msra.mxu0 %v461
  %777 = vmatpush.bf16.msra.mxu0 %v453
  %778 = vmatpush.bf16.msra.mxu0 %v445
  %779 = vmatpush.bf16.msra.mxu0 %v437
  %780 = vmatpush.bf16.msra.mxu0 %v429
  %781 = vmatpush.bf16.msra.mxu0 %v421
  %782 = vmatpush.bf16.msra.mxu0 %v413
  %783 = vmatmul.bf16.gmra.mxu0 %v128
  %v784 = vpop.f32.mrf.mxu0
  %v785 = vadd.f32 %v116, %v784
  %v786 = vpop.f32.mrf.mxu0
  %787 = vdwg.mxu0
  %788 = vmatpush.bf16.msra.mxu0 0
  %789 = vmatpush.bf16.msra.mxu0 0
  %790 = vmatpush.bf16.msra.mxu0 0
  %791 = vmatpush.bf16.msra.mxu0 0
  %792 = vmatpush.bf16.msra.mxu0 %v614
  %793 = vmatpush.bf16.msra.mxu0 %v493
  %794 = vmatpush.bf16.msra.mxu0 %v485
  %795 = vmatpush.bf16.msra.mxu0 %v477
  %796 = vmatmul.bf16.gmra.mxu0 %v592
  %v797 = vpop.f32.mrf.mxu0
  %v798 = vadd.f32 %v785, %v797
  %v799 = vpop.f32.mrf.mxu0
  %800 = vdwg.mxu0
  %801 = vmatpush.bf16.msra.mxu0 %v470
  %802 = vmatpush.bf16.msra.mxu0 %v462
  %803 = vmatpush.bf16.msra.mxu0 %v454
  %804 = vmatpush.bf16.msra.mxu0 %v446
  %805 = vmatpush.bf16.msra.mxu0 %v438
  %806 = vmatpush.bf16.msra.mxu0 %v430
  %807 = vmatpush.bf16.msra.mxu0 %v422
  %808 = vmatpush.bf16.msra.mxu0 %v414
  %809 = vmatmul.bf16.gmra.mxu0 %v128
  %v810 = vpop.f32.mrf.mxu0
  %v811 = vadd.f32 %v117, %v810
  %v812 = vpop.f32.mrf.mxu0
  %813 = vdwg.mxu0
  %814 = vmatpush.bf16.msra.mxu0 0
  %815 = vmatpush.bf16.msra.mxu0 0
  %816 = vmatpush.bf16.msra.mxu0 0
  %817 = vmatpush.bf16.msra.mxu0 0
  %818 = vmatpush.bf16.msra.mxu0 %v617
  %819 = vmatpush.bf16.msra.mxu0 %v494
  %820 = vmatpush.bf16.msra.mxu0 %v486
  %821 = vmatpush.bf16.msra.mxu0 %v478
  %822 = vmatmul.bf16.gmra.mxu0 %v592
  %v823 = vpop.f32.mrf.mxu0
  %v824 = vadd.f32 %v811, %v823
  %v825 = vpop.f32.mrf.mxu0
  %826 = vdwg.mxu0
  %v827 = vpack.c.bf16 %v668, %v642
  %v828 = vpack.c.bf16 %v720, %v694
  %v829 = vpack.c.bf16 %v772, %v746
  %v830 = vpack.c.bf16 %v824, %v798
  %v835 = vrot.slane %v827, 3
  %v836 = vrot.slane %v828, 6
  %v837 = vrot.slane %v828, 1
  %v838 = vrot.slane %v829, 4
  %v839 = vrot.slane %v829, 7
  %v840 = vrot.slane %v830, 2
  %v841 = vrot.slane %v830, 5
  %v844 = vsel %vm594, %v827, %v835
  %vm845 = vcmask 1042434
  %v848 = vsel %vm845, %v836, %v837
  %vm849 = vcmask 1041408
  %v850 = vsel %vm849, %v844, %v848
  %vm851 = vcmask 1044484
  %v854 = vsel %vm851, %v838, %v839
  %vm855 = vcmask 1046534
  %v858 = vsel %vm855, %v840, %v841
  %vm859 = vcmask 1045508
  %v860 = vsel %vm859, %v854, %v858
  %vm861 = vcmask 1043456
  %v862 = vsel %vm861, %v850, %v860
  %864 = vst [vmem:[%s3] sm:$0xff] %v862
  // Predicated region
  $region14: #{_lambda_.15} parent=0 // pred_check
    _
  $region15: #{_lambda_.15} parent=0 // pred_check_branch
    %866 = sbr.rel (0) target = $region17
  $region16: #{_lambda_.15} parent=0 // pred_region
    _
  $region17: #{_lambda_.15} parent=0 // pred_fallthru
    _
  // Predicated region
  $region18: #{_lambda_.15} parent=0 // pred_check
    _
  $region19: #{_lambda_.15} parent=0 // pred_check_branch
    %868 = sbr.rel (0) target = $region21
  $region20: #{_lambda_.15} parent=0 // pred_region
    _
  $region21: #{_lambda_.15} parent=0 // pred_fallthru
    _

// kernel: _lambda_.14
$region0: #{_lambda_.14}
  #allocation0 [shape = 'u32[]', space=smem, size = 0x4, offset = 0x4, fixed_abs, tag = 'smem constant byte address 0x4 - core index']
  #allocation1 [shape = 'u32[72,128]{1,0:T(1,128)}', space=vmem, size = 0x9000, scoped, tag = 'internal scratch']
  %s0 = inlined_call_operand.vmem [shape: bf16[2,1074], index: 0, kind: input, shape index: {}]
  %s1 = inlined_call_operand.vmem [shape: bf16[1074,256], index: 1, kind: input, shape index: {}]
  %s2 = inlined_call_operand.vmem [shape: f32[1,256], index: 2, kind: input, shape index: {}]
  %s3 = inlined_call_operand.vmem [shape: f32[2,256], index: 3, kind: output, shape index: {}]
  %s4 = sld [smem:[#allocation0]]
  $region22: #{_lambda_.14} parent=0
    _
  %s6 = ssub.s32 1, %s4
  %s7 = scalar_select 0, %s6, %s4
  // Predicated region
  $region2: #{_lambda_.14} parent=0 // pred_check
    _
  $region3: #{_lambda_.14} parent=0 // pred_check_branch
    %9 = sbr.rel (0) target = $region5
  $region4: #{_lambda_.14} parent=0 // pred_region
    _
  $region5: #{_lambda_.14} parent=0 // pred_fallthru
    _
  // Predicated region
  $region6: #{_lambda_.14} parent=0 // pred_check
    _
  $region7: #{_lambda_.14} parent=0 // pred_check_branch
    %11 = sbr.rel (0) target = $region9
  $region8: #{_lambda_.14} parent=0 // pred_region
    _
  $region9: #{_lambda_.14} parent=0 // pred_fallthru
    _
  // Predicated region
  $region10: #{_lambda_.14} parent=0 // pred_check
    _
  $region11: #{_lambda_.14} parent=0 // pred_check_branch
    %13 = sbr.rel (0) target = $region13
  $region12: #{_lambda_.14} parent=0 // pred_region
    _
  $region13: #{_lambda_.14} parent=0 // pred_fallthru
    _
  %v15 = vld [vmem:[%s0] sm:$0xff]
  %v16 = vld [vmem:[%s0 + $0x8] sm:$0x1]
  %v17 = vld [vmem:[%s1] sm:$0xff]
  %v18 = vld [vmem:[%s1 + $0x8] sm:$0xff]
  %v19 = vld [vmem:[%s1 + $0x10] sm:$0xff]
  %v20 = vld [vmem:[%s1 + $0x18] sm:$0xff]
  %v21 = vld [vmem:[%s1 + $0x20] sm:$0xff]
  %v22 = vld [vmem:[%s1 + $0x28] sm:$0xff]
  %v23 = vld [vmem:[%s1 + $0x30] sm:$0xff]
  %v24 = vld [vmem:[%s1 + $0x38] sm:$0xff]
  %v25 = vld [vmem:[%s1 + $0x40] sm:$0xff]
  %v26 = vld [vmem:[%s1 + $0x48] sm:$0xff]
  %v27 = vld [vmem:[%s1 + $0x50] sm:$0xff]
  %v28 = vld [vmem:[%s1 + $0x58] sm:$0xff]
  %v29 = vld [vmem:[%s1 + $0x60] sm:$0xff]
  %v30 = vld [vmem:[%s1 + $0x68] sm:$0xff]
  %v31 = vld [vmem:[%s1 + $0x70] sm:$0xff]
  %v32 = vld [vmem:[%s1 + $0x78] sm:$0xff]
  %v33 = vld [vmem:[%s1 + $0x80] sm:$0xff]
  %v34 = vld [vmem:[%s1 + $0x88] sm:$0xff]
  %v35 = vld [vmem:[%s1 + $0x90] sm:$0xff]
  %v36 = vld [vmem:[%s1 + $0x98] sm:$0xff]
  %v37 = vld [vmem:[%s1 + $0xa0] sm:$0xff]
  %v38 = vld [vmem:[%s1 + $0xa8] sm:$0xff]
  %v39 = vld [vmem:[%s1 + $0xb0] sm:$0xff]
  %v40 = vld [vmem:[%s1 + $0xb8] sm:$0xff]
  %v41 = vld [vmem:[%s1 + $0xc0] sm:$0xff]
  %v42 = vld [vmem:[%s1 + $0xc8] sm:$0xff]
  %v43 = vld [vmem:[%s1 + $0xd0] sm:$0xff]
  %v44 = vld [vmem:[%s1 + $0xd8] sm:$0xff]
  %v45 = vld [vmem:[%s1 + $0xe0] sm:$0xff]
  %v46 = vld [vmem:[%s1 + $0xe8] sm:$0xff]
  %v47 = vld [vmem:[%s1 + $0xf0] sm:$0xff]
  %v48 = vld [vmem:[%s1 + $0xf8] sm:$0xff]
  %v49 = vld [vmem:[%s1 + $0x100] sm:$0xff]
  %v50 = vld [vmem:[%s1 + $0x108] sm:$0xff]
  %v51 = vld [vmem:[%s1 + $0x110] sm:$0xff]
  %v52 = vld [vmem:[%s1 + $0x118] sm:$0xff]
  %v53 = vld [vmem:[%s1 + $0x120] sm:$0xff]
  %v54 = vld [vmem:[%s1 + $0x128] sm:$0xff]
  %v55 = vld [vmem:[%s1 + $0x130] sm:$0xff]
  %v56 = vld [vmem:[%s1 + $0x138] sm:$0xff]
  %v57 = vld [vmem:[%s1 + $0x140] sm:$0xff]
  %v58 = vld [vmem:[%s1 + $0x148] sm:$0xff]
  %v59 = vld [vmem:[%s1 + $0x150] sm:$0xff]
  %v60 = vld [vmem:[%s1 + $0x158] sm:$0xff]
  %v61 = vld [vmem:[%s1 + $0x160] sm:$0xff]
  %v62 = vld [vmem:[%s1 + $0x168] sm:$0xff]
  %v63 = vld [vmem:[%s1 + $0x170] sm:$0xff]
  %v64 = vld [vmem:[%s1 + $0x178] sm:$0xff]
  %v65 = vld [vmem:[%s1 + $0x180] sm:$0xff]
  %v66 = vld [vmem:[%s1 + $0x188] sm:$0xff]
  %v67 = vld [vmem:[%s1 + $0x190] sm:$0xff]
  %v68 = vld [vmem:[%s1 + $0x198] sm:$0xff]
  %v69 = vld [vmem:[%s1 + $0x1a0] sm:$0xff]
  %v70 = vld [vmem:[%s1 + $0x1a8] sm:$0xff]
  %v71 = vld [vmem:[%s1 + $0x1b0] sm:$0xff]
  %v72 = vld [vmem:[%s1 + $0x1b8] sm:$0xff]
  %v73 = vld [vmem:[%s1 + $0x1c0] sm:$0xff]
  %v74 = vld [vmem:[%s1 + $0x1c8] sm:$0xff]
  %v75 = vld [vmem:[%s1 + $0x1d0] sm:$0xff]
  %v76 = vld [vmem:[%s1 + $0x1d8] sm:$0xff]
  %v77 = vld [vmem:[%s1 + $0x1e0] sm:$0xff]
  %v78 = vld [vmem:[%s1 + $0x1e8] sm:$0xff]
  %v79 = vld [vmem:[%s1 + $0x1f0] sm:$0xff]
  %v80 = vld [vmem:[%s1 + $0x1f8] sm:$0xff]
  %v81 = vld [vmem:[%s1 + $0x200] sm:$0xff]
  %v82 = vld [vmem:[%s1 + $0x208] sm:$0xff]
  %v83 = vld [vmem:[%s1 + $0x210] sm:$0xff]
  %v84 = vld [vmem:[%s1 + $0x218] sm:$0xff]
  %v85 = vld [vmem:[%s1 + $0x220] sm:$0xff]
  %v86 = vld [vmem:[%s1 + $0x228] sm:$0xff]
  %v87 = vld [vmem:[%s1 + $0x230] sm:$0xff]
  %v88 = vld [vmem:[%s1 + $0x238] sm:$0xff]
  %v89 = vld [vmem:[%s1 + $0x240] sm:$0xff]
  %v90 = vld [vmem:[%s1 + $0x248] sm:$0xff]
  %v91 = vld [vmem:[%s1 + $0x250] sm:$0xff]
  %v92 = vld [vmem:[%s1 + $0x258] sm:$0xff]
  %v93 = vld [vmem:[%s1 + $0x260] sm:$0xff]
  %v94 = vld [vmem:[%s1 + $0x268] sm:$0xff]
  %v95 = vld [vmem:[%s1 + $0x270] sm:$0xff]
  %v96 = vld [vmem:[%s1 + $0x278] sm:$0xff]
  %v97 = vld [vmem:[%s1 + $0x280] sm:$0xff]
  %v98 = vld [vmem:[%s1 + $0x288] sm:$0xff]
  %v99 = vld [vmem:[%s1 + $0x290] sm:$0xff]
  %v100 = vld [vmem:[%s1 + $0x298] sm:$0xff]
  %v101 = vld [vmem:[%s1 + $0x2a0] sm:$0xff]
  %v102 = vld [vmem:[%s1 + $0x2a8] sm:$0xff]
  %v103 = vld [vmem:[%s1 + $0x2b0] sm:$0xff]
  %v104 = vld [vmem:[%s1 + $0x2b8] sm:$0xff]
  %v105 = vld [vmem:[%s1 + $0x2c0] sm:$0xff]
  %v106 = vld [vmem:[%s1 + $0x2c8] sm:$0xff]
  %v107 = vld [vmem:[%s1 + $0x2d0] sm:$0xff]
  %v108 = vld [vmem:[%s1 + $0x2d8] sm:$0xff]
  %v109 = vld [vmem:[%s1 + $0x2e0] sm:$0xff]
  %v110 = vld [vmem:[%s1 + $0x2e8] sm:$0xff]
  %v111 = vld [vmem:[%s1 + $0x2f0] sm:$0xff]
  %v112 = vld [vmem:[%s1 + $0x2f8] sm:$0xff]
  %v113 = vld [vmem:[%s1 + $0x300] sm:$0xff]
  %v114 = vld [vmem:[%s1 + $0x308] sm:$0xff]
  %v115 = vld [vmem:[%s1 + $0x310] sm:$0xff]
  %v116 = vld [vmem:[%s1 + $0x318] sm:$0xff]
  %v117 = vld [vmem:[%s1 + $0x320] sm:$0xff]
  %v118 = vld [vmem:[%s1 + $0x328] sm:$0xff]
  %v119 = vld [vmem:[%s1 + $0x330] sm:$0xff]
  %v120 = vld [vmem:[%s1 + $0x338] sm:$0xff]
  %v121 = vld [vmem:[%s1 + $0x340] sm:$0xff]
  %v122 = vld [vmem:[%s1 + $0x348] sm:$0xff]
  %v123 = vld [vmem:[%s1 + $0x350] sm:$0xff]
  %v124 = vld [vmem:[%s1 + $0x358] sm:$0xff]
  %v125 = vld [vmem:[%s1 + $0x360] sm:$0xff]
  %v126 = vld [vmem:[%s1 + $0x368] sm:$0xff]
  %v127 = vld [vmem:[%s1 + $0x370] sm:$0xff]
  %v128 = vld [vmem:[%s1 + $0x378] sm:$0xff]
  %v129 = vld [vmem:[%s1 + $0x380] sm:$0xff]
  %v130 = vld [vmem:[%s1 + $0x388] sm:$0xff]
  %v131 = vld [vmem:[%s1 + $0x390] sm:$0xff]
  %v132 = vld [vmem:[%s1 + $0x398] sm:$0xff]
  %v133 = vld [vmem:[%s1 + $0x3a0] sm:$0xff]
  %v134 = vld [vmem:[%s1 + $0x3a8] sm:$0xff]
  %v135 = vld [vmem:[%s1 + $0x3b0] sm:$0xff]
  %v136 = vld [vmem:[%s1 + $0x3b8] sm:$0xff]
  %v137 = vld [vmem:[%s1 + $0x3c0] sm:$0xff]
  %v138 = vld [vmem:[%s1 + $0x3c8] sm:$0xff]
  %v139 = vld [vmem:[%s1 + $0x3d0] sm:$0xff]
  %v140 = vld [vmem:[%s1 + $0x3d8] sm:$0xff]
  %v141 = vld [vmem:[%s1 + $0x3e0] sm:$0xff]
  %v142 = vld [vmem:[%s1 + $0x3e8] sm:$0xff]
  %v143 = vld [vmem:[%s1 + $0x3f0] sm:$0xff]
  %v144 = vld [vmem:[%s1 + $0x3f8] sm:$0xff]
  %v145 = vld [vmem:[%s1 + $0x400] sm:$0xff]
  %v146 = vld [vmem:[%s1 + $0x408] sm:$0xff]
  %v147 = vld [vmem:[%s1 + $0x410] sm:$0xff]
  %v148 = vld [vmem:[%s1 + $0x418] sm:$0xff]
  %v149 = vld [vmem:[%s1 + $0x420] sm:$0xff]
  %v150 = vld [vmem:[%s1 + $0x428] sm:$0xff]
  %v151 = vld [vmem:[%s1 + $0x430] sm:$0x11]
  %v152 = vld [vmem:[%s2] sm:$0x3]
  %v154 = vperm.slane %v152, 0
  %v155 = vperm.slane %v152, 1
  %159 = vst [vmem:[#allocation1] ss:$9 sm:$0xff] %v15
  %v160 = vld [vmem:[#allocation1] sm:$0xff]
  %v161 = vld [vmem:[#allocation1 + $0x9] sm:$0xff]
  %v162 = vld [vmem:[#allocation1 + $0x12] sm:$0xff]
  %v163 = vld [vmem:[#allocation1 + $0x1b] sm:$0xff]
  %v164 = vld [vmem:[#allocation1 + $0x24] sm:$0xff]
  %v165 = vld [vmem:[#allocation1 + $0x2d] sm:$0xff]
  %v166 = vld [vmem:[#allocation1 + $0x36] sm:$0xff]
  %v167 = vld [vmem:[#allocation1 + $0x3f] sm:$0xff]
  %169 = vst [vmem:[#allocation1] ss:$9 sm:$0xff] %v16
  %v170 = vld [vmem:[#allocation1] sm:$0xff]
  %v314 = vunpack.c.l.b16 %v17
  %v315 = vunpack.c.h.b16 %v17
  %v316 = vunpack.c.l.b16 %v18
  %v317 = vunpack.c.h.b16 %v18
  %v318 = vunpack.c.l.b16 %v19
  %v319 = vunpack.c.h.b16 %v19
  %v320 = vunpack.c.l.b16 %v20
  %v321 = vunpack.c.h.b16 %v20
  %v322 = vunpack.c.l.b16 %v21
  %v323 = vunpack.c.h.b16 %v21
  %v324 = vunpack.c.l.b16 %v22
  %v325 = vunpack.c.h.b16 %v22
  %v326 = vunpack.c.l.b16 %v23
  %v327 = vunpack.c.h.b16 %v23
  %v328 = vunpack.c.l.b16 %v24
  %v329 = vunpack.c.h.b16 %v24
  %v330 = vunpack.c.l.b16 %v25
  %v331 = vunpack.c.h.b16 %v25
  %v332 = vunpack.c.l.b16 %v26
  %v333 = vunpack.c.h.b16 %v26
  %v334 = vunpack.c.l.b16 %v27
  %v335 = vunpack.c.h.b16 %v27
  %v336 = vunpack.c.l.b16 %v28
  %v337 = vunpack.c.h.b16 %v28
  %v338 = vunpack.c.l.b16 %v29
  %v339 = vunpack.c.h.b16 %v29
  %v340 = vunpack.c.l.b16 %v30
  %v341 = vunpack.c.h.b16 %v30
  %v342 = vunpack.c.l.b16 %v31
  %v343 = vunpack.c.h.b16 %v31
  %v344 = vunpack.c.l.b16 %v32
  %v345 = vunpack.c.h.b16 %v32
  %v346 = vunpack.c.l.b16 %v33
  %v347 = vunpack.c.h.b16 %v33
  %v348 = vunpack.c.l.b16 %v34
  %v349 = vunpack.c.h.b16 %v34
  %v350 = vunpack.c.l.b16 %v35
  %v351 = vunpack.c.h.b16 %v35
  %v352 = vunpack.c.l.b16 %v36
  %v353 = vunpack.c.h.b16 %v36
  %v354 = vunpack.c.l.b16 %v37
  %v355 = vunpack.c.h.b16 %v37
  %v356 = vunpack.c.l.b16 %v38
  %v357 = vunpack.c.h.b16 %v38
  %v358 = vunpack.c.l.b16 %v39
  %v359 = vunpack.c.h.b16 %v39
  %v360 = vunpack.c.l.b16 %v40
  %v361 = vunpack.c.h.b16 %v40
  %v362 = vunpack.c.l.b16 %v41
  %v363 = vunpack.c.h.b16 %v41
  %v364 = vunpack.c.l.b16 %v42
  %v365 = vunpack.c.h.b16 %v42
  %v366 = vunpack.c.l.b16 %v43
  %v367 = vunpack.c.h.b16 %v43
  %v368 = vunpack.c.l.b16 %v44
  %v369 = vunpack.c.h.b16 %v44
  %v370 = vunpack.c.l.b16 %v45
  %v371 = vunpack.c.h.b16 %v45
  %v372 = vunpack.c.l.b16 %v46
  %v373 = vunpack.c.h.b16 %v46
  %v374 = vunpack.c.l.b16 %v47
  %v375 = vunpack.c.h.b16 %v47
  %v376 = vunpack.c.l.b16 %v48
  %v377 = vunpack.c.h.b16 %v48
  %v378 = vunpack.c.l.b16 %v49
  %v379 = vunpack.c.h.b16 %v49
  %v380 = vunpack.c.l.b16 %v50
  %v381 = vunpack.c.h.b16 %v50
  %v382 = vunpack.c.l.b16 %v51
  %v383 = vunpack.c.h.b16 %v51
  %v384 = vunpack.c.l.b16 %v52
  %v385 = vunpack.c.h.b16 %v52
  %v386 = vunpack.c.l.b16 %v53
  %v387 = vunpack.c.h.b16 %v53
  %v388 = vunpack.c.l.b16 %v54
  %v389 = vunpack.c.h.b16 %v54
  %v390 = vunpack.c.l.b16 %v55
  %v391 = vunpack.c.h.b16 %v55
  %v392 = vunpack.c.l.b16 %v56
  %v393 = vunpack.c.h.b16 %v56
  %v394 = vunpack.c.l.b16 %v57
  %v395 = vunpack.c.h.b16 %v57
  %v396 = vunpack.c.l.b16 %v58
  %v397 = vunpack.c.h.b16 %v58
  %v398 = vunpack.c.l.b16 %v59
  %v399 = vunpack.c.h.b16 %v59
  %v400 = vunpack.c.l.b16 %v60
  %v401 = vunpack.c.h.b16 %v60
  %v402 = vunpack.c.l.b16 %v61
  %v403 = vunpack.c.h.b16 %v61
  %v404 = vunpack.c.l.b16 %v62
  %v405 = vunpack.c.h.b16 %v62
  %v406 = vunpack.c.l.b16 %v63
  %v407 = vunpack.c.h.b16 %v63
  %v408 = vunpack.c.l.b16 %v64
  %v409 = vunpack.c.h.b16 %v64
  %v410 = vunpack.c.l.b16 %v65
  %v411 = vunpack.c.h.b16 %v65
  %v412 = vunpack.c.l.b16 %v66
  %v413 = vunpack.c.h.b16 %v66
  %v414 = vunpack.c.l.b16 %v67
  %v415 = vunpack.c.h.b16 %v67
  %v416 = vunpack.c.l.b16 %v68
  %v417 = vunpack.c.h.b16 %v68
  %v418 = vunpack.c.l.b16 %v69
  %v419 = vunpack.c.h.b16 %v69
  %v420 = vunpack.c.l.b16 %v70
  %v421 = vunpack.c.h.b16 %v70
  %v422 = vunpack.c.l.b16 %v71
  %v423 = vunpack.c.h.b16 %v71
  %v424 = vunpack.c.l.b16 %v72
  %v425 = vunpack.c.h.b16 %v72
  %v426 = vunpack.c.l.b16 %v73
  %v427 = vunpack.c.h.b16 %v73
  %v428 = vunpack.c.l.b16 %v74
  %v429 = vunpack.c.h.b16 %v74
  %v430 = vunpack.c.l.b16 %v75
  %v431 = vunpack.c.h.b16 %v75
  %v432 = vunpack.c.l.b16 %v76
  %v433 = vunpack.c.h.b16 %v76
  %v434 = vunpack.c.l.b16 %v77
  %v435 = vunpack.c.h.b16 %v77
  %v436 = vunpack.c.l.b16 %v78
  %v437 = vunpack.c.h.b16 %v78
  %v438 = vunpack.c.l.b16 %v79
  %v439 = vunpack.c.h.b16 %v79
  %v440 = vunpack.c.l.b16 %v80
  %v441 = vunpack.c.h.b16 %v80
  %v442 = vunpack.c.l.b16 %v81
  %v443 = vunpack.c.h.b16 %v81
  %v444 = vunpack.c.l.b16 %v82
  %v445 = vunpack.c.h.b16 %v82
  %v446 = vunpack.c.l.b16 %v83
  %v447 = vunpack.c.h.b16 %v83
  %v448 = vunpack.c.l.b16 %v84
  %v449 = vunpack.c.h.b16 %v84
  %v450 = vunpack.c.l.b16 %v85
  %v451 = vunpack.c.h.b16 %v85
  %v452 = vunpack.c.l.b16 %v86
  %v453 = vunpack.c.h.b16 %v86
  %v454 = vunpack.c.l.b16 %v87
  %v455 = vunpack.c.h.b16 %v87
  %v456 = vunpack.c.l.b16 %v88
  %v457 = vunpack.c.h.b16 %v88
  %v458 = vunpack.c.l.b16 %v89
  %v459 = vunpack.c.h.b16 %v89
  %v460 = vunpack.c.l.b16 %v90
  %v461 = vunpack.c.h.b16 %v90
  %v462 = vunpack.c.l.b16 %v91
  %v463 = vunpack.c.h.b16 %v91
  %v464 = vunpack.c.l.b16 %v92
  %v465 = vunpack.c.h.b16 %v92
  %v466 = vunpack.c.l.b16 %v93
  %v467 = vunpack.c.h.b16 %v93
  %v468 = vunpack.c.l.b16 %v94
  %v469 = vunpack.c.h.b16 %v94
  %v470 = vunpack.c.l.b16 %v95
  %v471 = vunpack.c.h.b16 %v95
  %v472 = vunpack.c.l.b16 %v96
  %v473 = vunpack.c.h.b16 %v96
  %v474 = vunpack.c.l.b16 %v97
  %v475 = vunpack.c.h.b16 %v97
  %v476 = vunpack.c.l.b16 %v98
  %v477 = vunpack.c.h.b16 %v98
  %v478 = vunpack.c.l.b16 %v99
  %v479 = vunpack.c.h.b16 %v99
  %v480 = vunpack.c.l.b16 %v100
  %v481 = vunpack.c.h.b16 %v100
  %v482 = vunpack.c.l.b16 %v101
  %v483 = vunpack.c.h.b16 %v101
  %v484 = vunpack.c.l.b16 %v102
  %v485 = vunpack.c.h.b16 %v102
  %v486 = vunpack.c.l.b16 %v103
  %v487 = vunpack.c.h.b16 %v103
  %v488 = vunpack.c.l.b16 %v104
  %v489 = vunpack.c.h.b16 %v104
  %v490 = vunpack.c.l.b16 %v105
  %v491 = vunpack.c.h.b16 %v105
  %v492 = vunpack.c.l.b16 %v106
  %v493 = vunpack.c.h.b16 %v106
  %v494 = vunpack.c.l.b16 %v107
  %v495 = vunpack.c.h.b16 %v107
  %v496 = vunpack.c.l.b16 %v108
  %v497 = vunpack.c.h.b16 %v108
  %v498 = vunpack.c.l.b16 %v109
  %v499 = vunpack.c.h.b16 %v109
  %v500 = vunpack.c.l.b16 %v110
  %v501 = vunpack.c.h.b16 %v110
  %v502 = vunpack.c.l.b16 %v111
  %v503 = vunpack.c.h.b16 %v111
  %v504 = vunpack.c.l.b16 %v112
  %v505 = vunpack.c.h.b16 %v112
  %v506 = vunpack.c.l.b16 %v113
  %v507 = vunpack.c.h.b16 %v113
  %v508 = vunpack.c.l.b16 %v114
  %v509 = vunpack.c.h.b16 %v114
  %v510 = vunpack.c.l.b16 %v115
  %v511 = vunpack.c.h.b16 %v115
  %v512 = vunpack.c.l.b16 %v116
  %v513 = vunpack.c.h.b16 %v116
  %v514 = vunpack.c.l.b16 %v117
  %v515 = vunpack.c.h.b16 %v117
  %v516 = vunpack.c.l.b16 %v118
  %v517 = vunpack.c.h.b16 %v118
  %v518 = vunpack.c.l.b16 %v119
  %v519 = vunpack.c.h.b16 %v119
  %v520 = vunpack.c.l.b16 %v120
  %v521 = vunpack.c.h.b16 %v120
  %v522 = vunpack.c.l.b16 %v121
  %v523 = vunpack.c.h.b16 %v121
  %v524 = vunpack.c.l.b16 %v122
  %v525 = vunpack.c.h.b16 %v122
  %v526 = vunpack.c.l.b16 %v123
  %v527 = vunpack.c.h.b16 %v123
  %v528 = vunpack.c.l.b16 %v124
  %v529 = vunpack.c.h.b16 %v124
  %v530 = vunpack.c.l.b16 %v125
  %v531 = vunpack.c.h.b16 %v125
  %v532 = vunpack.c.l.b16 %v126
  %v533 = vunpack.c.h.b16 %v126
  %v534 = vunpack.c.l.b16 %v127
  %v535 = vunpack.c.h.b16 %v127
  %v536 = vunpack.c.l.b16 %v128
  %v537 = vunpack.c.h.b16 %v128
  %v538 = vunpack.c.l.b16 %v129
  %v539 = vunpack.c.h.b16 %v129
  %v540 = vunpack.c.l.b16 %v130
  %v541 = vunpack.c.h.b16 %v130
  %v542 = vunpack.c.l.b16 %v131
  %v543 = vunpack.c.h.b16 %v131
  %v544 = vunpack.c.l.b16 %v132
  %v545 = vunpack.c.h.b16 %v132
  %v546 = vunpack.c.l.b16 %v133
  %v547 = vunpack.c.h.b16 %v133
  %v548 = vunpack.c.l.b16 %v134
  %v549 = vunpack.c.h.b16 %v134
  %v550 = vunpack.c.l.b16 %v135
  %v551 = vunpack.c.h.b16 %v135
  %v552 = vunpack.c.l.b16 %v136
  %v553 = vunpack.c.h.b16 %v136
  %v554 = vunpack.c.l.b16 %v137
  %v555 = vunpack.c.h.b16 %v137
  %v556 = vunpack.c.l.b16 %v138
  %v557 = vunpack.c.h.b16 %v138
  %v558 = vunpack.c.l.b16 %v139
  %v559 = vunpack.c.h.b16 %v139
  %v560 = vunpack.c.l.b16 %v140
  %v561 = vunpack.c.h.b16 %v140
  %v562 = vunpack.c.l.b16 %v141
  %v563 = vunpack.c.h.b16 %v141
  %v564 = vunpack.c.l.b16 %v142
  %v565 = vunpack.c.h.b16 %v142
  %v566 = vunpack.c.l.b16 %v143
  %v567 = vunpack.c.h.b16 %v143
  %v568 = vunpack.c.l.b16 %v144
  %v569 = vunpack.c.h.b16 %v144
  %v570 = vunpack.c.l.b16 %v145
  %v571 = vunpack.c.h.b16 %v145
  %v572 = vunpack.c.l.b16 %v146
  %v573 = vunpack.c.h.b16 %v146
  %v574 = vunpack.c.l.b16 %v147
  %v575 = vunpack.c.h.b16 %v147
  %v576 = vunpack.c.l.b16 %v148
  %v577 = vunpack.c.h.b16 %v148
  %v578 = vunpack.c.l.b16 %v149
  %v579 = vunpack.c.h.b16 %v149
  %v580 = vunpack.c.l.b16 %v150
  %v581 = vunpack.c.h.b16 %v150
  %v582 = vunpack.c.l.b16 %v151
  %v583 = vunpack.c.h.b16 %v151
  %v584 = vpack.c.b16 %v316, %v314
  %v585 = vpack.c.b16 %v317, %v315
  %v586 = vpack.c.b16 %v320, %v318
  %v587 = vpack.c.b16 %v321, %v319
  %v588 = vpack.c.b16 %v324, %v322
  %v589 = vpack.c.b16 %v325, %v323
  %v590 = vpack.c.b16 %v328, %v326
  %v591 = vpack.c.b16 %v329, %v327
  %v592 = vpack.c.b16 %v332, %v330
  %v593 = vpack.c.b16 %v333, %v331
  %v594 = vpack.c.b16 %v336, %v334
  %v595 = vpack.c.b16 %v337, %v335
  %v596 = vpack.c.b16 %v340, %v338
  %v597 = vpack.c.b16 %v341, %v339
  %v598 = vpack.c.b16 %v344, %v342
  %v599 = vpack.c.b16 %v345, %v343
  %v600 = vpack.c.b16 %v348, %v346
  %v601 = vpack.c.b16 %v349, %v347
  %v602 = vpack.c.b16 %v352, %v350
  %v603 = vpack.c.b16 %v353, %v351
  %v604 = vpack.c.b16 %v356, %v354
  %v605 = vpack.c.b16 %v357, %v355
  %v606 = vpack.c.b16 %v360, %v358
  %v607 = vpack.c.b16 %v361, %v359
  %v608 = vpack.c.b16 %v364, %v362
  %v609 = vpack.c.b16 %v365, %v363
  %v610 = vpack.c.b16 %v368, %v366
  %v611 = vpack.c.b16 %v369, %v367
  %v612 = vpack.c.b16 %v372, %v370
  %v613 = vpack.c.b16 %v373, %v371
  %v614 = vpack.c.b16 %v376, %v374
  %v615 = vpack.c.b16 %v377, %v375
  %v616 = vpack.c.b16 %v380, %v378
  %v617 = vpack.c.b16 %v381, %v379
  %v618 = vpack.c.b16 %v384, %v382
  %v619 = vpack.c.b16 %v385, %v383
  %v620 = vpack.c.b16 %v388, %v386
  %v621 = vpack.c.b16 %v389, %v387
  %v622 = vpack.c.b16 %v392, %v390
  %v623 = vpack.c.b16 %v393, %v391
  %v624 = vpack.c.b16 %v396, %v394
  %v625 = vpack.c.b16 %v397, %v395
  %v626 = vpack.c.b16 %v400, %v398
  %v627 = vpack.c.b16 %v401, %v399
  %v628 = vpack.c.b16 %v404, %v402
  %v629 = vpack.c.b16 %v405, %v403
  %v630 = vpack.c.b16 %v408, %v406
  %v631 = vpack.c.b16 %v409, %v407
  %v632 = vpack.c.b16 %v412, %v410
  %v633 = vpack.c.b16 %v413, %v411
  %v634 = vpack.c.b16 %v416, %v414
  %v635 = vpack.c.b16 %v417, %v415
  %v636 = vpack.c.b16 %v420, %v418
  %v637 = vpack.c.b16 %v421, %v419
  %v638 = vpack.c.b16 %v424, %v422
  %v639 = vpack.c.b16 %v425, %v423
  %v640 = vpack.c.b16 %v428, %v426
  %v641 = vpack.c.b16 %v429, %v427
  %v642 = vpack.c.b16 %v432, %v430
  %v643 = vpack.c.b16 %v433, %v431
  %v644 = vpack.c.b16 %v436, %v434
  %v645 = vpack.c.b16 %v437, %v435
  %v646 = vpack.c.b16 %v440, %v438
  %v647 = vpack.c.b16 %v441, %v439
  %v648 = vpack.c.b16 %v444, %v442
  %v649 = vpack.c.b16 %v445, %v443
  %v650 = vpack.c.b16 %v448, %v446
  %v651 = vpack.c.b16 %v449, %v447
  %v652 = vpack.c.b16 %v452, %v450
  %v653 = vpack.c.b16 %v453, %v451
  %v654 = vpack.c.b16 %v456, %v454
  %v655 = vpack.c.b16 %v457, %v455
  %v656 = vpack.c.b16 %v460, %v458
  %v657 = vpack.c.b16 %v461, %v459
  %v658 = vpack.c.b16 %v464, %v462
  %v659 = vpack.c.b16 %v465, %v463
  %v660 = vpack.c.b16 %v468, %v466
  %v661 = vpack.c.b16 %v469, %v467
  %v662 = vpack.c.b16 %v472, %v470
  %v663 = vpack.c.b16 %v473, %v471
  %v664 = vpack.c.b16 %v476, %v474
  %v665 = vpack.c.b16 %v477, %v475
  %v666 = vpack.c.b16 %v480, %v478
  %v667 = vpack.c.b16 %v481, %v479
  %v668 = vpack.c.b16 %v484, %v482
  %v669 = vpack.c.b16 %v485, %v483
  %v670 = vpack.c.b16 %v488, %v486
  %v671 = vpack.c.b16 %v489, %v487
  %v672 = vpack.c.b16 %v492, %v490
  %v673 = vpack.c.b16 %v493, %v491
  %v674 = vpack.c.b16 %v496, %v494
  %v675 = vpack.c.b16 %v497, %v495
  %v676 = vpack.c.b16 %v500, %v498
  %v677 = vpack.c.b16 %v501, %v499
  %v678 = vpack.c.b16 %v504, %v502
  %v679 = vpack.c.b16 %v505, %v503
  %v680 = vpack.c.b16 %v508, %v506
  %v681 = vpack.c.b16 %v509, %v507
  %v682 = vpack.c.b16 %v512, %v510
  %v683 = vpack.c.b16 %v513, %v511
  %v684 = vpack.c.b16 %v516, %v514
  %v685 = vpack.c.b16 %v517, %v515
  %v686 = vpack.c.b16 %v520, %v518
  %v687 = vpack.c.b16 %v521, %v519
  %v688 = vpack.c.b16 %v524, %v522
  %v689 = vpack.c.b16 %v525, %v523
  %v690 = vpack.c.b16 %v528, %v526
  %v691 = vpack.c.b16 %v529, %v527
  %v692 = vpack.c.b16 %v532, %v530
  %v693 = vpack.c.b16 %v533, %v531
  %v694 = vpack.c.b16 %v536, %v534
  %v695 = vpack.c.b16 %v537, %v535
  %v696 = vpack.c.b16 %v540, %v538
  %v697 = vpack.c.b16 %v541, %v539
  %v698 = vpack.c.b16 %v544, %v542
  %v699 = vpack.c.b16 %v545, %v543
  %v700 = vpack.c.b16 %v548, %v546
  %v701 = vpack.c.b16 %v549, %v547
  %v702 = vpack.c.b16 %v552, %v550
  %v703 = vpack.c.b16 %v553, %v551
  %v704 = vpack.c.b16 %v556, %v554
  %v705 = vpack.c.b16 %v557, %v555
  %v706 = vpack.c.b16 %v560, %v558
  %v707 = vpack.c.b16 %v561, %v559
  %v708 = vpack.c.b16 %v564, %v562
  %v709 = vpack.c.b16 %v565, %v563
  %v710 = vpack.c.b16 %v568, %v566
  %v711 = vpack.c.b16 %v569, %v567
  %v712 = vpack.c.b16 %v572, %v570
  %v713 = vpack.c.b16 %v573, %v571
  %v714 = vpack.c.b16 %v576, %v574
  %v715 = vpack.c.b16 %v577, %v575
  %v716 = vpack.c.b16 %v580, %v578
  %v717 = vpack.c.b16 %v581, %v579
  %v718 = vpack.c.b16 %v582, %v582
  %v719 = vpack.c.b16 %v583, %v583
  %vm854 = vcmask 408576
  %v855 = vsel %vm854, %v170, 0
  %vm857 = vcmask 1040384
  %v859 = vsel %vm857, %v718, 0
  %v862 = vsel %vm857, %v719, 0
  %864 = vmatpush.bf16.msra.mxu0 %v598
  %865 = vmatpush.bf16.msra.mxu0 %v596
  %866 = vmatpush.bf16.msra.mxu0 %v594
  %867 = vmatpush.bf16.msra.mxu0 %v592
  %868 = vmatpush.bf16.msra.mxu0 %v590
  %869 = vmatpush.bf16.msra.mxu0 %v588
  %870 = vmatpush.bf16.msra.mxu0 %v586
  %871 = vmatpush.bf16.msra.mxu0 %v584
  %872 = vmatmul.bf16.gmra.mxu0 %v160
  %v873 = vpop.f32.mrf.mxu0
  %v874 = vadd.f32 %v154, %v873
  %v875 = vpop.f32.mrf.mxu0
  %876 = vdwg.mxu0
  %877 = vmatpush.bf16.msra.mxu0 %v614
  %878 = vmatpush.bf16.msra.mxu0 %v612
  %879 = vmatpush.bf16.msra.mxu0 %v610
  %880 = vmatpush.bf16.msra.mxu0 %v608
  %881 = vmatpush.bf16.msra.mxu0 %v606
  %882 = vmatpush.bf16.msra.mxu0 %v604
  %883 = vmatpush.bf16.msra.mxu0 %v602
  %884 = vmatpush.bf16.msra.mxu0 %v600
  %885 = vmatmul.bf16.gmra.mxu0 %v161
  %v886 = vpop.f32.mrf.mxu0
  %v887 = vadd.f32 %v874, %v886
  %v888 = vpop.f32.mrf.mxu0
  %889 = vdwg.mxu0
  %890 = vmatpush.bf16.msra.mxu0 %v630
  %891 = vmatpush.bf16.msra.mxu0 %v628
  %892 = vmatpush.bf16.msra.mxu0 %v626
  %893 = vmatpush.bf16.msra.mxu0 %v624
  %894 = vmatpush.bf16.msra.mxu0 %v622
  %895 = vmatpush.bf16.msra.mxu0 %v620
  %896 = vmatpush.bf16.msra.mxu0 %v618
  %897 = vmatpush.bf16.msra.mxu0 %v616
  %898 = vmatmul.bf16.gmra.mxu0 %v162
  %v899 = vpop.f32.mrf.mxu0
  %v900 = vadd.f32 %v887, %v899
  %v901 = vpop.f32.mrf.mxu0
  %902 = vdwg.mxu0
  %903 = vmatpush.bf16.msra.mxu0 %v646
  %904 = vmatpush.bf16.msra.mxu0 %v644
  %905 = vmatpush.bf16.msra.mxu0 %v642
  %906 = vmatpush.bf16.msra.mxu0 %v640
  %907 = vmatpush.bf16.msra.mxu0 %v638
  %908 = vmatpush.bf16.msra.mxu0 %v636
  %909 = vmatpush.bf16.msra.mxu0 %v634
  %910 = vmatpush.bf16.msra.mxu0 %v632
  %911 = vmatmul.bf16.gmra.mxu0 %v163
  %v912 = vpop.f32.mrf.mxu0
  %v913 = vadd.f32 %v900, %v912
  %v914 = vpop.f32.mrf.mxu0
  %915 = vdwg.mxu0
  %916 = vmatpush.bf16.msra.mxu0 %v662
  %917 = vmatpush.bf16.msra.mxu0 %v660
  %918 = vmatpush.bf16.msra.mxu0 %v658
  %919 = vmatpush.bf16.msra.mxu0 %v656
  %920 = vmatpush.bf16.msra.mxu0 %v654
  %921 = vmatpush.bf16.msra.mxu0 %v652
  %922 = vmatpush.bf16.msra.mxu0 %v650
  %923 = vmatpush.bf16.msra.mxu0 %v648
  %924 = vmatmul.bf16.gmra.mxu0 %v164
  %v925 = vpop.f32.mrf.mxu0
  %v926 = vadd.f32 %v913, %v925
  %v927 = vpop.f32.mrf.mxu0
  %928 = vdwg.mxu0
  %929 = vmatpush.bf16.msra.mxu0 %v678
  %930 = vmatpush.bf16.msra.mxu0 %v676
  %931 = vmatpush.bf16.msra.mxu0 %v674
  %932 = vmatpush.bf16.msra.mxu0 %v672
  %933 = vmatpush.bf16.msra.mxu0 %v670
  %934 = vmatpush.bf16.msra.mxu0 %v668
  %935 = vmatpush.bf16.msra.mxu0 %v666
  %936 = vmatpush.bf16.msra.mxu0 %v664
  %937 = vmatmul.bf16.gmra.mxu0 %v165
  %v938 = vpop.f32.mrf.mxu0
  %v939 = vadd.f32 %v926, %v938
  %v940 = vpop.f32.mrf.mxu0
  %941 = vdwg.mxu0
  %942 = vmatpush.bf16.msra.mxu0 %v694
  %943 = vmatpush.bf16.msra.mxu0 %v692
  %944 = vmatpush.bf16.msra.mxu0 %v690
  %945 = vmatpush.bf16.msra.mxu0 %v688
  %946 = vmatpush.bf16.msra.mxu0 %v686
  %947 = vmatpush.bf16.msra.mxu0 %v684
  %948 = vmatpush.bf16.msra.mxu0 %v682
  %949 = vmatpush.bf16.msra.mxu0 %v680
  %950 = vmatmul.bf16.gmra.mxu0 %v166
  %v951 = vpop.f32.mrf.mxu0
  %v952 = vadd.f32 %v939, %v951
  %v953 = vpop.f32.mrf.mxu0
  %954 = vdwg.mxu0
  %955 = vmatpush.bf16.msra.mxu0 %v710
  %956 = vmatpush.bf16.msra.mxu0 %v708
  %957 = vmatpush.bf16.msra.mxu0 %v706
  %958 = vmatpush.bf16.msra.mxu0 %v704
  %959 = vmatpush.bf16.msra.mxu0 %v702
  %960 = vmatpush.bf16.msra.mxu0 %v700
  %961 = vmatpush.bf16.msra.mxu0 %v698
  %962 = vmatpush.bf16.msra.mxu0 %v696
  %963 = vmatmul.bf16.gmra.mxu0 %v167
  %v964 = vpop.f32.mrf.mxu0
  %v965 = vadd.f32 %v952, %v964
  %v966 = vpop.f32.mrf.mxu0
  %967 = vdwg.mxu0
  %968 = vmatpush.bf16.msra.mxu0 0
  %969 = vmatpush.bf16.msra.mxu0 0
  %970 = vmatpush.bf16.msra.mxu0 0
  %971 = vmatpush.bf16.msra.mxu0 0
  %972 = vmatpush.bf16.msra.mxu0 %v859
  %973 = vmatpush.bf16.msra.mxu0 %v716
  %974 = vmatpush.bf16.msra.mxu0 %v714
  %975 = vmatpush.bf16.msra.mxu0 %v712
  %976 = vmatmul.bf16.gmra.mxu0 %v855
  %v977 = vpop.f32.mrf.mxu0
  %v978 = vadd.f32 %v965, %v977
  %v979 = vpop.f32.mrf.mxu0
  %980 = vdwg.mxu0
  %981 = vmatpush.bf16.msra.mxu0 %v599
  %982 = vmatpush.bf16.msra.mxu0 %v597
  %983 = vmatpush.bf16.msra.mxu0 %v595
  %984 = vmatpush.bf16.msra.mxu0 %v593
  %985 = vmatpush.bf16.msra.mxu0 %v591
  %986 = vmatpush.bf16.msra.mxu0 %v589
  %987 = vmatpush.bf16.msra.mxu0 %v587
  %988 = vmatpush.bf16.msra.mxu0 %v585
  %989 = vmatmul.bf16.gmra.mxu0 %v160
  %v990 = vpop.f32.mrf.mxu0
  %v991 = vadd.f32 %v155, %v990
  %v992 = vpop.f32.mrf.mxu0
  %993 = vdwg.mxu0
  %994 = vmatpush.bf16.msra.mxu0 %v615
  %995 = vmatpush.bf16.msra.mxu0 %v613
  %996 = vmatpush.bf16.msra.mxu0 %v611
  %997 = vmatpush.bf16.msra.mxu0 %v609
  %998 = vmatpush.bf16.msra.mxu0 %v607
  %999 = vmatpush.bf16.msra.mxu0 %v605
  %1000 = vmatpush.bf16.msra.mxu0 %v603
  %1001 = vmatpush.bf16.msra.mxu0 %v601
  %1002 = vmatmul.bf16.gmra.mxu0 %v161
  %v1003 = vpop.f32.mrf.mxu0
  %v1004 = vadd.f32 %v991, %v1003
  %v1005 = vpop.f32.mrf.mxu0
  %1006 = vdwg.mxu0
  %1007 = vmatpush.bf16.msra.mxu0 %v631
  %1008 = vmatpush.bf16.msra.mxu0 %v629
  %1009 = vmatpush.bf16.msra.mxu0 %v627
  %1010 = vmatpush.bf16.msra.mxu0 %v625
  %1011 = vmatpush.bf16.msra.mxu0 %v623
  %1012 = vmatpush.bf16.msra.mxu0 %v621
  %1013 = vmatpush.bf16.msra.mxu0 %v619
  %1014 = vmatpush.bf16.msra.mxu0 %v617
  %1015 = vmatmul.bf16.gmra.mxu0 %v162
  %v1016 = vpop.f32.mrf.mxu0
  %v1017 = vadd.f32 %v1004, %v1016
  %v1018 = vpop.f32.mrf.mxu0
  %1019 = vdwg.mxu0
  %1020 = vmatpush.bf16.msra.mxu0 %v647
  %1021 = vmatpush.bf16.msra.mxu0 %v645
  %1022 = vmatpush.bf16.msra.mxu0 %v643
  %1023 = vmatpush.bf16.msra.mxu0 %v641
  %1024 = vmatpush.bf16.msra.mxu0 %v639
  %1025 = vmatpush.bf16.msra.mxu0 %v637
  %1026 = vmatpush.bf16.msra.mxu0 %v635
  %1027 = vmatpush.bf16.msra.mxu0 %v633
  %1028 = vmatmul.bf16.gmra.mxu0 %v163
  %v1029 = vpop.f32.mrf.mxu0
  %v1030 = vadd.f32 %v1017, %v1029
  %v1031 = vpop.f32.mrf.mxu0
  %1032 = vdwg.mxu0
  %1033 = vmatpush.bf16.msra.mxu0 %v663
  %1034 = vmatpush.bf16.msra.mxu0 %v661
  %1035 = vmatpush.bf16.msra.mxu0 %v659
  %1036 = vmatpush.bf16.msra.mxu0 %v657
  %1037 = vmatpush.bf16.msra.mxu0 %v655
  %1038 = vmatpush.bf16.msra.mxu0 %v653
  %1039 = vmatpush.bf16.msra.mxu0 %v651
  %1040 = vmatpush.bf16.msra.mxu0 %v649
  %1041 = vmatmul.bf16.gmra.mxu0 %v164
  %v1042 = vpop.f32.mrf.mxu0
  %v1043 = vadd.f32 %v1030, %v1042
  %v1044 = vpop.f32.mrf.mxu0
  %1045 = vdwg.mxu0
  %1046 = vmatpush.bf16.msra.mxu0 %v679
  %1047 = vmatpush.bf16.msra.mxu0 %v677
  %1048 = vmatpush.bf16.msra.mxu0 %v675
  %1049 = vmatpush.bf16.msra.mxu0 %v673
  %1050 = vmatpush.bf16.msra.mxu0 %v671
  %1051 = vmatpush.bf16.msra.mxu0 %v669
  %1052 = vmatpush.bf16.msra.mxu0 %v667
  %1053 = vmatpush.bf16.msra.mxu0 %v665
  %1054 = vmatmul.bf16.gmra.mxu0 %v165
  %v1055 = vpop.f32.mrf.mxu0
  %v1056 = vadd.f32 %v1043, %v1055
  %v1057 = vpop.f32.mrf.mxu0
  %1058 = vdwg.mxu0
  %1059 = vmatpush.bf16.msra.mxu0 %v695
  %1060 = vmatpush.bf16.msra.mxu0 %v693
  %1061 = vmatpush.bf16.msra.mxu0 %v691
  %1062 = vmatpush.bf16.msra.mxu0 %v689
  %1063 = vmatpush.bf16.msra.mxu0 %v687
  %1064 = vmatpush.bf16.msra.mxu0 %v685
  %1065 = vmatpush.bf16.msra.mxu0 %v683
  %1066 = vmatpush.bf16.msra.mxu0 %v681
  %1067 = vmatmul.bf16.gmra.mxu0 %v166
  %v1068 = vpop.f32.mrf.mxu0
  %v1069 = vadd.f32 %v1056, %v1068
  %v1070 = vpop.f32.mrf.mxu0
  %1071 = vdwg.mxu0
  %1072 = vmatpush.bf16.msra.mxu0 %v711
  %1073 = vmatpush.bf16.msra.mxu0 %v709
  %1074 = vmatpush.bf16.msra.mxu0 %v707
  %1075 = vmatpush.bf16.msra.mxu0 %v705
  %1076 = vmatpush.bf16.msra.mxu0 %v703
  %1077 = vmatpush.bf16.msra.mxu0 %v701
  %1078 = vmatpush.bf16.msra.mxu0 %v699
  %1079 = vmatpush.bf16.msra.mxu0 %v697
  %1080 = vmatmul.bf16.gmra.mxu0 %v167
  %v1081 = vpop.f32.mrf.mxu0
  %v1082 = vadd.f32 %v1069, %v1081
  %v1083 = vpop.f32.mrf.mxu0
  %1084 = vdwg.mxu0
  %1085 = vmatpush.bf16.msra.mxu0 0
  %1086 = vmatpush.bf16.msra.mxu0 0
  %1087 = vmatpush.bf16.msra.mxu0 0
  %1088 = vmatpush.bf16.msra.mxu0 0
  %1089 = vmatpush.bf16.msra.mxu0 %v862
  %1090 = vmatpush.bf16.msra.mxu0 %v717
  %1091 = vmatpush.bf16.msra.mxu0 %v715
  %1092 = vmatpush.bf16.msra.mxu0 %v713
  %1093 = vmatmul.bf16.gmra.mxu0 %v855
  %v1094 = vpop.f32.mrf.mxu0
  %v1095 = vadd.f32 %v1082, %v1094
  %v1096 = vpop.f32.mrf.mxu0
  %1097 = vdwg.mxu0
  %v1100 = vrot.slane %v1095, 6
  %vm1101 = vcmask 1041408
  %v1102 = vsel %vm1101, %v978, %v1100
  %1104 = vst [vmem:[%s3] sm:$0xf] %v1102
  // Predicated region
  $region14: #{_lambda_.14} parent=0 // pred_check
    _
  $region15: #{_lambda_.14} parent=0 // pred_check_branch
    %1106 = sbr.rel (0) target = $region17
  $region16: #{_lambda_.14} parent=0 // pred_region
    _
  $region17: #{_lambda_.14} parent=0 // pred_fallthru
    _
  // Predicated region
  $region18: #{_lambda_.14} parent=0 // pred_check
    _
  $region19: #{_lambda_.14} parent=0 // pred_check_branch
    %1108 = sbr.rel (0) target = $region21
  $region20: #{_lambda_.14} parent=0 // pred_region
    _
  $region21: #{_lambda_.14} parent=0 // pred_fallthru
    _

// kernel: _lambda_.17
$region0: #{_lambda_.17}
  #allocation0 [shape = 'u32[]', space=smem, size = 0x4, offset = 0x4, fixed_abs, tag = 'smem constant byte address 0x4 - core index']
  #allocation1 [shape = 'u32[72,128]{1,0:T(1,128)}', space=vmem, size = 0x9000, scoped, tag = 'internal scratch']
  %s0 = inlined_call_operand.vmem [shape: bf16[32,1152], index: 0, kind: input, shape index: {}]
  %s1 = inlined_call_operand.vmem [shape: bf16[1152,256], index: 1, kind: input, shape index: {}]
  %s2 = inlined_call_operand.vmem [shape: f32[1,256], index: 2, kind: input, shape index: {}]
  %s3 = inlined_call_operand.vmem [shape: bf16[32,256], index: 3, kind: output, shape index: {}]
  %s4 = sld [smem:[#allocation0]]
  $region22: #{_lambda_.17} parent=0
    _
  %s6 = ssub.s32 1, %s4
  %s7 = scalar_select 0, %s6, %s4
  // Predicated region
  $region2: #{_lambda_.17} parent=0 // pred_check
    _
  $region3: #{_lambda_.17} parent=0 // pred_check_branch
    %9 = sbr.rel (0) target = $region5
  $region4: #{_lambda_.17} parent=0 // pred_region
    _
  $region5: #{_lambda_.17} parent=0 // pred_fallthru
    _
  // Predicated region
  $region6: #{_lambda_.17} parent=0 // pred_check
    _
  $region7: #{_lambda_.17} parent=0 // pred_check_branch
    %11 = sbr.rel (0) target = $region9
  $region8: #{_lambda_.17} parent=0 // pred_region
    _
  $region9: #{_lambda_.17} parent=0 // pred_fallthru
    _
  // Predicated region
  $region10: #{_lambda_.17} parent=0 // pred_check
    _
  $region11: #{_lambda_.17} parent=0 // pred_check_branch
    %13 = sbr.rel (0) target = $region13
  $region12: #{_lambda_.17} parent=0 // pred_region
    _
  $region13: #{_lambda_.17} parent=0 // pred_fallthru
    _
  %v14 = vld [vmem:[%s0] sm:$0xff]
  %v15 = vld [vmem:[%s0 + $0x8] sm:$0xff]
  %v16 = vld [vmem:[%s0 + $0x10] sm:$0xff]
  %v17 = vld [vmem:[%s0 + $0x18] sm:$0xff]
  %v18 = vld [vmem:[%s0 + $0x20] sm:$0xf]
  %v19 = vld [vmem:[%s0 + $0x24] sm:$0xff]
  %v20 = vld [vmem:[%s0 + $0x2c] sm:$0xff]
  %v21 = vld [vmem:[%s0 + $0x34] sm:$0xff]
  %v22 = vld [vmem:[%s0 + $0x3c] sm:$0xff]
  %v23 = vld [vmem:[%s0 + $0x44] sm:$0xf]
  %v24 = vld [vmem:[%s0 + $0x48] sm:$0xff]
  %v25 = vld [vmem:[%s0 + $0x50] sm:$0xff]
  %v26 = vld [vmem:[%s0 + $0x58] sm:$0xff]
  %v27 = vld [vmem:[%s0 + $0x60] sm:$0xff]
  %v28 = vld [vmem:[%s0 + $0x68] sm:$0xf]
  %v29 = vld [vmem:[%s0 + $0x6c] sm:$0xff]
  %v30 = vld [vmem:[%s0 + $0x74] sm:$0xff]
  %v31 = vld [vmem:[%s0 + $0x7c] sm:$0xff]
  %v32 = vld [vmem:[%s0 + $0x84] sm:$0xff]
  %v33 = vld [vmem:[%s0 + $0x8c] sm:$0xf]
  %v34 = vld [vmem:[%s1] sm:$0xff]
  %v35 = vld [vmem:[%s1 + $0x8] sm:$0xff]
  %v36 = vld [vmem:[%s1 + $0x10] sm:$0xff]
  %v37 = vld [vmem:[%s1 + $0x18] sm:$0xff]
  %v38 = vld [vmem:[%s1 + $0x20] sm:$0xff]
  %v39 = vld [vmem:[%s1 + $0x28] sm:$0xff]
  %v40 = vld [vmem:[%s1 + $0x30] sm:$0xff]
  %v41 = vld [vmem:[%s1 + $0x38] sm:$0xff]
  %v42 = vld [vmem:[%s1 + $0x40] sm:$0xff]
  %v43 = vld [vmem:[%s1 + $0x48] sm:$0xff]
  %v44 = vld [vmem:[%s1 + $0x50] sm:$0xff]
  %v45 = vld [vmem:[%s1 + $0x58] sm:$0xff]
  %v46 = vld [vmem:[%s1 + $0x60] sm:$0xff]
  %v47 = vld [vmem:[%s1 + $0x68] sm:$0xff]
  %v48 = vld [vmem:[%s1 + $0x70] sm:$0xff]
  %v49 = vld [vmem:[%s1 + $0x78] sm:$0xff]
  %v50 = vld [vmem:[%s1 + $0x80] sm:$0xff]
  %v51 = vld [vmem:[%s1 + $0x88] sm:$0xff]
  %v52 = vld [vmem:[%s1 + $0x90] sm:$0xff]
  %v53 = vld [vmem:[%s1 + $0x98] sm:$0xff]
  %v54 = vld [vmem:[%s1 + $0xa0] sm:$0xff]
  %v55 = vld [vmem:[%s1 + $0xa8] sm:$0xff]
  %v56 = vld [vmem:[%s1 + $0xb0] sm:$0xff]
  %v57 = vld [vmem:[%s1 + $0xb8] sm:$0xff]
  %v58 = vld [vmem:[%s1 + $0xc0] sm:$0xff]
  %v59 = vld [vmem:[%s1 + $0xc8] sm:$0xff]
  %v60 = vld [vmem:[%s1 + $0xd0] sm:$0xff]
  %v61 = vld [vmem:[%s1 + $0xd8] sm:$0xff]
  %v62 = vld [vmem:[%s1 + $0xe0] sm:$0xff]
  %v63 = vld [vmem:[%s1 + $0xe8] sm:$0xff]
  %v64 = vld [vmem:[%s1 + $0xf0] sm:$0xff]
  %v65 = vld [vmem:[%s1 + $0xf8] sm:$0xff]
  %v66 = vld [vmem:[%s1 + $0x100] sm:$0xff]
  %v67 = vld [vmem:[%s1 + $0x108] sm:$0xff]
  %v68 = vld [vmem:[%s1 + $0x110] sm:$0xff]
  %v69 = vld [vmem:[%s1 + $0x118] sm:$0xff]
  %v70 = vld [vmem:[%s1 + $0x120] sm:$0xff]
  %v71 = vld [vmem:[%s1 + $0x128] sm:$0xff]
  %v72 = vld [vmem:[%s1 + $0x130] sm:$0xff]
  %v73 = vld [vmem:[%s1 + $0x138] sm:$0xff]
  %v74 = vld [vmem:[%s1 + $0x140] sm:$0xff]
  %v75 = vld [vmem:[%s1 + $0x148] sm:$0xff]
  %v76 = vld [vmem:[%s1 + $0x150] sm:$0xff]
  %v77 = vld [vmem:[%s1 + $0x158] sm:$0xff]
  %v78 = vld [vmem:[%s1 + $0x160] sm:$0xff]
  %v79 = vld [vmem:[%s1 + $0x168] sm:$0xff]
  %v80 = vld [vmem:[%s1 + $0x170] sm:$0xff]
  %v81 = vld [vmem:[%s1 + $0x178] sm:$0xff]
  %v82 = vld [vmem:[%s1 + $0x180] sm:$0xff]
  %v83 = vld [vmem:[%s1 + $0x188] sm:$0xff]
  %v84 = vld [vmem:[%s1 + $0x190] sm:$0xff]
  %v85 = vld [vmem:[%s1 + $0x198] sm:$0xff]
  %v86 = vld [vmem:[%s1 + $0x1a0] sm:$0xff]
  %v87 = vld [vmem:[%s1 + $0x1a8] sm:$0xff]
  %v88 = vld [vmem:[%s1 + $0x1b0] sm:$0xff]
  %v89 = vld [vmem:[%s1 + $0x1b8] sm:$0xff]
  %v90 = vld [vmem:[%s1 + $0x1c0] sm:$0xff]
  %v91 = vld [vmem:[%s1 + $0x1c8] sm:$0xff]
  %v92 = vld [vmem:[%s1 + $0x1d0] sm:$0xff]
  %v93 = vld [vmem:[%s1 + $0x1d8] sm:$0xff]
  %v94 = vld [vmem:[%s1 + $0x1e0] sm:$0xff]
  %v95 = vld [vmem:[%s1 + $0x1e8] sm:$0xff]
  %v96 = vld [vmem:[%s1 + $0x1f0] sm:$0xff]
  %v97 = vld [vmem:[%s1 + $0x1f8] sm:$0xff]
  %v98 = vld [vmem:[%s1 + $0x200] sm:$0xff]
  %v99 = vld [vmem:[%s1 + $0x208] sm:$0xff]
  %v100 = vld [vmem:[%s1 + $0x210] sm:$0xff]
  %v101 = vld [vmem:[%s1 + $0x218] sm:$0xff]
  %v102 = vld [vmem:[%s1 + $0x220] sm:$0xff]
  %v103 = vld [vmem:[%s1 + $0x228] sm:$0xff]
  %v104 = vld [vmem:[%s1 + $0x230] sm:$0xff]
  %v105 = vld [vmem:[%s1 + $0x238] sm:$0xff]
  %v106 = vld [vmem:[%s1 + $0x240] sm:$0xff]
  %v107 = vld [vmem:[%s1 + $0x248] sm:$0xff]
  %v108 = vld [vmem:[%s1 + $0x250] sm:$0xff]
  %v109 = vld [vmem:[%s1 + $0x258] sm:$0xff]
  %v110 = vld [vmem:[%s1 + $0x260] sm:$0xff]
  %v111 = vld [vmem:[%s1 + $0x268] sm:$0xff]
  %v112 = vld [vmem:[%s1 + $0x270] sm:$0xff]
  %v113 = vld [vmem:[%s1 + $0x278] sm:$0xff]
  %v114 = vld [vmem:[%s1 + $0x280] sm:$0xff]
  %v115 = vld [vmem:[%s1 + $0x288] sm:$0xff]
  %v116 = vld [vmem:[%s1 + $0x290] sm:$0xff]
  %v117 = vld [vmem:[%s1 + $0x298] sm:$0xff]
  %v118 = vld [vmem:[%s1 + $0x2a0] sm:$0xff]
  %v119 = vld [vmem:[%s1 + $0x2a8] sm:$0xff]
  %v120 = vld [vmem:[%s1 + $0x2b0] sm:$0xff]
  %v121 = vld [vmem:[%s1 + $0x2b8] sm:$0xff]
  %v122 = vld [vmem:[%s1 + $0x2c0] sm:$0xff]
  %v123 = vld [vmem:[%s1 + $0x2c8] sm:$0xff]
  %v124 = vld [vmem:[%s1 + $0x2d0] sm:$0xff]
  %v125 = vld [vmem:[%s1 + $0x2d8] sm:$0xff]
  %v126 = vld [vmem:[%s1 + $0x2e0] sm:$0xff]
  %v127 = vld [vmem:[%s1 + $0x2e8] sm:$0xff]
  %v128 = vld [vmem:[%s1 + $0x2f0] sm:$0xff]
  %v129 = vld [vmem:[%s1 + $0x2f8] sm:$0xff]
  %v130 = vld [vmem:[%s1 + $0x300] sm:$0xff]
  %v131 = vld [vmem:[%s1 + $0x308] sm:$0xff]
  %v132 = vld [vmem:[%s1 + $0x310] sm:$0xff]
  %v133 = vld [vmem:[%s1 + $0x318] sm:$0xff]
  %v134 = vld [vmem:[%s1 + $0x320] sm:$0xff]
  %v135 = vld [vmem:[%s1 + $0x328] sm:$0xff]
  %v136 = vld [vmem:[%s1 + $0x330] sm:$0xff]
  %v137 = vld [vmem:[%s1 + $0x338] sm:$0xff]
  %v138 = vld [vmem:[%s1 + $0x340] sm:$0xff]
  %v139 = vld [vmem:[%s1 + $0x348] sm:$0xff]
  %v140 = vld [vmem:[%s1 + $0x350] sm:$0xff]
  %v141 = vld [vmem:[%s1 + $0x358] sm:$0xff]
  %v142 = vld [vmem:[%s1 + $0x360] sm:$0xff]
  %v143 = vld [vmem:[%s1 + $0x368] sm:$0xff]
  %v144 = vld [vmem:[%s1 + $0x370] sm:$0xff]
  %v145 = vld [vmem:[%s1 + $0x378] sm:$0xff]
  %v146 = vld [vmem:[%s1 + $0x380] sm:$0xff]
  %v147 = vld [vmem:[%s1 + $0x388] sm:$0xff]
  %v148 = vld [vmem:[%s1 + $0x390] sm:$0xff]
  %v149 = vld [vmem:[%s1 + $0x398] sm:$0xff]
  %v150 = vld [vmem:[%s1 + $0x3a0] sm:$0xff]
  %v151 = vld [vmem:[%s1 + $0x3a8] sm:$0xff]
  %v152 = vld [vmem:[%s1 + $0x3b0] sm:$0xff]
  %v153 = vld [vmem:[%s1 + $0x3b8] sm:$0xff]
  %v154 = vld [vmem:[%s1 + $0x3c0] sm:$0xff]
  %v155 = vld [vmem:[%s1 + $0x3c8] sm:$0xff]
  %v156 = vld [vmem:[%s1 + $0x3d0] sm:$0xff]
  %v157 = vld [vmem:[%s1 + $0x3d8] sm:$0xff]
  %v158 = vld [vmem:[%s1 + $0x3e0] sm:$0xff]
  %v159 = vld [vmem:[%s1 + $0x3e8] sm:$0xff]
  %v160 = vld [vmem:[%s1 + $0x3f0] sm:$0xff]
  %v161 = vld [vmem:[%s1 + $0x3f8] sm:$0xff]
  %v162 = vld [vmem:[%s1 + $0x400] sm:$0xff]
  %v163 = vld [vmem:[%s1 + $0x408] sm:$0xff]
  %v164 = vld [vmem:[%s1 + $0x410] sm:$0xff]
  %v165 = vld [vmem:[%s1 + $0x418] sm:$0xff]
  %v166 = vld [vmem:[%s1 + $0x420] sm:$0xff]
  %v167 = vld [vmem:[%s1 + $0x428] sm:$0xff]
  %v168 = vld [vmem:[%s1 + $0x430] sm:$0xff]
  %v169 = vld [vmem:[%s1 + $0x438] sm:$0xff]
  %v170 = vld [vmem:[%s1 + $0x440] sm:$0xff]
  %v171 = vld [vmem:[%s1 + $0x448] sm:$0xff]
  %v172 = vld [vmem:[%s1 + $0x450] sm:$0xff]
  %v173 = vld [vmem:[%s1 + $0x458] sm:$0xff]
  %v174 = vld [vmem:[%s1 + $0x460] sm:$0xff]
  %v175 = vld [vmem:[%s1 + $0x468] sm:$0xff]
  %v176 = vld [vmem:[%s1 + $0x470] sm:$0xff]
  %v177 = vld [vmem:[%s1 + $0x478] sm:$0xff]
  %v178 = vld [vmem:[%s2] sm:$0x3]
  %v180 = vperm.slane %v178, 0
  %v181 = vperm.slane %v178, 1
  %v204 = vunpack.c.l.b16 %v14
  %v205 = vunpack.c.h.b16 %v14
  %v206 = vunpack.c.l.b16 %v15
  %v207 = vunpack.c.h.b16 %v15
  %v208 = vunpack.c.l.b16 %v16
  %v209 = vunpack.c.h.b16 %v16
  %v210 = vunpack.c.l.b16 %v17
  %v211 = vunpack.c.h.b16 %v17
  %v212 = vunpack.c.l.b16 %v18
  %v213 = vunpack.c.l.b16 %v19
  %v214 = vunpack.c.h.b16 %v19
  %v215 = vunpack.c.l.b16 %v20
  %v216 = vunpack.c.h.b16 %v20
  %v217 = vunpack.c.l.b16 %v21
  %v218 = vunpack.c.h.b16 %v21
  %v219 = vunpack.c.l.b16 %v22
  %v220 = vunpack.c.h.b16 %v22
  %v221 = vunpack.c.l.b16 %v23
  %v222 = vunpack.c.l.b16 %v24
  %v223 = vunpack.c.h.b16 %v24
  %v224 = vunpack.c.l.b16 %v25
  %v225 = vunpack.c.h.b16 %v25
  %v226 = vunpack.c.l.b16 %v26
  %v227 = vunpack.c.h.b16 %v26
  %v228 = vunpack.c.l.b16 %v27
  %v229 = vunpack.c.h.b16 %v27
  %v230 = vunpack.c.l.b16 %v28
  %v231 = vunpack.c.l.b16 %v29
  %v232 = vunpack.c.h.b16 %v29
  %v233 = vunpack.c.l.b16 %v30
  %v234 = vunpack.c.h.b16 %v30
  %v235 = vunpack.c.l.b16 %v31
  %v236 = vunpack.c.h.b16 %v31
  %v237 = vunpack.c.l.b16 %v32
  %v238 = vunpack.c.h.b16 %v32
  %v239 = vunpack.c.l.b16 %v33
  %v240 = vpack.c.b16 %v213, %v204
  %v241 = vpack.c.b16 %v214, %v205
  %v242 = vpack.c.b16 %v215, %v206
  %v243 = vpack.c.b16 %v216, %v207
  %v244 = vpack.c.b16 %v217, %v208
  %v245 = vpack.c.b16 %v218, %v209
  %v246 = vpack.c.b16 %v219, %v210
  %v247 = vpack.c.b16 %v220, %v211
  %v248 = vpack.c.b16 %v221, %v212
  %v249 = vpack.c.b16 %v231, %v222
  %v250 = vpack.c.b16 %v232, %v223
  %v251 = vpack.c.b16 %v233, %v224
  %v252 = vpack.c.b16 %v234, %v225
  %v253 = vpack.c.b16 %v235, %v226
  %v254 = vpack.c.b16 %v236, %v227
  %v255 = vpack.c.b16 %v237, %v228
  %v256 = vpack.c.b16 %v238, %v229
  %v257 = vpack.c.b16 %v239, %v230
  %v420 = vunpack.c.l.b16 %v34
  %v421 = vunpack.c.h.b16 %v34
  %v422 = vunpack.c.l.b16 %v35
  %v423 = vunpack.c.h.b16 %v35
  %v424 = vunpack.c.l.b16 %v36
  %v425 = vunpack.c.h.b16 %v36
  %v426 = vunpack.c.l.b16 %v37
  %v427 = vunpack.c.h.b16 %v37
  %v428 = vunpack.c.l.b16 %v38
  %v429 = vunpack.c.h.b16 %v38
  %v430 = vunpack.c.l.b16 %v39
  %v431 = vunpack.c.h.b16 %v39
  %v432 = vunpack.c.l.b16 %v40
  %v433 = vunpack.c.h.b16 %v40
  %v434 = vunpack.c.l.b16 %v41
  %v435 = vunpack.c.h.b16 %v41
  %v436 = vunpack.c.l.b16 %v42
  %v437 = vunpack.c.h.b16 %v42
  %v438 = vunpack.c.l.b16 %v43
  %v439 = vunpack.c.h.b16 %v43
  %v440 = vunpack.c.l.b16 %v44
  %v441 = vunpack.c.h.b16 %v44
  %v442 = vunpack.c.l.b16 %v45
  %v443 = vunpack.c.h.b16 %v45
  %v444 = vunpack.c.l.b16 %v46
  %v445 = vunpack.c.h.b16 %v46
  %v446 = vunpack.c.l.b16 %v47
  %v447 = vunpack.c.h.b16 %v47
  %v448 = vunpack.c.l.b16 %v48
  %v449 = vunpack.c.h.b16 %v48
  %v450 = vunpack.c.l.b16 %v49
  %v451 = vunpack.c.h.b16 %v49
  %v452 = vunpack.c.l.b16 %v50
  %v453 = vunpack.c.h.b16 %v50
  %v454 = vunpack.c.l.b16 %v51
  %v455 = vunpack.c.h.b16 %v51
  %v456 = vunpack.c.l.b16 %v52
  %v457 = vunpack.c.h.b16 %v52
  %v458 = vunpack.c.l.b16 %v53
  %v459 = vunpack.c.h.b16 %v53
  %v460 = vunpack.c.l.b16 %v54
  %v461 = vunpack.c.h.b16 %v54
  %v462 = vunpack.c.l.b16 %v55
  %v463 = vunpack.c.h.b16 %v55
  %v464 = vunpack.c.l.b16 %v56
  %v465 = vunpack.c.h.b16 %v56
  %v466 = vunpack.c.l.b16 %v57
  %v467 = vunpack.c.h.b16 %v57
  %v468 = vunpack.c.l.b16 %v58
  %v469 = vunpack.c.h.b16 %v58
  %v470 = vunpack.c.l.b16 %v59
  %v471 = vunpack.c.h.b16 %v59
  %v472 = vunpack.c.l.b16 %v60
  %v473 = vunpack.c.h.b16 %v60
  %v474 = vunpack.c.l.b16 %v61
  %v475 = vunpack.c.h.b16 %v61
  %v476 = vunpack.c.l.b16 %v62
  %v477 = vunpack.c.h.b16 %v62
  %v478 = vunpack.c.l.b16 %v63
  %v479 = vunpack.c.h.b16 %v63
  %v480 = vunpack.c.l.b16 %v64
  %v481 = vunpack.c.h.b16 %v64
  %v482 = vunpack.c.l.b16 %v65
  %v483 = vunpack.c.h.b16 %v65
  %v484 = vunpack.c.l.b16 %v66
  %v485 = vunpack.c.h.b16 %v66
  %v486 = vunpack.c.l.b16 %v67
  %v487 = vunpack.c.h.b16 %v67
  %v488 = vunpack.c.l.b16 %v68
  %v489 = vunpack.c.h.b16 %v68
  %v490 = vunpack.c.l.b16 %v69
  %v491 = vunpack.c.h.b16 %v69
  %v492 = vunpack.c.l.b16 %v70
  %v493 = vunpack.c.h.b16 %v70
  %v494 = vunpack.c.l.b16 %v71
  %v495 = vunpack.c.h.b16 %v71
  %v496 = vunpack.c.l.b16 %v72
  %v497 = vunpack.c.h.b16 %v72
  %v498 = vunpack.c.l.b16 %v73
  %v499 = vunpack.c.h.b16 %v73
  %v500 = vunpack.c.l.b16 %v74
  %v501 = vunpack.c.h.b16 %v74
  %v502 = vunpack.c.l.b16 %v75
  %v503 = vunpack.c.h.b16 %v75
  %v504 = vunpack.c.l.b16 %v76
  %v505 = vunpack.c.h.b16 %v76
  %v506 = vunpack.c.l.b16 %v77
  %v507 = vunpack.c.h.b16 %v77
  %v508 = vunpack.c.l.b16 %v78
  %v509 = vunpack.c.h.b16 %v78
  %v510 = vunpack.c.l.b16 %v79
  %v511 = vunpack.c.h.b16 %v79
  %v512 = vunpack.c.l.b16 %v80
  %v513 = vunpack.c.h.b16 %v80
  %v514 = vunpack.c.l.b16 %v81
  %v515 = vunpack.c.h.b16 %v81
  %v516 = vunpack.c.l.b16 %v82
  %v517 = vunpack.c.h.b16 %v82
  %v518 = vunpack.c.l.b16 %v83
  %v519 = vunpack.c.h.b16 %v83
  %v520 = vunpack.c.l.b16 %v84
  %v521 = vunpack.c.h.b16 %v84
  %v522 = vunpack.c.l.b16 %v85
  %v523 = vunpack.c.h.b16 %v85
  %v524 = vunpack.c.l.b16 %v86
  %v525 = vunpack.c.h.b16 %v86
  %v526 = vunpack.c.l.b16 %v87
  %v527 = vunpack.c.h.b16 %v87
  %v528 = vunpack.c.l.b16 %v88
  %v529 = vunpack.c.h.b16 %v88
  %v530 = vunpack.c.l.b16 %v89
  %v531 = vunpack.c.h.b16 %v89
  %v532 = vunpack.c.l.b16 %v90
  %v533 = vunpack.c.h.b16 %v90
  %v534 = vunpack.c.l.b16 %v91
  %v535 = vunpack.c.h.b16 %v91
  %v536 = vunpack.c.l.b16 %v92
  %v537 = vunpack.c.h.b16 %v92
  %v538 = vunpack.c.l.b16 %v93
  %v539 = vunpack.c.h.b16 %v93
  %v540 = vunpack.c.l.b16 %v94
  %v541 = vunpack.c.h.b16 %v94
  %v542 = vunpack.c.l.b16 %v95
  %v543 = vunpack.c.h.b16 %v95
  %v544 = vunpack.c.l.b16 %v96
  %v545 = vunpack.c.h.b16 %v96
  %v546 = vunpack.c.l.b16 %v97
  %v547 = vunpack.c.h.b16 %v97
  %v548 = vunpack.c.l.b16 %v98
  %v549 = vunpack.c.h.b16 %v98
  %v550 = vunpack.c.l.b16 %v99
  %v551 = vunpack.c.h.b16 %v99
  %v552 = vunpack.c.l.b16 %v100
  %v553 = vunpack.c.h.b16 %v100
  %v554 = vunpack.c.l.b16 %v101
  %v555 = vunpack.c.h.b16 %v101
  %v556 = vunpack.c.l.b16 %v102
  %v557 = vunpack.c.h.b16 %v102
  %v558 = vunpack.c.l.b16 %v103
  %v559 = vunpack.c.h.b16 %v103
  %v560 = vunpack.c.l.b16 %v104
  %v561 = vunpack.c.h.b16 %v104
  %v562 = vunpack.c.l.b16 %v105
  %v563 = vunpack.c.h.b16 %v105
  %v564 = vunpack.c.l.b16 %v106
  %v565 = vunpack.c.h.b16 %v106
  %v566 = vunpack.c.l.b16 %v107
  %v567 = vunpack.c.h.b16 %v107
  %v568 = vunpack.c.l.b16 %v108
  %v569 = vunpack.c.h.b16 %v108
  %v570 = vunpack.c.l.b16 %v109
  %v571 = vunpack.c.h.b16 %v109
  %v572 = vunpack.c.l.b16 %v110
  %v573 = vunpack.c.h.b16 %v110
  %v574 = vunpack.c.l.b16 %v111
  %v575 = vunpack.c.h.b16 %v111
  %v576 = vunpack.c.l.b16 %v112
  %v577 = vunpack.c.h.b16 %v112
  %v578 = vunpack.c.l.b16 %v113
  %v579 = vunpack.c.h.b16 %v113
  %v580 = vunpack.c.l.b16 %v114
  %v581 = vunpack.c.h.b16 %v114
  %v582 = vunpack.c.l.b16 %v115
  %v583 = vunpack.c.h.b16 %v115
  %v584 = vunpack.c.l.b16 %v116
  %v585 = vunpack.c.h.b16 %v116
  %v586 = vunpack.c.l.b16 %v117
  %v587 = vunpack.c.h.b16 %v117
  %v588 = vunpack.c.l.b16 %v118
  %v589 = vunpack.c.h.b16 %v118
  %v590 = vunpack.c.l.b16 %v119
  %v591 = vunpack.c.h.b16 %v119
  %v592 = vunpack.c.l.b16 %v120
  %v593 = vunpack.c.h.b16 %v120
  %v594 = vunpack.c.l.b16 %v121
  %v595 = vunpack.c.h.b16 %v121
  %v596 = vunpack.c.l.b16 %v122
  %v597 = vunpack.c.h.b16 %v122
  %v598 = vunpack.c.l.b16 %v123
  %v599 = vunpack.c.h.b16 %v123
  %v600 = vunpack.c.l.b16 %v124
  %v601 = vunpack.c.h.b16 %v124
  %v602 = vunpack.c.l.b16 %v125
  %v603 = vunpack.c.h.b16 %v125
  %v604 = vunpack.c.l.b16 %v126
  %v605 = vunpack.c.h.b16 %v126
  %v606 = vunpack.c.l.b16 %v127
  %v607 = vunpack.c.h.b16 %v127
  %v608 = vunpack.c.l.b16 %v128
  %v609 = vunpack.c.h.b16 %v128
  %v610 = vunpack.c.l.b16 %v129
  %v611 = vunpack.c.h.b16 %v129
  %v612 = vunpack.c.l.b16 %v130
  %v613 = vunpack.c.h.b16 %v130
  %v614 = vunpack.c.l.b16 %v131
  %v615 = vunpack.c.h.b16 %v131
  %v616 = vunpack.c.l.b16 %v132
  %v617 = vunpack.c.h.b16 %v132
  %v618 = vunpack.c.l.b16 %v133
  %v619 = vunpack.c.h.b16 %v133
  %v620 = vunpack.c.l.b16 %v134
  %v621 = vunpack.c.h.b16 %v134
  %v622 = vunpack.c.l.b16 %v135
  %v623 = vunpack.c.h.b16 %v135
  %v624 = vunpack.c.l.b16 %v136
  %v625 = vunpack.c.h.b16 %v136
  %v626 = vunpack.c.l.b16 %v137
  %v627 = vunpack.c.h.b16 %v137
  %v628 = vunpack.c.l.b16 %v138
  %v629 = vunpack.c.h.b16 %v138
  %v630 = vunpack.c.l.b16 %v139
  %v631 = vunpack.c.h.b16 %v139
  %v632 = vunpack.c.l.b16 %v140
  %v633 = vunpack.c.h.b16 %v140
  %v634 = vunpack.c.l.b16 %v141
  %v635 = vunpack.c.h.b16 %v141
  %v636 = vunpack.c.l.b16 %v142
  %v637 = vunpack.c.h.b16 %v142
  %v638 = vunpack.c.l.b16 %v143
  %v639 = vunpack.c.h.b16 %v143
  %v640 = vunpack.c.l.b16 %v144
  %v641 = vunpack.c.h.b16 %v144
  %v642 = vunpack.c.l.b16 %v145
  %v643 = vunpack.c.h.b16 %v145
  %v644 = vunpack.c.l.b16 %v146
  %v645 = vunpack.c.h.b16 %v146
  %v646 = vunpack.c.l.b16 %v147
  %v647 = vunpack.c.h.b16 %v147
  %v648 = vunpack.c.l.b16 %v148
  %v649 = vunpack.c.h.b16 %v148
  %v650 = vunpack.c.l.b16 %v149
  %v651 = vunpack.c.h.b16 %v149
  %v652 = vunpack.c.l.b16 %v150
  %v653 = vunpack.c.h.b16 %v150
  %v654 = vunpack.c.l.b16 %v151
  %v655 = vunpack.c.h.b16 %v151
  %v656 = vunpack.c.l.b16 %v152
  %v657 = vunpack.c.h.b16 %v152
  %v658 = vunpack.c.l.b16 %v153
  %v659 = vunpack.c.h.b16 %v153
  %v660 = vunpack.c.l.b16 %v154
  %v661 = vunpack.c.h.b16 %v154
  %v662 = vunpack.c.l.b16 %v155
  %v663 = vunpack.c.h.b16 %v155
  %v664 = vunpack.c.l.b16 %v156
  %v665 = vunpack.c.h.b16 %v156
  %v666 = vunpack.c.l.b16 %v157
  %v667 = vunpack.c.h.b16 %v157
  %v668 = vunpack.c.l.b16 %v158
  %v669 = vunpack.c.h.b16 %v158
  %v670 = vunpack.c.l.b16 %v159
  %v671 = vunpack.c.h.b16 %v159
  %v672 = vunpack.c.l.b16 %v160
  %v673 = vunpack.c.h.b16 %v160
  %v674 = vunpack.c.l.b16 %v161
  %v675 = vunpack.c.h.b16 %v161
  %v676 = vunpack.c.l.b16 %v162
  %v677 = vunpack.c.h.b16 %v162
  %v678 = vunpack.c.l.b16 %v163
  %v679 = vunpack.c.h.b16 %v163
  %v680 = vunpack.c.l.b16 %v164
  %v681 = vunpack.c.h.b16 %v164
  %v682 = vunpack.c.l.b16 %v165
  %v683 = vunpack.c.h.b16 %v165
  %v684 = vunpack.c.l.b16 %v166
  %v685 = vunpack.c.h.b16 %v166
  %v686 = vunpack.c.l.b16 %v167
  %v687 = vunpack.c.h.b16 %v167
  %v688 = vunpack.c.l.b16 %v168
  %v689 = vunpack.c.h.b16 %v168
  %v690 = vunpack.c.l.b16 %v169
  %v691 = vunpack.c.h.b16 %v169
  %v692 = vunpack.c.l.b16 %v170
  %v693 = vunpack.c.h.b16 %v170
  %v694 = vunpack.c.l.b16 %v171
  %v695 = vunpack.c.h.b16 %v171
  %v696 = vunpack.c.l.b16 %v172
  %v697 = vunpack.c.h.b16 %v172
  %v698 = vunpack.c.l.b16 %v173
  %v699 = vunpack.c.h.b16 %v173
  %v700 = vunpack.c.l.b16 %v174
  %v701 = vunpack.c.h.b16 %v174
  %v702 = vunpack.c.l.b16 %v175
  %v703 = vunpack.c.h.b16 %v175
  %v704 = vunpack.c.l.b16 %v176
  %v705 = vunpack.c.h.b16 %v176
  %v706 = vunpack.c.l.b16 %v177
  %v707 = vunpack.c.h.b16 %v177
  %v708 = vpack.c.b16 %v422, %v420
  %v709 = vpack.c.b16 %v423, %v421
  %v710 = vpack.c.b16 %v426, %v424
  %v711 = vpack.c.b16 %v427, %v425
  %v712 = vpack.c.b16 %v430, %v428
  %v713 = vpack.c.b16 %v431, %v429
  %v714 = vpack.c.b16 %v434, %v432
  %v715 = vpack.c.b16 %v435, %v433
  %v716 = vpack.c.b16 %v438, %v436
  %v717 = vpack.c.b16 %v439, %v437
  %v718 = vpack.c.b16 %v442, %v440
  %v719 = vpack.c.b16 %v443, %v441
  %v720 = vpack.c.b16 %v446, %v444
  %v721 = vpack.c.b16 %v447, %v445
  %v722 = vpack.c.b16 %v450, %v448
  %v723 = vpack.c.b16 %v451, %v449
  %v724 = vpack.c.b16 %v454, %v452
  %v725 = vpack.c.b16 %v455, %v453
  %v726 = vpack.c.b16 %v458, %v456
  %v727 = vpack.c.b16 %v459, %v457
  %v728 = vpack.c.b16 %v462, %v460
  %v729 = vpack.c.b16 %v463, %v461
  %v730 = vpack.c.b16 %v466, %v464
  %v731 = vpack.c.b16 %v467, %v465
  %v732 = vpack.c.b16 %v470, %v468
  %v733 = vpack.c.b16 %v471, %v469
  %v734 = vpack.c.b16 %v474, %v472
  %v735 = vpack.c.b16 %v475, %v473
  %v736 = vpack.c.b16 %v478, %v476
  %v737 = vpack.c.b16 %v479, %v477
  %v738 = vpack.c.b16 %v482, %v480
  %v739 = vpack.c.b16 %v483, %v481
  %v740 = vpack.c.b16 %v486, %v484
  %v741 = vpack.c.b16 %v487, %v485
  %v742 = vpack.c.b16 %v490, %v488
  %v743 = vpack.c.b16 %v491, %v489
  %v744 = vpack.c.b16 %v494, %v492
  %v745 = vpack.c.b16 %v495, %v493
  %v746 = vpack.c.b16 %v498, %v496
  %v747 = vpack.c.b16 %v499, %v497
  %v748 = vpack.c.b16 %v502, %v500
  %v749 = vpack.c.b16 %v503, %v501
  %v750 = vpack.c.b16 %v506, %v504
  %v751 = vpack.c.b16 %v507, %v505
  %v752 = vpack.c.b16 %v510, %v508
  %v753 = vpack.c.b16 %v511, %v509
  %v754 = vpack.c.b16 %v514, %v512
  %v755 = vpack.c.b16 %v515, %v513
  %v756 = vpack.c.b16 %v518, %v516
  %v757 = vpack.c.b16 %v519, %v517
  %v758 = vpack.c.b16 %v522, %v520
  %v759 = vpack.c.b16 %v523, %v521
  %v760 = vpack.c.b16 %v526, %v524
  %v761 = vpack.c.b16 %v527, %v525
  %v762 = vpack.c.b16 %v530, %v528
  %v763 = vpack.c.b16 %v531, %v529
  %v764 = vpack.c.b16 %v534, %v532
  %v765 = vpack.c.b16 %v535, %v533
  %v766 = vpack.c.b16 %v538, %v536
  %v767 = vpack.c.b16 %v539, %v537
  %v768 = vpack.c.b16 %v542, %v540
  %v769 = vpack.c.b16 %v543, %v541
  %v770 = vpack.c.b16 %v546, %v544
  %v771 = vpack.c.b16 %v547, %v545
  %v772 = vpack.c.b16 %v550, %v548
  %v773 = vpack.c.b16 %v551, %v549
  %v774 = vpack.c.b16 %v554, %v552
  %v775 = vpack.c.b16 %v555, %v553
  %v776 = vpack.c.b16 %v558, %v556
  %v777 = vpack.c.b16 %v559, %v557
  %v778 = vpack.c.b16 %v562, %v560
  %v779 = vpack.c.b16 %v563, %v561
  %v780 = vpack.c.b16 %v566, %v564
  %v781 = vpack.c.b16 %v567, %v565
  %v782 = vpack.c.b16 %v570, %v568
  %v783 = vpack.c.b16 %v571, %v569
  %v784 = vpack.c.b16 %v574, %v572
  %v785 = vpack.c.b16 %v575, %v573
  %v786 = vpack.c.b16 %v578, %v576
  %v787 = vpack.c.b16 %v579, %v577
  %v788 = vpack.c.b16 %v582, %v580
  %v789 = vpack.c.b16 %v583, %v581
  %v790 = vpack.c.b16 %v586, %v584
  %v791 = vpack.c.b16 %v587, %v585
  %v792 = vpack.c.b16 %v590, %v588
  %v793 = vpack.c.b16 %v591, %v589
  %v794 = vpack.c.b16 %v594, %v592
  %v795 = vpack.c.b16 %v595, %v593
  %v796 = vpack.c.b16 %v598, %v596
  %v797 = vpack.c.b16 %v599, %v597
  %v798 = vpack.c.b16 %v602, %v600
  %v799 = vpack.c.b16 %v603, %v601
  %v800 = vpack.c.b16 %v606, %v604
  %v801 = vpack.c.b16 %v607, %v605
  %v802 = vpack.c.b16 %v610, %v608
  %v803 = vpack.c.b16 %v611, %v609
  %v804 = vpack.c.b16 %v614, %v612
  %v805 = vpack.c.b16 %v615, %v613
  %v806 = vpack.c.b16 %v618, %v616
  %v807 = vpack.c.b16 %v619, %v617
  %v808 = vpack.c.b16 %v622, %v620
  %v809 = vpack.c.b16 %v623, %v621
  %v810 = vpack.c.b16 %v626, %v624
  %v811 = vpack.c.b16 %v627, %v625
  %v812 = vpack.c.b16 %v630, %v628
  %v813 = vpack.c.b16 %v631, %v629
  %v814 = vpack.c.b16 %v634, %v632
  %v815 = vpack.c.b16 %v635, %v633
  %v816 = vpack.c.b16 %v638, %v636
  %v817 = vpack.c.b16 %v639, %v637
  %v818 = vpack.c.b16 %v642, %v640
  %v819 = vpack.c.b16 %v643, %v641
  %v820 = vpack.c.b16 %v646, %v644
  %v821 = vpack.c.b16 %v647, %v645
  %v822 = vpack.c.b16 %v650, %v648
  %v823 = vpack.c.b16 %v651, %v649
  %v824 = vpack.c.b16 %v654, %v652
  %v825 = vpack.c.b16 %v655, %v653
  %v826 = vpack.c.b16 %v658, %v656
  %v827 = vpack.c.b16 %v659, %v657
  %v828 = vpack.c.b16 %v662, %v660
  %v829 = vpack.c.b16 %v663, %v661
  %v830 = vpack.c.b16 %v666, %v664
  %v831 = vpack.c.b16 %v667, %v665
  %v832 = vpack.c.b16 %v670, %v668
  %v833 = vpack.c.b16 %v671, %v669
  %v834 = vpack.c.b16 %v674, %v672
  %v835 = vpack.c.b16 %v675, %v673
  %v836 = vpack.c.b16 %v678, %v676
  %v837 = vpack.c.b16 %v679, %v677
  %v838 = vpack.c.b16 %v682, %v680
  %v839 = vpack.c.b16 %v683, %v681
  %v840 = vpack.c.b16 %v686, %v684
  %v841 = vpack.c.b16 %v687, %v685
  %v842 = vpack.c.b16 %v690, %v688
  %v843 = vpack.c.b16 %v691, %v689
  %v844 = vpack.c.b16 %v694, %v692
  %v845 = vpack.c.b16 %v695, %v693
  %v846 = vpack.c.b16 %v698, %v696
  %v847 = vpack.c.b16 %v699, %v697
  %v848 = vpack.c.b16 %v702, %v700
  %v849 = vpack.c.b16 %v703, %v701
  %v850 = vpack.c.b16 %v706, %v704
  %v851 = vpack.c.b16 %v707, %v705
  %996 = vmatpush.bf16.msra.mxu0 %v722
  %997 = vmatpush.bf16.msra.mxu0 %v720
  %998 = vmatpush.bf16.msra.mxu0 %v718
  %999 = vmatpush.bf16.msra.mxu0 %v716
  %1000 = vmatpush.bf16.msra.mxu0 %v714
  %1001 = vmatpush.bf16.msra.mxu0 %v712
  %1002 = vmatpush.bf16.msra.mxu0 %v710
  %1003 = vmatpush.bf16.msra.mxu0 %v708
  %1004 = vmatmul.bf16.gmra.mxu0 %v240
  %v1005 = vpop.f32.mrf.mxu0
  %v1006 = vadd.f32 %v180, %v1005
  %v1007 = vpop.f32.mrf.mxu0
  %v1008 = vadd.f32 %v180, %v1007
  %1009 = vmatmul.bf16.gmra.mxu0 %v249
  %v1010 = vpop.f32.mrf.mxu0
  %v1011 = vadd.f32 %v180, %v1010
  %v1012 = vpop.f32.mrf.mxu0
  %v1013 = vadd.f32 %v180, %v1012
  %1014 = vdwg.mxu0
  %1015 = vmatpush.bf16.msra.mxu0 %v738
  %1016 = vmatpush.bf16.msra.mxu0 %v736
  %1017 = vmatpush.bf16.msra.mxu0 %v734
  %1018 = vmatpush.bf16.msra.mxu0 %v732
  %1019 = vmatpush.bf16.msra.mxu0 %v730
  %1020 = vmatpush.bf16.msra.mxu0 %v728
  %1021 = vmatpush.bf16.msra.mxu0 %v726
  %1022 = vmatpush.bf16.msra.mxu0 %v724
  %1023 = vmatmul.bf16.gmra.mxu0 %v241
  %v1024 = vpop.f32.mrf.mxu0
  %v1025 = vadd.f32 %v1006, %v1024
  %v1026 = vpop.f32.mrf.mxu0
  %v1027 = vadd.f32 %v1008, %v1026
  %1028 = vmatmul.bf16.gmra.mxu0 %v250
  %v1029 = vpop.f32.mrf.mxu0
  %v1030 = vadd.f32 %v1011, %v1029
  %v1031 = vpop.f32.mrf.mxu0
  %v1032 = vadd.f32 %v1013, %v1031
  %1033 = vdwg.mxu0
  %1034 = vmatpush.bf16.msra.mxu0 %v754
  %1035 = vmatpush.bf16.msra.mxu0 %v752
  %1036 = vmatpush.bf16.msra.mxu0 %v750
  %1037 = vmatpush.bf16.msra.mxu0 %v748
  %1038 = vmatpush.bf16.msra.mxu0 %v746
  %1039 = vmatpush.bf16.msra.mxu0 %v744
  %1040 = vmatpush.bf16.msra.mxu0 %v742
  %1041 = vmatpush.bf16.msra.mxu0 %v740
  %1042 = vmatmul.bf16.gmra.mxu0 %v242
  %v1043 = vpop.f32.mrf.mxu0
  %v1044 = vadd.f32 %v1025, %v1043
  %v1045 = vpop.f32.mrf.mxu0
  %v1046 = vadd.f32 %v1027, %v1045
  %1047 = vmatmul.bf16.gmra.mxu0 %v251
  %v1048 = vpop.f32.mrf.mxu0
  %v1049 = vadd.f32 %v1030, %v1048
  %v1050 = vpop.f32.mrf.mxu0
  %v1051 = vadd.f32 %v1032, %v1050
  %1052 = vdwg.mxu0
  %1053 = vmatpush.bf16.msra.mxu0 %v770
  %1054 = vmatpush.bf16.msra.mxu0 %v768
  %1055 = vmatpush.bf16.msra.mxu0 %v766
  %1056 = vmatpush.bf16.msra.mxu0 %v764
  %1057 = vmatpush.bf16.msra.mxu0 %v762
  %1058 = vmatpush.bf16.msra.mxu0 %v760
  %1059 = vmatpush.bf16.msra.mxu0 %v758
  %1060 = vmatpush.bf16.msra.mxu0 %v756
  %1061 = vmatmul.bf16.gmra.mxu0 %v243
  %v1062 = vpop.f32.mrf.mxu0
  %v1063 = vadd.f32 %v1044, %v1062
  %v1064 = vpop.f32.mrf.mxu0
  %v1065 = vadd.f32 %v1046, %v1064
  %1066 = vmatmul.bf16.gmra.mxu0 %v252
  %v1067 = vpop.f32.mrf.mxu0
  %v1068 = vadd.f32 %v1049, %v1067
  %v1069 = vpop.f32.mrf.mxu0
  %v1070 = vadd.f32 %v1051, %v1069
  %1071 = vdwg.mxu0
  %1072 = vmatpush.bf16.msra.mxu0 %v786
  %1073 = vmatpush.bf16.msra.mxu0 %v784
  %1074 = vmatpush.bf16.msra.mxu0 %v782
  %1075 = vmatpush.bf16.msra.mxu0 %v780
  %1076 = vmatpush.bf16.msra.mxu0 %v778
  %1077 = vmatpush.bf16.msra.mxu0 %v776
  %1078 = vmatpush.bf16.msra.mxu0 %v774
  %1079 = vmatpush.bf16.msra.mxu0 %v772
  %1080 = vmatmul.bf16.gmra.mxu0 %v244
  %v1081 = vpop.f32.mrf.mxu0
  %v1082 = vadd.f32 %v1063, %v1081
  %v1083 = vpop.f32.mrf.mxu0
  %v1084 = vadd.f32 %v1065, %v1083
  %1085 = vmatmul.bf16.gmra.mxu0 %v253
  %v1086 = vpop.f32.mrf.mxu0
  %v1087 = vadd.f32 %v1068, %v1086
  %v1088 = vpop.f32.mrf.mxu0
  %v1089 = vadd.f32 %v1070, %v1088
  %1090 = vdwg.mxu0
  %1091 = vmatpush.bf16.msra.mxu0 %v802
  %1092 = vmatpush.bf16.msra.mxu0 %v800
  %1093 = vmatpush.bf16.msra.mxu0 %v798
  %1094 = vmatpush.bf16.msra.mxu0 %v796
  %1095 = vmatpush.bf16.msra.mxu0 %v794
  %1096 = vmatpush.bf16.msra.mxu0 %v792
  %1097 = vmatpush.bf16.msra.mxu0 %v790
  %1098 = vmatpush.bf16.msra.mxu0 %v788
  %1099 = vmatmul.bf16.gmra.mxu0 %v245
  %v1100 = vpop.f32.mrf.mxu0
  %v1101 = vadd.f32 %v1082, %v1100
  %v1102 = vpop.f32.mrf.mxu0
  %v1103 = vadd.f32 %v1084, %v1102
  %1104 = vmatmul.bf16.gmra.mxu0 %v254
  %v1105 = vpop.f32.mrf.mxu0
  %v1106 = vadd.f32 %v1087, %v1105
  %v1107 = vpop.f32.mrf.mxu0
  %v1108 = vadd.f32 %v1089, %v1107
  %1109 = vdwg.mxu0
  %1110 = vmatpush.bf16.msra.mxu0 %v818
  %1111 = vmatpush.bf16.msra.mxu0 %v816
  %1112 = vmatpush.bf16.msra.mxu0 %v814
  %1113 = vmatpush.bf16.msra.mxu0 %v812
  %1114 = vmatpush.bf16.msra.mxu0 %v810
  %1115 = vmatpush.bf16.msra.mxu0 %v808
  %1116 = vmatpush.bf16.msra.mxu0 %v806
  %1117 = vmatpush.bf16.msra.mxu0 %v804
  %1118 = vmatmul.bf16.gmra.mxu0 %v246
  %v1119 = vpop.f32.mrf.mxu0
  %v1120 = vadd.f32 %v1101, %v1119
  %v1121 = vpop.f32.mrf.mxu0
  %v1122 = vadd.f32 %v1103, %v1121
  %1123 = vmatmul.bf16.gmra.mxu0 %v255
  %v1124 = vpop.f32.mrf.mxu0
  %v1125 = vadd.f32 %v1106, %v1124
  %v1126 = vpop.f32.mrf.mxu0
  %v1127 = vadd.f32 %v1108, %v1126
  %1128 = vdwg.mxu0
  %1129 = vmatpush.bf16.msra.mxu0 %v834
  %1130 = vmatpush.bf16.msra.mxu0 %v832
  %1131 = vmatpush.bf16.msra.mxu0 %v830
  %1132 = vmatpush.bf16.msra.mxu0 %v828
  %1133 = vmatpush.bf16.msra.mxu0 %v826
  %1134 = vmatpush.bf16.msra.mxu0 %v824
  %1135 = vmatpush.bf16.msra.mxu0 %v822
  %1136 = vmatpush.bf16.msra.mxu0 %v820
  %1137 = vmatmul.bf16.gmra.mxu0 %v247
  %v1138 = vpop.f32.mrf.mxu0
  %v1139 = vadd.f32 %v1120, %v1138
  %v1140 = vpop.f32.mrf.mxu0
  %v1141 = vadd.f32 %v1122, %v1140
  %1142 = vmatmul.bf16.gmra.mxu0 %v256
  %v1143 = vpop.f32.mrf.mxu0
  %v1144 = vadd.f32 %v1125, %v1143
  %v1145 = vpop.f32.mrf.mxu0
  %v1146 = vadd.f32 %v1127, %v1145
  %1147 = vdwg.mxu0
  %1148 = vmatpush.bf16.msra.mxu0 %v850
  %1149 = vmatpush.bf16.msra.mxu0 %v848
  %1150 = vmatpush.bf16.msra.mxu0 %v846
  %1151 = vmatpush.bf16.msra.mxu0 %v844
  %1152 = vmatpush.bf16.msra.mxu0 %v842
  %1153 = vmatpush.bf16.msra.mxu0 %v840
  %1154 = vmatpush.bf16.msra.mxu0 %v838
  %1155 = vmatpush.bf16.msra.mxu0 %v836
  %1156 = vmatmul.bf16.gmra.mxu0 %v248
  %v1157 = vpop.f32.mrf.mxu0
  %v1158 = vadd.f32 %v1139, %v1157
  %v1159 = vpop.f32.mrf.mxu0
  %v1160 = vadd.f32 %v1141, %v1159
  %1161 = vmatmul.bf16.gmra.mxu0 %v257
  %v1162 = vpop.f32.mrf.mxu0
  %v1163 = vadd.f32 %v1144, %v1162
  %v1164 = vpop.f32.mrf.mxu0
  %v1165 = vadd.f32 %v1146, %v1164
  %1166 = vdwg.mxu0
  %1167 = vmatpush.bf16.msra.mxu0 %v723
  %1168 = vmatpush.bf16.msra.mxu0 %v721
  %1169 = vmatpush.bf16.msra.mxu0 %v719
  %1170 = vmatpush.bf16.msra.mxu0 %v717
  %1171 = vmatpush.bf16.msra.mxu0 %v715
  %1172 = vmatpush.bf16.msra.mxu0 %v713
  %1173 = vmatpush.bf16.msra.mxu0 %v711
  %1174 = vmatpush.bf16.msra.mxu0 %v709
  %1175 = vmatmul.bf16.gmra.mxu0 %v240
  %v1176 = vpop.f32.mrf.mxu0
  %v1177 = vadd.f32 %v181, %v1176
  %v1178 = vpop.f32.mrf.mxu0
  %v1179 = vadd.f32 %v181, %v1178
  %1180 = vmatmul.bf16.gmra.mxu0 %v249
  %v1181 = vpop.f32.mrf.mxu0
  %v1182 = vadd.f32 %v181, %v1181
  %v1183 = vpop.f32.mrf.mxu0
  %v1184 = vadd.f32 %v181, %v1183
  %1185 = vdwg.mxu0
  %1186 = vmatpush.bf16.msra.mxu0 %v739
  %1187 = vmatpush.bf16.msra.mxu0 %v737
  %1188 = vmatpush.bf16.msra.mxu0 %v735
  %1189 = vmatpush.bf16.msra.mxu0 %v733
  %1190 = vmatpush.bf16.msra.mxu0 %v731
  %1191 = vmatpush.bf16.msra.mxu0 %v729
  %1192 = vmatpush.bf16.msra.mxu0 %v727
  %1193 = vmatpush.bf16.msra.mxu0 %v725
  %1194 = vmatmul.bf16.gmra.mxu0 %v241
  %v1195 = vpop.f32.mrf.mxu0
  %v1196 = vadd.f32 %v1177, %v1195
  %v1197 = vpop.f32.mrf.mxu0
  %v1198 = vadd.f32 %v1179, %v1197
  %1199 = vmatmul.bf16.gmra.mxu0 %v250
  %v1200 = vpop.f32.mrf.mxu0
  %v1201 = vadd.f32 %v1182, %v1200
  %v1202 = vpop.f32.mrf.mxu0
  %v1203 = vadd.f32 %v1184, %v1202
  %1204 = vdwg.mxu0
  %1205 = vmatpush.bf16.msra.mxu0 %v755
  %1206 = vmatpush.bf16.msra.mxu0 %v753
  %1207 = vmatpush.bf16.msra.mxu0 %v751
  %1208 = vmatpush.bf16.msra.mxu0 %v749
  %1209 = vmatpush.bf16.msra.mxu0 %v747
  %1210 = vmatpush.bf16.msra.mxu0 %v745
  %1211 = vmatpush.bf16.msra.mxu0 %v743
  %1212 = vmatpush.bf16.msra.mxu0 %v741
  %1213 = vmatmul.bf16.gmra.mxu0 %v242
  %v1214 = vpop.f32.mrf.mxu0
  %v1215 = vadd.f32 %v1196, %v1214
  %v1216 = vpop.f32.mrf.mxu0
  %v1217 = vadd.f32 %v1198, %v1216
  %1218 = vmatmul.bf16.gmra.mxu0 %v251
  %v1219 = vpop.f32.mrf.mxu0
  %v1220 = vadd.f32 %v1201, %v1219
  %v1221 = vpop.f32.mrf.mxu0
  %v1222 = vadd.f32 %v1203, %v1221
  %1223 = vdwg.mxu0
  %1224 = vmatpush.bf16.msra.mxu0 %v771
  %1225 = vmatpush.bf16.msra.mxu0 %v769
  %1226 = vmatpush.bf16.msra.mxu0 %v767
  %1227 = vmatpush.bf16.msra.mxu0 %v765
  %1228 = vmatpush.bf16.msra.mxu0 %v763
  %1229 = vmatpush.bf16.msra.mxu0 %v761
  %1230 = vmatpush.bf16.msra.mxu0 %v759
  %1231 = vmatpush.bf16.msra.mxu0 %v757
  %1232 = vmatmul.bf16.gmra.mxu0 %v243
  %v1233 = vpop.f32.mrf.mxu0
  %v1234 = vadd.f32 %v1215, %v1233
  %v1235 = vpop.f32.mrf.mxu0
  %v1236 = vadd.f32 %v1217, %v1235
  %1237 = vmatmul.bf16.gmra.mxu0 %v252
  %v1238 = vpop.f32.mrf.mxu0
  %v1239 = vadd.f32 %v1220, %v1238
  %v1240 = vpop.f32.mrf.mxu0
  %v1241 = vadd.f32 %v1222, %v1240
  %1242 = vdwg.mxu0
  %1243 = vmatpush.bf16.msra.mxu0 %v787
  %1244 = vmatpush.bf16.msra.mxu0 %v785
  %1245 = vmatpush.bf16.msra.mxu0 %v783
  %1246 = vmatpush.bf16.msra.mxu0 %v781
  %1247 = vmatpush.bf16.msra.mxu0 %v779
  %1248 = vmatpush.bf16.msra.mxu0 %v777
  %1249 = vmatpush.bf16.msra.mxu0 %v775
  %1250 = vmatpush.bf16.msra.mxu0 %v773
  %1251 = vmatmul.bf16.gmra.mxu0 %v244
  %v1252 = vpop.f32.mrf.mxu0
  %v1253 = vadd.f32 %v1234, %v1252
  %v1254 = vpop.f32.mrf.mxu0
  %v1255 = vadd.f32 %v1236, %v1254
  %1256 = vmatmul.bf16.gmra.mxu0 %v253
  %v1257 = vpop.f32.mrf.mxu0
  %v1258 = vadd.f32 %v1239, %v1257
  %v1259 = vpop.f32.mrf.mxu0
  %v1260 = vadd.f32 %v1241, %v1259
  %1261 = vdwg.mxu0
  %1262 = vmatpush.bf16.msra.mxu0 %v803
  %1263 = vmatpush.bf16.msra.mxu0 %v801
  %1264 = vmatpush.bf16.msra.mxu0 %v799
  %1265 = vmatpush.bf16.msra.mxu0 %v797
  %1266 = vmatpush.bf16.msra.mxu0 %v795
  %1267 = vmatpush.bf16.msra.mxu0 %v793
  %1268 = vmatpush.bf16.msra.mxu0 %v791
  %1269 = vmatpush.bf16.msra.mxu0 %v789
  %1270 = vmatmul.bf16.gmra.mxu0 %v245
  %v1271 = vpop.f32.mrf.mxu0
  %v1272 = vadd.f32 %v1253, %v1271
  %v1273 = vpop.f32.mrf.mxu0
  %v1274 = vadd.f32 %v1255, %v1273
  %1275 = vmatmul.bf16.gmra.mxu0 %v254
  %v1276 = vpop.f32.mrf.mxu0
  %v1277 = vadd.f32 %v1258, %v1276
  %v1278 = vpop.f32.mrf.mxu0
  %v1279 = vadd.f32 %v1260, %v1278
  %1280 = vdwg.mxu0
  %1281 = vmatpush.bf16.msra.mxu0 %v819
  %1282 = vmatpush.bf16.msra.mxu0 %v817
  %1283 = vmatpush.bf16.msra.mxu0 %v815
  %1284 = vmatpush.bf16.msra.mxu0 %v813
  %1285 = vmatpush.bf16.msra.mxu0 %v811
  %1286 = vmatpush.bf16.msra.mxu0 %v809
  %1287 = vmatpush.bf16.msra.mxu0 %v807
  %1288 = vmatpush.bf16.msra.mxu0 %v805
  %1289 = vmatmul.bf16.gmra.mxu0 %v246
  %v1290 = vpop.f32.mrf.mxu0
  %v1291 = vadd.f32 %v1272, %v1290
  %v1292 = vpop.f32.mrf.mxu0
  %v1293 = vadd.f32 %v1274, %v1292
  %1294 = vmatmul.bf16.gmra.mxu0 %v255
  %v1295 = vpop.f32.mrf.mxu0
  %v1296 = vadd.f32 %v1277, %v1295
  %v1297 = vpop.f32.mrf.mxu0
  %v1298 = vadd.f32 %v1279, %v1297
  %1299 = vdwg.mxu0
  %1300 = vmatpush.bf16.msra.mxu0 %v835
  %1301 = vmatpush.bf16.msra.mxu0 %v833
  %1302 = vmatpush.bf16.msra.mxu0 %v831
  %1303 = vmatpush.bf16.msra.mxu0 %v829
  %1304 = vmatpush.bf16.msra.mxu0 %v827
  %1305 = vmatpush.bf16.msra.mxu0 %v825
  %1306 = vmatpush.bf16.msra.mxu0 %v823
  %1307 = vmatpush.bf16.msra.mxu0 %v821
  %1308 = vmatmul.bf16.gmra.mxu0 %v247
  %v1309 = vpop.f32.mrf.mxu0
  %v1310 = vadd.f32 %v1291, %v1309
  %v1311 = vpop.f32.mrf.mxu0
  %v1312 = vadd.f32 %v1293, %v1311
  %1313 = vmatmul.bf16.gmra.mxu0 %v256
  %v1314 = vpop.f32.mrf.mxu0
  %v1315 = vadd.f32 %v1296, %v1314
  %v1316 = vpop.f32.mrf.mxu0
  %v1317 = vadd.f32 %v1298, %v1316
  %1318 = vdwg.mxu0
  %1319 = vmatpush.bf16.msra.mxu0 %v851
  %1320 = vmatpush.bf16.msra.mxu0 %v849
  %1321 = vmatpush.bf16.msra.mxu0 %v847
  %1322 = vmatpush.bf16.msra.mxu0 %v845
  %1323 = vmatpush.bf16.msra.mxu0 %v843
  %1324 = vmatpush.bf16.msra.mxu0 %v841
  %1325 = vmatpush.bf16.msra.mxu0 %v839
  %1326 = vmatpush.bf16.msra.mxu0 %v837
  %1327 = vmatmul.bf16.gmra.mxu0 %v248
  %v1328 = vpop.f32.mrf.mxu0
  %v1329 = vadd.f32 %v1310, %v1328
  %v1330 = vpop.f32.mrf.mxu0
  %v1331 = vadd.f32 %v1312, %v1330
  %1332 = vmatmul.bf16.gmra.mxu0 %v257
  %v1333 = vpop.f32.mrf.mxu0
  %v1334 = vadd.f32 %v1315, %v1333
  %v1335 = vpop.f32.mrf.mxu0
  %v1336 = vadd.f32 %v1317, %v1335
  %1337 = vdwg.mxu0
  %v1338 = vmax.f32 %v1158, 0.0
  %v1339 = vmax.f32 %v1329, 0.0
  %v1340 = vmax.f32 %v1160, 0.0
  %v1341 = vmax.f32 %v1331, 0.0
  %v1342 = vmax.f32 %v1163, 0.0
  %v1343 = vmax.f32 %v1334, 0.0
  %v1344 = vmax.f32 %v1165, 0.0
  %v1345 = vmax.f32 %v1336, 0.0
  %v1346 = vpack.c.bf16 %v1339, %v1338
  %v1347 = vpack.c.bf16 %v1341, %v1340
  %v1348 = vpack.c.bf16 %v1343, %v1342
  %v1349 = vpack.c.bf16 %v1345, %v1344
  %1350 = vst [vmem:[%s3] sm:$0xff] %v1346
  %1351 = vst [vmem:[%s3 + $0x8] sm:$0xff] %v1347
  %1352 = vst [vmem:[%s3 + $0x10] sm:$0xff] %v1348
  %1353 = vst [vmem:[%s3 + $0x18] sm:$0xff] %v1349
  // Predicated region
  $region14: #{_lambda_.17} parent=0 // pred_check
    _
  $region15: #{_lambda_.17} parent=0 // pred_check_branch
    %1355 = sbr.rel (0) target = $region17
  $region16: #{_lambda_.17} parent=0 // pred_region
    _
  $region17: #{_lambda_.17} parent=0 // pred_fallthru
    _
  // Predicated region
  $region18: #{_lambda_.17} parent=0 // pred_check
    _
  $region19: #{_lambda_.17} parent=0 // pred_check_branch
    %1357 = sbr.rel (0) target = $region21
  $region20: #{_lambda_.17} parent=0 // pred_region
    _
  $region21: #{_lambda_.17} parent=0 // pred_fallthru
    _

// kernel: _lambda_.16
$region0: #{_lambda_.16}
  #allocation0 [shape = 'u32[]', space=smem, size = 0x4, offset = 0x4, fixed_abs, tag = 'smem constant byte address 0x4 - core index']
  #allocation1 [shape = 'u32[72,128]{1,0:T(1,128)}', space=vmem, size = 0x9000, scoped, tag = 'internal scratch']
  %s0 = inlined_call_operand.vmem [shape: bf16[8,2304], index: 0, kind: input, shape index: {}]
  %s1 = inlined_call_operand.vmem [shape: bf16[2304,512], index: 1, kind: input, shape index: {}]
  %s2 = inlined_call_operand.vmem [shape: f32[1,512], index: 2, kind: input, shape index: {}]
  %s3 = inlined_call_operand.vmem [shape: bf16[8,512], index: 3, kind: output, shape index: {}]
  %s4 = sld [smem:[#allocation0]]
  $region22: #{_lambda_.16} parent=0
    _
  %s6 = ssub.s32 1, %s4
  %s7 = scalar_select 0, %s6, %s4
  // Predicated region
  $region2: #{_lambda_.16} parent=0 // pred_check
    _
  $region3: #{_lambda_.16} parent=0 // pred_check_branch
    %9 = sbr.rel (0) target = $region5
  $region4: #{_lambda_.16} parent=0 // pred_region
    _
  $region5: #{_lambda_.16} parent=0 // pred_fallthru
    _
  // Predicated region
  $region6: #{_lambda_.16} parent=0 // pred_check
    _
  $region7: #{_lambda_.16} parent=0 // pred_check_branch
    %11 = sbr.rel (0) target = $region9
  $region8: #{_lambda_.16} parent=0 // pred_region
    _
  $region9: #{_lambda_.16} parent=0 // pred_fallthru
    _
  // Predicated region
  $region10: #{_lambda_.16} parent=0 // pred_check
    _
  $region11: #{_lambda_.16} parent=0 // pred_check_branch
    %13 = sbr.rel (0) target = $region13
  $region12: #{_lambda_.16} parent=0 // pred_region
    _
  $region13: #{_lambda_.16} parent=0 // pred_fallthru
    _
  %v14 = vld [vmem:[%s0] sm:$0xff]
  %v15 = vld [vmem:[%s0 + $0x8] sm:$0xff]
  %v16 = vld [vmem:[%s0 + $0x10] sm:$0xff]
  %v17 = vld [vmem:[%s0 + $0x18] sm:$0xff]
  %v18 = vld [vmem:[%s0 + $0x20] sm:$0xff]
  %v19 = vld [vmem:[%s0 + $0x28] sm:$0xff]
  %v20 = vld [vmem:[%s0 + $0x30] sm:$0xff]
  %v21 = vld [vmem:[%s0 + $0x38] sm:$0xff]
  %v22 = vld [vmem:[%s0 + $0x40] sm:$0xff]
  %v23 = vld [vmem:[%s1] sm:$0xff]
  %v24 = vld [vmem:[%s1 + $0x8] sm:$0xff]
  %v25 = vld [vmem:[%s1 + $0x10] sm:$0xff]
  %v26 = vld [vmem:[%s1 + $0x18] sm:$0xff]
  %v27 = vld [vmem:[%s1 + $0x20] sm:$0xff]
  %v28 = vld [vmem:[%s1 + $0x28] sm:$0xff]
  %v29 = vld [vmem:[%s1 + $0x30] sm:$0xff]
  %v30 = vld [vmem:[%s1 + $0x38] sm:$0xff]
  %v31 = vld [vmem:[%s1 + $0x40] sm:$0xff]
  %v32 = vld [vmem:[%s1 + $0x48] sm:$0xff]
  %v33 = vld [vmem:[%s1 + $0x50] sm:$0xff]
  %v34 = vld [vmem:[%s1 + $0x58] sm:$0xff]
  %v35 = vld [vmem:[%s1 + $0x60] sm:$0xff]
  %v36 = vld [vmem:[%s1 + $0x68] sm:$0xff]
  %v37 = vld [vmem:[%s1 + $0x70] sm:$0xff]
  %v38 = vld [vmem:[%s1 + $0x78] sm:$0xff]
  %v39 = vld [vmem:[%s1 + $0x80] sm:$0xff]
  %v40 = vld [vmem:[%s1 + $0x88] sm:$0xff]
  %v41 = vld [vmem:[%s1 + $0x90] sm:$0xff]
  %v42 = vld [vmem:[%s1 + $0x98] sm:$0xff]
  %v43 = vld [vmem:[%s1 + $0xa0] sm:$0xff]
  %v44 = vld [vmem:[%s1 + $0xa8] sm:$0xff]
  %v45 = vld [vmem:[%s1 + $0xb0] sm:$0xff]
  %v46 = vld [vmem:[%s1 + $0xb8] sm:$0xff]
  %v47 = vld [vmem:[%s1 + $0xc0] sm:$0xff]
  %v48 = vld [vmem:[%s1 + $0xc8] sm:$0xff]
  %v49 = vld [vmem:[%s1 + $0xd0] sm:$0xff]
  %v50 = vld [vmem:[%s1 + $0xd8] sm:$0xff]
  %v51 = vld [vmem:[%s1 + $0xe0] sm:$0xff]
  %v52 = vld [vmem:[%s1 + $0xe8] sm:$0xff]
  %v53 = vld [vmem:[%s1 + $0xf0] sm:$0xff]
  %v54 = vld [vmem:[%s1 + $0xf8] sm:$0xff]
  %v55 = vld [vmem:[%s1 + $0x100] sm:$0xff]
  %v56 = vld [vmem:[%s1 + $0x108] sm:$0xff]
  %v57 = vld [vmem:[%s1 + $0x110] sm:$0xff]
  %v58 = vld [vmem:[%s1 + $0x118] sm:$0xff]
  %v59 = vld [vmem:[%s1 + $0x120] sm:$0xff]
  %v60 = vld [vmem:[%s1 + $0x128] sm:$0xff]
  %v61 = vld [vmem:[%s1 + $0x130] sm:$0xff]
  %v62 = vld [vmem:[%s1 + $0x138] sm:$0xff]
  %v63 = vld [vmem:[%s1 + $0x140] sm:$0xff]
  %v64 = vld [vmem:[%s1 + $0x148] sm:$0xff]
  %v65 = vld [vmem:[%s1 + $0x150] sm:$0xff]
  %v66 = vld [vmem:[%s1 + $0x158] sm:$0xff]
  %v67 = vld [vmem:[%s1 + $0x160] sm:$0xff]
  %v68 = vld [vmem:[%s1 + $0x168] sm:$0xff]
  %v69 = vld [vmem:[%s1 + $0x170] sm:$0xff]
  %v70 = vld [vmem:[%s1 + $0x178] sm:$0xff]
  %v71 = vld [vmem:[%s1 + $0x180] sm:$0xff]
  %v72 = vld [vmem:[%s1 + $0x188] sm:$0xff]
  %v73 = vld [vmem:[%s1 + $0x190] sm:$0xff]
  %v74 = vld [vmem:[%s1 + $0x198] sm:$0xff]
  %v75 = vld [vmem:[%s1 + $0x1a0] sm:$0xff]
  %v76 = vld [vmem:[%s1 + $0x1a8] sm:$0xff]
  %v77 = vld [vmem:[%s1 + $0x1b0] sm:$0xff]
  %v78 = vld [vmem:[%s1 + $0x1b8] sm:$0xff]
  %v79 = vld [vmem:[%s1 + $0x1c0] sm:$0xff]
  %v80 = vld [vmem:[%s1 + $0x1c8] sm:$0xff]
  %v81 = vld [vmem:[%s1 + $0x1d0] sm:$0xff]
  %v82 = vld [vmem:[%s1 + $0x1d8] sm:$0xff]
  %v83 = vld [vmem:[%s1 + $0x1e0] sm:$0xff]
  %v84 = vld [vmem:[%s1 + $0x1e8] sm:$0xff]
  %v85 = vld [vmem:[%s1 + $0x1f0] sm:$0xff]
  %v86 = vld [vmem:[%s1 + $0x1f8] sm:$0xff]
  %v87 = vld [vmem:[%s1 + $0x200] sm:$0xff]
  %v88 = vld [vmem:[%s1 + $0x208] sm:$0xff]
  %v89 = vld [vmem:[%s1 + $0x210] sm:$0xff]
  %v90 = vld [vmem:[%s1 + $0x218] sm:$0xff]
  %v91 = vld [vmem:[%s1 + $0x220] sm:$0xff]
  %v92 = vld [vmem:[%s1 + $0x228] sm:$0xff]
  %v93 = vld [vmem:[%s1 + $0x230] sm:$0xff]
  %v94 = vld [vmem:[%s1 + $0x238] sm:$0xff]
  %v95 = vld [vmem:[%s1 + $0x240] sm:$0xff]
  %v96 = vld [vmem:[%s1 + $0x248] sm:$0xff]
  %v97 = vld [vmem:[%s1 + $0x250] sm:$0xff]
  %v98 = vld [vmem:[%s1 + $0x258] sm:$0xff]
  %v99 = vld [vmem:[%s1 + $0x260] sm:$0xff]
  %v100 = vld [vmem:[%s1 + $0x268] sm:$0xff]
  %v101 = vld [vmem:[%s1 + $0x270] sm:$0xff]
  %v102 = vld [vmem:[%s1 + $0x278] sm:$0xff]
  %v103 = vld [vmem:[%s1 + $0x280] sm:$0xff]
  %v104 = vld [vmem:[%s1 + $0x288] sm:$0xff]
  %v105 = vld [vmem:[%s1 + $0x290] sm:$0xff]
  %v106 = vld [vmem:[%s1 + $0x298] sm:$0xff]
  %v107 = vld [vmem:[%s1 + $0x2a0] sm:$0xff]
  %v108 = vld [vmem:[%s1 + $0x2a8] sm:$0xff]
  %v109 = vld [vmem:[%s1 + $0x2b0] sm:$0xff]
  %v110 = vld [vmem:[%s1 + $0x2b8] sm:$0xff]
  %v111 = vld [vmem:[%s1 + $0x2c0] sm:$0xff]
  %v112 = vld [vmem:[%s1 + $0x2c8] sm:$0xff]
  %v113 = vld [vmem:[%s1 + $0x2d0] sm:$0xff]
  %v114 = vld [vmem:[%s1 + $0x2d8] sm:$0xff]
  %v115 = vld [vmem:[%s1 + $0x2e0] sm:$0xff]
  %v116 = vld [vmem:[%s1 + $0x2e8] sm:$0xff]
  %v117 = vld [vmem:[%s1 + $0x2f0] sm:$0xff]
  %v118 = vld [vmem:[%s1 + $0x2f8] sm:$0xff]
  %v119 = vld [vmem:[%s1 + $0x300] sm:$0xff]
  %v120 = vld [vmem:[%s1 + $0x308] sm:$0xff]
  %v121 = vld [vmem:[%s1 + $0x310] sm:$0xff]
  %v122 = vld [vmem:[%s1 + $0x318] sm:$0xff]
  %v123 = vld [vmem:[%s1 + $0x320] sm:$0xff]
  %v124 = vld [vmem:[%s1 + $0x328] sm:$0xff]
  %v125 = vld [vmem:[%s1 + $0x330] sm:$0xff]
  %v126 = vld [vmem:[%s1 + $0x338] sm:$0xff]
  %v127 = vld [vmem:[%s1 + $0x340] sm:$0xff]
  %v128 = vld [vmem:[%s1 + $0x348] sm:$0xff]
  %v129 = vld [vmem:[%s1 + $0x350] sm:$0xff]
  %v130 = vld [vmem:[%s1 + $0x358] sm:$0xff]
  %v131 = vld [vmem:[%s1 + $0x360] sm:$0xff]
  %v132 = vld [vmem:[%s1 + $0x368] sm:$0xff]
  %v133 = vld [vmem:[%s1 + $0x370] sm:$0xff]
  %v134 = vld [vmem:[%s1 + $0x378] sm:$0xff]
  %v135 = vld [vmem:[%s1 + $0x380] sm:$0xff]
  %v136 = vld [vmem:[%s1 + $0x388] sm:$0xff]
  %v137 = vld [vmem:[%s1 + $0x390] sm:$0xff]
  %v138 = vld [vmem:[%s1 + $0x398] sm:$0xff]
  %v139 = vld [vmem:[%s1 + $0x3a0] sm:$0xff]
  %v140 = vld [vmem:[%s1 + $0x3a8] sm:$0xff]
  %v141 = vld [vmem:[%s1 + $0x3b0] sm:$0xff]
  %v142 = vld [vmem:[%s1 + $0x3b8] sm:$0xff]
  %v143 = vld [vmem:[%s1 + $0x3c0] sm:$0xff]
  %v144 = vld [vmem:[%s1 + $0x3c8] sm:$0xff]
  %v145 = vld [vmem:[%s1 + $0x3d0] sm:$0xff]
  %v146 = vld [vmem:[%s1 + $0x3d8] sm:$0xff]
  %v147 = vld [vmem:[%s1 + $0x3e0] sm:$0xff]
  %v148 = vld [vmem:[%s1 + $0x3e8] sm:$0xff]
  %v149 = vld [vmem:[%s1 + $0x3f0] sm:$0xff]
  %v150 = vld [vmem:[%s1 + $0x3f8] sm:$0xff]
  %v151 = vld [vmem:[%s1 + $0x400] sm:$0xff]
  %v152 = vld [vmem:[%s1 + $0x408] sm:$0xff]
  %v153 = vld [vmem:[%s1 + $0x410] sm:$0xff]
  %v154 = vld [vmem:[%s1 + $0x418] sm:$0xff]
  %v155 = vld [vmem:[%s1 + $0x420] sm:$0xff]
  %v156 = vld [vmem:[%s1 + $0x428] sm:$0xff]
  %v157 = vld [vmem:[%s1 + $0x430] sm:$0xff]
  %v158 = vld [vmem:[%s1 + $0x438] sm:$0xff]
  %v159 = vld [vmem:[%s1 + $0x440] sm:$0xff]
  %v160 = vld [vmem:[%s1 + $0x448] sm:$0xff]
  %v161 = vld [vmem:[%s1 + $0x450] sm:$0xff]
  %v162 = vld [vmem:[%s1 + $0x458] sm:$0xff]
  %v163 = vld [vmem:[%s1 + $0x460] sm:$0xff]
  %v164 = vld [vmem:[%s1 + $0x468] sm:$0xff]
  %v165 = vld [vmem:[%s1 + $0x470] sm:$0xff]
  %v166 = vld [vmem:[%s1 + $0x478] sm:$0xff]
  %v167 = vld [vmem:[%s1 + $0x480] sm:$0xff]
  %v168 = vld [vmem:[%s1 + $0x488] sm:$0xff]
  %v169 = vld [vmem:[%s1 + $0x490] sm:$0xff]
  %v170 = vld [vmem:[%s1 + $0x498] sm:$0xff]
  %v171 = vld [vmem:[%s1 + $0x4a0] sm:$0xff]
  %v172 = vld [vmem:[%s1 + $0x4a8] sm:$0xff]
  %v173 = vld [vmem:[%s1 + $0x4b0] sm:$0xff]
  %v174 = vld [vmem:[%s1 + $0x4b8] sm:$0xff]
  %v175 = vld [vmem:[%s1 + $0x4c0] sm:$0xff]
  %v176 = vld [vmem:[%s1 + $0x4c8] sm:$0xff]
  %v177 = vld [vmem:[%s1 + $0x4d0] sm:$0xff]
  %v178 = vld [vmem:[%s1 + $0x4d8] sm:$0xff]
  %v179 = vld [vmem:[%s1 + $0x4e0] sm:$0xff]
  %v180 = vld [vmem:[%s1 + $0x4e8] sm:$0xff]
  %v181 = vld [vmem:[%s1 + $0x4f0] sm:$0xff]
  %v182 = vld [vmem:[%s1 + $0x4f8] sm:$0xff]
  %v183 = vld [vmem:[%s1 + $0x500] sm:$0xff]
  %v184 = vld [vmem:[%s1 + $0x508] sm:$0xff]
  %v185 = vld [vmem:[%s1 + $0x510] sm:$0xff]
  %v186 = vld [vmem:[%s1 + $0x518] sm:$0xff]
  %v187 = vld [vmem:[%s1 + $0x520] sm:$0xff]
  %v188 = vld [vmem:[%s1 + $0x528] sm:$0xff]
  %v189 = vld [vmem:[%s1 + $0x530] sm:$0xff]
  %v190 = vld [vmem:[%s1 + $0x538] sm:$0xff]
  %v191 = vld [vmem:[%s1 + $0x540] sm:$0xff]
  %v192 = vld [vmem:[%s1 + $0x548] sm:$0xff]
  %v193 = vld [vmem:[%s1 + $0x550] sm:$0xff]
  %v194 = vld [vmem:[%s1 + $0x558] sm:$0xff]
  %v195 = vld [vmem:[%s1 + $0x560] sm:$0xff]
  %v196 = vld [vmem:[%s1 + $0x568] sm:$0xff]
  %v197 = vld [vmem:[%s1 + $0x570] sm:$0xff]
  %v198 = vld [vmem:[%s1 + $0x578] sm:$0xff]
  %v199 = vld [vmem:[%s1 + $0x580] sm:$0xff]
  %v200 = vld [vmem:[%s1 + $0x588] sm:$0xff]
  %v201 = vld [vmem:[%s1 + $0x590] sm:$0xff]
  %v202 = vld [vmem:[%s1 + $0x598] sm:$0xff]
  %v203 = vld [vmem:[%s1 + $0x5a0] sm:$0xff]
  %v204 = vld [vmem:[%s1 + $0x5a8] sm:$0xff]
  %v205 = vld [vmem:[%s1 + $0x5b0] sm:$0xff]
  %v206 = vld [vmem:[%s1 + $0x5b8] sm:$0xff]
  %v207 = vld [vmem:[%s1 + $0x5c0] sm:$0xff]
  %v208 = vld [vmem:[%s1 + $0x5c8] sm:$0xff]
  %v209 = vld [vmem:[%s1 + $0x5d0] sm:$0xff]
  %v210 = vld [vmem:[%s1 + $0x5d8] sm:$0xff]
  %v211 = vld [vmem:[%s1 + $0x5e0] sm:$0xff]
  %v212 = vld [vmem:[%s1 + $0x5e8] sm:$0xff]
  %v213 = vld [vmem:[%s1 + $0x5f0] sm:$0xff]
  %v214 = vld [vmem:[%s1 + $0x5f8] sm:$0xff]
  %v215 = vld [vmem:[%s1 + $0x600] sm:$0xff]
  %v216 = vld [vmem:[%s1 + $0x608] sm:$0xff]
  %v217 = vld [vmem:[%s1 + $0x610] sm:$0xff]
  %v218 = vld [vmem:[%s1 + $0x618] sm:$0xff]
  %v219 = vld [vmem:[%s1 + $0x620] sm:$0xff]
  %v220 = vld [vmem:[%s1 + $0x628] sm:$0xff]
  %v221 = vld [vmem:[%s1 + $0x630] sm:$0xff]
  %v222 = vld [vmem:[%s1 + $0x638] sm:$0xff]
  %v223 = vld [vmem:[%s1 + $0x640] sm:$0xff]
  %v224 = vld [vmem:[%s1 + $0x648] sm:$0xff]
  %v225 = vld [vmem:[%s1 + $0x650] sm:$0xff]
  %v226 = vld [vmem:[%s1 + $0x658] sm:$0xff]
  %v227 = vld [vmem:[%s1 + $0x660] sm:$0xff]
  %v228 = vld [vmem:[%s1 + $0x668] sm:$0xff]
  %v229 = vld [vmem:[%s1 + $0x670] sm:$0xff]
  %v230 = vld [vmem:[%s1 + $0x678] sm:$0xff]
  %v231 = vld [vmem:[%s1 + $0x680] sm:$0xff]
  %v232 = vld [vmem:[%s1 + $0x688] sm:$0xff]
  %v233 = vld [vmem:[%s1 + $0x690] sm:$0xff]
  %v234 = vld [vmem:[%s1 + $0x698] sm:$0xff]
  %v235 = vld [vmem:[%s1 + $0x6a0] sm:$0xff]
  %v236 = vld [vmem:[%s1 + $0x6a8] sm:$0xff]
  %v237 = vld [vmem:[%s1 + $0x6b0] sm:$0xff]
  %v238 = vld [vmem:[%s1 + $0x6b8] sm:$0xff]
  %v239 = vld [vmem:[%s1 + $0x6c0] sm:$0xff]
  %v240 = vld [vmem:[%s1 + $0x6c8] sm:$0xff]
  %v241 = vld [vmem:[%s1 + $0x6d0] sm:$0xff]
  %v242 = vld [vmem:[%s1 + $0x6d8] sm:$0xff]
  %v243 = vld [vmem:[%s1 + $0x6e0] sm:$0xff]
  %v244 = vld [vmem:[%s1 + $0x6e8] sm:$0xff]
  %v245 = vld [vmem:[%s1 + $0x6f0] sm:$0xff]
  %v246 = vld [vmem:[%s1 + $0x6f8] sm:$0xff]
  %v247 = vld [vmem:[%s1 + $0x700] sm:$0xff]
  %v248 = vld [vmem:[%s1 + $0x708] sm:$0xff]
  %v249 = vld [vmem:[%s1 + $0x710] sm:$0xff]
  %v250 = vld [vmem:[%s1 + $0x718] sm:$0xff]
  %v251 = vld [vmem:[%s1 + $0x720] sm:$0xff]
  %v252 = vld [vmem:[%s1 + $0x728] sm:$0xff]
  %v253 = vld [vmem:[%s1 + $0x730] sm:$0xff]
  %v254 = vld [vmem:[%s1 + $0x738] sm:$0xff]
  %v255 = vld [vmem:[%s1 + $0x740] sm:$0xff]
  %v256 = vld [vmem:[%s1 + $0x748] sm:$0xff]
  %v257 = vld [vmem:[%s1 + $0x750] sm:$0xff]
  %v258 = vld [vmem:[%s1 + $0x758] sm:$0xff]
  %v259 = vld [vmem:[%s1 + $0x760] sm:$0xff]
  %v260 = vld [vmem:[%s1 + $0x768] sm:$0xff]
  %v261 = vld [vmem:[%s1 + $0x770] sm:$0xff]
  %v262 = vld [vmem:[%s1 + $0x778] sm:$0xff]
  %v263 = vld [vmem:[%s1 + $0x780] sm:$0xff]
  %v264 = vld [vmem:[%s1 + $0x788] sm:$0xff]
  %v265 = vld [vmem:[%s1 + $0x790] sm:$0xff]
  %v266 = vld [vmem:[%s1 + $0x798] sm:$0xff]
  %v267 = vld [vmem:[%s1 + $0x7a0] sm:$0xff]
  %v268 = vld [vmem:[%s1 + $0x7a8] sm:$0xff]
  %v269 = vld [vmem:[%s1 + $0x7b0] sm:$0xff]
  %v270 = vld [vmem:[%s1 + $0x7b8] sm:$0xff]
  %v271 = vld [vmem:[%s1 + $0x7c0] sm:$0xff]
  %v272 = vld [vmem:[%s1 + $0x7c8] sm:$0xff]
  %v273 = vld [vmem:[%s1 + $0x7d0] sm:$0xff]
  %v274 = vld [vmem:[%s1 + $0x7d8] sm:$0xff]
  %v275 = vld [vmem:[%s1 + $0x7e0] sm:$0xff]
  %v276 = vld [vmem:[%s1 + $0x7e8] sm:$0xff]
  %v277 = vld [vmem:[%s1 + $0x7f0] sm:$0xff]
  %v278 = vld [vmem:[%s1 + $0x7f8] sm:$0xff]
  %v279 = vld [vmem:[%s1 + $0x800] sm:$0xff]
  %v280 = vld [vmem:[%s1 + $0x808] sm:$0xff]
  %v281 = vld [vmem:[%s1 + $0x810] sm:$0xff]
  %v282 = vld [vmem:[%s1 + $0x818] sm:$0xff]
  %v283 = vld [vmem:[%s1 + $0x820] sm:$0xff]
  %v284 = vld [vmem:[%s1 + $0x828] sm:$0xff]
  %v285 = vld [vmem:[%s1 + $0x830] sm:$0xff]
  %v286 = vld [vmem:[%s1 + $0x838] sm:$0xff]
  %v287 = vld [vmem:[%s1 + $0x840] sm:$0xff]
  %v288 = vld [vmem:[%s1 + $0x848] sm:$0xff]
  %v289 = vld [vmem:[%s1 + $0x850] sm:$0xff]
  %v290 = vld [vmem:[%s1 + $0x858] sm:$0xff]
  %v291 = vld [vmem:[%s1 + $0x860] sm:$0xff]
  %v292 = vld [vmem:[%s1 + $0x868] sm:$0xff]
  %v293 = vld [vmem:[%s1 + $0x870] sm:$0xff]
  %v294 = vld [vmem:[%s1 + $0x878] sm:$0xff]
  %v295 = vld [vmem:[%s1 + $0x880] sm:$0xff]
  %v296 = vld [vmem:[%s1 + $0x888] sm:$0xff]
  %v297 = vld [vmem:[%s1 + $0x890] sm:$0xff]
  %v298 = vld [vmem:[%s1 + $0x898] sm:$0xff]
  %v299 = vld [vmem:[%s1 + $0x8a0] sm:$0xff]
  %v300 = vld [vmem:[%s1 + $0x8a8] sm:$0xff]
  %v301 = vld [vmem:[%s1 + $0x8b0] sm:$0xff]
  %v302 = vld [vmem:[%s1 + $0x8b8] sm:$0xff]
  %v303 = vld [vmem:[%s1 + $0x8c0] sm:$0xff]
  %v304 = vld [vmem:[%s1 + $0x8c8] sm:$0xff]
  %v305 = vld [vmem:[%s1 + $0x8d0] sm:$0xff]
  %v306 = vld [vmem:[%s1 + $0x8d8] sm:$0xff]
  %v307 = vld [vmem:[%s1 + $0x8e0] sm:$0xff]
  %v308 = vld [vmem:[%s1 + $0x8e8] sm:$0xff]
  %v309 = vld [vmem:[%s1 + $0x8f0] sm:$0xff]
  %v310 = vld [vmem:[%s1 + $0x8f8] sm:$0xff]
  %v311 = vld [vmem:[%s1 + $0x900] sm:$0xff]
  %v312 = vld [vmem:[%s1 + $0x908] sm:$0xff]
  %v313 = vld [vmem:[%s1 + $0x910] sm:$0xff]
  %v314 = vld [vmem:[%s1 + $0x918] sm:$0xff]
  %v315 = vld [vmem:[%s1 + $0x920] sm:$0xff]
  %v316 = vld [vmem:[%s1 + $0x928] sm:$0xff]
  %v317 = vld [vmem:[%s1 + $0x930] sm:$0xff]
  %v318 = vld [vmem:[%s1 + $0x938] sm:$0xff]
  %v319 = vld [vmem:[%s1 + $0x940] sm:$0xff]
  %v320 = vld [vmem:[%s1 + $0x948] sm:$0xff]
  %v321 = vld [vmem:[%s1 + $0x950] sm:$0xff]
  %v322 = vld [vmem:[%s1 + $0x958] sm:$0xff]
  %v323 = vld [vmem:[%s1 + $0x960] sm:$0xff]
  %v324 = vld [vmem:[%s1 + $0x968] sm:$0xff]
  %v325 = vld [vmem:[%s1 + $0x970] sm:$0xff]
  %v326 = vld [vmem:[%s1 + $0x978] sm:$0xff]
  %v327 = vld [vmem:[%s1 + $0x980] sm:$0xff]
  %v328 = vld [vmem:[%s1 + $0x988] sm:$0xff]
  %v329 = vld [vmem:[%s1 + $0x990] sm:$0xff]
  %v330 = vld [vmem:[%s1 + $0x998] sm:$0xff]
  %v331 = vld [vmem:[%s1 + $0x9a0] sm:$0xff]
  %v332 = vld [vmem:[%s1 + $0x9a8] sm:$0xff]
  %v333 = vld [vmem:[%s1 + $0x9b0] sm:$0xff]
  %v334 = vld [vmem:[%s1 + $0x9b8] sm:$0xff]
  %v335 = vld [vmem:[%s1 + $0x9c0] sm:$0xff]
  %v336 = vld [vmem:[%s1 + $0x9c8] sm:$0xff]
  %v337 = vld [vmem:[%s1 + $0x9d0] sm:$0xff]
  %v338 = vld [vmem:[%s1 + $0x9d8] sm:$0xff]
  %v339 = vld [vmem:[%s1 + $0x9e0] sm:$0xff]
  %v340 = vld [vmem:[%s1 + $0x9e8] sm:$0xff]
  %v341 = vld [vmem:[%s1 + $0x9f0] sm:$0xff]
  %v342 = vld [vmem:[%s1 + $0x9f8] sm:$0xff]
  %v343 = vld [vmem:[%s1 + $0xa00] sm:$0xff]
  %v344 = vld [vmem:[%s1 + $0xa08] sm:$0xff]
  %v345 = vld [vmem:[%s1 + $0xa10] sm:$0xff]
  %v346 = vld [vmem:[%s1 + $0xa18] sm:$0xff]
  %v347 = vld [vmem:[%s1 + $0xa20] sm:$0xff]
  %v348 = vld [vmem:[%s1 + $0xa28] sm:$0xff]
  %v349 = vld [vmem:[%s1 + $0xa30] sm:$0xff]
  %v350 = vld [vmem:[%s1 + $0xa38] sm:$0xff]
  %v351 = vld [vmem:[%s1 + $0xa40] sm:$0xff]
  %v352 = vld [vmem:[%s1 + $0xa48] sm:$0xff]
  %v353 = vld [vmem:[%s1 + $0xa50] sm:$0xff]
  %v354 = vld [vmem:[%s1 + $0xa58] sm:$0xff]
  %v355 = vld [vmem:[%s1 + $0xa60] sm:$0xff]
  %v356 = vld [vmem:[%s1 + $0xa68] sm:$0xff]
  %v357 = vld [vmem:[%s1 + $0xa70] sm:$0xff]
  %v358 = vld [vmem:[%s1 + $0xa78] sm:$0xff]
  %v359 = vld [vmem:[%s1 + $0xa80] sm:$0xff]
  %v360 = vld [vmem:[%s1 + $0xa88] sm:$0xff]
  %v361 = vld [vmem:[%s1 + $0xa90] sm:$0xff]
  %v362 = vld [vmem:[%s1 + $0xa98] sm:$0xff]
  %v363 = vld [vmem:[%s1 + $0xaa0] sm:$0xff]
  %v364 = vld [vmem:[%s1 + $0xaa8] sm:$0xff]
  %v365 = vld [vmem:[%s1 + $0xab0] sm:$0xff]
  %v366 = vld [vmem:[%s1 + $0xab8] sm:$0xff]
  %v367 = vld [vmem:[%s1 + $0xac0] sm:$0xff]
  %v368 = vld [vmem:[%s1 + $0xac8] sm:$0xff]
  %v369 = vld [vmem:[%s1 + $0xad0] sm:$0xff]
  %v370 = vld [vmem:[%s1 + $0xad8] sm:$0xff]
  %v371 = vld [vmem:[%s1 + $0xae0] sm:$0xff]
  %v372 = vld [vmem:[%s1 + $0xae8] sm:$0xff]
  %v373 = vld [vmem:[%s1 + $0xaf0] sm:$0xff]
  %v374 = vld [vmem:[%s1 + $0xaf8] sm:$0xff]
  %v375 = vld [vmem:[%s1 + $0xb00] sm:$0xff]
  %v376 = vld [vmem:[%s1 + $0xb08] sm:$0xff]
  %v377 = vld [vmem:[%s1 + $0xb10] sm:$0xff]
  %v378 = vld [vmem:[%s1 + $0xb18] sm:$0xff]
  %v379 = vld [vmem:[%s1 + $0xb20] sm:$0xff]
  %v380 = vld [vmem:[%s1 + $0xb28] sm:$0xff]
  %v381 = vld [vmem:[%s1 + $0xb30] sm:$0xff]
  %v382 = vld [vmem:[%s1 + $0xb38] sm:$0xff]
  %v383 = vld [vmem:[%s1 + $0xb40] sm:$0xff]
  %v384 = vld [vmem:[%s1 + $0xb48] sm:$0xff]
  %v385 = vld [vmem:[%s1 + $0xb50] sm:$0xff]
  %v386 = vld [vmem:[%s1 + $0xb58] sm:$0xff]
  %v387 = vld [vmem:[%s1 + $0xb60] sm:$0xff]
  %v388 = vld [vmem:[%s1 + $0xb68] sm:$0xff]
  %v389 = vld [vmem:[%s1 + $0xb70] sm:$0xff]
  %v390 = vld [vmem:[%s1 + $0xb78] sm:$0xff]
  %v391 = vld [vmem:[%s1 + $0xb80] sm:$0xff]
  %v392 = vld [vmem:[%s1 + $0xb88] sm:$0xff]
  %v393 = vld [vmem:[%s1 + $0xb90] sm:$0xff]
  %v394 = vld [vmem:[%s1 + $0xb98] sm:$0xff]
  %v395 = vld [vmem:[%s1 + $0xba0] sm:$0xff]
  %v396 = vld [vmem:[%s1 + $0xba8] sm:$0xff]
  %v397 = vld [vmem:[%s1 + $0xbb0] sm:$0xff]
  %v398 = vld [vmem:[%s1 + $0xbb8] sm:$0xff]
  %v399 = vld [vmem:[%s1 + $0xbc0] sm:$0xff]
  %v400 = vld [vmem:[%s1 + $0xbc8] sm:$0xff]
  %v401 = vld [vmem:[%s1 + $0xbd0] sm:$0xff]
  %v402 = vld [vmem:[%s1 + $0xbd8] sm:$0xff]
  %v403 = vld [vmem:[%s1 + $0xbe0] sm:$0xff]
  %v404 = vld [vmem:[%s1 + $0xbe8] sm:$0xff]
  %v405 = vld [vmem:[%s1 + $0xbf0] sm:$0xff]
  %v406 = vld [vmem:[%s1 + $0xbf8] sm:$0xff]
  %v407 = vld [vmem:[%s1 + $0xc00] sm:$0xff]
  %v408 = vld [vmem:[%s1 + $0xc08] sm:$0xff]
  %v409 = vld [vmem:[%s1 + $0xc10] sm:$0xff]
  %v410 = vld [vmem:[%s1 + $0xc18] sm:$0xff]
  %v411 = vld [vmem:[%s1 + $0xc20] sm:$0xff]
  %v412 = vld [vmem:[%s1 + $0xc28] sm:$0xff]
  %v413 = vld [vmem:[%s1 + $0xc30] sm:$0xff]
  %v414 = vld [vmem:[%s1 + $0xc38] sm:$0xff]
  %v415 = vld [vmem:[%s1 + $0xc40] sm:$0xff]
  %v416 = vld [vmem:[%s1 + $0xc48] sm:$0xff]
  %v417 = vld [vmem:[%s1 + $0xc50] sm:$0xff]
  %v418 = vld [vmem:[%s1 + $0xc58] sm:$0xff]
  %v419 = vld [vmem:[%s1 + $0xc60] sm:$0xff]
  %v420 = vld [vmem:[%s1 + $0xc68] sm:$0xff]
  %v421 = vld [vmem:[%s1 + $0xc70] sm:$0xff]
  %v422 = vld [vmem:[%s1 + $0xc78] sm:$0xff]
  %v423 = vld [vmem:[%s1 + $0xc80] sm:$0xff]
  %v424 = vld [vmem:[%s1 + $0xc88] sm:$0xff]
  %v425 = vld [vmem:[%s1 + $0xc90] sm:$0xff]
  %v426 = vld [vmem:[%s1 + $0xc98] sm:$0xff]
  %v427 = vld [vmem:[%s1 + $0xca0] sm:$0xff]
  %v428 = vld [vmem:[%s1 + $0xca8] sm:$0xff]
  %v429 = vld [vmem:[%s1 + $0xcb0] sm:$0xff]
  %v430 = vld [vmem:[%s1 + $0xcb8] sm:$0xff]
  %v431 = vld [vmem:[%s1 + $0xcc0] sm:$0xff]
  %v432 = vld [vmem:[%s1 + $0xcc8] sm:$0xff]
  %v433 = vld [vmem:[%s1 + $0xcd0] sm:$0xff]
  %v434 = vld [vmem:[%s1 + $0xcd8] sm:$0xff]
  %v435 = vld [vmem:[%s1 + $0xce0] sm:$0xff]
  %v436 = vld [vmem:[%s1 + $0xce8] sm:$0xff]
  %v437 = vld [vmem:[%s1 + $0xcf0] sm:$0xff]
  %v438 = vld [vmem:[%s1 + $0xcf8] sm:$0xff]
  %v439 = vld [vmem:[%s1 + $0xd00] sm:$0xff]
  %v440 = vld [vmem:[%s1 + $0xd08] sm:$0xff]
  %v441 = vld [vmem:[%s1 + $0xd10] sm:$0xff]
  %v442 = vld [vmem:[%s1 + $0xd18] sm:$0xff]
  %v443 = vld [vmem:[%s1 + $0xd20] sm:$0xff]
  %v444 = vld [vmem:[%s1 + $0xd28] sm:$0xff]
  %v445 = vld [vmem:[%s1 + $0xd30] sm:$0xff]
  %v446 = vld [vmem:[%s1 + $0xd38] sm:$0xff]
  %v447 = vld [vmem:[%s1 + $0xd40] sm:$0xff]
  %v448 = vld [vmem:[%s1 + $0xd48] sm:$0xff]
  %v449 = vld [vmem:[%s1 + $0xd50] sm:$0xff]
  %v450 = vld [vmem:[%s1 + $0xd58] sm:$0xff]
  %v451 = vld [vmem:[%s1 + $0xd60] sm:$0xff]
  %v452 = vld [vmem:[%s1 + $0xd68] sm:$0xff]
  %v453 = vld [vmem:[%s1 + $0xd70] sm:$0xff]
  %v454 = vld [vmem:[%s1 + $0xd78] sm:$0xff]
  %v455 = vld [vmem:[%s1 + $0xd80] sm:$0xff]
  %v456 = vld [vmem:[%s1 + $0xd88] sm:$0xff]
  %v457 = vld [vmem:[%s1 + $0xd90] sm:$0xff]
  %v458 = vld [vmem:[%s1 + $0xd98] sm:$0xff]
  %v459 = vld [vmem:[%s1 + $0xda0] sm:$0xff]
  %v460 = vld [vmem:[%s1 + $0xda8] sm:$0xff]
  %v461 = vld [vmem:[%s1 + $0xdb0] sm:$0xff]
  %v462 = vld [vmem:[%s1 + $0xdb8] sm:$0xff]
  %v463 = vld [vmem:[%s1 + $0xdc0] sm:$0xff]
  %v464 = vld [vmem:[%s1 + $0xdc8] sm:$0xff]
  %v465 = vld [vmem:[%s1 + $0xdd0] sm:$0xff]
  %v466 = vld [vmem:[%s1 + $0xdd8] sm:$0xff]
  %v467 = vld [vmem:[%s1 + $0xde0] sm:$0xff]
  %v468 = vld [vmem:[%s1 + $0xde8] sm:$0xff]
  %v469 = vld [vmem:[%s1 + $0xdf0] sm:$0xff]
  %v470 = vld [vmem:[%s1 + $0xdf8] sm:$0xff]
  %v471 = vld [vmem:[%s1 + $0xe00] sm:$0xff]
  %v472 = vld [vmem:[%s1 + $0xe08] sm:$0xff]
  %v473 = vld [vmem:[%s1 + $0xe10] sm:$0xff]
  %v474 = vld [vmem:[%s1 + $0xe18] sm:$0xff]
  %v475 = vld [vmem:[%s1 + $0xe20] sm:$0xff]
  %v476 = vld [vmem:[%s1 + $0xe28] sm:$0xff]
  %v477 = vld [vmem:[%s1 + $0xe30] sm:$0xff]
  %v478 = vld [vmem:[%s1 + $0xe38] sm:$0xff]
  %v479 = vld [vmem:[%s1 + $0xe40] sm:$0xff]
  %v480 = vld [vmem:[%s1 + $0xe48] sm:$0xff]
  %v481 = vld [vmem:[%s1 + $0xe50] sm:$0xff]
  %v482 = vld [vmem:[%s1 + $0xe58] sm:$0xff]
  %v483 = vld [vmem:[%s1 + $0xe60] sm:$0xff]
  %v484 = vld [vmem:[%s1 + $0xe68] sm:$0xff]
  %v485 = vld [vmem:[%s1 + $0xe70] sm:$0xff]
  %v486 = vld [vmem:[%s1 + $0xe78] sm:$0xff]
  %v487 = vld [vmem:[%s1 + $0xe80] sm:$0xff]
  %v488 = vld [vmem:[%s1 + $0xe88] sm:$0xff]
  %v489 = vld [vmem:[%s1 + $0xe90] sm:$0xff]
  %v490 = vld [vmem:[%s1 + $0xe98] sm:$0xff]
  %v491 = vld [vmem:[%s1 + $0xea0] sm:$0xff]
  %v492 = vld [vmem:[%s1 + $0xea8] sm:$0xff]
  %v493 = vld [vmem:[%s1 + $0xeb0] sm:$0xff]
  %v494 = vld [vmem:[%s1 + $0xeb8] sm:$0xff]
  %v495 = vld [vmem:[%s1 + $0xec0] sm:$0xff]
  %v496 = vld [vmem:[%s1 + $0xec8] sm:$0xff]
  %v497 = vld [vmem:[%s1 + $0xed0] sm:$0xff]
  %v498 = vld [vmem:[%s1 + $0xed8] sm:$0xff]
  %v499 = vld [vmem:[%s1 + $0xee0] sm:$0xff]
  %v500 = vld [vmem:[%s1 + $0xee8] sm:$0xff]
  %v501 = vld [vmem:[%s1 + $0xef0] sm:$0xff]
  %v502 = vld [vmem:[%s1 + $0xef8] sm:$0xff]
  %v503 = vld [vmem:[%s1 + $0xf00] sm:$0xff]
  %v504 = vld [vmem:[%s1 + $0xf08] sm:$0xff]
  %v505 = vld [vmem:[%s1 + $0xf10] sm:$0xff]
  %v506 = vld [vmem:[%s1 + $0xf18] sm:$0xff]
  %v507 = vld [vmem:[%s1 + $0xf20] sm:$0xff]
  %v508 = vld [vmem:[%s1 + $0xf28] sm:$0xff]
  %v509 = vld [vmem:[%s1 + $0xf30] sm:$0xff]
  %v510 = vld [vmem:[%s1 + $0xf38] sm:$0xff]
  %v511 = vld [vmem:[%s1 + $0xf40] sm:$0xff]
  %v512 = vld [vmem:[%s1 + $0xf48] sm:$0xff]
  %v513 = vld [vmem:[%s1 + $0xf50] sm:$0xff]
  %v514 = vld [vmem:[%s1 + $0xf58] sm:$0xff]
  %v515 = vld [vmem:[%s1 + $0xf60] sm:$0xff]
  %v516 = vld [vmem:[%s1 + $0xf68] sm:$0xff]
  %v517 = vld [vmem:[%s1 + $0xf70] sm:$0xff]
  %v518 = vld [vmem:[%s1 + $0xf78] sm:$0xff]
  %v519 = vld [vmem:[%s1 + $0xf80] sm:$0xff]
  %v520 = vld [vmem:[%s1 + $0xf88] sm:$0xff]
  %v521 = vld [vmem:[%s1 + $0xf90] sm:$0xff]
  %v522 = vld [vmem:[%s1 + $0xf98] sm:$0xff]
  %v523 = vld [vmem:[%s1 + $0xfa0] sm:$0xff]
  %v524 = vld [vmem:[%s1 + $0xfa8] sm:$0xff]
  %v525 = vld [vmem:[%s1 + $0xfb0] sm:$0xff]
  %v526 = vld [vmem:[%s1 + $0xfb8] sm:$0xff]
  %v527 = vld [vmem:[%s1 + $0xfc0] sm:$0xff]
  %v528 = vld [vmem:[%s1 + $0xfc8] sm:$0xff]
  %v529 = vld [vmem:[%s1 + $0xfd0] sm:$0xff]
  %v530 = vld [vmem:[%s1 + $0xfd8] sm:$0xff]
  %v531 = vld [vmem:[%s1 + $0xfe0] sm:$0xff]
  %v532 = vld [vmem:[%s1 + $0xfe8] sm:$0xff]
  %v533 = vld [vmem:[%s1 + $0xff0] sm:$0xff]
  %v534 = vld [vmem:[%s1 + $0xff8] sm:$0xff]
  %v535 = vld [vmem:[%s1 + $0x1000] sm:$0xff]
  %v536 = vld [vmem:[%s1 + $0x1008] sm:$0xff]
  %v537 = vld [vmem:[%s1 + $0x1010] sm:$0xff]
  %v538 = vld [vmem:[%s1 + $0x1018] sm:$0xff]
  %v539 = vld [vmem:[%s1 + $0x1020] sm:$0xff]
  %v540 = vld [vmem:[%s1 + $0x1028] sm:$0xff]
  %v541 = vld [vmem:[%s1 + $0x1030] sm:$0xff]
  %v542 = vld [vmem:[%s1 + $0x1038] sm:$0xff]
  %v543 = vld [vmem:[%s1 + $0x1040] sm:$0xff]
  %v544 = vld [vmem:[%s1 + $0x1048] sm:$0xff]
  %v545 = vld [vmem:[%s1 + $0x1050] sm:$0xff]
  %v546 = vld [vmem:[%s1 + $0x1058] sm:$0xff]
  %v547 = vld [vmem:[%s1 + $0x1060] sm:$0xff]
  %v548 = vld [vmem:[%s1 + $0x1068] sm:$0xff]
  %v549 = vld [vmem:[%s1 + $0x1070] sm:$0xff]
  %v550 = vld [vmem:[%s1 + $0x1078] sm:$0xff]
  %v551 = vld [vmem:[%s1 + $0x1080] sm:$0xff]
  %v552 = vld [vmem:[%s1 + $0x1088] sm:$0xff]
  %v553 = vld [vmem:[%s1 + $0x1090] sm:$0xff]
  %v554 = vld [vmem:[%s1 + $0x1098] sm:$0xff]
  %v555 = vld [vmem:[%s1 + $0x10a0] sm:$0xff]
  %v556 = vld [vmem:[%s1 + $0x10a8] sm:$0xff]
  %v557 = vld [vmem:[%s1 + $0x10b0] sm:$0xff]
  %v558 = vld [vmem:[%s1 + $0x10b8] sm:$0xff]
  %v559 = vld [vmem:[%s1 + $0x10c0] sm:$0xff]
  %v560 = vld [vmem:[%s1 + $0x10c8] sm:$0xff]
  %v561 = vld [vmem:[%s1 + $0x10d0] sm:$0xff]
  %v562 = vld [vmem:[%s1 + $0x10d8] sm:$0xff]
  %v563 = vld [vmem:[%s1 + $0x10e0] sm:$0xff]
  %v564 = vld [vmem:[%s1 + $0x10e8] sm:$0xff]
  %v565 = vld [vmem:[%s1 + $0x10f0] sm:$0xff]
  %v566 = vld [vmem:[%s1 + $0x10f8] sm:$0xff]
  %v567 = vld [vmem:[%s1 + $0x1100] sm:$0xff]
  %v568 = vld [vmem:[%s1 + $0x1108] sm:$0xff]
  %v569 = vld [vmem:[%s1 + $0x1110] sm:$0xff]
  %v570 = vld [vmem:[%s1 + $0x1118] sm:$0xff]
  %v571 = vld [vmem:[%s1 + $0x1120] sm:$0xff]
  %v572 = vld [vmem:[%s1 + $0x1128] sm:$0xff]
  %v573 = vld [vmem:[%s1 + $0x1130] sm:$0xff]
  %v574 = vld [vmem:[%s1 + $0x1138] sm:$0xff]
  %v575 = vld [vmem:[%s1 + $0x1140] sm:$0xff]
  %v576 = vld [vmem:[%s1 + $0x1148] sm:$0xff]
  %v577 = vld [vmem:[%s1 + $0x1150] sm:$0xff]
  %v578 = vld [vmem:[%s1 + $0x1158] sm:$0xff]
  %v579 = vld [vmem:[%s1 + $0x1160] sm:$0xff]
  %v580 = vld [vmem:[%s1 + $0x1168] sm:$0xff]
  %v581 = vld [vmem:[%s1 + $0x1170] sm:$0xff]
  %v582 = vld [vmem:[%s1 + $0x1178] sm:$0xff]
  %v583 = vld [vmem:[%s1 + $0x1180] sm:$0xff]
  %v584 = vld [vmem:[%s1 + $0x1188] sm:$0xff]
  %v585 = vld [vmem:[%s1 + $0x1190] sm:$0xff]
  %v586 = vld [vmem:[%s1 + $0x1198] sm:$0xff]
  %v587 = vld [vmem:[%s1 + $0x11a0] sm:$0xff]
  %v588 = vld [vmem:[%s1 + $0x11a8] sm:$0xff]
  %v589 = vld [vmem:[%s1 + $0x11b0] sm:$0xff]
  %v590 = vld [vmem:[%s1 + $0x11b8] sm:$0xff]
  %v591 = vld [vmem:[%s1 + $0x11c0] sm:$0xff]
  %v592 = vld [vmem:[%s1 + $0x11c8] sm:$0xff]
  %v593 = vld [vmem:[%s1 + $0x11d0] sm:$0xff]
  %v594 = vld [vmem:[%s1 + $0x11d8] sm:$0xff]
  %v595 = vld [vmem:[%s1 + $0x11e0] sm:$0xff]
  %v596 = vld [vmem:[%s1 + $0x11e8] sm:$0xff]
  %v597 = vld [vmem:[%s1 + $0x11f0] sm:$0xff]
  %v598 = vld [vmem:[%s1 + $0x11f8] sm:$0xff]
  %v599 = vld [vmem:[%s2] sm:$0xf]
  %v601 = vperm.slane %v599, 0
  %v602 = vperm.slane %v599, 1
  %v603 = vperm.slane %v599, 2
  %v604 = vperm.slane %v599, 3
  %v618 = vunpack.c.l.b16 %v14
  %v619 = vunpack.c.h.b16 %v14
  %v620 = vunpack.c.l.b16 %v15
  %v621 = vunpack.c.h.b16 %v15
  %v622 = vunpack.c.l.b16 %v16
  %v623 = vunpack.c.h.b16 %v16
  %v624 = vunpack.c.l.b16 %v17
  %v625 = vunpack.c.h.b16 %v17
  %v626 = vunpack.c.l.b16 %v18
  %v627 = vunpack.c.h.b16 %v18
  %v628 = vunpack.c.l.b16 %v19
  %v629 = vunpack.c.h.b16 %v19
  %v630 = vunpack.c.l.b16 %v20
  %v631 = vunpack.c.h.b16 %v20
  %v632 = vunpack.c.l.b16 %v21
  %v633 = vunpack.c.h.b16 %v21
  %v634 = vunpack.c.l.b16 %v22
  %v635 = vunpack.c.h.b16 %v22
  %v636 = vpack.c.b16 %v618, %v618
  %v637 = vpack.c.b16 %v619, %v619
  %v638 = vpack.c.b16 %v620, %v620
  %v639 = vpack.c.b16 %v621, %v621
  %v640 = vpack.c.b16 %v622, %v622
  %v641 = vpack.c.b16 %v623, %v623
  %v642 = vpack.c.b16 %v624, %v624
  %v643 = vpack.c.b16 %v625, %v625
  %v644 = vpack.c.b16 %v626, %v626
  %v645 = vpack.c.b16 %v627, %v627
  %v646 = vpack.c.b16 %v628, %v628
  %v647 = vpack.c.b16 %v629, %v629
  %v648 = vpack.c.b16 %v630, %v630
  %v649 = vpack.c.b16 %v631, %v631
  %v650 = vpack.c.b16 %v632, %v632
  %v651 = vpack.c.b16 %v633, %v633
  %v652 = vpack.c.b16 %v634, %v634
  %v653 = vpack.c.b16 %v635, %v635
  %v1248 = vunpack.c.l.b16 %v23
  %v1249 = vunpack.c.h.b16 %v23
  %v1250 = vunpack.c.l.b16 %v24
  %v1251 = vunpack.c.h.b16 %v24
  %v1252 = vunpack.c.l.b16 %v25
  %v1253 = vunpack.c.h.b16 %v25
  %v1254 = vunpack.c.l.b16 %v26
  %v1255 = vunpack.c.h.b16 %v26
  %v1256 = vunpack.c.l.b16 %v27
  %v1257 = vunpack.c.h.b16 %v27
  %v1258 = vunpack.c.l.b16 %v28
  %v1259 = vunpack.c.h.b16 %v28
  %v1260 = vunpack.c.l.b16 %v29
  %v1261 = vunpack.c.h.b16 %v29
  %v1262 = vunpack.c.l.b16 %v30
  %v1263 = vunpack.c.h.b16 %v30
  %v1264 = vunpack.c.l.b16 %v31
  %v1265 = vunpack.c.h.b16 %v31
  %v1266 = vunpack.c.l.b16 %v32
  %v1267 = vunpack.c.h.b16 %v32
  %v1268 = vunpack.c.l.b16 %v33
  %v1269 = vunpack.c.h.b16 %v33
  %v1270 = vunpack.c.l.b16 %v34
  %v1271 = vunpack.c.h.b16 %v34
  %v1272 = vunpack.c.l.b16 %v35
  %v1273 = vunpack.c.h.b16 %v35
  %v1274 = vunpack.c.l.b16 %v36
  %v1275 = vunpack.c.h.b16 %v36
  %v1276 = vunpack.c.l.b16 %v37
  %v1277 = vunpack.c.h.b16 %v37
  %v1278 = vunpack.c.l.b16 %v38
  %v1279 = vunpack.c.h.b16 %v38
  %v1280 = vunpack.c.l.b16 %v39
  %v1281 = vunpack.c.h.b16 %v39
  %v1282 = vunpack.c.l.b16 %v40
  %v1283 = vunpack.c.h.b16 %v40
  %v1284 = vunpack.c.l.b16 %v41
  %v1285 = vunpack.c.h.b16 %v41
  %v1286 = vunpack.c.l.b16 %v42
  %v1287 = vunpack.c.h.b16 %v42
  %v1288 = vunpack.c.l.b16 %v43
  %v1289 = vunpack.c.h.b16 %v43
  %v1290 = vunpack.c.l.b16 %v44
  %v1291 = vunpack.c.h.b16 %v44
  %v1292 = vunpack.c.l.b16 %v45
  %v1293 = vunpack.c.h.b16 %v45
  %v1294 = vunpack.c.l.b16 %v46
  %v1295 = vunpack.c.h.b16 %v46
  %v1296 = vunpack.c.l.b16 %v47
  %v1297 = vunpack.c.h.b16 %v47
  %v1298 = vunpack.c.l.b16 %v48
  %v1299 = vunpack.c.h.b16 %v48
  %v1300 = vunpack.c.l.b16 %v49
  %v1301 = vunpack.c.h.b16 %v49
  %v1302 = vunpack.c.l.b16 %v50
  %v1303 = vunpack.c.h.b16 %v50
  %v1304 = vunpack.c.l.b16 %v51
  %v1305 = vunpack.c.h.b16 %v51
  %v1306 = vunpack.c.l.b16 %v52
  %v1307 = vunpack.c.h.b16 %v52
  %v1308 = vunpack.c.l.b16 %v53
  %v1309 = vunpack.c.h.b16 %v53
  %v1310 = vunpack.c.l.b16 %v54
  %v1311 = vunpack.c.h.b16 %v54
  %v1312 = vunpack.c.l.b16 %v55
  %v1313 = vunpack.c.h.b16 %v55
  %v1314 = vunpack.c.l.b16 %v56
  %v1315 = vunpack.c.h.b16 %v56
  %v1316 = vunpack.c.l.b16 %v57
  %v1317 = vunpack.c.h.b16 %v57
  %v1318 = vunpack.c.l.b16 %v58
  %v1319 = vunpack.c.h.b16 %v58
  %v1320 = vunpack.c.l.b16 %v59
  %v1321 = vunpack.c.h.b16 %v59
  %v1322 = vunpack.c.l.b16 %v60
  %v1323 = vunpack.c.h.b16 %v60
  %v1324 = vunpack.c.l.b16 %v61
  %v1325 = vunpack.c.h.b16 %v61
  %v1326 = vunpack.c.l.b16 %v62
  %v1327 = vunpack.c.h.b16 %v62
  %v1328 = vunpack.c.l.b16 %v63
  %v1329 = vunpack.c.h.b16 %v63
  %v1330 = vunpack.c.l.b16 %v64
  %v1331 = vunpack.c.h.b16 %v64
  %v1332 = vunpack.c.l.b16 %v65
  %v1333 = vunpack.c.h.b16 %v65
  %v1334 = vunpack.c.l.b16 %v66
  %v1335 = vunpack.c.h.b16 %v66
  %v1336 = vunpack.c.l.b16 %v67
  %v1337 = vunpack.c.h.b16 %v67
  %v1338 = vunpack.c.l.b16 %v68
  %v1339 = vunpack.c.h.b16 %v68
  %v1340 = vunpack.c.l.b16 %v69
  %v1341 = vunpack.c.h.b16 %v69
  %v1342 = vunpack.c.l.b16 %v70
  %v1343 = vunpack.c.h.b16 %v70
  %v1344 = vunpack.c.l.b16 %v71
  %v1345 = vunpack.c.h.b16 %v71
  %v1346 = vunpack.c.l.b16 %v72
  %v1347 = vunpack.c.h.b16 %v72
  %v1348 = vunpack.c.l.b16 %v73
  %v1349 = vunpack.c.h.b16 %v73
  %v1350 = vunpack.c.l.b16 %v74
  %v1351 = vunpack.c.h.b16 %v74
  %v1352 = vunpack.c.l.b16 %v75
  %v1353 = vunpack.c.h.b16 %v75
  %v1354 = vunpack.c.l.b16 %v76
  %v1355 = vunpack.c.h.b16 %v76
  %v1356 = vunpack.c.l.b16 %v77
  %v1357 = vunpack.c.h.b16 %v77
  %v1358 = vunpack.c.l.b16 %v78
  %v1359 = vunpack.c.h.b16 %v78
  %v1360 = vunpack.c.l.b16 %v79
  %v1361 = vunpack.c.h.b16 %v79
  %v1362 = vunpack.c.l.b16 %v80
  %v1363 = vunpack.c.h.b16 %v80
  %v1364 = vunpack.c.l.b16 %v81
  %v1365 = vunpack.c.h.b16 %v81
  %v1366 = vunpack.c.l.b16 %v82
  %v1367 = vunpack.c.h.b16 %v82
  %v1368 = vunpack.c.l.b16 %v83
  %v1369 = vunpack.c.h.b16 %v83
  %v1370 = vunpack.c.l.b16 %v84
  %v1371 = vunpack.c.h.b16 %v84
  %v1372 = vunpack.c.l.b16 %v85
  %v1373 = vunpack.c.h.b16 %v85
  %v1374 = vunpack.c.l.b16 %v86
  %v1375 = vunpack.c.h.b16 %v86
  %v1376 = vunpack.c.l.b16 %v87
  %v1377 = vunpack.c.h.b16 %v87
  %v1378 = vunpack.c.l.b16 %v88
  %v1379 = vunpack.c.h.b16 %v88
  %v1380 = vunpack.c.l.b16 %v89
  %v1381 = vunpack.c.h.b16 %v89
  %v1382 = vunpack.c.l.b16 %v90
  %v1383 = vunpack.c.h.b16 %v90
  %v1384 = vunpack.c.l.b16 %v91
  %v1385 = vunpack.c.h.b16 %v91
  %v1386 = vunpack.c.l.b16 %v92
  %v1387 = vunpack.c.h.b16 %v92
  %v1388 = vunpack.c.l.b16 %v93
  %v1389 = vunpack.c.h.b16 %v93
  %v1390 = vunpack.c.l.b16 %v94
  %v1391 = vunpack.c.h.b16 %v94
  %v1392 = vunpack.c.l.b16 %v95
  %v1393 = vunpack.c.h.b16 %v95
  %v1394 = vunpack.c.l.b16 %v96
  %v1395 = vunpack.c.h.b16 %v96
  %v1396 = vunpack.c.l.b16 %v97
  %v1397 = vunpack.c.h.b16 %v97
  %v1398 = vunpack.c.l.b16 %v98
  %v1399 = vunpack.c.h.b16 %v98
  %v1400 = vunpack.c.l.b16 %v99
  %v1401 = vunpack.c.h.b16 %v99
  %v1402 = vunpack.c.l.b16 %v100
  %v1403 = vunpack.c.h.b16 %v100
  %v1404 = vunpack.c.l.b16 %v101
  %v1405 = vunpack.c.h.b16 %v101
  %v1406 = vunpack.c.l.b16 %v102
  %v1407 = vunpack.c.h.b16 %v102
  %v1408 = vunpack.c.l.b16 %v103
  %v1409 = vunpack.c.h.b16 %v103
  %v1410 = vunpack.c.l.b16 %v104
  %v1411 = vunpack.c.h.b16 %v104
  %v1412 = vunpack.c.l.b16 %v105
  %v1413 = vunpack.c.h.b16 %v105
  %v1414 = vunpack.c.l.b16 %v106
  %v1415 = vunpack.c.h.b16 %v106
  %v1416 = vunpack.c.l.b16 %v107
  %v1417 = vunpack.c.h.b16 %v107
  %v1418 = vunpack.c.l.b16 %v108
  %v1419 = vunpack.c.h.b16 %v108
  %v1420 = vunpack.c.l.b16 %v109
  %v1421 = vunpack.c.h.b16 %v109
  %v1422 = vunpack.c.l.b16 %v110
  %v1423 = vunpack.c.h.b16 %v110
  %v1424 = vunpack.c.l.b16 %v111
  %v1425 = vunpack.c.h.b16 %v111
  %v1426 = vunpack.c.l.b16 %v112
  %v1427 = vunpack.c.h.b16 %v112
  %v1428 = vunpack.c.l.b16 %v113
  %v1429 = vunpack.c.h.b16 %v113
  %v1430 = vunpack.c.l.b16 %v114
  %v1431 = vunpack.c.h.b16 %v114
  %v1432 = vunpack.c.l.b16 %v115
  %v1433 = vunpack.c.h.b16 %v115
  %v1434 = vunpack.c.l.b16 %v116
  %v1435 = vunpack.c.h.b16 %v116
  %v1436 = vunpack.c.l.b16 %v117
  %v1437 = vunpack.c.h.b16 %v117
  %v1438 = vunpack.c.l.b16 %v118
  %v1439 = vunpack.c.h.b16 %v118
  %v1440 = vunpack.c.l.b16 %v119
  %v1441 = vunpack.c.h.b16 %v119
  %v1442 = vunpack.c.l.b16 %v120
  %v1443 = vunpack.c.h.b16 %v120
  %v1444 = vunpack.c.l.b16 %v121
  %v1445 = vunpack.c.h.b16 %v121
  %v1446 = vunpack.c.l.b16 %v122
  %v1447 = vunpack.c.h.b16 %v122
  %v1448 = vunpack.c.l.b16 %v123
  %v1449 = vunpack.c.h.b16 %v123
  %v1450 = vunpack.c.l.b16 %v124
  %v1451 = vunpack.c.h.b16 %v124
  %v1452 = vunpack.c.l.b16 %v125
  %v1453 = vunpack.c.h.b16 %v125
  %v1454 = vunpack.c.l.b16 %v126
  %v1455 = vunpack.c.h.b16 %v126
  %v1456 = vunpack.c.l.b16 %v127
  %v1457 = vunpack.c.h.b16 %v127
  %v1458 = vunpack.c.l.b16 %v128
  %v1459 = vunpack.c.h.b16 %v128
  %v1460 = vunpack.c.l.b16 %v129
  %v1461 = vunpack.c.h.b16 %v129
  %v1462 = vunpack.c.l.b16 %v130
  %v1463 = vunpack.c.h.b16 %v130
  %v1464 = vunpack.c.l.b16 %v131
  %v1465 = vunpack.c.h.b16 %v131
  %v1466 = vunpack.c.l.b16 %v132
  %v1467 = vunpack.c.h.b16 %v132
  %v1468 = vunpack.c.l.b16 %v133
  %v1469 = vunpack.c.h.b16 %v133
  %v1470 = vunpack.c.l.b16 %v134
  %v1471 = vunpack.c.h.b16 %v134
  %v1472 = vunpack.c.l.b16 %v135
  %v1473 = vunpack.c.h.b16 %v135
  %v1474 = vunpack.c.l.b16 %v136
  %v1475 = vunpack.c.h.b16 %v136
  %v1476 = vunpack.c.l.b16 %v137
  %v1477 = vunpack.c.h.b16 %v137
  %v1478 = vunpack.c.l.b16 %v138
  %v1479 = vunpack.c.h.b16 %v138
  %v1480 = vunpack.c.l.b16 %v139
  %v1481 = vunpack.c.h.b16 %v139
  %v1482 = vunpack.c.l.b16 %v140
  %v1483 = vunpack.c.h.b16 %v140
  %v1484 = vunpack.c.l.b16 %v141
  %v1485 = vunpack.c.h.b16 %v141
  %v1486 = vunpack.c.l.b16 %v142
  %v1487 = vunpack.c.h.b16 %v142
  %v1488 = vunpack.c.l.b16 %v143
  %v1489 = vunpack.c.h.b16 %v143
  %v1490 = vunpack.c.l.b16 %v144
  %v1491 = vunpack.c.h.b16 %v144
  %v1492 = vunpack.c.l.b16 %v145
  %v1493 = vunpack.c.h.b16 %v145
  %v1494 = vunpack.c.l.b16 %v146
  %v1495 = vunpack.c.h.b16 %v146
  %v1496 = vunpack.c.l.b16 %v147
  %v1497 = vunpack.c.h.b16 %v147
  %v1498 = vunpack.c.l.b16 %v148
  %v1499 = vunpack.c.h.b16 %v148
  %v1500 = vunpack.c.l.b16 %v149
  %v1501 = vunpack.c.h.b16 %v149
  %v1502 = vunpack.c.l.b16 %v150
  %v1503 = vunpack.c.h.b16 %v150
  %v1504 = vunpack.c.l.b16 %v151
  %v1505 = vunpack.c.h.b16 %v151
  %v1506 = vunpack.c.l.b16 %v152
  %v1507 = vunpack.c.h.b16 %v152
  %v1508 = vunpack.c.l.b16 %v153
  %v1509 = vunpack.c.h.b16 %v153
  %v1510 = vunpack.c.l.b16 %v154
  %v1511 = vunpack.c.h.b16 %v154
  %v1512 = vunpack.c.l.b16 %v155
  %v1513 = vunpack.c.h.b16 %v155
  %v1514 = vunpack.c.l.b16 %v156
  %v1515 = vunpack.c.h.b16 %v156
  %v1516 = vunpack.c.l.b16 %v157
  %v1517 = vunpack.c.h.b16 %v157
  %v1518 = vunpack.c.l.b16 %v158
  %v1519 = vunpack.c.h.b16 %v158
  %v1520 = vunpack.c.l.b16 %v159
  %v1521 = vunpack.c.h.b16 %v159
  %v1522 = vunpack.c.l.b16 %v160
  %v1523 = vunpack.c.h.b16 %v160
  %v1524 = vunpack.c.l.b16 %v161
  %v1525 = vunpack.c.h.b16 %v161
  %v1526 = vunpack.c.l.b16 %v162
  %v1527 = vunpack.c.h.b16 %v162
  %v1528 = vunpack.c.l.b16 %v163
  %v1529 = vunpack.c.h.b16 %v163
  %v1530 = vunpack.c.l.b16 %v164
  %v1531 = vunpack.c.h.b16 %v164
  %v1532 = vunpack.c.l.b16 %v165
  %v1533 = vunpack.c.h.b16 %v165
  %v1534 = vunpack.c.l.b16 %v166
  %v1535 = vunpack.c.h.b16 %v166
  %v1536 = vunpack.c.l.b16 %v167
  %v1537 = vunpack.c.h.b16 %v167
  %v1538 = vunpack.c.l.b16 %v168
  %v1539 = vunpack.c.h.b16 %v168
  %v1540 = vunpack.c.l.b16 %v169
  %v1541 = vunpack.c.h.b16 %v169
  %v1542 = vunpack.c.l.b16 %v170
  %v1543 = vunpack.c.h.b16 %v170
  %v1544 = vunpack.c.l.b16 %v171
  %v1545 = vunpack.c.h.b16 %v171
  %v1546 = vunpack.c.l.b16 %v172
  %v1547 = vunpack.c.h.b16 %v172
  %v1548 = vunpack.c.l.b16 %v173
  %v1549 = vunpack.c.h.b16 %v173
  %v1550 = vunpack.c.l.b16 %v174
  %v1551 = vunpack.c.h.b16 %v174
  %v1552 = vunpack.c.l.b16 %v175
  %v1553 = vunpack.c.h.b16 %v175
  %v1554 = vunpack.c.l.b16 %v176
  %v1555 = vunpack.c.h.b16 %v176
  %v1556 = vunpack.c.l.b16 %v177
  %v1557 = vunpack.c.h.b16 %v177
  %v1558 = vunpack.c.l.b16 %v178
  %v1559 = vunpack.c.h.b16 %v178
  %v1560 = vunpack.c.l.b16 %v179
  %v1561 = vunpack.c.h.b16 %v179
  %v1562 = vunpack.c.l.b16 %v180
  %v1563 = vunpack.c.h.b16 %v180
  %v1564 = vunpack.c.l.b16 %v181
  %v1565 = vunpack.c.h.b16 %v181
  %v1566 = vunpack.c.l.b16 %v182
  %v1567 = vunpack.c.h.b16 %v182
  %v1568 = vunpack.c.l.b16 %v183
  %v1569 = vunpack.c.h.b16 %v183
  %v1570 = vunpack.c.l.b16 %v184
  %v1571 = vunpack.c.h.b16 %v184
  %v1572 = vunpack.c.l.b16 %v185
  %v1573 = vunpack.c.h.b16 %v185
  %v1574 = vunpack.c.l.b16 %v186
  %v1575 = vunpack.c.h.b16 %v186
  %v1576 = vunpack.c.l.b16 %v187
  %v1577 = vunpack.c.h.b16 %v187
  %v1578 = vunpack.c.l.b16 %v188
  %v1579 = vunpack.c.h.b16 %v188
  %v1580 = vunpack.c.l.b16 %v189
  %v1581 = vunpack.c.h.b16 %v189
  %v1582 = vunpack.c.l.b16 %v190
  %v1583 = vunpack.c.h.b16 %v190
  %v1584 = vunpack.c.l.b16 %v191
  %v1585 = vunpack.c.h.b16 %v191
  %v1586 = vunpack.c.l.b16 %v192
  %v1587 = vunpack.c.h.b16 %v192
  %v1588 = vunpack.c.l.b16 %v193
  %v1589 = vunpack.c.h.b16 %v193
  %v1590 = vunpack.c.l.b16 %v194
  %v1591 = vunpack.c.h.b16 %v194
  %v1592 = vunpack.c.l.b16 %v195
  %v1593 = vunpack.c.h.b16 %v195
  %v1594 = vunpack.c.l.b16 %v196
  %v1595 = vunpack.c.h.b16 %v196
  %v1596 = vunpack.c.l.b16 %v197
  %v1597 = vunpack.c.h.b16 %v197
  %v1598 = vunpack.c.l.b16 %v198
  %v1599 = vunpack.c.h.b16 %v198
  %v1600 = vunpack.c.l.b16 %v199
  %v1601 = vunpack.c.h.b16 %v199
  %v1602 = vunpack.c.l.b16 %v200
  %v1603 = vunpack.c.h.b16 %v200
  %v1604 = vunpack.c.l.b16 %v201
  %v1605 = vunpack.c.h.b16 %v201
  %v1606 = vunpack.c.l.b16 %v202
  %v1607 = vunpack.c.h.b16 %v202
  %v1608 = vunpack.c.l.b16 %v203
  %v1609 = vunpack.c.h.b16 %v203
  %v1610 = vunpack.c.l.b16 %v204
  %v1611 = vunpack.c.h.b16 %v204
  %v1612 = vunpack.c.l.b16 %v205
  %v1613 = vunpack.c.h.b16 %v205
  %v1614 = vunpack.c.l.b16 %v206
  %v1615 = vunpack.c.h.b16 %v206
  %v1616 = vunpack.c.l.b16 %v207
  %v1617 = vunpack.c.h.b16 %v207
  %v1618 = vunpack.c.l.b16 %v208
  %v1619 = vunpack.c.h.b16 %v208
  %v1620 = vunpack.c.l.b16 %v209
  %v1621 = vunpack.c.h.b16 %v209
  %v1622 = vunpack.c.l.b16 %v210
  %v1623 = vunpack.c.h.b16 %v210
  %v1624 = vunpack.c.l.b16 %v211
  %v1625 = vunpack.c.h.b16 %v211
  %v1626 = vunpack.c.l.b16 %v212
  %v1627 = vunpack.c.h.b16 %v212
  %v1628 = vunpack.c.l.b16 %v213
  %v1629 = vunpack.c.h.b16 %v213
  %v1630 = vunpack.c.l.b16 %v214
  %v1631 = vunpack.c.h.b16 %v214
  %v1632 = vunpack.c.l.b16 %v215
  %v1633 = vunpack.c.h.b16 %v215
  %v1634 = vunpack.c.l.b16 %v216
  %v1635 = vunpack.c.h.b16 %v216
  %v1636 = vunpack.c.l.b16 %v217
  %v1637 = vunpack.c.h.b16 %v217
  %v1638 = vunpack.c.l.b16 %v218
  %v1639 = vunpack.c.h.b16 %v218
  %v1640 = vunpack.c.l.b16 %v219
  %v1641 = vunpack.c.h.b16 %v219
  %v1642 = vunpack.c.l.b16 %v220
  %v1643 = vunpack.c.h.b16 %v220
  %v1644 = vunpack.c.l.b16 %v221
  %v1645 = vunpack.c.h.b16 %v221
  %v1646 = vunpack.c.l.b16 %v222
  %v1647 = vunpack.c.h.b16 %v222
  %v1648 = vunpack.c.l.b16 %v223
  %v1649 = vunpack.c.h.b16 %v223
  %v1650 = vunpack.c.l.b16 %v224
  %v1651 = vunpack.c.h.b16 %v224
  %v1652 = vunpack.c.l.b16 %v225
  %v1653 = vunpack.c.h.b16 %v225
  %v1654 = vunpack.c.l.b16 %v226
  %v1655 = vunpack.c.h.b16 %v226
  %v1656 = vunpack.c.l.b16 %v227
  %v1657 = vunpack.c.h.b16 %v227
  %v1658 = vunpack.c.l.b16 %v228
  %v1659 = vunpack.c.h.b16 %v228
  %v1660 = vunpack.c.l.b16 %v229
  %v1661 = vunpack.c.h.b16 %v229
  %v1662 = vunpack.c.l.b16 %v230
  %v1663 = vunpack.c.h.b16 %v230
  %v1664 = vunpack.c.l.b16 %v231
  %v1665 = vunpack.c.h.b16 %v231
  %v1666 = vunpack.c.l.b16 %v232
  %v1667 = vunpack.c.h.b16 %v232
  %v1668 = vunpack.c.l.b16 %v233
  %v1669 = vunpack.c.h.b16 %v233
  %v1670 = vunpack.c.l.b16 %v234
  %v1671 = vunpack.c.h.b16 %v234
  %v1672 = vunpack.c.l.b16 %v235
  %v1673 = vunpack.c.h.b16 %v235
  %v1674 = vunpack.c.l.b16 %v236
  %v1675 = vunpack.c.h.b16 %v236
  %v1676 = vunpack.c.l.b16 %v237
  %v1677 = vunpack.c.h.b16 %v237
  %v1678 = vunpack.c.l.b16 %v238
  %v1679 = vunpack.c.h.b16 %v238
  %v1680 = vunpack.c.l.b16 %v239
  %v1681 = vunpack.c.h.b16 %v239
  %v1682 = vunpack.c.l.b16 %v240
  %v1683 = vunpack.c.h.b16 %v240
  %v1684 = vunpack.c.l.b16 %v241
  %v1685 = vunpack.c.h.b16 %v241
  %v1686 = vunpack.c.l.b16 %v242
  %v1687 = vunpack.c.h.b16 %v242
  %v1688 = vunpack.c.l.b16 %v243
  %v1689 = vunpack.c.h.b16 %v243
  %v1690 = vunpack.c.l.b16 %v244
  %v1691 = vunpack.c.h.b16 %v244
  %v1692 = vunpack.c.l.b16 %v245
  %v1693 = vunpack.c.h.b16 %v245
  %v1694 = vunpack.c.l.b16 %v246
  %v1695 = vunpack.c.h.b16 %v246
  %v1696 = vunpack.c.l.b16 %v247
  %v1697 = vunpack.c.h.b16 %v247
  %v1698 = vunpack.c.l.b16 %v248
  %v1699 = vunpack.c.h.b16 %v248
  %v1700 = vunpack.c.l.b16 %v249
  %v1701 = vunpack.c.h.b16 %v249
  %v1702 = vunpack.c.l.b16 %v250
  %v1703 = vunpack.c.h.b16 %v250
  %v1704 = vunpack.c.l.b16 %v251
  %v1705 = vunpack.c.h.b16 %v251
  %v1706 = vunpack.c.l.b16 %v252
  %v1707 = vunpack.c.h.b16 %v252
  %v1708 = vunpack.c.l.b16 %v253
  %v1709 = vunpack.c.h.b16 %v253
  %v1710 = vunpack.c.l.b16 %v254
  %v1711 = vunpack.c.h.b16 %v254
  %v1712 = vunpack.c.l.b16 %v255
  %v1713 = vunpack.c.h.b16 %v255
  %v1714 = vunpack.c.l.b16 %v256
  %v1715 = vunpack.c.h.b16 %v256
  %v1716 = vunpack.c.l.b16 %v257
  %v1717 = vunpack.c.h.b16 %v257
  %v1718 = vunpack.c.l.b16 %v258
  %v1719 = vunpack.c.h.b16 %v258
  %v1720 = vunpack.c.l.b16 %v259
  %v1721 = vunpack.c.h.b16 %v259
  %v1722 = vunpack.c.l.b16 %v260
  %v1723 = vunpack.c.h.b16 %v260
  %v1724 = vunpack.c.l.b16 %v261
  %v1725 = vunpack.c.h.b16 %v261
  %v1726 = vunpack.c.l.b16 %v262
  %v1727 = vunpack.c.h.b16 %v262
  %v1728 = vunpack.c.l.b16 %v263
  %v1729 = vunpack.c.h.b16 %v263
  %v1730 = vunpack.c.l.b16 %v264
  %v1731 = vunpack.c.h.b16 %v264
  %v1732 = vunpack.c.l.b16 %v265
  %v1733 = vunpack.c.h.b16 %v265
  %v1734 = vunpack.c.l.b16 %v266
  %v1735 = vunpack.c.h.b16 %v266
  %v1736 = vunpack.c.l.b16 %v267
  %v1737 = vunpack.c.h.b16 %v267
  %v1738 = vunpack.c.l.b16 %v268
  %v1739 = vunpack.c.h.b16 %v268
  %v1740 = vunpack.c.l.b16 %v269
  %v1741 = vunpack.c.h.b16 %v269
  %v1742 = vunpack.c.l.b16 %v270
  %v1743 = vunpack.c.h.b16 %v270
  %v1744 = vunpack.c.l.b16 %v271
  %v1745 = vunpack.c.h.b16 %v271
  %v1746 = vunpack.c.l.b16 %v272
  %v1747 = vunpack.c.h.b16 %v272
  %v1748 = vunpack.c.l.b16 %v273
  %v1749 = vunpack.c.h.b16 %v273
  %v1750 = vunpack.c.l.b16 %v274
  %v1751 = vunpack.c.h.b16 %v274
  %v1752 = vunpack.c.l.b16 %v275
  %v1753 = vunpack.c.h.b16 %v275
  %v1754 = vunpack.c.l.b16 %v276
  %v1755 = vunpack.c.h.b16 %v276
  %v1756 = vunpack.c.l.b16 %v277
  %v1757 = vunpack.c.h.b16 %v277
  %v1758 = vunpack.c.l.b16 %v278
  %v1759 = vunpack.c.h.b16 %v278
  %v1760 = vunpack.c.l.b16 %v279
  %v1761 = vunpack.c.h.b16 %v279
  %v1762 = vunpack.c.l.b16 %v280
  %v1763 = vunpack.c.h.b16 %v280
  %v1764 = vunpack.c.l.b16 %v281
  %v1765 = vunpack.c.h.b16 %v281
  %v1766 = vunpack.c.l.b16 %v282
  %v1767 = vunpack.c.h.b16 %v282
  %v1768 = vunpack.c.l.b16 %v283
  %v1769 = vunpack.c.h.b16 %v283
  %v1770 = vunpack.c.l.b16 %v284
  %v1771 = vunpack.c.h.b16 %v284
  %v1772 = vunpack.c.l.b16 %v285
  %v1773 = vunpack.c.h.b16 %v285
  %v1774 = vunpack.c.l.b16 %v286
  %v1775 = vunpack.c.h.b16 %v286
  %v1776 = vunpack.c.l.b16 %v287
  %v1777 = vunpack.c.h.b16 %v287
  %v1778 = vunpack.c.l.b16 %v288
  %v1779 = vunpack.c.h.b16 %v288
  %v1780 = vunpack.c.l.b16 %v289
  %v1781 = vunpack.c.h.b16 %v289
  %v1782 = vunpack.c.l.b16 %v290
  %v1783 = vunpack.c.h.b16 %v290
  %v1784 = vunpack.c.l.b16 %v291
  %v1785 = vunpack.c.h.b16 %v291
  %v1786 = vunpack.c.l.b16 %v292
  %v1787 = vunpack.c.h.b16 %v292
  %v1788 = vunpack.c.l.b16 %v293
  %v1789 = vunpack.c.h.b16 %v293
  %v1790 = vunpack.c.l.b16 %v294
  %v1791 = vunpack.c.h.b16 %v294
  %v1792 = vunpack.c.l.b16 %v295
  %v1793 = vunpack.c.h.b16 %v295
  %v1794 = vunpack.c.l.b16 %v296
  %v1795 = vunpack.c.h.b16 %v296
  %v1796 = vunpack.c.l.b16 %v297
  %v1797 = vunpack.c.h.b16 %v297
  %v1798 = vunpack.c.l.b16 %v298
  %v1799 = vunpack.c.h.b16 %v298
  %v1800 = vunpack.c.l.b16 %v299
  %v1801 = vunpack.c.h.b16 %v299
  %v1802 = vunpack.c.l.b16 %v300
  %v1803 = vunpack.c.h.b16 %v300
  %v1804 = vunpack.c.l.b16 %v301
  %v1805 = vunpack.c.h.b16 %v301
  %v1806 = vunpack.c.l.b16 %v302
  %v1807 = vunpack.c.h.b16 %v302
  %v1808 = vunpack.c.l.b16 %v303
  %v1809 = vunpack.c.h.b16 %v303
  %v1810 = vunpack.c.l.b16 %v304
  %v1811 = vunpack.c.h.b16 %v304
  %v1812 = vunpack.c.l.b16 %v305
  %v1813 = vunpack.c.h.b16 %v305
  %v1814 = vunpack.c.l.b16 %v306
  %v1815 = vunpack.c.h.b16 %v306
  %v1816 = vunpack.c.l.b16 %v307
  %v1817 = vunpack.c.h.b16 %v307
  %v1818 = vunpack.c.l.b16 %v308
  %v1819 = vunpack.c.h.b16 %v308
  %v1820 = vunpack.c.l.b16 %v309
  %v1821 = vunpack.c.h.b16 %v309
  %v1822 = vunpack.c.l.b16 %v310
  %v1823 = vunpack.c.h.b16 %v310
  %v1824 = vunpack.c.l.b16 %v311
  %v1825 = vunpack.c.h.b16 %v311
  %v1826 = vunpack.c.l.b16 %v312
  %v1827 = vunpack.c.h.b16 %v312
  %v1828 = vunpack.c.l.b16 %v313
  %v1829 = vunpack.c.h.b16 %v313
  %v1830 = vunpack.c.l.b16 %v314
  %v1831 = vunpack.c.h.b16 %v314
  %v1832 = vunpack.c.l.b16 %v315
  %v1833 = vunpack.c.h.b16 %v315
  %v1834 = vunpack.c.l.b16 %v316
  %v1835 = vunpack.c.h.b16 %v316
  %v1836 = vunpack.c.l.b16 %v317
  %v1837 = vunpack.c.h.b16 %v317
  %v1838 = vunpack.c.l.b16 %v318
  %v1839 = vunpack.c.h.b16 %v318
  %v1840 = vunpack.c.l.b16 %v319
  %v1841 = vunpack.c.h.b16 %v319
  %v1842 = vunpack.c.l.b16 %v320
  %v1843 = vunpack.c.h.b16 %v320
  %v1844 = vunpack.c.l.b16 %v321
  %v1845 = vunpack.c.h.b16 %v321
  %v1846 = vunpack.c.l.b16 %v322
  %v1847 = vunpack.c.h.b16 %v322
  %v1848 = vunpack.c.l.b16 %v323
  %v1849 = vunpack.c.h.b16 %v323
  %v1850 = vunpack.c.l.b16 %v324
  %v1851 = vunpack.c.h.b16 %v324
  %v1852 = vunpack.c.l.b16 %v325
  %v1853 = vunpack.c.h.b16 %v325
  %v1854 = vunpack.c.l.b16 %v326
  %v1855 = vunpack.c.h.b16 %v326
  %v1856 = vunpack.c.l.b16 %v327
  %v1857 = vunpack.c.h.b16 %v327
  %v1858 = vunpack.c.l.b16 %v328
  %v1859 = vunpack.c.h.b16 %v328
  %v1860 = vunpack.c.l.b16 %v329
  %v1861 = vunpack.c.h.b16 %v329
  %v1862 = vunpack.c.l.b16 %v330
  %v1863 = vunpack.c.h.b16 %v330
  %v1864 = vunpack.c.l.b16 %v331
  %v1865 = vunpack.c.h.b16 %v331
  %v1866 = vunpack.c.l.b16 %v332
  %v1867 = vunpack.c.h.b16 %v332
  %v1868 = vunpack.c.l.b16 %v333
  %v1869 = vunpack.c.h.b16 %v333
  %v1870 = vunpack.c.l.b16 %v334
  %v1871 = vunpack.c.h.b16 %v334
  %v1872 = vunpack.c.l.b16 %v335
  %v1873 = vunpack.c.h.b16 %v335
  %v1874 = vunpack.c.l.b16 %v336
  %v1875 = vunpack.c.h.b16 %v336
  %v1876 = vunpack.c.l.b16 %v337
  %v1877 = vunpack.c.h.b16 %v337
  %v1878 = vunpack.c.l.b16 %v338
  %v1879 = vunpack.c.h.b16 %v338
  %v1880 = vunpack.c.l.b16 %v339
  %v1881 = vunpack.c.h.b16 %v339
  %v1882 = vunpack.c.l.b16 %v340
  %v1883 = vunpack.c.h.b16 %v340
  %v1884 = vunpack.c.l.b16 %v341
  %v1885 = vunpack.c.h.b16 %v341
  %v1886 = vunpack.c.l.b16 %v342
  %v1887 = vunpack.c.h.b16 %v342
  %v1888 = vunpack.c.l.b16 %v343
  %v1889 = vunpack.c.h.b16 %v343
  %v1890 = vunpack.c.l.b16 %v344
  %v1891 = vunpack.c.h.b16 %v344
  %v1892 = vunpack.c.l.b16 %v345
  %v1893 = vunpack.c.h.b16 %v345
  %v1894 = vunpack.c.l.b16 %v346
  %v1895 = vunpack.c.h.b16 %v346
  %v1896 = vunpack.c.l.b16 %v347
  %v1897 = vunpack.c.h.b16 %v347
  %v1898 = vunpack.c.l.b16 %v348
  %v1899 = vunpack.c.h.b16 %v348
  %v1900 = vunpack.c.l.b16 %v349
  %v1901 = vunpack.c.h.b16 %v349
  %v1902 = vunpack.c.l.b16 %v350
  %v1903 = vunpack.c.h.b16 %v350
  %v1904 = vunpack.c.l.b16 %v351
  %v1905 = vunpack.c.h.b16 %v351
  %v1906 = vunpack.c.l.b16 %v352
  %v1907 = vunpack.c.h.b16 %v352
  %v1908 = vunpack.c.l.b16 %v353
  %v1909 = vunpack.c.h.b16 %v353
  %v1910 = vunpack.c.l.b16 %v354
  %v1911 = vunpack.c.h.b16 %v354
  %v1912 = vunpack.c.l.b16 %v355
  %v1913 = vunpack.c.h.b16 %v355
  %v1914 = vunpack.c.l.b16 %v356
  %v1915 = vunpack.c.h.b16 %v356
  %v1916 = vunpack.c.l.b16 %v357
  %v1917 = vunpack.c.h.b16 %v357
  %v1918 = vunpack.c.l.b16 %v358
  %v1919 = vunpack.c.h.b16 %v358
  %v1920 = vunpack.c.l.b16 %v359
  %v1921 = vunpack.c.h.b16 %v359
  %v1922 = vunpack.c.l.b16 %v360
  %v1923 = vunpack.c.h.b16 %v360
  %v1924 = vunpack.c.l.b16 %v361
  %v1925 = vunpack.c.h.b16 %v361
  %v1926 = vunpack.c.l.b16 %v362
  %v1927 = vunpack.c.h.b16 %v362
  %v1928 = vunpack.c.l.b16 %v363
  %v1929 = vunpack.c.h.b16 %v363
  %v1930 = vunpack.c.l.b16 %v364
  %v1931 = vunpack.c.h.b16 %v364
  %v1932 = vunpack.c.l.b16 %v365
  %v1933 = vunpack.c.h.b16 %v365
  %v1934 = vunpack.c.l.b16 %v366
  %v1935 = vunpack.c.h.b16 %v366
  %v1936 = vunpack.c.l.b16 %v367
  %v1937 = vunpack.c.h.b16 %v367
  %v1938 = vunpack.c.l.b16 %v368
  %v1939 = vunpack.c.h.b16 %v368
  %v1940 = vunpack.c.l.b16 %v369
  %v1941 = vunpack.c.h.b16 %v369
  %v1942 = vunpack.c.l.b16 %v370
  %v1943 = vunpack.c.h.b16 %v370
  %v1944 = vunpack.c.l.b16 %v371
  %v1945 = vunpack.c.h.b16 %v371
  %v1946 = vunpack.c.l.b16 %v372
  %v1947 = vunpack.c.h.b16 %v372
  %v1948 = vunpack.c.l.b16 %v373
  %v1949 = vunpack.c.h.b16 %v373
  %v1950 = vunpack.c.l.b16 %v374
  %v1951 = vunpack.c.h.b16 %v374
  %v1952 = vunpack.c.l.b16 %v375
  %v1953 = vunpack.c.h.b16 %v375
  %v1954 = vunpack.c.l.b16 %v376
  %v1955 = vunpack.c.h.b16 %v376
  %v1956 = vunpack.c.l.b16 %v377
  %v1957 = vunpack.c.h.b16 %v377
  %v1958 = vunpack.c.l.b16 %v378
  %v1959 = vunpack.c.h.b16 %v378
  %v1960 = vunpack.c.l.b16 %v379
  %v1961 = vunpack.c.h.b16 %v379
  %v1962 = vunpack.c.l.b16 %v380
  %v1963 = vunpack.c.h.b16 %v380
  %v1964 = vunpack.c.l.b16 %v381
  %v1965 = vunpack.c.h.b16 %v381
  %v1966 = vunpack.c.l.b16 %v382
  %v1967 = vunpack.c.h.b16 %v382
  %v1968 = vunpack.c.l.b16 %v383
  %v1969 = vunpack.c.h.b16 %v383
  %v1970 = vunpack.c.l.b16 %v384
  %v1971 = vunpack.c.h.b16 %v384
  %v1972 = vunpack.c.l.b16 %v385
  %v1973 = vunpack.c.h.b16 %v385
  %v1974 = vunpack.c.l.b16 %v386
  %v1975 = vunpack.c.h.b16 %v386
  %v1976 = vunpack.c.l.b16 %v387
  %v1977 = vunpack.c.h.b16 %v387
  %v1978 = vunpack.c.l.b16 %v388
  %v1979 = vunpack.c.h.b16 %v388
  %v1980 = vunpack.c.l.b16 %v389
  %v1981 = vunpack.c.h.b16 %v389
  %v1982 = vunpack.c.l.b16 %v390
  %v1983 = vunpack.c.h.b16 %v390
  %v1984 = vunpack.c.l.b16 %v391
  %v1985 = vunpack.c.h.b16 %v391
  %v1986 = vunpack.c.l.b16 %v392
  %v1987 = vunpack.c.h.b16 %v392
  %v1988 = vunpack.c.l.b16 %v393
  %v1989 = vunpack.c.h.b16 %v393
  %v1990 = vunpack.c.l.b16 %v394
  %v1991 = vunpack.c.h.b16 %v394
  %v1992 = vunpack.c.l.b16 %v395
  %v1993 = vunpack.c.h.b16 %v395
  %v1994 = vunpack.c.l.b16 %v396
  %v1995 = vunpack.c.h.b16 %v396
  %v1996 = vunpack.c.l.b16 %v397
  %v1997 = vunpack.c.h.b16 %v397
  %v1998 = vunpack.c.l.b16 %v398
  %v1999 = vunpack.c.h.b16 %v398
  %v2000 = vunpack.c.l.b16 %v399
  %v2001 = vunpack.c.h.b16 %v399
  %v2002 = vunpack.c.l.b16 %v400
  %v2003 = vunpack.c.h.b16 %v400
  %v2004 = vunpack.c.l.b16 %v401
  %v2005 = vunpack.c.h.b16 %v401
  %v2006 = vunpack.c.l.b16 %v402
  %v2007 = vunpack.c.h.b16 %v402
  %v2008 = vunpack.c.l.b16 %v403
  %v2009 = vunpack.c.h.b16 %v403
  %v2010 = vunpack.c.l.b16 %v404
  %v2011 = vunpack.c.h.b16 %v404
  %v2012 = vunpack.c.l.b16 %v405
  %v2013 = vunpack.c.h.b16 %v405
  %v2014 = vunpack.c.l.b16 %v406
  %v2015 = vunpack.c.h.b16 %v406
  %v2016 = vunpack.c.l.b16 %v407
  %v2017 = vunpack.c.h.b16 %v407
  %v2018 = vunpack.c.l.b16 %v408
  %v2019 = vunpack.c.h.b16 %v408
  %v2020 = vunpack.c.l.b16 %v409
  %v2021 = vunpack.c.h.b16 %v409
  %v2022 = vunpack.c.l.b16 %v410
  %v2023 = vunpack.c.h.b16 %v410
  %v2024 = vunpack.c.l.b16 %v411
  %v2025 = vunpack.c.h.b16 %v411
  %v2026 = vunpack.c.l.b16 %v412
  %v2027 = vunpack.c.h.b16 %v412
  %v2028 = vunpack.c.l.b16 %v413
  %v2029 = vunpack.c.h.b16 %v413
  %v2030 = vunpack.c.l.b16 %v414
  %v2031 = vunpack.c.h.b16 %v414
  %v2032 = vunpack.c.l.b16 %v415
  %v2033 = vunpack.c.h.b16 %v415
  %v2034 = vunpack.c.l.b16 %v416
  %v2035 = vunpack.c.h.b16 %v416
  %v2036 = vunpack.c.l.b16 %v417
  %v2037 = vunpack.c.h.b16 %v417
  %v2038 = vunpack.c.l.b16 %v418
  %v2039 = vunpack.c.h.b16 %v418
  %v2040 = vunpack.c.l.b16 %v419
  %v2041 = vunpack.c.h.b16 %v419
  %v2042 = vunpack.c.l.b16 %v420
  %v2043 = vunpack.c.h.b16 %v420
  %v2044 = vunpack.c.l.b16 %v421
  %v2045 = vunpack.c.h.b16 %v421
  %v2046 = vunpack.c.l.b16 %v422
  %v2047 = vunpack.c.h.b16 %v422
  %v2048 = vunpack.c.l.b16 %v423
  %v2049 = vunpack.c.h.b16 %v423
  %v2050 = vunpack.c.l.b16 %v424
  %v2051 = vunpack.c.h.b16 %v424
  %v2052 = vunpack.c.l.b16 %v425
  %v2053 = vunpack.c.h.b16 %v425
  %v2054 = vunpack.c.l.b16 %v426
  %v2055 = vunpack.c.h.b16 %v426
  %v2056 = vunpack.c.l.b16 %v427
  %v2057 = vunpack.c.h.b16 %v427
  %v2058 = vunpack.c.l.b16 %v428
  %v2059 = vunpack.c.h.b16 %v428
  %v2060 = vunpack.c.l.b16 %v429
  %v2061 = vunpack.c.h.b16 %v429
  %v2062 = vunpack.c.l.b16 %v430
  %v2063 = vunpack.c.h.b16 %v430
  %v2064 = vunpack.c.l.b16 %v431
  %v2065 = vunpack.c.h.b16 %v431
  %v2066 = vunpack.c.l.b16 %v432
  %v2067 = vunpack.c.h.b16 %v432
  %v2068 = vunpack.c.l.b16 %v433
  %v2069 = vunpack.c.h.b16 %v433
  %v2070 = vunpack.c.l.b16 %v434
  %v2071 = vunpack.c.h.b16 %v434
  %v2072 = vunpack.c.l.b16 %v435
  %v2073 = vunpack.c.h.b16 %v435
  %v2074 = vunpack.c.l.b16 %v436
  %v2075 = vunpack.c.h.b16 %v436
  %v2076 = vunpack.c.l.b16 %v437
  %v2077 = vunpack.c.h.b16 %v437
  %v2078 = vunpack.c.l.b16 %v438
  %v2079 = vunpack.c.h.b16 %v438
  %v2080 = vunpack.c.l.b16 %v439
  %v2081 = vunpack.c.h.b16 %v439
  %v2082 = vunpack.c.l.b16 %v440
  %v2083 = vunpack.c.h.b16 %v440
  %v2084 = vunpack.c.l.b16 %v441
  %v2085 = vunpack.c.h.b16 %v441
  %v2086 = vunpack.c.l.b16 %v442
  %v2087 = vunpack.c.h.b16 %v442
  %v2088 = vunpack.c.l.b16 %v443
  %v2089 = vunpack.c.h.b16 %v443
  %v2090 = vunpack.c.l.b16 %v444
  %v2091 = vunpack.c.h.b16 %v444
  %v2092 = vunpack.c.l.b16 %v445
  %v2093 = vunpack.c.h.b16 %v445
  %v2094 = vunpack.c.l.b16 %v446
  %v2095 = vunpack.c.h.b16 %v446
  %v2096 = vunpack.c.l.b16 %v447
  %v2097 = vunpack.c.h.b16 %v447
  %v2098 = vunpack.c.l.b16 %v448
  %v2099 = vunpack.c.h.b16 %v448
  %v2100 = vunpack.c.l.b16 %v449
  %v2101 = vunpack.c.h.b16 %v449
  %v2102 = vunpack.c.l.b16 %v450
  %v2103 = vunpack.c.h.b16 %v450
  %v2104 = vunpack.c.l.b16 %v451
  %v2105 = vunpack.c.h.b16 %v451
  %v2106 = vunpack.c.l.b16 %v452
  %v2107 = vunpack.c.h.b16 %v452
  %v2108 = vunpack.c.l.b16 %v453
  %v2109 = vunpack.c.h.b16 %v453
  %v2110 = vunpack.c.l.b16 %v454
  %v2111 = vunpack.c.h.b16 %v454
  %v2112 = vunpack.c.l.b16 %v455
  %v2113 = vunpack.c.h.b16 %v455
  %v2114 = vunpack.c.l.b16 %v456
  %v2115 = vunpack.c.h.b16 %v456
  %v2116 = vunpack.c.l.b16 %v457
  %v2117 = vunpack.c.h.b16 %v457
  %v2118 = vunpack.c.l.b16 %v458
  %v2119 = vunpack.c.h.b16 %v458
  %v2120 = vunpack.c.l.b16 %v459
  %v2121 = vunpack.c.h.b16 %v459
  %v2122 = vunpack.c.l.b16 %v460
  %v2123 = vunpack.c.h.b16 %v460
  %v2124 = vunpack.c.l.b16 %v461
  %v2125 = vunpack.c.h.b16 %v461
  %v2126 = vunpack.c.l.b16 %v462
  %v2127 = vunpack.c.h.b16 %v462
  %v2128 = vunpack.c.l.b16 %v463
  %v2129 = vunpack.c.h.b16 %v463
  %v2130 = vunpack.c.l.b16 %v464
  %v2131 = vunpack.c.h.b16 %v464
  %v2132 = vunpack.c.l.b16 %v465
  %v2133 = vunpack.c.h.b16 %v465
  %v2134 = vunpack.c.l.b16 %v466
  %v2135 = vunpack.c.h.b16 %v466
  %v2136 = vunpack.c.l.b16 %v467
  %v2137 = vunpack.c.h.b16 %v467
  %v2138 = vunpack.c.l.b16 %v468
  %v2139 = vunpack.c.h.b16 %v468
  %v2140 = vunpack.c.l.b16 %v469
  %v2141 = vunpack.c.h.b16 %v469
  %v2142 = vunpack.c.l.b16 %v470
  %v2143 = vunpack.c.h.b16 %v470
  %v2144 = vunpack.c.l.b16 %v471
  %v2145 = vunpack.c.h.b16 %v471
  %v2146 = vunpack.c.l.b16 %v472
  %v2147 = vunpack.c.h.b16 %v472
  %v2148 = vunpack.c.l.b16 %v473
  %v2149 = vunpack.c.h.b16 %v473
  %v2150 = vunpack.c.l.b16 %v474
  %v2151 = vunpack.c.h.b16 %v474
  %v2152 = vunpack.c.l.b16 %v475
  %v2153 = vunpack.c.h.b16 %v475
  %v2154 = vunpack.c.l.b16 %v476
  %v2155 = vunpack.c.h.b16 %v476
  %v2156 = vunpack.c.l.b16 %v477
  %v2157 = vunpack.c.h.b16 %v477
  %v2158 = vunpack.c.l.b16 %v478
  %v2159 = vunpack.c.h.b16 %v478
  %v2160 = vunpack.c.l.b16 %v479
  %v2161 = vunpack.c.h.b16 %v479
  %v2162 = vunpack.c.l.b16 %v480
  %v2163 = vunpack.c.h.b16 %v480
  %v2164 = vunpack.c.l.b16 %v481
  %v2165 = vunpack.c.h.b16 %v481
  %v2166 = vunpack.c.l.b16 %v482
  %v2167 = vunpack.c.h.b16 %v482
  %v2168 = vunpack.c.l.b16 %v483
  %v2169 = vunpack.c.h.b16 %v483
  %v2170 = vunpack.c.l.b16 %v484
  %v2171 = vunpack.c.h.b16 %v484
  %v2172 = vunpack.c.l.b16 %v485
  %v2173 = vunpack.c.h.b16 %v485
  %v2174 = vunpack.c.l.b16 %v486
  %v2175 = vunpack.c.h.b16 %v486
  %v2176 = vunpack.c.l.b16 %v487
  %v2177 = vunpack.c.h.b16 %v487
  %v2178 = vunpack.c.l.b16 %v488
  %v2179 = vunpack.c.h.b16 %v488
  %v2180 = vunpack.c.l.b16 %v489
  %v2181 = vunpack.c.h.b16 %v489
  %v2182 = vunpack.c.l.b16 %v490
  %v2183 = vunpack.c.h.b16 %v490
  %v2184 = vunpack.c.l.b16 %v491
  %v2185 = vunpack.c.h.b16 %v491
  %v2186 = vunpack.c.l.b16 %v492
  %v2187 = vunpack.c.h.b16 %v492
  %v2188 = vunpack.c.l.b16 %v493
  %v2189 = vunpack.c.h.b16 %v493
  %v2190 = vunpack.c.l.b16 %v494
  %v2191 = vunpack.c.h.b16 %v494
  %v2192 = vunpack.c.l.b16 %v495
  %v2193 = vunpack.c.h.b16 %v495
  %v2194 = vunpack.c.l.b16 %v496
  %v2195 = vunpack.c.h.b16 %v496
  %v2196 = vunpack.c.l.b16 %v497
  %v2197 = vunpack.c.h.b16 %v497
  %v2198 = vunpack.c.l.b16 %v498
  %v2199 = vunpack.c.h.b16 %v498
  %v2200 = vunpack.c.l.b16 %v499
  %v2201 = vunpack.c.h.b16 %v499
  %v2202 = vunpack.c.l.b16 %v500
  %v2203 = vunpack.c.h.b16 %v500
  %v2204 = vunpack.c.l.b16 %v501
  %v2205 = vunpack.c.h.b16 %v501
  %v2206 = vunpack.c.l.b16 %v502
  %v2207 = vunpack.c.h.b16 %v502
  %v2208 = vunpack.c.l.b16 %v503
  %v2209 = vunpack.c.h.b16 %v503
  %v2210 = vunpack.c.l.b16 %v504
  %v2211 = vunpack.c.h.b16 %v504
  %v2212 = vunpack.c.l.b16 %v505
  %v2213 = vunpack.c.h.b16 %v505
  %v2214 = vunpack.c.l.b16 %v506
  %v2215 = vunpack.c.h.b16 %v506
  %v2216 = vunpack.c.l.b16 %v507
  %v2217 = vunpack.c.h.b16 %v507
  %v2218 = vunpack.c.l.b16 %v508
  %v2219 = vunpack.c.h.b16 %v508
  %v2220 = vunpack.c.l.b16 %v509
  %v2221 = vunpack.c.h.b16 %v509
  %v2222 = vunpack.c.l.b16 %v510
  %v2223 = vunpack.c.h.b16 %v510
  %v2224 = vunpack.c.l.b16 %v511
  %v2225 = vunpack.c.h.b16 %v511
  %v2226 = vunpack.c.l.b16 %v512
  %v2227 = vunpack.c.h.b16 %v512
  %v2228 = vunpack.c.l.b16 %v513
  %v2229 = vunpack.c.h.b16 %v513
  %v2230 = vunpack.c.l.b16 %v514
  %v2231 = vunpack.c.h.b16 %v514
  %v2232 = vunpack.c.l.b16 %v515
  %v2233 = vunpack.c.h.b16 %v515
  %v2234 = vunpack.c.l.b16 %v516
  %v2235 = vunpack.c.h.b16 %v516
  %v2236 = vunpack.c.l.b16 %v517
  %v2237 = vunpack.c.h.b16 %v517
  %v2238 = vunpack.c.l.b16 %v518
  %v2239 = vunpack.c.h.b16 %v518
  %v2240 = vunpack.c.l.b16 %v519
  %v2241 = vunpack.c.h.b16 %v519
  %v2242 = vunpack.c.l.b16 %v520
  %v2243 = vunpack.c.h.b16 %v520
  %v2244 = vunpack.c.l.b16 %v521
  %v2245 = vunpack.c.h.b16 %v521
  %v2246 = vunpack.c.l.b16 %v522
  %v2247 = vunpack.c.h.b16 %v522
  %v2248 = vunpack.c.l.b16 %v523
  %v2249 = vunpack.c.h.b16 %v523
  %v2250 = vunpack.c.l.b16 %v524
  %v2251 = vunpack.c.h.b16 %v524
  %v2252 = vunpack.c.l.b16 %v525
  %v2253 = vunpack.c.h.b16 %v525
  %v2254 = vunpack.c.l.b16 %v526
  %v2255 = vunpack.c.h.b16 %v526
  %v2256 = vunpack.c.l.b16 %v527
  %v2257 = vunpack.c.h.b16 %v527
  %v2258 = vunpack.c.l.b16 %v528
  %v2259 = vunpack.c.h.b16 %v528
  %v2260 = vunpack.c.l.b16 %v529
  %v2261 = vunpack.c.h.b16 %v529
  %v2262 = vunpack.c.l.b16 %v530
  %v2263 = vunpack.c.h.b16 %v530
  %v2264 = vunpack.c.l.b16 %v531
  %v2265 = vunpack.c.h.b16 %v531
  %v2266 = vunpack.c.l.b16 %v532
  %v2267 = vunpack.c.h.b16 %v532
  %v2268 = vunpack.c.l.b16 %v533
  %v2269 = vunpack.c.h.b16 %v533
  %v2270 = vunpack.c.l.b16 %v534
  %v2271 = vunpack.c.h.b16 %v534
  %v2272 = vunpack.c.l.b16 %v535
  %v2273 = vunpack.c.h.b16 %v535
  %v2274 = vunpack.c.l.b16 %v536
  %v2275 = vunpack.c.h.b16 %v536
  %v2276 = vunpack.c.l.b16 %v537
  %v2277 = vunpack.c.h.b16 %v537
  %v2278 = vunpack.c.l.b16 %v538
  %v2279 = vunpack.c.h.b16 %v538
  %v2280 = vunpack.c.l.b16 %v539
  %v2281 = vunpack.c.h.b16 %v539
  %v2282 = vunpack.c.l.b16 %v540
  %v2283 = vunpack.c.h.b16 %v540
  %v2284 = vunpack.c.l.b16 %v541
  %v2285 = vunpack.c.h.b16 %v541
  %v2286 = vunpack.c.l.b16 %v542
  %v2287 = vunpack.c.h.b16 %v542
  %v2288 = vunpack.c.l.b16 %v543
  %v2289 = vunpack.c.h.b16 %v543
  %v2290 = vunpack.c.l.b16 %v544
  %v2291 = vunpack.c.h.b16 %v544
  %v2292 = vunpack.c.l.b16 %v545
  %v2293 = vunpack.c.h.b16 %v545
  %v2294 = vunpack.c.l.b16 %v546
  %v2295 = vunpack.c.h.b16 %v546
  %v2296 = vunpack.c.l.b16 %v547
  %v2297 = vunpack.c.h.b16 %v547
  %v2298 = vunpack.c.l.b16 %v548
  %v2299 = vunpack.c.h.b16 %v548
  %v2300 = vunpack.c.l.b16 %v549
  %v2301 = vunpack.c.h.b16 %v549
  %v2302 = vunpack.c.l.b16 %v550
  %v2303 = vunpack.c.h.b16 %v550
  %v2304 = vunpack.c.l.b16 %v551
  %v2305 = vunpack.c.h.b16 %v551
  %v2306 = vunpack.c.l.b16 %v552
  %v2307 = vunpack.c.h.b16 %v552
  %v2308 = vunpack.c.l.b16 %v553
  %v2309 = vunpack.c.h.b16 %v553
  %v2310 = vunpack.c.l.b16 %v554
  %v2311 = vunpack.c.h.b16 %v554
  %v2312 = vunpack.c.l.b16 %v555
  %v2313 = vunpack.c.h.b16 %v555
  %v2314 = vunpack.c.l.b16 %v556
  %v2315 = vunpack.c.h.b16 %v556
  %v2316 = vunpack.c.l.b16 %v557
  %v2317 = vunpack.c.h.b16 %v557
  %v2318 = vunpack.c.l.b16 %v558
  %v2319 = vunpack.c.h.b16 %v558
  %v2320 = vunpack.c.l.b16 %v559
  %v2321 = vunpack.c.h.b16 %v559
  %v2322 = vunpack.c.l.b16 %v560
  %v2323 = vunpack.c.h.b16 %v560
  %v2324 = vunpack.c.l.b16 %v561
  %v2325 = vunpack.c.h.b16 %v561
  %v2326 = vunpack.c.l.b16 %v562
  %v2327 = vunpack.c.h.b16 %v562
  %v2328 = vunpack.c.l.b16 %v563
  %v2329 = vunpack.c.h.b16 %v563
  %v2330 = vunpack.c.l.b16 %v564
  %v2331 = vunpack.c.h.b16 %v564
  %v2332 = vunpack.c.l.b16 %v565
  %v2333 = vunpack.c.h.b16 %v565
  %v2334 = vunpack.c.l.b16 %v566
  %v2335 = vunpack.c.h.b16 %v566
  %v2336 = vunpack.c.l.b16 %v567
  %v2337 = vunpack.c.h.b16 %v567
  %v2338 = vunpack.c.l.b16 %v568
  %v2339 = vunpack.c.h.b16 %v568
  %v2340 = vunpack.c.l.b16 %v569
  %v2341 = vunpack.c.h.b16 %v569
  %v2342 = vunpack.c.l.b16 %v570
  %v2343 = vunpack.c.h.b16 %v570
  %v2344 = vunpack.c.l.b16 %v571
  %v2345 = vunpack.c.h.b16 %v571
  %v2346 = vunpack.c.l.b16 %v572
  %v2347 = vunpack.c.h.b16 %v572
  %v2348 = vunpack.c.l.b16 %v573
  %v2349 = vunpack.c.h.b16 %v573
  %v2350 = vunpack.c.l.b16 %v574
  %v2351 = vunpack.c.h.b16 %v574
  %v2352 = vunpack.c.l.b16 %v575
  %v2353 = vunpack.c.h.b16 %v575
  %v2354 = vunpack.c.l.b16 %v576
  %v2355 = vunpack.c.h.b16 %v576
  %v2356 = vunpack.c.l.b16 %v577
  %v2357 = vunpack.c.h.b16 %v577
  %v2358 = vunpack.c.l.b16 %v578
  %v2359 = vunpack.c.h.b16 %v578
  %v2360 = vunpack.c.l.b16 %v579
  %v2361 = vunpack.c.h.b16 %v579
  %v2362 = vunpack.c.l.b16 %v580
  %v2363 = vunpack.c.h.b16 %v580
  %v2364 = vunpack.c.l.b16 %v581
  %v2365 = vunpack.c.h.b16 %v581
  %v2366 = vunpack.c.l.b16 %v582
  %v2367 = vunpack.c.h.b16 %v582
  %v2368 = vunpack.c.l.b16 %v583
  %v2369 = vunpack.c.h.b16 %v583
  %v2370 = vunpack.c.l.b16 %v584
  %v2371 = vunpack.c.h.b16 %v584
  %v2372 = vunpack.c.l.b16 %v585
  %v2373 = vunpack.c.h.b16 %v585
  %v2374 = vunpack.c.l.b16 %v586
  %v2375 = vunpack.c.h.b16 %v586
  %v2376 = vunpack.c.l.b16 %v587
  %v2377 = vunpack.c.h.b16 %v587
  %v2378 = vunpack.c.l.b16 %v588
  %v2379 = vunpack.c.h.b16 %v588
  %v2380 = vunpack.c.l.b16 %v589
  %v2381 = vunpack.c.h.b16 %v589
  %v2382 = vunpack.c.l.b16 %v590
  %v2383 = vunpack.c.h.b16 %v590
  %v2384 = vunpack.c.l.b16 %v591
  %v2385 = vunpack.c.h.b16 %v591
  %v2386 = vunpack.c.l.b16 %v592
  %v2387 = vunpack.c.h.b16 %v592
  %v2388 = vunpack.c.l.b16 %v593
  %v2389 = vunpack.c.h.b16 %v593
  %v2390 = vunpack.c.l.b16 %v594
  %v2391 = vunpack.c.h.b16 %v594
  %v2392 = vunpack.c.l.b16 %v595
  %v2393 = vunpack.c.h.b16 %v595
  %v2394 = vunpack.c.l.b16 %v596
  %v2395 = vunpack.c.h.b16 %v596
  %v2396 = vunpack.c.l.b16 %v597
  %v2397 = vunpack.c.h.b16 %v597
  %v2398 = vunpack.c.l.b16 %v598
  %v2399 = vunpack.c.h.b16 %v598
  %v2400 = vpack.c.b16 %v1252, %v1248
  %v2401 = vpack.c.b16 %v1253, %v1249
  %v2402 = vpack.c.b16 %v1254, %v1250
  %v2403 = vpack.c.b16 %v1255, %v1251
  %v2404 = vpack.c.b16 %v1260, %v1256
  %v2405 = vpack.c.b16 %v1261, %v1257
  %v2406 = vpack.c.b16 %v1262, %v1258
  %v2407 = vpack.c.b16 %v1263, %v1259
  %v2408 = vpack.c.b16 %v1268, %v1264
  %v2409 = vpack.c.b16 %v1269, %v1265
  %v2410 = vpack.c.b16 %v1270, %v1266
  %v2411 = vpack.c.b16 %v1271, %v1267
  %v2412 = vpack.c.b16 %v1276, %v1272
  %v2413 = vpack.c.b16 %v1277, %v1273
  %v2414 = vpack.c.b16 %v1278, %v1274
  %v2415 = vpack.c.b16 %v1279, %v1275
  %v2416 = vpack.c.b16 %v1284, %v1280
  %v2417 = vpack.c.b16 %v1285, %v1281
  %v2418 = vpack.c.b16 %v1286, %v1282
  %v2419 = vpack.c.b16 %v1287, %v1283
  %v2420 = vpack.c.b16 %v1292, %v1288
  %v2421 = vpack.c.b16 %v1293, %v1289
  %v2422 = vpack.c.b16 %v1294, %v1290
  %v2423 = vpack.c.b16 %v1295, %v1291
  %v2424 = vpack.c.b16 %v1300, %v1296
  %v2425 = vpack.c.b16 %v1301, %v1297
  %v2426 = vpack.c.b16 %v1302, %v1298
  %v2427 = vpack.c.b16 %v1303, %v1299
  %v2428 = vpack.c.b16 %v1308, %v1304
  %v2429 = vpack.c.b16 %v1309, %v1305
  %v2430 = vpack.c.b16 %v1310, %v1306
  %v2431 = vpack.c.b16 %v1311, %v1307
  %v2432 = vpack.c.b16 %v1316, %v1312
  %v2433 = vpack.c.b16 %v1317, %v1313
  %v2434 = vpack.c.b16 %v1318, %v1314
  %v2435 = vpack.c.b16 %v1319, %v1315
  %v2436 = vpack.c.b16 %v1324, %v1320
  %v2437 = vpack.c.b16 %v1325, %v1321
  %v2438 = vpack.c.b16 %v1326, %v1322
  %v2439 = vpack.c.b16 %v1327, %v1323
  %v2440 = vpack.c.b16 %v1332, %v1328
  %v2441 = vpack.c.b16 %v1333, %v1329
  %v2442 = vpack.c.b16 %v1334, %v1330
  %v2443 = vpack.c.b16 %v1335, %v1331
  %v2444 = vpack.c.b16 %v1340, %v1336
  %v2445 = vpack.c.b16 %v1341, %v1337
  %v2446 = vpack.c.b16 %v1342, %v1338
  %v2447 = vpack.c.b16 %v1343, %v1339
  %v2448 = vpack.c.b16 %v1348, %v1344
  %v2449 = vpack.c.b16 %v1349, %v1345
  %v2450 = vpack.c.b16 %v1350, %v1346
  %v2451 = vpack.c.b16 %v1351, %v1347
  %v2452 = vpack.c.b16 %v1356, %v1352
  %v2453 = vpack.c.b16 %v1357, %v1353
  %v2454 = vpack.c.b16 %v1358, %v1354
  %v2455 = vpack.c.b16 %v1359, %v1355
  %v2456 = vpack.c.b16 %v1364, %v1360
  %v2457 = vpack.c.b16 %v1365, %v1361
  %v2458 = vpack.c.b16 %v1366, %v1362
  %v2459 = vpack.c.b16 %v1367, %v1363
  %v2460 = vpack.c.b16 %v1372, %v1368
  %v2461 = vpack.c.b16 %v1373, %v1369
  %v2462 = vpack.c.b16 %v1374, %v1370
  %v2463 = vpack.c.b16 %v1375, %v1371
  %v2464 = vpack.c.b16 %v1380, %v1376
  %v2465 = vpack.c.b16 %v1381, %v1377
  %v2466 = vpack.c.b16 %v1382, %v1378
  %v2467 = vpack.c.b16 %v1383, %v1379
  %v2468 = vpack.c.b16 %v1388, %v1384
  %v2469 = vpack.c.b16 %v1389, %v1385
  %v2470 = vpack.c.b16 %v1390, %v1386
  %v2471 = vpack.c.b16 %v1391, %v1387
  %v2472 = vpack.c.b16 %v1396, %v1392
  %v2473 = vpack.c.b16 %v1397, %v1393
  %v2474 = vpack.c.b16 %v1398, %v1394
  %v2475 = vpack.c.b16 %v1399, %v1395
  %v2476 = vpack.c.b16 %v1404, %v1400
  %v2477 = vpack.c.b16 %v1405, %v1401
  %v2478 = vpack.c.b16 %v1406, %v1402
  %v2479 = vpack.c.b16 %v1407, %v1403
  %v2480 = vpack.c.b16 %v1412, %v1408
  %v2481 = vpack.c.b16 %v1413, %v1409
  %v2482 = vpack.c.b16 %v1414, %v1410
  %v2483 = vpack.c.b16 %v1415, %v1411
  %v2484 = vpack.c.b16 %v1420, %v1416
  %v2485 = vpack.c.b16 %v1421, %v1417
  %v2486 = vpack.c.b16 %v1422, %v1418
  %v2487 = vpack.c.b16 %v1423, %v1419
  %v2488 = vpack.c.b16 %v1428, %v1424
  %v2489 = vpack.c.b16 %v1429, %v1425
  %v2490 = vpack.c.b16 %v1430, %v1426
  %v2491 = vpack.c.b16 %v1431, %v1427
  %v2492 = vpack.c.b16 %v1436, %v1432
  %v2493 = vpack.c.b16 %v1437, %v1433
  %v2494 = vpack.c.b16 %v1438, %v1434
  %v2495 = vpack.c.b16 %v1439, %v1435
  %v2496 = vpack.c.b16 %v1444, %v1440
  %v2497 = vpack.c.b16 %v1445, %v1441
  %v2498 = vpack.c.b16 %v1446, %v1442
  %v2499 = vpack.c.b16 %v1447, %v1443
  %v2500 = vpack.c.b16 %v1452, %v1448
  %v2501 = vpack.c.b16 %v1453, %v1449
  %v2502 = vpack.c.b16 %v1454, %v1450
  %v2503 = vpack.c.b16 %v1455, %v1451
  %v2504 = vpack.c.b16 %v1460, %v1456
  %v2505 = vpack.c.b16 %v1461, %v1457
  %v2506 = vpack.c.b16 %v1462, %v1458
  %v2507 = vpack.c.b16 %v1463, %v1459
  %v2508 = vpack.c.b16 %v1468, %v1464
  %v2509 = vpack.c.b16 %v1469, %v1465
  %v2510 = vpack.c.b16 %v1470, %v1466
  %v2511 = vpack.c.b16 %v1471, %v1467
  %v2512 = vpack.c.b16 %v1476, %v1472
  %v2513 = vpack.c.b16 %v1477, %v1473
  %v2514 = vpack.c.b16 %v1478, %v1474
  %v2515 = vpack.c.b16 %v1479, %v1475
  %v2516 = vpack.c.b16 %v1484, %v1480
  %v2517 = vpack.c.b16 %v1485, %v1481
  %v2518 = vpack.c.b16 %v1486, %v1482
  %v2519 = vpack.c.b16 %v1487, %v1483
  %v2520 = vpack.c.b16 %v1492, %v1488
  %v2521 = vpack.c.b16 %v1493, %v1489
  %v2522 = vpack.c.b16 %v1494, %v1490
  %v2523 = vpack.c.b16 %v1495, %v1491
  %v2524 = vpack.c.b16 %v1500, %v1496
  %v2525 = vpack.c.b16 %v1501, %v1497
  %v2526 = vpack.c.b16 %v1502, %v1498
  %v2527 = vpack.c.b16 %v1503, %v1499
  %v2528 = vpack.c.b16 %v1508, %v1504
  %v2529 = vpack.c.b16 %v1509, %v1505
  %v2530 = vpack.c.b16 %v1510, %v1506
  %v2531 = vpack.c.b16 %v1511, %v1507
  %v2532 = vpack.c.b16 %v1516, %v1512
  %v2533 = vpack.c.b16 %v1517, %v1513
  %v2534 = vpack.c.b16 %v1518, %v1514
  %v2535 = vpack.c.b16 %v1519, %v1515
  %v2536 = vpack.c.b16 %v1524, %v1520
  %v2537 = vpack.c.b16 %v1525, %v1521
  %v2538 = vpack.c.b16 %v1526, %v1522
  %v2539 = vpack.c.b16 %v1527, %v1523
  %v2540 = vpack.c.b16 %v1532, %v1528
  %v2541 = vpack.c.b16 %v1533, %v1529
  %v2542 = vpack.c.b16 %v1534, %v1530
  %v2543 = vpack.c.b16 %v1535, %v1531
  %v2544 = vpack.c.b16 %v1540, %v1536
  %v2545 = vpack.c.b16 %v1541, %v1537
  %v2546 = vpack.c.b16 %v1542, %v1538
  %v2547 = vpack.c.b16 %v1543, %v1539
  %v2548 = vpack.c.b16 %v1548, %v1544
  %v2549 = vpack.c.b16 %v1549, %v1545
  %v2550 = vpack.c.b16 %v1550, %v1546
  %v2551 = vpack.c.b16 %v1551, %v1547
  %v2552 = vpack.c.b16 %v1556, %v1552
  %v2553 = vpack.c.b16 %v1557, %v1553
  %v2554 = vpack.c.b16 %v1558, %v1554
  %v2555 = vpack.c.b16 %v1559, %v1555
  %v2556 = vpack.c.b16 %v1564, %v1560
  %v2557 = vpack.c.b16 %v1565, %v1561
  %v2558 = vpack.c.b16 %v1566, %v1562
  %v2559 = vpack.c.b16 %v1567, %v1563
  %v2560 = vpack.c.b16 %v1572, %v1568
  %v2561 = vpack.c.b16 %v1573, %v1569
  %v2562 = vpack.c.b16 %v1574, %v1570
  %v2563 = vpack.c.b16 %v1575, %v1571
  %v2564 = vpack.c.b16 %v1580, %v1576
  %v2565 = vpack.c.b16 %v1581, %v1577
  %v2566 = vpack.c.b16 %v1582, %v1578
  %v2567 = vpack.c.b16 %v1583, %v1579
  %v2568 = vpack.c.b16 %v1588, %v1584
  %v2569 = vpack.c.b16 %v1589, %v1585
  %v2570 = vpack.c.b16 %v1590, %v1586
  %v2571 = vpack.c.b16 %v1591, %v1587
  %v2572 = vpack.c.b16 %v1596, %v1592
  %v2573 = vpack.c.b16 %v1597, %v1593
  %v2574 = vpack.c.b16 %v1598, %v1594
  %v2575 = vpack.c.b16 %v1599, %v1595
  %v2576 = vpack.c.b16 %v1604, %v1600
  %v2577 = vpack.c.b16 %v1605, %v1601
  %v2578 = vpack.c.b16 %v1606, %v1602
  %v2579 = vpack.c.b16 %v1607, %v1603
  %v2580 = vpack.c.b16 %v1612, %v1608
  %v2581 = vpack.c.b16 %v1613, %v1609
  %v2582 = vpack.c.b16 %v1614, %v1610
  %v2583 = vpack.c.b16 %v1615, %v1611
  %v2584 = vpack.c.b16 %v1620, %v1616
  %v2585 = vpack.c.b16 %v1621, %v1617
  %v2586 = vpack.c.b16 %v1622, %v1618
  %v2587 = vpack.c.b16 %v1623, %v1619
  %v2588 = vpack.c.b16 %v1628, %v1624
  %v2589 = vpack.c.b16 %v1629, %v1625
  %v2590 = vpack.c.b16 %v1630, %v1626
  %v2591 = vpack.c.b16 %v1631, %v1627
  %v2592 = vpack.c.b16 %v1636, %v1632
  %v2593 = vpack.c.b16 %v1637, %v1633
  %v2594 = vpack.c.b16 %v1638, %v1634
  %v2595 = vpack.c.b16 %v1639, %v1635
  %v2596 = vpack.c.b16 %v1644, %v1640
  %v2597 = vpack.c.b16 %v1645, %v1641
  %v2598 = vpack.c.b16 %v1646, %v1642
  %v2599 = vpack.c.b16 %v1647, %v1643
  %v2600 = vpack.c.b16 %v1652, %v1648
  %v2601 = vpack.c.b16 %v1653, %v1649
  %v2602 = vpack.c.b16 %v1654, %v1650
  %v2603 = vpack.c.b16 %v1655, %v1651
  %v2604 = vpack.c.b16 %v1660, %v1656
  %v2605 = vpack.c.b16 %v1661, %v1657
  %v2606 = vpack.c.b16 %v1662, %v1658
  %v2607 = vpack.c.b16 %v1663, %v1659
  %v2608 = vpack.c.b16 %v1668, %v1664
  %v2609 = vpack.c.b16 %v1669, %v1665
  %v2610 = vpack.c.b16 %v1670, %v1666
  %v2611 = vpack.c.b16 %v1671, %v1667
  %v2612 = vpack.c.b16 %v1676, %v1672
  %v2613 = vpack.c.b16 %v1677, %v1673
  %v2614 = vpack.c.b16 %v1678, %v1674
  %v2615 = vpack.c.b16 %v1679, %v1675
  %v2616 = vpack.c.b16 %v1684, %v1680
  %v2617 = vpack.c.b16 %v1685, %v1681
  %v2618 = vpack.c.b16 %v1686, %v1682
  %v2619 = vpack.c.b16 %v1687, %v1683
  %v2620 = vpack.c.b16 %v1692, %v1688
  %v2621 = vpack.c.b16 %v1693, %v1689
  %v2622 = vpack.c.b16 %v1694, %v1690
  %v2623 = vpack.c.b16 %v1695, %v1691
  %v2624 = vpack.c.b16 %v1700, %v1696
  %v2625 = vpack.c.b16 %v1701, %v1697
  %v2626 = vpack.c.b16 %v1702, %v1698
  %v2627 = vpack.c.b16 %v1703, %v1699
  %v2628 = vpack.c.b16 %v1708, %v1704
  %v2629 = vpack.c.b16 %v1709, %v1705
  %v2630 = vpack.c.b16 %v1710, %v1706
  %v2631 = vpack.c.b16 %v1711, %v1707
  %v2632 = vpack.c.b16 %v1716, %v1712
  %v2633 = vpack.c.b16 %v1717, %v1713
  %v2634 = vpack.c.b16 %v1718, %v1714
  %v2635 = vpack.c.b16 %v1719, %v1715
  %v2636 = vpack.c.b16 %v1724, %v1720
  %v2637 = vpack.c.b16 %v1725, %v1721
  %v2638 = vpack.c.b16 %v1726, %v1722
  %v2639 = vpack.c.b16 %v1727, %v1723
  %v2640 = vpack.c.b16 %v1732, %v1728
  %v2641 = vpack.c.b16 %v1733, %v1729
  %v2642 = vpack.c.b16 %v1734, %v1730
  %v2643 = vpack.c.b16 %v1735, %v1731
  %v2644 = vpack.c.b16 %v1740, %v1736
  %v2645 = vpack.c.b16 %v1741, %v1737
  %v2646 = vpack.c.b16 %v1742, %v1738
  %v2647 = vpack.c.b16 %v1743, %v1739
  %v2648 = vpack.c.b16 %v1748, %v1744
  %v2649 = vpack.c.b16 %v1749, %v1745
  %v2650 = vpack.c.b16 %v1750, %v1746
  %v2651 = vpack.c.b16 %v1751, %v1747
  %v2652 = vpack.c.b16 %v1756, %v1752
  %v2653 = vpack.c.b16 %v1757, %v1753
  %v2654 = vpack.c.b16 %v1758, %v1754
  %v2655 = vpack.c.b16 %v1759, %v1755
  %v2656 = vpack.c.b16 %v1764, %v1760
  %v2657 = vpack.c.b16 %v1765, %v1761
  %v2658 = vpack.c.b16 %v1766, %v1762
  %v2659 = vpack.c.b16 %v1767, %v1763
  %v2660 = vpack.c.b16 %v1772, %v1768
  %v2661 = vpack.c.b16 %v1773, %v1769
  %v2662 = vpack.c.b16 %v1774, %v1770
  %v2663 = vpack.c.b16 %v1775, %v1771
  %v2664 = vpack.c.b16 %v1780, %v1776
  %v2665 = vpack.c.b16 %v1781, %v1777
  %v2666 = vpack.c.b16 %v1782, %v1778
  %v2667 = vpack.c.b16 %v1783, %v1779
  %v2668 = vpack.c.b16 %v1788, %v1784
  %v2669 = vpack.c.b16 %v1789, %v1785
  %v2670 = vpack.c.b16 %v1790, %v1786
  %v2671 = vpack.c.b16 %v1791, %v1787
  %v2672 = vpack.c.b16 %v1796, %v1792
  %v2673 = vpack.c.b16 %v1797, %v1793
  %v2674 = vpack.c.b16 %v1798, %v1794
  %v2675 = vpack.c.b16 %v1799, %v1795
  %v2676 = vpack.c.b16 %v1804, %v1800
  %v2677 = vpack.c.b16 %v1805, %v1801
  %v2678 = vpack.c.b16 %v1806, %v1802
  %v2679 = vpack.c.b16 %v1807, %v1803
  %v2680 = vpack.c.b16 %v1812, %v1808
  %v2681 = vpack.c.b16 %v1813, %v1809
  %v2682 = vpack.c.b16 %v1814, %v1810
  %v2683 = vpack.c.b16 %v1815, %v1811
  %v2684 = vpack.c.b16 %v1820, %v1816
  %v2685 = vpack.c.b16 %v1821, %v1817
  %v2686 = vpack.c.b16 %v1822, %v1818
  %v2687 = vpack.c.b16 %v1823, %v1819
  %v2688 = vpack.c.b16 %v1828, %v1824
  %v2689 = vpack.c.b16 %v1829, %v1825
  %v2690 = vpack.c.b16 %v1830, %v1826
  %v2691 = vpack.c.b16 %v1831, %v1827
  %v2692 = vpack.c.b16 %v1836, %v1832
  %v2693 = vpack.c.b16 %v1837, %v1833
  %v2694 = vpack.c.b16 %v1838, %v1834
  %v2695 = vpack.c.b16 %v1839, %v1835
  %v2696 = vpack.c.b16 %v1844, %v1840
  %v2697 = vpack.c.b16 %v1845, %v1841
  %v2698 = vpack.c.b16 %v1846, %v1842
  %v2699 = vpack.c.b16 %v1847, %v1843
  %v2700 = vpack.c.b16 %v1852, %v1848
  %v2701 = vpack.c.b16 %v1853, %v1849
  %v2702 = vpack.c.b16 %v1854, %v1850
  %v2703 = vpack.c.b16 %v1855, %v1851
  %v2704 = vpack.c.b16 %v1860, %v1856
  %v2705 = vpack.c.b16 %v1861, %v1857
  %v2706 = vpack.c.b16 %v1862, %v1858
  %v2707 = vpack.c.b16 %v1863, %v1859
  %v2708 = vpack.c.b16 %v1868, %v1864
  %v2709 = vpack.c.b16 %v1869, %v1865
  %v2710 = vpack.c.b16 %v1870, %v1866
  %v2711 = vpack.c.b16 %v1871, %v1867
  %v2712 = vpack.c.b16 %v1876, %v1872
  %v2713 = vpack.c.b16 %v1877, %v1873
  %v2714 = vpack.c.b16 %v1878, %v1874
  %v2715 = vpack.c.b16 %v1879, %v1875
  %v2716 = vpack.c.b16 %v1884, %v1880
  %v2717 = vpack.c.b16 %v1885, %v1881
  %v2718 = vpack.c.b16 %v1886, %v1882
  %v2719 = vpack.c.b16 %v1887, %v1883
  %v2720 = vpack.c.b16 %v1892, %v1888
  %v2721 = vpack.c.b16 %v1893, %v1889
  %v2722 = vpack.c.b16 %v1894, %v1890
  %v2723 = vpack.c.b16 %v1895, %v1891
  %v2724 = vpack.c.b16 %v1900, %v1896
  %v2725 = vpack.c.b16 %v1901, %v1897
  %v2726 = vpack.c.b16 %v1902, %v1898
  %v2727 = vpack.c.b16 %v1903, %v1899
  %v2728 = vpack.c.b16 %v1908, %v1904
  %v2729 = vpack.c.b16 %v1909, %v1905
  %v2730 = vpack.c.b16 %v1910, %v1906
  %v2731 = vpack.c.b16 %v1911, %v1907
  %v2732 = vpack.c.b16 %v1916, %v1912
  %v2733 = vpack.c.b16 %v1917, %v1913
  %v2734 = vpack.c.b16 %v1918, %v1914
  %v2735 = vpack.c.b16 %v1919, %v1915
  %v2736 = vpack.c.b16 %v1924, %v1920
  %v2737 = vpack.c.b16 %v1925, %v1921
  %v2738 = vpack.c.b16 %v1926, %v1922
  %v2739 = vpack.c.b16 %v1927, %v1923
  %v2740 = vpack.c.b16 %v1932, %v1928
  %v2741 = vpack.c.b16 %v1933, %v1929
  %v2742 = vpack.c.b16 %v1934, %v1930
  %v2743 = vpack.c.b16 %v1935, %v1931
  %v2744 = vpack.c.b16 %v1940, %v1936
  %v2745 = vpack.c.b16 %v1941, %v1937
  %v2746 = vpack.c.b16 %v1942, %v1938
  %v2747 = vpack.c.b16 %v1943, %v1939
  %v2748 = vpack.c.b16 %v1948, %v1944
  %v2749 = vpack.c.b16 %v1949, %v1945
  %v2750 = vpack.c.b16 %v1950, %v1946
  %v2751 = vpack.c.b16 %v1951, %v1947
  %v2752 = vpack.c.b16 %v1956, %v1952
  %v2753 = vpack.c.b16 %v1957, %v1953
  %v2754 = vpack.c.b16 %v1958, %v1954
  %v2755 = vpack.c.b16 %v1959, %v1955
  %v2756 = vpack.c.b16 %v1964, %v1960
  %v2757 = vpack.c.b16 %v1965, %v1961
  %v2758 = vpack.c.b16 %v1966, %v1962
  %v2759 = vpack.c.b16 %v1967, %v1963
  %v2760 = vpack.c.b16 %v1972, %v1968
  %v2761 = vpack.c.b16 %v1973, %v1969
  %v2762 = vpack.c.b16 %v1974, %v1970
  %v2763 = vpack.c.b16 %v1975, %v1971
  %v2764 = vpack.c.b16 %v1980, %v1976
  %v2765 = vpack.c.b16 %v1981, %v1977
  %v2766 = vpack.c.b16 %v1982, %v1978
  %v2767 = vpack.c.b16 %v1983, %v1979
  %v2768 = vpack.c.b16 %v1988, %v1984
  %v2769 = vpack.c.b16 %v1989, %v1985
  %v2770 = vpack.c.b16 %v1990, %v1986
  %v2771 = vpack.c.b16 %v1991, %v1987
  %v2772 = vpack.c.b16 %v1996, %v1992
  %v2773 = vpack.c.b16 %v1997, %v1993
  %v2774 = vpack.c.b16 %v1998, %v1994
  %v2775 = vpack.c.b16 %v1999, %v1995
  %v2776 = vpack.c.b16 %v2004, %v2000
  %v2777 = vpack.c.b16 %v2005, %v2001
  %v2778 = vpack.c.b16 %v2006, %v2002
  %v2779 = vpack.c.b16 %v2007, %v2003
  %v2780 = vpack.c.b16 %v2012, %v2008
  %v2781 = vpack.c.b16 %v2013, %v2009
  %v2782 = vpack.c.b16 %v2014, %v2010
  %v2783 = vpack.c.b16 %v2015, %v2011
  %v2784 = vpack.c.b16 %v2020, %v2016
  %v2785 = vpack.c.b16 %v2021, %v2017
  %v2786 = vpack.c.b16 %v2022, %v2018
  %v2787 = vpack.c.b16 %v2023, %v2019
  %v2788 = vpack.c.b16 %v2028, %v2024
  %v2789 = vpack.c.b16 %v2029, %v2025
  %v2790 = vpack.c.b16 %v2030, %v2026
  %v2791 = vpack.c.b16 %v2031, %v2027
  %v2792 = vpack.c.b16 %v2036, %v2032
  %v2793 = vpack.c.b16 %v2037, %v2033
  %v2794 = vpack.c.b16 %v2038, %v2034
  %v2795 = vpack.c.b16 %v2039, %v2035
  %v2796 = vpack.c.b16 %v2044, %v2040
  %v2797 = vpack.c.b16 %v2045, %v2041
  %v2798 = vpack.c.b16 %v2046, %v2042
  %v2799 = vpack.c.b16 %v2047, %v2043
  %v2800 = vpack.c.b16 %v2052, %v2048
  %v2801 = vpack.c.b16 %v2053, %v2049
  %v2802 = vpack.c.b16 %v2054, %v2050
  %v2803 = vpack.c.b16 %v2055, %v2051
  %v2804 = vpack.c.b16 %v2060, %v2056
  %v2805 = vpack.c.b16 %v2061, %v2057
  %v2806 = vpack.c.b16 %v2062, %v2058
  %v2807 = vpack.c.b16 %v2063, %v2059
  %v2808 = vpack.c.b16 %v2068, %v2064
  %v2809 = vpack.c.b16 %v2069, %v2065
  %v2810 = vpack.c.b16 %v2070, %v2066
  %v2811 = vpack.c.b16 %v2071, %v2067
  %v2812 = vpack.c.b16 %v2076, %v2072
  %v2813 = vpack.c.b16 %v2077, %v2073
  %v2814 = vpack.c.b16 %v2078, %v2074
  %v2815 = vpack.c.b16 %v2079, %v2075
  %v2816 = vpack.c.b16 %v2084, %v2080
  %v2817 = vpack.c.b16 %v2085, %v2081
  %v2818 = vpack.c.b16 %v2086, %v2082
  %v2819 = vpack.c.b16 %v2087, %v2083
  %v2820 = vpack.c.b16 %v2092, %v2088
  %v2821 = vpack.c.b16 %v2093, %v2089
  %v2822 = vpack.c.b16 %v2094, %v2090
  %v2823 = vpack.c.b16 %v2095, %v2091
  %v2824 = vpack.c.b16 %v2100, %v2096
  %v2825 = vpack.c.b16 %v2101, %v2097
  %v2826 = vpack.c.b16 %v2102, %v2098
  %v2827 = vpack.c.b16 %v2103, %v2099
  %v2828 = vpack.c.b16 %v2108, %v2104
  %v2829 = vpack.c.b16 %v2109, %v2105
  %v2830 = vpack.c.b16 %v2110, %v2106
  %v2831 = vpack.c.b16 %v2111, %v2107
  %v2832 = vpack.c.b16 %v2116, %v2112
  %v2833 = vpack.c.b16 %v2117, %v2113
  %v2834 = vpack.c.b16 %v2118, %v2114
  %v2835 = vpack.c.b16 %v2119, %v2115
  %v2836 = vpack.c.b16 %v2124, %v2120
  %v2837 = vpack.c.b16 %v2125, %v2121
  %v2838 = vpack.c.b16 %v2126, %v2122
  %v2839 = vpack.c.b16 %v2127, %v2123
  %v2840 = vpack.c.b16 %v2132, %v2128
  %v2841 = vpack.c.b16 %v2133, %v2129
  %v2842 = vpack.c.b16 %v2134, %v2130
  %v2843 = vpack.c.b16 %v2135, %v2131
  %v2844 = vpack.c.b16 %v2140, %v2136
  %v2845 = vpack.c.b16 %v2141, %v2137
  %v2846 = vpack.c.b16 %v2142, %v2138
  %v2847 = vpack.c.b16 %v2143, %v2139
  %v2848 = vpack.c.b16 %v2148, %v2144
  %v2849 = vpack.c.b16 %v2149, %v2145
  %v2850 = vpack.c.b16 %v2150, %v2146
  %v2851 = vpack.c.b16 %v2151, %v2147
  %v2852 = vpack.c.b16 %v2156, %v2152
  %v2853 = vpack.c.b16 %v2157, %v2153
  %v2854 = vpack.c.b16 %v2158, %v2154
  %v2855 = vpack.c.b16 %v2159, %v2155
  %v2856 = vpack.c.b16 %v2164, %v2160
  %v2857 = vpack.c.b16 %v2165, %v2161
  %v2858 = vpack.c.b16 %v2166, %v2162
  %v2859 = vpack.c.b16 %v2167, %v2163
  %v2860 = vpack.c.b16 %v2172, %v2168
  %v2861 = vpack.c.b16 %v2173, %v2169
  %v2862 = vpack.c.b16 %v2174, %v2170
  %v2863 = vpack.c.b16 %v2175, %v2171
  %v2864 = vpack.c.b16 %v2180, %v2176
  %v2865 = vpack.c.b16 %v2181, %v2177
  %v2866 = vpack.c.b16 %v2182, %v2178
  %v2867 = vpack.c.b16 %v2183, %v2179
  %v2868 = vpack.c.b16 %v2188, %v2184
  %v2869 = vpack.c.b16 %v2189, %v2185
  %v2870 = vpack.c.b16 %v2190, %v2186
  %v2871 = vpack.c.b16 %v2191, %v2187
  %v2872 = vpack.c.b16 %v2196, %v2192
  %v2873 = vpack.c.b16 %v2197, %v2193
  %v2874 = vpack.c.b16 %v2198, %v2194
  %v2875 = vpack.c.b16 %v2199, %v2195
  %v2876 = vpack.c.b16 %v2204, %v2200
  %v2877 = vpack.c.b16 %v2205, %v2201
  %v2878 = vpack.c.b16 %v2206, %v2202
  %v2879 = vpack.c.b16 %v2207, %v2203
  %v2880 = vpack.c.b16 %v2212, %v2208
  %v2881 = vpack.c.b16 %v2213, %v2209
  %v2882 = vpack.c.b16 %v2214, %v2210
  %v2883 = vpack.c.b16 %v2215, %v2211
  %v2884 = vpack.c.b16 %v2220, %v2216
  %v2885 = vpack.c.b16 %v2221, %v2217
  %v2886 = vpack.c.b16 %v2222, %v2218
  %v2887 = vpack.c.b16 %v2223, %v2219
  %v2888 = vpack.c.b16 %v2228, %v2224
  %v2889 = vpack.c.b16 %v2229, %v2225
  %v2890 = vpack.c.b16 %v2230, %v2226
  %v2891 = vpack.c.b16 %v2231, %v2227
  %v2892 = vpack.c.b16 %v2236, %v2232
  %v2893 = vpack.c.b16 %v2237, %v2233
  %v2894 = vpack.c.b16 %v2238, %v2234
  %v2895 = vpack.c.b16 %v2239, %v2235
  %v2896 = vpack.c.b16 %v2244, %v2240
  %v2897 = vpack.c.b16 %v2245, %v2241
  %v2898 = vpack.c.b16 %v2246, %v2242
  %v2899 = vpack.c.b16 %v2247, %v2243
  %v2900 = vpack.c.b16 %v2252, %v2248
  %v2901 = vpack.c.b16 %v2253, %v2249
  %v2902 = vpack.c.b16 %v2254, %v2250
  %v2903 = vpack.c.b16 %v2255, %v2251
  %v2904 = vpack.c.b16 %v2260, %v2256
  %v2905 = vpack.c.b16 %v2261, %v2257
  %v2906 = vpack.c.b16 %v2262, %v2258
  %v2907 = vpack.c.b16 %v2263, %v2259
  %v2908 = vpack.c.b16 %v2268, %v2264
  %v2909 = vpack.c.b16 %v2269, %v2265
  %v2910 = vpack.c.b16 %v2270, %v2266
  %v2911 = vpack.c.b16 %v2271, %v2267
  %v2912 = vpack.c.b16 %v2276, %v2272
  %v2913 = vpack.c.b16 %v2277, %v2273
  %v2914 = vpack.c.b16 %v2278, %v2274
  %v2915 = vpack.c.b16 %v2279, %v2275
  %v2916 = vpack.c.b16 %v2284, %v2280
  %v2917 = vpack.c.b16 %v2285, %v2281
  %v2918 = vpack.c.b16 %v2286, %v2282
  %v2919 = vpack.c.b16 %v2287, %v2283
  %v2920 = vpack.c.b16 %v2292, %v2288
  %v2921 = vpack.c.b16 %v2293, %v2289
  %v2922 = vpack.c.b16 %v2294, %v2290
  %v2923 = vpack.c.b16 %v2295, %v2291
  %v2924 = vpack.c.b16 %v2300, %v2296
  %v2925 = vpack.c.b16 %v2301, %v2297
  %v2926 = vpack.c.b16 %v2302, %v2298
  %v2927 = vpack.c.b16 %v2303, %v2299
  %v2928 = vpack.c.b16 %v2308, %v2304
  %v2929 = vpack.c.b16 %v2309, %v2305
  %v2930 = vpack.c.b16 %v2310, %v2306
  %v2931 = vpack.c.b16 %v2311, %v2307
  %v2932 = vpack.c.b16 %v2316, %v2312
  %v2933 = vpack.c.b16 %v2317, %v2313
  %v2934 = vpack.c.b16 %v2318, %v2314
  %v2935 = vpack.c.b16 %v2319, %v2315
  %v2936 = vpack.c.b16 %v2324, %v2320
  %v2937 = vpack.c.b16 %v2325, %v2321
  %v2938 = vpack.c.b16 %v2326, %v2322
  %v2939 = vpack.c.b16 %v2327, %v2323
  %v2940 = vpack.c.b16 %v2332, %v2328
  %v2941 = vpack.c.b16 %v2333, %v2329
  %v2942 = vpack.c.b16 %v2334, %v2330
  %v2943 = vpack.c.b16 %v2335, %v2331
  %v2944 = vpack.c.b16 %v2340, %v2336
  %v2945 = vpack.c.b16 %v2341, %v2337
  %v2946 = vpack.c.b16 %v2342, %v2338
  %v2947 = vpack.c.b16 %v2343, %v2339
  %v2948 = vpack.c.b16 %v2348, %v2344
  %v2949 = vpack.c.b16 %v2349, %v2345
  %v2950 = vpack.c.b16 %v2350, %v2346
  %v2951 = vpack.c.b16 %v2351, %v2347
  %v2952 = vpack.c.b16 %v2356, %v2352
  %v2953 = vpack.c.b16 %v2357, %v2353
  %v2954 = vpack.c.b16 %v2358, %v2354
  %v2955 = vpack.c.b16 %v2359, %v2355
  %v2956 = vpack.c.b16 %v2364, %v2360
  %v2957 = vpack.c.b16 %v2365, %v2361
  %v2958 = vpack.c.b16 %v2366, %v2362
  %v2959 = vpack.c.b16 %v2367, %v2363
  %v2960 = vpack.c.b16 %v2372, %v2368
  %v2961 = vpack.c.b16 %v2373, %v2369
  %v2962 = vpack.c.b16 %v2374, %v2370
  %v2963 = vpack.c.b16 %v2375, %v2371
  %v2964 = vpack.c.b16 %v2380, %v2376
  %v2965 = vpack.c.b16 %v2381, %v2377
  %v2966 = vpack.c.b16 %v2382, %v2378
  %v2967 = vpack.c.b16 %v2383, %v2379
  %v2968 = vpack.c.b16 %v2388, %v2384
  %v2969 = vpack.c.b16 %v2389, %v2385
  %v2970 = vpack.c.b16 %v2390, %v2386
  %v2971 = vpack.c.b16 %v2391, %v2387
  %v2972 = vpack.c.b16 %v2396, %v2392
  %v2973 = vpack.c.b16 %v2397, %v2393
  %v2974 = vpack.c.b16 %v2398, %v2394
  %v2975 = vpack.c.b16 %v2399, %v2395
  %3552 = vmatpush.bf16.msra.mxu0 %v2428
  %3553 = vmatpush.bf16.msra.mxu0 %v2424
  %3554 = vmatpush.bf16.msra.mxu0 %v2420
  %3555 = vmatpush.bf16.msra.mxu0 %v2416
  %3556 = vmatpush.bf16.msra.mxu0 %v2412
  %3557 = vmatpush.bf16.msra.mxu0 %v2408
  %3558 = vmatpush.bf16.msra.mxu0 %v2404
  %3559 = vmatpush.bf16.msra.mxu0 %v2400
  %3560 = vmatmul.bf16.gmra.mxu0 %v636
  %v3561 = vpop.f32.mrf.mxu0
  %v3562 = vadd.f32 %v601, %v3561
  %v3563 = vpop.f32.mrf.mxu0
  %3564 = vdwg.mxu0
  %3565 = vmatpush.bf16.msra.mxu0 %v2460
  %3566 = vmatpush.bf16.msra.mxu0 %v2456
  %3567 = vmatpush.bf16.msra.mxu0 %v2452
  %3568 = vmatpush.bf16.msra.mxu0 %v2448
  %3569 = vmatpush.bf16.msra.mxu0 %v2444
  %3570 = vmatpush.bf16.msra.mxu0 %v2440
  %3571 = vmatpush.bf16.msra.mxu0 %v2436
  %3572 = vmatpush.bf16.msra.mxu0 %v2432
  %3573 = vmatmul.bf16.gmra.mxu0 %v637
  %v3574 = vpop.f32.mrf.mxu0
  %v3575 = vadd.f32 %v3562, %v3574
  %v3576 = vpop.f32.mrf.mxu0
  %3577 = vdwg.mxu0
  %3578 = vmatpush.bf16.msra.mxu0 %v2492
  %3579 = vmatpush.bf16.msra.mxu0 %v2488
  %3580 = vmatpush.bf16.msra.mxu0 %v2484
  %3581 = vmatpush.bf16.msra.mxu0 %v2480
  %3582 = vmatpush.bf16.msra.mxu0 %v2476
  %3583 = vmatpush.bf16.msra.mxu0 %v2472
  %3584 = vmatpush.bf16.msra.mxu0 %v2468
  %3585 = vmatpush.bf16.msra.mxu0 %v2464
  %3586 = vmatmul.bf16.gmra.mxu0 %v638
  %v3587 = vpop.f32.mrf.mxu0
  %v3588 = vadd.f32 %v3575, %v3587
  %v3589 = vpop.f32.mrf.mxu0
  %3590 = vdwg.mxu0
  %3591 = vmatpush.bf16.msra.mxu0 %v2524
  %3592 = vmatpush.bf16.msra.mxu0 %v2520
  %3593 = vmatpush.bf16.msra.mxu0 %v2516
  %3594 = vmatpush.bf16.msra.mxu0 %v2512
  %3595 = vmatpush.bf16.msra.mxu0 %v2508
  %3596 = vmatpush.bf16.msra.mxu0 %v2504
  %3597 = vmatpush.bf16.msra.mxu0 %v2500
  %3598 = vmatpush.bf16.msra.mxu0 %v2496
  %3599 = vmatmul.bf16.gmra.mxu0 %v639
  %v3600 = vpop.f32.mrf.mxu0
  %v3601 = vadd.f32 %v3588, %v3600
  %v3602 = vpop.f32.mrf.mxu0
  %3603 = vdwg.mxu0
  %3604 = vmatpush.bf16.msra.mxu0 %v2556
  %3605 = vmatpush.bf16.msra.mxu0 %v2552
  %3606 = vmatpush.bf16.msra.mxu0 %v2548
  %3607 = vmatpush.bf16.msra.mxu0 %v2544
  %3608 = vmatpush.bf16.msra.mxu0 %v2540
  %3609 = vmatpush.bf16.msra.mxu0 %v2536
  %3610 = vmatpush.bf16.msra.mxu0 %v2532
  %3611 = vmatpush.bf16.msra.mxu0 %v2528
  %3612 = vmatmul.bf16.gmra.mxu0 %v640
  %v3613 = vpop.f32.mrf.mxu0
  %v3614 = vadd.f32 %v3601, %v3613
  %v3615 = vpop.f32.mrf.mxu0
  %3616 = vdwg.mxu0
  %3617 = vmatpush.bf16.msra.mxu0 %v2588
  %3618 = vmatpush.bf16.msra.mxu0 %v2584
  %3619 = vmatpush.bf16.msra.mxu0 %v2580
  %3620 = vmatpush.bf16.msra.mxu0 %v2576
  %3621 = vmatpush.bf16.msra.mxu0 %v2572
  %3622 = vmatpush.bf16.msra.mxu0 %v2568
  %3623 = vmatpush.bf16.msra.mxu0 %v2564
  %3624 = vmatpush.bf16.msra.mxu0 %v2560
  %3625 = vmatmul.bf16.gmra.mxu0 %v641
  %v3626 = vpop.f32.mrf.mxu0
  %v3627 = vadd.f32 %v3614, %v3626
  %v3628 = vpop.f32.mrf.mxu0
  %3629 = vdwg.mxu0
  %3630 = vmatpush.bf16.msra.mxu0 %v2620
  %3631 = vmatpush.bf16.msra.mxu0 %v2616
  %3632 = vmatpush.bf16.msra.mxu0 %v2612
  %3633 = vmatpush.bf16.msra.mxu0 %v2608
  %3634 = vmatpush.bf16.msra.mxu0 %v2604
  %3635 = vmatpush.bf16.msra.mxu0 %v2600
  %3636 = vmatpush.bf16.msra.mxu0 %v2596
  %3637 = vmatpush.bf16.msra.mxu0 %v2592
  %3638 = vmatmul.bf16.gmra.mxu0 %v642
  %v3639 = vpop.f32.mrf.mxu0
  %v3640 = vadd.f32 %v3627, %v3639
  %v3641 = vpop.f32.mrf.mxu0
  %3642 = vdwg.mxu0
  %3643 = vmatpush.bf16.msra.mxu0 %v2652
  %3644 = vmatpush.bf16.msra.mxu0 %v2648
  %3645 = vmatpush.bf16.msra.mxu0 %v2644
  %3646 = vmatpush.bf16.msra.mxu0 %v2640
  %3647 = vmatpush.bf16.msra.mxu0 %v2636
  %3648 = vmatpush.bf16.msra.mxu0 %v2632
  %3649 = vmatpush.bf16.msra.mxu0 %v2628
  %3650 = vmatpush.bf16.msra.mxu0 %v2624
  %3651 = vmatmul.bf16.gmra.mxu0 %v643
  %v3652 = vpop.f32.mrf.mxu0
  %v3653 = vadd.f32 %v3640, %v3652
  %v3654 = vpop.f32.mrf.mxu0
  %3655 = vdwg.mxu0
  %3656 = vmatpush.bf16.msra.mxu0 %v2684
  %3657 = vmatpush.bf16.msra.mxu0 %v2680
  %3658 = vmatpush.bf16.msra.mxu0 %v2676
  %3659 = vmatpush.bf16.msra.mxu0 %v2672
  %3660 = vmatpush.bf16.msra.mxu0 %v2668
  %3661 = vmatpush.bf16.msra.mxu0 %v2664
  %3662 = vmatpush.bf16.msra.mxu0 %v2660
  %3663 = vmatpush.bf16.msra.mxu0 %v2656
  %3664 = vmatmul.bf16.gmra.mxu0 %v644
  %v3665 = vpop.f32.mrf.mxu0
  %v3666 = vadd.f32 %v3653, %v3665
  %v3667 = vpop.f32.mrf.mxu0
  %3668 = vdwg.mxu0
  %3669 = vmatpush.bf16.msra.mxu0 %v2716
  %3670 = vmatpush.bf16.msra.mxu0 %v2712
  %3671 = vmatpush.bf16.msra.mxu0 %v2708
  %3672 = vmatpush.bf16.msra.mxu0 %v2704
  %3673 = vmatpush.bf16.msra.mxu0 %v2700
  %3674 = vmatpush.bf16.msra.mxu0 %v2696
  %3675 = vmatpush.bf16.msra.mxu0 %v2692
  %3676 = vmatpush.bf16.msra.mxu0 %v2688
  %3677 = vmatmul.bf16.gmra.mxu0 %v645
  %v3678 = vpop.f32.mrf.mxu0
  %v3679 = vadd.f32 %v3666, %v3678
  %v3680 = vpop.f32.mrf.mxu0
  %3681 = vdwg.mxu0
  %3682 = vmatpush.bf16.msra.mxu0 %v2748
  %3683 = vmatpush.bf16.msra.mxu0 %v2744
  %3684 = vmatpush.bf16.msra.mxu0 %v2740
  %3685 = vmatpush.bf16.msra.mxu0 %v2736
  %3686 = vmatpush.bf16.msra.mxu0 %v2732
  %3687 = vmatpush.bf16.msra.mxu0 %v2728
  %3688 = vmatpush.bf16.msra.mxu0 %v2724
  %3689 = vmatpush.bf16.msra.mxu0 %v2720
  %3690 = vmatmul.bf16.gmra.mxu0 %v646
  %v3691 = vpop.f32.mrf.mxu0
  %v3692 = vadd.f32 %v3679, %v3691
  %v3693 = vpop.f32.mrf.mxu0
  %3694 = vdwg.mxu0
  %3695 = vmatpush.bf16.msra.mxu0 %v2780
  %3696 = vmatpush.bf16.msra.mxu0 %v2776
  %3697 = vmatpush.bf16.msra.mxu0 %v2772
  %3698 = vmatpush.bf16.msra.mxu0 %v2768
  %3699 = vmatpush.bf16.msra.mxu0 %v2764
  %3700 = vmatpush.bf16.msra.mxu0 %v2760
  %3701 = vmatpush.bf16.msra.mxu0 %v2756
  %3702 = vmatpush.bf16.msra.mxu0 %v2752
  %3703 = vmatmul.bf16.gmra.mxu0 %v647
  %v3704 = vpop.f32.mrf.mxu0
  %v3705 = vadd.f32 %v3692, %v3704
  %v3706 = vpop.f32.mrf.mxu0
  %3707 = vdwg.mxu0
  %3708 = vmatpush.bf16.msra.mxu0 %v2812
  %3709 = vmatpush.bf16.msra.mxu0 %v2808
  %3710 = vmatpush.bf16.msra.mxu0 %v2804
  %3711 = vmatpush.bf16.msra.mxu0 %v2800
  %3712 = vmatpush.bf16.msra.mxu0 %v2796
  %3713 = vmatpush.bf16.msra.mxu0 %v2792
  %3714 = vmatpush.bf16.msra.mxu0 %v2788
  %3715 = vmatpush.bf16.msra.mxu0 %v2784
  %3716 = vmatmul.bf16.gmra.mxu0 %v648
  %v3717 = vpop.f32.mrf.mxu0
  %v3718 = vadd.f32 %v3705, %v3717
  %v3719 = vpop.f32.mrf.mxu0
  %3720 = vdwg.mxu0
  %3721 = vmatpush.bf16.msra.mxu0 %v2844
  %3722 = vmatpush.bf16.msra.mxu0 %v2840
  %3723 = vmatpush.bf16.msra.mxu0 %v2836
  %3724 = vmatpush.bf16.msra.mxu0 %v2832
  %3725 = vmatpush.bf16.msra.mxu0 %v2828
  %3726 = vmatpush.bf16.msra.mxu0 %v2824
  %3727 = vmatpush.bf16.msra.mxu0 %v2820
  %3728 = vmatpush.bf16.msra.mxu0 %v2816
  %3729 = vmatmul.bf16.gmra.mxu0 %v649
  %v3730 = vpop.f32.mrf.mxu0
  %v3731 = vadd.f32 %v3718, %v3730
  %v3732 = vpop.f32.mrf.mxu0
  %3733 = vdwg.mxu0
  %3734 = vmatpush.bf16.msra.mxu0 %v2876
  %3735 = vmatpush.bf16.msra.mxu0 %v2872
  %3736 = vmatpush.bf16.msra.mxu0 %v2868
  %3737 = vmatpush.bf16.msra.mxu0 %v2864
  %3738 = vmatpush.bf16.msra.mxu0 %v2860
  %3739 = vmatpush.bf16.msra.mxu0 %v2856
  %3740 = vmatpush.bf16.msra.mxu0 %v2852
  %3741 = vmatpush.bf16.msra.mxu0 %v2848
  %3742 = vmatmul.bf16.gmra.mxu0 %v650
  %v3743 = vpop.f32.mrf.mxu0
  %v3744 = vadd.f32 %v3731, %v3743
  %v3745 = vpop.f32.mrf.mxu0
  %3746 = vdwg.mxu0
  %3747 = vmatpush.bf16.msra.mxu0 %v2908
  %3748 = vmatpush.bf16.msra.mxu0 %v2904
  %3749 = vmatpush.bf16.msra.mxu0 %v2900
  %3750 = vmatpush.bf16.msra.mxu0 %v2896
  %3751 = vmatpush.bf16.msra.mxu0 %v2892
  %3752 = vmatpush.bf16.msra.mxu0 %v2888
  %3753 = vmatpush.bf16.msra.mxu0 %v2884
  %3754 = vmatpush.bf16.msra.mxu0 %v2880
  %3755 = vmatmul.bf16.gmra.mxu0 %v651
  %v3756 = vpop.f32.mrf.mxu0
  %v3757 = vadd.f32 %v3744, %v3756
  %v3758 = vpop.f32.mrf.mxu0
  %3759 = vdwg.mxu0
  %3760 = vmatpush.bf16.msra.mxu0 %v2940
  %3761 = vmatpush.bf16.msra.mxu0 %v2936
  %3762 = vmatpush.bf16.msra.mxu0 %v2932
  %3763 = vmatpush.bf16.msra.mxu0 %v2928
  %3764 = vmatpush.bf16.msra.mxu0 %v2924
  %3765 = vmatpush.bf16.msra.mxu0 %v2920
  %3766 = vmatpush.bf16.msra.mxu0 %v2916
  %3767 = vmatpush.bf16.msra.mxu0 %v2912
  %3768 = vmatmul.bf16.gmra.mxu0 %v652
  %v3769 = vpop.f32.mrf.mxu0
  %v3770 = vadd.f32 %v3757, %v3769
  %v3771 = vpop.f32.mrf.mxu0
  %3772 = vdwg.mxu0
  %3773 = vmatpush.bf16.msra.mxu0 %v2972
  %3774 = vmatpush.bf16.msra.mxu0 %v2968
  %3775 = vmatpush.bf16.msra.mxu0 %v2964
  %3776 = vmatpush.bf16.msra.mxu0 %v2960
  %3777 = vmatpush.bf16.msra.mxu0 %v2956
  %3778 = vmatpush.bf16.msra.mxu0 %v2952
  %3779 = vmatpush.bf16.msra.mxu0 %v2948
  %3780 = vmatpush.bf16.msra.mxu0 %v2944
  %3781 = vmatmul.bf16.gmra.mxu0 %v653
  %v3782 = vpop.f32.mrf.mxu0
  %v3783 = vadd.f32 %v3770, %v3782
  %v3784 = vpop.f32.mrf.mxu0
  %3785 = vdwg.mxu0
  %3786 = vmatpush.bf16.msra.mxu0 %v2429
  %3787 = vmatpush.bf16.msra.mxu0 %v2425
  %3788 = vmatpush.bf16.msra.mxu0 %v2421
  %3789 = vmatpush.bf16.msra.mxu0 %v2417
  %3790 = vmatpush.bf16.msra.mxu0 %v2413
  %3791 = vmatpush.bf16.msra.mxu0 %v2409
  %3792 = vmatpush.bf16.msra.mxu0 %v2405
  %3793 = vmatpush.bf16.msra.mxu0 %v2401
  %3794 = vmatmul.bf16.gmra.mxu0 %v636
  %v3795 = vpop.f32.mrf.mxu0
  %v3796 = vadd.f32 %v602, %v3795
  %v3797 = vpop.f32.mrf.mxu0
  %3798 = vdwg.mxu0
  %3799 = vmatpush.bf16.msra.mxu0 %v2461
  %3800 = vmatpush.bf16.msra.mxu0 %v2457
  %3801 = vmatpush.bf16.msra.mxu0 %v2453
  %3802 = vmatpush.bf16.msra.mxu0 %v2449
  %3803 = vmatpush.bf16.msra.mxu0 %v2445
  %3804 = vmatpush.bf16.msra.mxu0 %v2441
  %3805 = vmatpush.bf16.msra.mxu0 %v2437
  %3806 = vmatpush.bf16.msra.mxu0 %v2433
  %3807 = vmatmul.bf16.gmra.mxu0 %v637
  %v3808 = vpop.f32.mrf.mxu0
  %v3809 = vadd.f32 %v3796, %v3808
  %v3810 = vpop.f32.mrf.mxu0
  %3811 = vdwg.mxu0
  %3812 = vmatpush.bf16.msra.mxu0 %v2493
  %3813 = vmatpush.bf16.msra.mxu0 %v2489
  %3814 = vmatpush.bf16.msra.mxu0 %v2485
  %3815 = vmatpush.bf16.msra.mxu0 %v2481
  %3816 = vmatpush.bf16.msra.mxu0 %v2477
  %3817 = vmatpush.bf16.msra.mxu0 %v2473
  %3818 = vmatpush.bf16.msra.mxu0 %v2469
  %3819 = vmatpush.bf16.msra.mxu0 %v2465
  %3820 = vmatmul.bf16.gmra.mxu0 %v638
  %v3821 = vpop.f32.mrf.mxu0
  %v3822 = vadd.f32 %v3809, %v3821
  %v3823 = vpop.f32.mrf.mxu0
  %3824 = vdwg.mxu0
  %3825 = vmatpush.bf16.msra.mxu0 %v2525
  %3826 = vmatpush.bf16.msra.mxu0 %v2521
  %3827 = vmatpush.bf16.msra.mxu0 %v2517
  %3828 = vmatpush.bf16.msra.mxu0 %v2513
  %3829 = vmatpush.bf16.msra.mxu0 %v2509
  %3830 = vmatpush.bf16.msra.mxu0 %v2505
  %3831 = vmatpush.bf16.msra.mxu0 %v2501
  %3832 = vmatpush.bf16.msra.mxu0 %v2497
  %3833 = vmatmul.bf16.gmra.mxu0 %v639
  %v3834 = vpop.f32.mrf.mxu0
  %v3835 = vadd.f32 %v3822, %v3834
  %v3836 = vpop.f32.mrf.mxu0
  %3837 = vdwg.mxu0
  %3838 = vmatpush.bf16.msra.mxu0 %v2557
  %3839 = vmatpush.bf16.msra.mxu0 %v2553
  %3840 = vmatpush.bf16.msra.mxu0 %v2549
  %3841 = vmatpush.bf16.msra.mxu0 %v2545
  %3842 = vmatpush.bf16.msra.mxu0 %v2541
  %3843 = vmatpush.bf16.msra.mxu0 %v2537
  %3844 = vmatpush.bf16.msra.mxu0 %v2533
  %3845 = vmatpush.bf16.msra.mxu0 %v2529
  %3846 = vmatmul.bf16.gmra.mxu0 %v640
  %v3847 = vpop.f32.mrf.mxu0
  %v3848 = vadd.f32 %v3835, %v3847
  %v3849 = vpop.f32.mrf.mxu0
  %3850 = vdwg.mxu0
  %3851 = vmatpush.bf16.msra.mxu0 %v2589
  %3852 = vmatpush.bf16.msra.mxu0 %v2585
  %3853 = vmatpush.bf16.msra.mxu0 %v2581
  %3854 = vmatpush.bf16.msra.mxu0 %v2577
  %3855 = vmatpush.bf16.msra.mxu0 %v2573
  %3856 = vmatpush.bf16.msra.mxu0 %v2569
  %3857 = vmatpush.bf16.msra.mxu0 %v2565
  %3858 = vmatpush.bf16.msra.mxu0 %v2561
  %3859 = vmatmul.bf16.gmra.mxu0 %v641
  %v3860 = vpop.f32.mrf.mxu0
  %v3861 = vadd.f32 %v3848, %v3860
  %v3862 = vpop.f32.mrf.mxu0
  %3863 = vdwg.mxu0
  %3864 = vmatpush.bf16.msra.mxu0 %v2621
  %3865 = vmatpush.bf16.msra.mxu0 %v2617
  %3866 = vmatpush.bf16.msra.mxu0 %v2613
  %3867 = vmatpush.bf16.msra.mxu0 %v2609
  %3868 = vmatpush.bf16.msra.mxu0 %v2605
  %3869 = vmatpush.bf16.msra.mxu0 %v2601
  %3870 = vmatpush.bf16.msra.mxu0 %v2597
  %3871 = vmatpush.bf16.msra.mxu0 %v2593
  %3872 = vmatmul.bf16.gmra.mxu0 %v642
  %v3873 = vpop.f32.mrf.mxu0
  %v3874 = vadd.f32 %v3861, %v3873
  %v3875 = vpop.f32.mrf.mxu0
  %3876 = vdwg.mxu0
  %3877 = vmatpush.bf16.msra.mxu0 %v2653
  %3878 = vmatpush.bf16.msra.mxu0 %v2649
  %3879 = vmatpush.bf16.msra.mxu0 %v2645
  %3880 = vmatpush.bf16.msra.mxu0 %v2641
  %3881 = vmatpush.bf16.msra.mxu0 %v2637
  %3882 = vmatpush.bf16.msra.mxu0 %v2633
  %3883 = vmatpush.bf16.msra.mxu0 %v2629
  %3884 = vmatpush.bf16.msra.mxu0 %v2625
  %3885 = vmatmul.bf16.gmra.mxu0 %v643
  %v3886 = vpop.f32.mrf.mxu0
  %v3887 = vadd.f32 %v3874, %v3886
  %v3888 = vpop.f32.mrf.mxu0
  %3889 = vdwg.mxu0
  %3890 = vmatpush.bf16.msra.mxu0 %v2685
  %3891 = vmatpush.bf16.msra.mxu0 %v2681
  %3892 = vmatpush.bf16.msra.mxu0 %v2677
  %3893 = vmatpush.bf16.msra.mxu0 %v2673
  %3894 = vmatpush.bf16.msra.mxu0 %v2669
  %3895 = vmatpush.bf16.msra.mxu0 %v2665
  %3896 = vmatpush.bf16.msra.mxu0 %v2661
  %3897 = vmatpush.bf16.msra.mxu0 %v2657
  %3898 = vmatmul.bf16.gmra.mxu0 %v644
  %v3899 = vpop.f32.mrf.mxu0
  %v3900 = vadd.f32 %v3887, %v3899
  %v3901 = vpop.f32.mrf.mxu0
  %3902 = vdwg.mxu0
  %3903 = vmatpush.bf16.msra.mxu0 %v2717
  %3904 = vmatpush.bf16.msra.mxu0 %v2713
  %3905 = vmatpush.bf16.msra.mxu0 %v2709
  %3906 = vmatpush.bf16.msra.mxu0 %v2705
  %3907 = vmatpush.bf16.msra.mxu0 %v2701
  %3908 = vmatpush.bf16.msra.mxu0 %v2697
  %3909 = vmatpush.bf16.msra.mxu0 %v2693
  %3910 = vmatpush.bf16.msra.mxu0 %v2689
  %3911 = vmatmul.bf16.gmra.mxu0 %v645
  %v3912 = vpop.f32.mrf.mxu0
  %v3913 = vadd.f32 %v3900, %v3912
  %v3914 = vpop.f32.mrf.mxu0
  %3915 = vdwg.mxu0
  %3916 = vmatpush.bf16.msra.mxu0 %v2749
  %3917 = vmatpush.bf16.msra.mxu0 %v2745
  %3918 = vmatpush.bf16.msra.mxu0 %v2741
  %3919 = vmatpush.bf16.msra.mxu0 %v2737
  %3920 = vmatpush.bf16.msra.mxu0 %v2733
  %3921 = vmatpush.bf16.msra.mxu0 %v2729
  %3922 = vmatpush.bf16.msra.mxu0 %v2725
  %3923 = vmatpush.bf16.msra.mxu0 %v2721
  %3924 = vmatmul.bf16.gmra.mxu0 %v646
  %v3925 = vpop.f32.mrf.mxu0
  %v3926 = vadd.f32 %v3913, %v3925
  %v3927 = vpop.f32.mrf.mxu0
  %3928 = vdwg.mxu0
  %3929 = vmatpush.bf16.msra.mxu0 %v2781
  %3930 = vmatpush.bf16.msra.mxu0 %v2777
  %3931 = vmatpush.bf16.msra.mxu0 %v2773
  %3932 = vmatpush.bf16.msra.mxu0 %v2769
  %3933 = vmatpush.bf16.msra.mxu0 %v2765
  %3934 = vmatpush.bf16.msra.mxu0 %v2761
  %3935 = vmatpush.bf16.msra.mxu0 %v2757
  %3936 = vmatpush.bf16.msra.mxu0 %v2753
  %3937 = vmatmul.bf16.gmra.mxu0 %v647
  %v3938 = vpop.f32.mrf.mxu0
  %v3939 = vadd.f32 %v3926, %v3938
  %v3940 = vpop.f32.mrf.mxu0
  %3941 = vdwg.mxu0
  %3942 = vmatpush.bf16.msra.mxu0 %v2813
  %3943 = vmatpush.bf16.msra.mxu0 %v2809
  %3944 = vmatpush.bf16.msra.mxu0 %v2805
  %3945 = vmatpush.bf16.msra.mxu0 %v2801
  %3946 = vmatpush.bf16.msra.mxu0 %v2797
  %3947 = vmatpush.bf16.msra.mxu0 %v2793
  %3948 = vmatpush.bf16.msra.mxu0 %v2789
  %3949 = vmatpush.bf16.msra.mxu0 %v2785
  %3950 = vmatmul.bf16.gmra.mxu0 %v648
  %v3951 = vpop.f32.mrf.mxu0
  %v3952 = vadd.f32 %v3939, %v3951
  %v3953 = vpop.f32.mrf.mxu0
  %3954 = vdwg.mxu0
  %3955 = vmatpush.bf16.msra.mxu0 %v2845
  %3956 = vmatpush.bf16.msra.mxu0 %v2841
  %3957 = vmatpush.bf16.msra.mxu0 %v2837
  %3958 = vmatpush.bf16.msra.mxu0 %v2833
  %3959 = vmatpush.bf16.msra.mxu0 %v2829
  %3960 = vmatpush.bf16.msra.mxu0 %v2825
  %3961 = vmatpush.bf16.msra.mxu0 %v2821
  %3962 = vmatpush.bf16.msra.mxu0 %v2817
  %3963 = vmatmul.bf16.gmra.mxu0 %v649
  %v3964 = vpop.f32.mrf.mxu0
  %v3965 = vadd.f32 %v3952, %v3964
  %v3966 = vpop.f32.mrf.mxu0
  %3967 = vdwg.mxu0
  %3968 = vmatpush.bf16.msra.mxu0 %v2877
  %3969 = vmatpush.bf16.msra.mxu0 %v2873
  %3970 = vmatpush.bf16.msra.mxu0 %v2869
  %3971 = vmatpush.bf16.msra.mxu0 %v2865
  %3972 = vmatpush.bf16.msra.mxu0 %v2861
  %3973 = vmatpush.bf16.msra.mxu0 %v2857
  %3974 = vmatpush.bf16.msra.mxu0 %v2853
  %3975 = vmatpush.bf16.msra.mxu0 %v2849
  %3976 = vmatmul.bf16.gmra.mxu0 %v650
  %v3977 = vpop.f32.mrf.mxu0
  %v3978 = vadd.f32 %v3965, %v3977
  %v3979 = vpop.f32.mrf.mxu0
  %3980 = vdwg.mxu0
  %3981 = vmatpush.bf16.msra.mxu0 %v2909
  %3982 = vmatpush.bf16.msra.mxu0 %v2905
  %3983 = vmatpush.bf16.msra.mxu0 %v2901
  %3984 = vmatpush.bf16.msra.mxu0 %v2897
  %3985 = vmatpush.bf16.msra.mxu0 %v2893
  %3986 = vmatpush.bf16.msra.mxu0 %v2889
  %3987 = vmatpush.bf16.msra.mxu0 %v2885
  %3988 = vmatpush.bf16.msra.mxu0 %v2881
  %3989 = vmatmul.bf16.gmra.mxu0 %v651
  %v3990 = vpop.f32.mrf.mxu0
  %v3991 = vadd.f32 %v3978, %v3990
  %v3992 = vpop.f32.mrf.mxu0
  %3993 = vdwg.mxu0
  %3994 = vmatpush.bf16.msra.mxu0 %v2941
  %3995 = vmatpush.bf16.msra.mxu0 %v2937
  %3996 = vmatpush.bf16.msra.mxu0 %v2933
  %3997 = vmatpush.bf16.msra.mxu0 %v2929
  %3998 = vmatpush.bf16.msra.mxu0 %v2925
  %3999 = vmatpush.bf16.msra.mxu0 %v2921
  %4000 = vmatpush.bf16.msra.mxu0 %v2917
  %4001 = vmatpush.bf16.msra.mxu0 %v2913
  %4002 = vmatmul.bf16.gmra.mxu0 %v652
  %v4003 = vpop.f32.mrf.mxu0
  %v4004 = vadd.f32 %v3991, %v4003
  %v4005 = vpop.f32.mrf.mxu0
  %4006 = vdwg.mxu0
  %4007 = vmatpush.bf16.msra.mxu0 %v2973
  %4008 = vmatpush.bf16.msra.mxu0 %v2969
  %4009 = vmatpush.bf16.msra.mxu0 %v2965
  %4010 = vmatpush.bf16.msra.mxu0 %v2961
  %4011 = vmatpush.bf16.msra.mxu0 %v2957
  %4012 = vmatpush.bf16.msra.mxu0 %v2953
  %4013 = vmatpush.bf16.msra.mxu0 %v2949
  %4014 = vmatpush.bf16.msra.mxu0 %v2945
  %4015 = vmatmul.bf16.gmra.mxu0 %v653
  %v4016 = vpop.f32.mrf.mxu0
  %v4017 = vadd.f32 %v4004, %v4016
  %v4018 = vpop.f32.mrf.mxu0
  %4019 = vdwg.mxu0
  %4020 = vmatpush.bf16.msra.mxu0 %v2430
  %4021 = vmatpush.bf16.msra.mxu0 %v2426
  %4022 = vmatpush.bf16.msra.mxu0 %v2422
  %4023 = vmatpush.bf16.msra.mxu0 %v2418
  %4024 = vmatpush.bf16.msra.mxu0 %v2414
  %4025 = vmatpush.bf16.msra.mxu0 %v2410
  %4026 = vmatpush.bf16.msra.mxu0 %v2406
  %4027 = vmatpush.bf16.msra.mxu0 %v2402
  %4028 = vmatmul.bf16.gmra.mxu0 %v636
  %v4029 = vpop.f32.mrf.mxu0
  %v4030 = vadd.f32 %v603, %v4029
  %v4031 = vpop.f32.mrf.mxu0
  %4032 = vdwg.mxu0
  %4033 = vmatpush.bf16.msra.mxu0 %v2462
  %4034 = vmatpush.bf16.msra.mxu0 %v2458
  %4035 = vmatpush.bf16.msra.mxu0 %v2454
  %4036 = vmatpush.bf16.msra.mxu0 %v2450
  %4037 = vmatpush.bf16.msra.mxu0 %v2446
  %4038 = vmatpush.bf16.msra.mxu0 %v2442
  %4039 = vmatpush.bf16.msra.mxu0 %v2438
  %4040 = vmatpush.bf16.msra.mxu0 %v2434
  %4041 = vmatmul.bf16.gmra.mxu0 %v637
  %v4042 = vpop.f32.mrf.mxu0
  %v4043 = vadd.f32 %v4030, %v4042
  %v4044 = vpop.f32.mrf.mxu0
  %4045 = vdwg.mxu0
  %4046 = vmatpush.bf16.msra.mxu0 %v2494
  %4047 = vmatpush.bf16.msra.mxu0 %v2490
  %4048 = vmatpush.bf16.msra.mxu0 %v2486
  %4049 = vmatpush.bf16.msra.mxu0 %v2482
  %4050 = vmatpush.bf16.msra.mxu0 %v2478
  %4051 = vmatpush.bf16.msra.mxu0 %v2474
  %4052 = vmatpush.bf16.msra.mxu0 %v2470
  %4053 = vmatpush.bf16.msra.mxu0 %v2466
  %4054 = vmatmul.bf16.gmra.mxu0 %v638
  %v4055 = vpop.f32.mrf.mxu0
  %v4056 = vadd.f32 %v4043, %v4055
  %v4057 = vpop.f32.mrf.mxu0
  %4058 = vdwg.mxu0
  %4059 = vmatpush.bf16.msra.mxu0 %v2526
  %4060 = vmatpush.bf16.msra.mxu0 %v2522
  %4061 = vmatpush.bf16.msra.mxu0 %v2518
  %4062 = vmatpush.bf16.msra.mxu0 %v2514
  %4063 = vmatpush.bf16.msra.mxu0 %v2510
  %4064 = vmatpush.bf16.msra.mxu0 %v2506
  %4065 = vmatpush.bf16.msra.mxu0 %v2502
  %4066 = vmatpush.bf16.msra.mxu0 %v2498
  %4067 = vmatmul.bf16.gmra.mxu0 %v639
  %v4068 = vpop.f32.mrf.mxu0
  %v4069 = vadd.f32 %v4056, %v4068
  %v4070 = vpop.f32.mrf.mxu0
  %4071 = vdwg.mxu0
  %4072 = vmatpush.bf16.msra.mxu0 %v2558
  %4073 = vmatpush.bf16.msra.mxu0 %v2554
  %4074 = vmatpush.bf16.msra.mxu0 %v2550
  %4075 = vmatpush.bf16.msra.mxu0 %v2546
  %4076 = vmatpush.bf16.msra.mxu0 %v2542
  %4077 = vmatpush.bf16.msra.mxu0 %v2538
  %4078 = vmatpush.bf16.msra.mxu0 %v2534
  %4079 = vmatpush.bf16.msra.mxu0 %v2530
  %4080 = vmatmul.bf16.gmra.mxu0 %v640
  %v4081 = vpop.f32.mrf.mxu0
  %v4082 = vadd.f32 %v4069, %v4081
  %v4083 = vpop.f32.mrf.mxu0
  %4084 = vdwg.mxu0
  %4085 = vmatpush.bf16.msra.mxu0 %v2590
  %4086 = vmatpush.bf16.msra.mxu0 %v2586
  %4087 = vmatpush.bf16.msra.mxu0 %v2582
  %4088 = vmatpush.bf16.msra.mxu0 %v2578
  %4089 = vmatpush.bf16.msra.mxu0 %v2574
  %4090 = vmatpush.bf16.msra.mxu0 %v2570
  %4091 = vmatpush.bf16.msra.mxu0 %v2566
  %4092 = vmatpush.bf16.msra.mxu0 %v2562
  %4093 = vmatmul.bf16.gmra.mxu0 %v641
  %v4094 = vpop.f32.mrf.mxu0
  %v4095 = vadd.f32 %v4082, %v4094
  %v4096 = vpop.f32.mrf.mxu0
  %4097 = vdwg.mxu0
  %4098 = vmatpush.bf16.msra.mxu0 %v2622
  %4099 = vmatpush.bf16.msra.mxu0 %v2618
  %4100 = vmatpush.bf16.msra.mxu0 %v2614
  %4101 = vmatpush.bf16.msra.mxu0 %v2610
  %4102 = vmatpush.bf16.msra.mxu0 %v2606
  %4103 = vmatpush.bf16.msra.mxu0 %v2602
  %4104 = vmatpush.bf16.msra.mxu0 %v2598
  %4105 = vmatpush.bf16.msra.mxu0 %v2594
  %4106 = vmatmul.bf16.gmra.mxu0 %v642
  %v4107 = vpop.f32.mrf.mxu0
  %v4108 = vadd.f32 %v4095, %v4107
  %v4109 = vpop.f32.mrf.mxu0
  %4110 = vdwg.mxu0
  %4111 = vmatpush.bf16.msra.mxu0 %v2654
  %4112 = vmatpush.bf16.msra.mxu0 %v2650
  %4113 = vmatpush.bf16.msra.mxu0 %v2646
  %4114 = vmatpush.bf16.msra.mxu0 %v2642
  %4115 = vmatpush.bf16.msra.mxu0 %v2638
  %4116 = vmatpush.bf16.msra.mxu0 %v2634
  %4117 = vmatpush.bf16.msra.mxu0 %v2630
  %4118 = vmatpush.bf16.msra.mxu0 %v2626
  %4119 = vmatmul.bf16.gmra.mxu0 %v643
  %v4120 = vpop.f32.mrf.mxu0
  %v4121 = vadd.f32 %v4108, %v4120
  %v4122 = vpop.f32.mrf.mxu0
  %4123 = vdwg.mxu0
  %4124 = vmatpush.bf16.msra.mxu0 %v2686
  %4125 = vmatpush.bf16.msra.mxu0 %v2682
  %4126 = vmatpush.bf16.msra.mxu0 %v2678
  %4127 = vmatpush.bf16.msra.mxu0 %v2674
  %4128 = vmatpush.bf16.msra.mxu0 %v2670
  %4129 = vmatpush.bf16.msra.mxu0 %v2666
  %4130 = vmatpush.bf16.msra.mxu0 %v2662
  %4131 = vmatpush.bf16.msra.mxu0 %v2658
  %4132 = vmatmul.bf16.gmra.mxu0 %v644
  %v4133 = vpop.f32.mrf.mxu0
  %v4134 = vadd.f32 %v4121, %v4133
  %v4135 = vpop.f32.mrf.mxu0
  %4136 = vdwg.mxu0
  %4137 = vmatpush.bf16.msra.mxu0 %v2718
  %4138 = vmatpush.bf16.msra.mxu0 %v2714
  %4139 = vmatpush.bf16.msra.mxu0 %v2710
  %4140 = vmatpush.bf16.msra.mxu0 %v2706
  %4141 = vmatpush.bf16.msra.mxu0 %v2702
  %4142 = vmatpush.bf16.msra.mxu0 %v2698
  %4143 = vmatpush.bf16.msra.mxu0 %v2694
  %4144 = vmatpush.bf16.msra.mxu0 %v2690
  %4145 = vmatmul.bf16.gmra.mxu0 %v645
  %v4146 = vpop.f32.mrf.mxu0
  %v4147 = vadd.f32 %v4134, %v4146
  %v4148 = vpop.f32.mrf.mxu0
  %4149 = vdwg.mxu0
  %4150 = vmatpush.bf16.msra.mxu0 %v2750
  %4151 = vmatpush.bf16.msra.mxu0 %v2746
  %4152 = vmatpush.bf16.msra.mxu0 %v2742
  %4153 = vmatpush.bf16.msra.mxu0 %v2738
  %4154 = vmatpush.bf16.msra.mxu0 %v2734
  %4155 = vmatpush.bf16.msra.mxu0 %v2730
  %4156 = vmatpush.bf16.msra.mxu0 %v2726
  %4157 = vmatpush.bf16.msra.mxu0 %v2722
  %4158 = vmatmul.bf16.gmra.mxu0 %v646
  %v4159 = vpop.f32.mrf.mxu0
  %v4160 = vadd.f32 %v4147, %v4159
  %v4161 = vpop.f32.mrf.mxu0
  %4162 = vdwg.mxu0
  %4163 = vmatpush.bf16.msra.mxu0 %v2782
  %4164 = vmatpush.bf16.msra.mxu0 %v2778
  %4165 = vmatpush.bf16.msra.mxu0 %v2774
  %4166 = vmatpush.bf16.msra.mxu0 %v2770
  %4167 = vmatpush.bf16.msra.mxu0 %v2766
  %4168 = vmatpush.bf16.msra.mxu0 %v2762
  %4169 = vmatpush.bf16.msra.mxu0 %v2758
  %4170 = vmatpush.bf16.msra.mxu0 %v2754
  %4171 = vmatmul.bf16.gmra.mxu0 %v647
  %v4172 = vpop.f32.mrf.mxu0
  %v4173 = vadd.f32 %v4160, %v4172
  %v4174 = vpop.f32.mrf.mxu0
  %4175 = vdwg.mxu0
  %4176 = vmatpush.bf16.msra.mxu0 %v2814
  %4177 = vmatpush.bf16.msra.mxu0 %v2810
  %4178 = vmatpush.bf16.msra.mxu0 %v2806
  %4179 = vmatpush.bf16.msra.mxu0 %v2802
  %4180 = vmatpush.bf16.msra.mxu0 %v2798
  %4181 = vmatpush.bf16.msra.mxu0 %v2794
  %4182 = vmatpush.bf16.msra.mxu0 %v2790
  %4183 = vmatpush.bf16.msra.mxu0 %v2786
  %4184 = vmatmul.bf16.gmra.mxu0 %v648
  %v4185 = vpop.f32.mrf.mxu0
  %v4186 = vadd.f32 %v4173, %v4185
  %v4187 = vpop.f32.mrf.mxu0
  %4188 = vdwg.mxu0
  %4189 = vmatpush.bf16.msra.mxu0 %v2846
  %4190 = vmatpush.bf16.msra.mxu0 %v2842
  %4191 = vmatpush.bf16.msra.mxu0 %v2838
  %4192 = vmatpush.bf16.msra.mxu0 %v2834
  %4193 = vmatpush.bf16.msra.mxu0 %v2830
  %4194 = vmatpush.bf16.msra.mxu0 %v2826
  %4195 = vmatpush.bf16.msra.mxu0 %v2822
  %4196 = vmatpush.bf16.msra.mxu0 %v2818
  %4197 = vmatmul.bf16.gmra.mxu0 %v649
  %v4198 = vpop.f32.mrf.mxu0
  %v4199 = vadd.f32 %v4186, %v4198
  %v4200 = vpop.f32.mrf.mxu0
  %4201 = vdwg.mxu0
  %4202 = vmatpush.bf16.msra.mxu0 %v2878
  %4203 = vmatpush.bf16.msra.mxu0 %v2874
  %4204 = vmatpush.bf16.msra.mxu0 %v2870
  %4205 = vmatpush.bf16.msra.mxu0 %v2866
  %4206 = vmatpush.bf16.msra.mxu0 %v2862
  %4207 = vmatpush.bf16.msra.mxu0 %v2858
  %4208 = vmatpush.bf16.msra.mxu0 %v2854
  %4209 = vmatpush.bf16.msra.mxu0 %v2850
  %4210 = vmatmul.bf16.gmra.mxu0 %v650
  %v4211 = vpop.f32.mrf.mxu0
  %v4212 = vadd.f32 %v4199, %v4211
  %v4213 = vpop.f32.mrf.mxu0
  %4214 = vdwg.mxu0
  %4215 = vmatpush.bf16.msra.mxu0 %v2910
  %4216 = vmatpush.bf16.msra.mxu0 %v2906
  %4217 = vmatpush.bf16.msra.mxu0 %v2902
  %4218 = vmatpush.bf16.msra.mxu0 %v2898
  %4219 = vmatpush.bf16.msra.mxu0 %v2894
  %4220 = vmatpush.bf16.msra.mxu0 %v2890
  %4221 = vmatpush.bf16.msra.mxu0 %v2886
  %4222 = vmatpush.bf16.msra.mxu0 %v2882
  %4223 = vmatmul.bf16.gmra.mxu0 %v651
  %v4224 = vpop.f32.mrf.mxu0
  %v4225 = vadd.f32 %v4212, %v4224
  %v4226 = vpop.f32.mrf.mxu0
  %4227 = vdwg.mxu0
  %4228 = vmatpush.bf16.msra.mxu0 %v2942
  %4229 = vmatpush.bf16.msra.mxu0 %v2938
  %4230 = vmatpush.bf16.msra.mxu0 %v2934
  %4231 = vmatpush.bf16.msra.mxu0 %v2930
  %4232 = vmatpush.bf16.msra.mxu0 %v2926
  %4233 = vmatpush.bf16.msra.mxu0 %v2922
  %4234 = vmatpush.bf16.msra.mxu0 %v2918
  %4235 = vmatpush.bf16.msra.mxu0 %v2914
  %4236 = vmatmul.bf16.gmra.mxu0 %v652
  %v4237 = vpop.f32.mrf.mxu0
  %v4238 = vadd.f32 %v4225, %v4237
  %v4239 = vpop.f32.mrf.mxu0
  %4240 = vdwg.mxu0
  %4241 = vmatpush.bf16.msra.mxu0 %v2974
  %4242 = vmatpush.bf16.msra.mxu0 %v2970
  %4243 = vmatpush.bf16.msra.mxu0 %v2966
  %4244 = vmatpush.bf16.msra.mxu0 %v2962
  %4245 = vmatpush.bf16.msra.mxu0 %v2958
  %4246 = vmatpush.bf16.msra.mxu0 %v2954
  %4247 = vmatpush.bf16.msra.mxu0 %v2950
  %4248 = vmatpush.bf16.msra.mxu0 %v2946
  %4249 = vmatmul.bf16.gmra.mxu0 %v653
  %v4250 = vpop.f32.mrf.mxu0
  %v4251 = vadd.f32 %v4238, %v4250
  %v4252 = vpop.f32.mrf.mxu0
  %4253 = vdwg.mxu0
  %4254 = vmatpush.bf16.msra.mxu0 %v2431
  %4255 = vmatpush.bf16.msra.mxu0 %v2427
  %4256 = vmatpush.bf16.msra.mxu0 %v2423
  %4257 = vmatpush.bf16.msra.mxu0 %v2419
  %4258 = vmatpush.bf16.msra.mxu0 %v2415
  %4259 = vmatpush.bf16.msra.mxu0 %v2411
  %4260 = vmatpush.bf16.msra.mxu0 %v2407
  %4261 = vmatpush.bf16.msra.mxu0 %v2403
  %4262 = vmatmul.bf16.gmra.mxu0 %v636
  %v4263 = vpop.f32.mrf.mxu0
  %v4264 = vadd.f32 %v604, %v4263
  %v4265 = vpop.f32.mrf.mxu0
  %4266 = vdwg.mxu0
  %4267 = vmatpush.bf16.msra.mxu0 %v2463
  %4268 = vmatpush.bf16.msra.mxu0 %v2459
  %4269 = vmatpush.bf16.msra.mxu0 %v2455
  %4270 = vmatpush.bf16.msra.mxu0 %v2451
  %4271 = vmatpush.bf16.msra.mxu0 %v2447
  %4272 = vmatpush.bf16.msra.mxu0 %v2443
  %4273 = vmatpush.bf16.msra.mxu0 %v2439
  %4274 = vmatpush.bf16.msra.mxu0 %v2435
  %4275 = vmatmul.bf16.gmra.mxu0 %v637
  %v4276 = vpop.f32.mrf.mxu0
  %v4277 = vadd.f32 %v4264, %v4276
  %v4278 = vpop.f32.mrf.mxu0
  %4279 = vdwg.mxu0
  %4280 = vmatpush.bf16.msra.mxu0 %v2495
  %4281 = vmatpush.bf16.msra.mxu0 %v2491
  %4282 = vmatpush.bf16.msra.mxu0 %v2487
  %4283 = vmatpush.bf16.msra.mxu0 %v2483
  %4284 = vmatpush.bf16.msra.mxu0 %v2479
  %4285 = vmatpush.bf16.msra.mxu0 %v2475
  %4286 = vmatpush.bf16.msra.mxu0 %v2471
  %4287 = vmatpush.bf16.msra.mxu0 %v2467
  %4288 = vmatmul.bf16.gmra.mxu0 %v638
  %v4289 = vpop.f32.mrf.mxu0
  %v4290 = vadd.f32 %v4277, %v4289
  %v4291 = vpop.f32.mrf.mxu0
  %4292 = vdwg.mxu0
  %4293 = vmatpush.bf16.msra.mxu0 %v2527
  %4294 = vmatpush.bf16.msra.mxu0 %v2523
  %4295 = vmatpush.bf16.msra.mxu0 %v2519
  %4296 = vmatpush.bf16.msra.mxu0 %v2515
  %4297 = vmatpush.bf16.msra.mxu0 %v2511
  %4298 = vmatpush.bf16.msra.mxu0 %v2507
  %4299 = vmatpush.bf16.msra.mxu0 %v2503
  %4300 = vmatpush.bf16.msra.mxu0 %v2499
  %4301 = vmatmul.bf16.gmra.mxu0 %v639
  %v4302 = vpop.f32.mrf.mxu0
  %v4303 = vadd.f32 %v4290, %v4302
  %v4304 = vpop.f32.mrf.mxu0
  %4305 = vdwg.mxu0
  %4306 = vmatpush.bf16.msra.mxu0 %v2559
  %4307 = vmatpush.bf16.msra.mxu0 %v2555
  %4308 = vmatpush.bf16.msra.mxu0 %v2551
  %4309 = vmatpush.bf16.msra.mxu0 %v2547
  %4310 = vmatpush.bf16.msra.mxu0 %v2543
  %4311 = vmatpush.bf16.msra.mxu0 %v2539
  %4312 = vmatpush.bf16.msra.mxu0 %v2535
  %4313 = vmatpush.bf16.msra.mxu0 %v2531
  %4314 = vmatmul.bf16.gmra.mxu0 %v640
  %v4315 = vpop.f32.mrf.mxu0
  %v4316 = vadd.f32 %v4303, %v4315
  %v4317 = vpop.f32.mrf.mxu0
  %4318 = vdwg.mxu0
  %4319 = vmatpush.bf16.msra.mxu0 %v2591
  %4320 = vmatpush.bf16.msra.mxu0 %v2587
  %4321 = vmatpush.bf16.msra.mxu0 %v2583
  %4322 = vmatpush.bf16.msra.mxu0 %v2579
  %4323 = vmatpush.bf16.msra.mxu0 %v2575
  %4324 = vmatpush.bf16.msra.mxu0 %v2571
  %4325 = vmatpush.bf16.msra.mxu0 %v2567
  %4326 = vmatpush.bf16.msra.mxu0 %v2563
  %4327 = vmatmul.bf16.gmra.mxu0 %v641
  %v4328 = vpop.f32.mrf.mxu0
  %v4329 = vadd.f32 %v4316, %v4328
  %v4330 = vpop.f32.mrf.mxu0
  %4331 = vdwg.mxu0
  %4332 = vmatpush.bf16.msra.mxu0 %v2623
  %4333 = vmatpush.bf16.msra.mxu0 %v2619
  %4334 = vmatpush.bf16.msra.mxu0 %v2615
  %4335 = vmatpush.bf16.msra.mxu0 %v2611
  %4336 = vmatpush.bf16.msra.mxu0 %v2607
  %4337 = vmatpush.bf16.msra.mxu0 %v2603
  %4338 = vmatpush.bf16.msra.mxu0 %v2599
  %4339 = vmatpush.bf16.msra.mxu0 %v2595
  %4340 = vmatmul.bf16.gmra.mxu0 %v642
  %v4341 = vpop.f32.mrf.mxu0
  %v4342 = vadd.f32 %v4329, %v4341
  %v4343 = vpop.f32.mrf.mxu0
  %4344 = vdwg.mxu0
  %4345 = vmatpush.bf16.msra.mxu0 %v2655
  %4346 = vmatpush.bf16.msra.mxu0 %v2651
  %4347 = vmatpush.bf16.msra.mxu0 %v2647
  %4348 = vmatpush.bf16.msra.mxu0 %v2643
  %4349 = vmatpush.bf16.msra.mxu0 %v2639
  %4350 = vmatpush.bf16.msra.mxu0 %v2635
  %4351 = vmatpush.bf16.msra.mxu0 %v2631
  %4352 = vmatpush.bf16.msra.mxu0 %v2627
  %4353 = vmatmul.bf16.gmra.mxu0 %v643
  %v4354 = vpop.f32.mrf.mxu0
  %v4355 = vadd.f32 %v4342, %v4354
  %v4356 = vpop.f32.mrf.mxu0
  %4357 = vdwg.mxu0
  %4358 = vmatpush.bf16.msra.mxu0 %v2687
  %4359 = vmatpush.bf16.msra.mxu0 %v2683
  %4360 = vmatpush.bf16.msra.mxu0 %v2679
  %4361 = vmatpush.bf16.msra.mxu0 %v2675
  %4362 = vmatpush.bf16.msra.mxu0 %v2671
  %4363 = vmatpush.bf16.msra.mxu0 %v2667
  %4364 = vmatpush.bf16.msra.mxu0 %v2663
  %4365 = vmatpush.bf16.msra.mxu0 %v2659
  %4366 = vmatmul.bf16.gmra.mxu0 %v644
  %v4367 = vpop.f32.mrf.mxu0
  %v4368 = vadd.f32 %v4355, %v4367
  %v4369 = vpop.f32.mrf.mxu0
  %4370 = vdwg.mxu0
  %4371 = vmatpush.bf16.msra.mxu0 %v2719
  %4372 = vmatpush.bf16.msra.mxu0 %v2715
  %4373 = vmatpush.bf16.msra.mxu0 %v2711
  %4374 = vmatpush.bf16.msra.mxu0 %v2707
  %4375 = vmatpush.bf16.msra.mxu0 %v2703
  %4376 = vmatpush.bf16.msra.mxu0 %v2699
  %4377 = vmatpush.bf16.msra.mxu0 %v2695
  %4378 = vmatpush.bf16.msra.mxu0 %v2691
  %4379 = vmatmul.bf16.gmra.mxu0 %v645
  %v4380 = vpop.f32.mrf.mxu0
  %v4381 = vadd.f32 %v4368, %v4380
  %v4382 = vpop.f32.mrf.mxu0
  %4383 = vdwg.mxu0
  %4384 = vmatpush.bf16.msra.mxu0 %v2751
  %4385 = vmatpush.bf16.msra.mxu0 %v2747
  %4386 = vmatpush.bf16.msra.mxu0 %v2743
  %4387 = vmatpush.bf16.msra.mxu0 %v2739
  %4388 = vmatpush.bf16.msra.mxu0 %v2735
  %4389 = vmatpush.bf16.msra.mxu0 %v2731
  %4390 = vmatpush.bf16.msra.mxu0 %v2727
  %4391 = vmatpush.bf16.msra.mxu0 %v2723
  %4392 = vmatmul.bf16.gmra.mxu0 %v646
  %v4393 = vpop.f32.mrf.mxu0
  %v4394 = vadd.f32 %v4381, %v4393
  %v4395 = vpop.f32.mrf.mxu0
  %4396 = vdwg.mxu0
  %4397 = vmatpush.bf16.msra.mxu0 %v2783
  %4398 = vmatpush.bf16.msra.mxu0 %v2779
  %4399 = vmatpush.bf16.msra.mxu0 %v2775
  %4400 = vmatpush.bf16.msra.mxu0 %v2771
  %4401 = vmatpush.bf16.msra.mxu0 %v2767
  %4402 = vmatpush.bf16.msra.mxu0 %v2763
  %4403 = vmatpush.bf16.msra.mxu0 %v2759
  %4404 = vmatpush.bf16.msra.mxu0 %v2755
  %4405 = vmatmul.bf16.gmra.mxu0 %v647
  %v4406 = vpop.f32.mrf.mxu0
  %v4407 = vadd.f32 %v4394, %v4406
  %v4408 = vpop.f32.mrf.mxu0
  %4409 = vdwg.mxu0
  %4410 = vmatpush.bf16.msra.mxu0 %v2815
  %4411 = vmatpush.bf16.msra.mxu0 %v2811
  %4412 = vmatpush.bf16.msra.mxu0 %v2807
  %4413 = vmatpush.bf16.msra.mxu0 %v2803
  %4414 = vmatpush.bf16.msra.mxu0 %v2799
  %4415 = vmatpush.bf16.msra.mxu0 %v2795
  %4416 = vmatpush.bf16.msra.mxu0 %v2791
  %4417 = vmatpush.bf16.msra.mxu0 %v2787
  %4418 = vmatmul.bf16.gmra.mxu0 %v648
  %v4419 = vpop.f32.mrf.mxu0
  %v4420 = vadd.f32 %v4407, %v4419
  %v4421 = vpop.f32.mrf.mxu0
  %4422 = vdwg.mxu0
  %4423 = vmatpush.bf16.msra.mxu0 %v2847
  %4424 = vmatpush.bf16.msra.mxu0 %v2843
  %4425 = vmatpush.bf16.msra.mxu0 %v2839
  %4426 = vmatpush.bf16.msra.mxu0 %v2835
  %4427 = vmatpush.bf16.msra.mxu0 %v2831
  %4428 = vmatpush.bf16.msra.mxu0 %v2827
  %4429 = vmatpush.bf16.msra.mxu0 %v2823
  %4430 = vmatpush.bf16.msra.mxu0 %v2819
  %4431 = vmatmul.bf16.gmra.mxu0 %v649
  %v4432 = vpop.f32.mrf.mxu0
  %v4433 = vadd.f32 %v4420, %v4432
  %v4434 = vpop.f32.mrf.mxu0
  %4435 = vdwg.mxu0
  %4436 = vmatpush.bf16.msra.mxu0 %v2879
  %4437 = vmatpush.bf16.msra.mxu0 %v2875
  %4438 = vmatpush.bf16.msra.mxu0 %v2871
  %4439 = vmatpush.bf16.msra.mxu0 %v2867
  %4440 = vmatpush.bf16.msra.mxu0 %v2863
  %4441 = vmatpush.bf16.msra.mxu0 %v2859
  %4442 = vmatpush.bf16.msra.mxu0 %v2855
  %4443 = vmatpush.bf16.msra.mxu0 %v2851
  %4444 = vmatmul.bf16.gmra.mxu0 %v650
  %v4445 = vpop.f32.mrf.mxu0
  %v4446 = vadd.f32 %v4433, %v4445
  %v4447 = vpop.f32.mrf.mxu0
  %4448 = vdwg.mxu0
  %4449 = vmatpush.bf16.msra.mxu0 %v2911
  %4450 = vmatpush.bf16.msra.mxu0 %v2907
  %4451 = vmatpush.bf16.msra.mxu0 %v2903
  %4452 = vmatpush.bf16.msra.mxu0 %v2899
  %4453 = vmatpush.bf16.msra.mxu0 %v2895
  %4454 = vmatpush.bf16.msra.mxu0 %v2891
  %4455 = vmatpush.bf16.msra.mxu0 %v2887
  %4456 = vmatpush.bf16.msra.mxu0 %v2883
  %4457 = vmatmul.bf16.gmra.mxu0 %v651
  %v4458 = vpop.f32.mrf.mxu0
  %v4459 = vadd.f32 %v4446, %v4458
  %v4460 = vpop.f32.mrf.mxu0
  %4461 = vdwg.mxu0
  %4462 = vmatpush.bf16.msra.mxu0 %v2943
  %4463 = vmatpush.bf16.msra.mxu0 %v2939
  %4464 = vmatpush.bf16.msra.mxu0 %v2935
  %4465 = vmatpush.bf16.msra.mxu0 %v2931
  %4466 = vmatpush.bf16.msra.mxu0 %v2927
  %4467 = vmatpush.bf16.msra.mxu0 %v2923
  %4468 = vmatpush.bf16.msra.mxu0 %v2919
  %4469 = vmatpush.bf16.msra.mxu0 %v2915
  %4470 = vmatmul.bf16.gmra.mxu0 %v652
  %v4471 = vpop.f32.mrf.mxu0
  %v4472 = vadd.f32 %v4459, %v4471
  %v4473 = vpop.f32.mrf.mxu0
  %4474 = vdwg.mxu0
  %4475 = vmatpush.bf16.msra.mxu0 %v2975
  %4476 = vmatpush.bf16.msra.mxu0 %v2971
  %4477 = vmatpush.bf16.msra.mxu0 %v2967
  %4478 = vmatpush.bf16.msra.mxu0 %v2963
  %4479 = vmatpush.bf16.msra.mxu0 %v2959
  %4480 = vmatpush.bf16.msra.mxu0 %v2955
  %4481 = vmatpush.bf16.msra.mxu0 %v2951
  %4482 = vmatpush.bf16.msra.mxu0 %v2947
  %4483 = vmatmul.bf16.gmra.mxu0 %v653
  %v4484 = vpop.f32.mrf.mxu0
  %v4485 = vadd.f32 %v4472, %v4484
  %v4486 = vpop.f32.mrf.mxu0
  %4487 = vdwg.mxu0
  %v4488 = vmax.f32 %v3783, 0.0
  %v4489 = vmax.f32 %v4017, 0.0
  %v4490 = vmax.f32 %v4251, 0.0
  %v4491 = vmax.f32 %v4485, 0.0
  %v4492 = vpack.c.bf16 %v4489, %v4488
  %v4493 = vpack.c.bf16 %v4491, %v4490
  %4494 = vst [vmem:[%s3] sm:$0xff] %v4492
  %4495 = vst [vmem:[%s3 + $0x8] sm:$0xff] %v4493
  // Predicated region
  $region14: #{_lambda_.16} parent=0 // pred_check
    _
  $region15: #{_lambda_.16} parent=0 // pred_check_branch
    %4497 = sbr.rel (0) target = $region17
  $region16: #{_lambda_.16} parent=0 // pred_region
    _
  $region17: #{_lambda_.16} parent=0 // pred_fallthru
    _
  // Predicated region
  $region18: #{_lambda_.16} parent=0 // pred_check
    _
  $region19: #{_lambda_.16} parent=0 // pred_check_branch
    %4499 = sbr.rel (0) target = $region21
  $region20: #{_lambda_.16} parent=0 // pred_region
    _
  $region21: #{_lambda_.16} parent=0 // pred_fallthru
    _

// kernel: _lambda_.18
$region0: #{_lambda_.18}
  #allocation0 [shape = 'u32[]', space=smem, size = 0x4, offset = 0x4, fixed_abs, tag = 'smem constant byte address 0x4 - core index']
  #allocation1 [shape = 'u32[72,128]{1,0:T(1,128)}', space=vmem, size = 0x9000, scoped, tag = 'internal scratch']
  %s0 = inlined_call_operand.vmem [shape: bf16[128,576], index: 0, kind: input, shape index: {}]
  %s1 = inlined_call_operand.vmem [shape: bf16[576,128], index: 1, kind: input, shape index: {}]
  %s2 = inlined_call_operand.vmem [shape: f32[1,128], index: 2, kind: input, shape index: {}]
  %s3 = inlined_call_operand.vmem [shape: bf16[128,128], index: 3, kind: output, shape index: {}]
  %s4 = sld [smem:[#allocation0]]
  $region22: #{_lambda_.18} parent=0
    _
  %s6 = ssub.s32 1, %s4
  %s7 = scalar_select 0, %s6, %s4
  // Predicated region
  $region2: #{_lambda_.18} parent=0 // pred_check
    _
  $region3: #{_lambda_.18} parent=0 // pred_check_branch
    %9 = sbr.rel (0) target = $region5
  $region4: #{_lambda_.18} parent=0 // pred_region
    _
  $region5: #{_lambda_.18} parent=0 // pred_fallthru
    _
  // Predicated region
  $region6: #{_lambda_.18} parent=0 // pred_check
    _
  $region7: #{_lambda_.18} parent=0 // pred_check_branch
    %11 = sbr.rel (0) target = $region9
  $region8: #{_lambda_.18} parent=0 // pred_region
    _
  $region9: #{_lambda_.18} parent=0 // pred_fallthru
    _
  // Predicated region
  $region10: #{_lambda_.18} parent=0 // pred_check
    _
  $region11: #{_lambda_.18} parent=0 // pred_check_branch
    %13 = sbr.rel (0) target = $region13
  $region12: #{_lambda_.18} parent=0 // pred_region
    _
  $region13: #{_lambda_.18} parent=0 // pred_fallthru
    _
  %v15 = vld [vmem:[%s0] sm:$0xff]
  %v16 = vld [vmem:[%s0 + $0x8] sm:$0xff]
  %v17 = vld [vmem:[%s0 + $0x10] sm:$0xf]
  %v18 = vld [vmem:[%s0 + $0x14] sm:$0xff]
  %v19 = vld [vmem:[%s0 + $0x1c] sm:$0xff]
  %v20 = vld [vmem:[%s0 + $0x24] sm:$0xf]
  %v21 = vld [vmem:[%s0 + $0x28] sm:$0xff]
  %v22 = vld [vmem:[%s0 + $0x30] sm:$0xff]
  %v23 = vld [vmem:[%s0 + $0x38] sm:$0xf]
  %v24 = vld [vmem:[%s0 + $0x3c] sm:$0xff]
  %v25 = vld [vmem:[%s0 + $0x44] sm:$0xff]
  %v26 = vld [vmem:[%s0 + $0x4c] sm:$0xf]
  %v27 = vld [vmem:[%s0 + $0x50] sm:$0xff]
  %v28 = vld [vmem:[%s0 + $0x58] sm:$0xff]
  %v29 = vld [vmem:[%s0 + $0x60] sm:$0xf]
  %v30 = vld [vmem:[%s0 + $0x64] sm:$0xff]
  %v31 = vld [vmem:[%s0 + $0x6c] sm:$0xff]
  %v32 = vld [vmem:[%s0 + $0x74] sm:$0xf]
  %v33 = vld [vmem:[%s0 + $0x78] sm:$0xff]
  %v34 = vld [vmem:[%s0 + $0x80] sm:$0xff]
  %v35 = vld [vmem:[%s0 + $0x88] sm:$0xf]
  %v36 = vld [vmem:[%s0 + $0x8c] sm:$0xff]
  %v37 = vld [vmem:[%s0 + $0x94] sm:$0xff]
  %v38 = vld [vmem:[%s0 + $0x9c] sm:$0xf]
  %v39 = vld [vmem:[%s0 + $0xa0] sm:$0xff]
  %v40 = vld [vmem:[%s0 + $0xa8] sm:$0xff]
  %v41 = vld [vmem:[%s0 + $0xb0] sm:$0xf]
  %v42 = vld [vmem:[%s0 + $0xb4] sm:$0xff]
  %v43 = vld [vmem:[%s0 + $0xbc] sm:$0xff]
  %v44 = vld [vmem:[%s0 + $0xc4] sm:$0xf]
  %v45 = vld [vmem:[%s0 + $0xc8] sm:$0xff]
  %v46 = vld [vmem:[%s0 + $0xd0] sm:$0xff]
  %v47 = vld [vmem:[%s0 + $0xd8] sm:$0xf]
  %v48 = vld [vmem:[%s0 + $0xdc] sm:$0xff]
  %v49 = vld [vmem:[%s0 + $0xe4] sm:$0xff]
  %v50 = vld [vmem:[%s0 + $0xec] sm:$0xf]
  %v51 = vld [vmem:[%s0 + $0xf0] sm:$0xff]
  %v52 = vld [vmem:[%s0 + $0xf8] sm:$0xff]
  %v53 = vld [vmem:[%s0 + $0x100] sm:$0xf]
  %v54 = vld [vmem:[%s0 + $0x104] sm:$0xff]
  %v55 = vld [vmem:[%s0 + $0x10c] sm:$0xff]
  %v56 = vld [vmem:[%s0 + $0x114] sm:$0xf]
  %v57 = vld [vmem:[%s0 + $0x118] sm:$0xff]
  %v58 = vld [vmem:[%s0 + $0x120] sm:$0xff]
  %v59 = vld [vmem:[%s0 + $0x128] sm:$0xf]
  %v60 = vld [vmem:[%s0 + $0x12c] sm:$0xff]
  %v61 = vld [vmem:[%s0 + $0x134] sm:$0xff]
  %v62 = vld [vmem:[%s0 + $0x13c] sm:$0xf]
  %v63 = vld [vmem:[%s1] sm:$0xf]
  %v64 = vld [vmem:[%s1 + $0x4] sm:$0xf]
  %v65 = vld [vmem:[%s1 + $0x8] sm:$0xf]
  %v66 = vld [vmem:[%s1 + $0xc] sm:$0xf]
  %v67 = vld [vmem:[%s1 + $0x10] sm:$0xf]
  %v68 = vld [vmem:[%s1 + $0x14] sm:$0xf]
  %v69 = vld [vmem:[%s1 + $0x18] sm:$0xf]
  %v70 = vld [vmem:[%s1 + $0x1c] sm:$0xf]
  %v71 = vld [vmem:[%s1 + $0x20] sm:$0xf]
  %v72 = vld [vmem:[%s1 + $0x24] sm:$0xf]
  %v73 = vld [vmem:[%s1 + $0x28] sm:$0xf]
  %v74 = vld [vmem:[%s1 + $0x2c] sm:$0xf]
  %v75 = vld [vmem:[%s1 + $0x30] sm:$0xf]
  %v76 = vld [vmem:[%s1 + $0x34] sm:$0xf]
  %v77 = vld [vmem:[%s1 + $0x38] sm:$0xf]
  %v78 = vld [vmem:[%s1 + $0x3c] sm:$0xf]
  %v79 = vld [vmem:[%s1 + $0x40] sm:$0xf]
  %v80 = vld [vmem:[%s1 + $0x44] sm:$0xf]
  %v81 = vld [vmem:[%s1 + $0x48] sm:$0xf]
  %v82 = vld [vmem:[%s1 + $0x4c] sm:$0xf]
  %v83 = vld [vmem:[%s1 + $0x50] sm:$0xf]
  %v84 = vld [vmem:[%s1 + $0x54] sm:$0xf]
  %v85 = vld [vmem:[%s1 + $0x58] sm:$0xf]
  %v86 = vld [vmem:[%s1 + $0x5c] sm:$0xf]
  %v87 = vld [vmem:[%s1 + $0x60] sm:$0xf]
  %v88 = vld [vmem:[%s1 + $0x64] sm:$0xf]
  %v89 = vld [vmem:[%s1 + $0x68] sm:$0xf]
  %v90 = vld [vmem:[%s1 + $0x6c] sm:$0xf]
  %v91 = vld [vmem:[%s1 + $0x70] sm:$0xf]
  %v92 = vld [vmem:[%s1 + $0x74] sm:$0xf]
  %v93 = vld [vmem:[%s1 + $0x78] sm:$0xf]
  %v94 = vld [vmem:[%s1 + $0x7c] sm:$0xf]
  %v95 = vld [vmem:[%s1 + $0x80] sm:$0xf]
  %v96 = vld [vmem:[%s1 + $0x84] sm:$0xf]
  %v97 = vld [vmem:[%s1 + $0x88] sm:$0xf]
  %v98 = vld [vmem:[%s1 + $0x8c] sm:$0xf]
  %v99 = vld [vmem:[%s1 + $0x90] sm:$0xf]
  %v100 = vld [vmem:[%s1 + $0x94] sm:$0xf]
  %v101 = vld [vmem:[%s1 + $0x98] sm:$0xf]
  %v102 = vld [vmem:[%s1 + $0x9c] sm:$0xf]
  %v103 = vld [vmem:[%s1 + $0xa0] sm:$0xf]
  %v104 = vld [vmem:[%s1 + $0xa4] sm:$0xf]
  %v105 = vld [vmem:[%s1 + $0xa8] sm:$0xf]
  %v106 = vld [vmem:[%s1 + $0xac] sm:$0xf]
  %v107 = vld [vmem:[%s1 + $0xb0] sm:$0xf]
  %v108 = vld [vmem:[%s1 + $0xb4] sm:$0xf]
  %v109 = vld [vmem:[%s1 + $0xb8] sm:$0xf]
  %v110 = vld [vmem:[%s1 + $0xbc] sm:$0xf]
  %v111 = vld [vmem:[%s1 + $0xc0] sm:$0xf]
  %v112 = vld [vmem:[%s1 + $0xc4] sm:$0xf]
  %v113 = vld [vmem:[%s1 + $0xc8] sm:$0xf]
  %v114 = vld [vmem:[%s1 + $0xcc] sm:$0xf]
  %v115 = vld [vmem:[%s1 + $0xd0] sm:$0xf]
  %v116 = vld [vmem:[%s1 + $0xd4] sm:$0xf]
  %v117 = vld [vmem:[%s1 + $0xd8] sm:$0xf]
  %v118 = vld [vmem:[%s1 + $0xdc] sm:$0xf]
  %v119 = vld [vmem:[%s1 + $0xe0] sm:$0xf]
  %v120 = vld [vmem:[%s1 + $0xe4] sm:$0xf]
  %v121 = vld [vmem:[%s1 + $0xe8] sm:$0xf]
  %v122 = vld [vmem:[%s1 + $0xec] sm:$0xf]
  %v123 = vld [vmem:[%s1 + $0xf0] sm:$0xf]
  %v124 = vld [vmem:[%s1 + $0xf4] sm:$0xf]
  %v125 = vld [vmem:[%s1 + $0xf8] sm:$0xf]
  %v126 = vld [vmem:[%s1 + $0xfc] sm:$0xf]
  %v127 = vld [vmem:[%s1 + $0x100] sm:$0xf]
  %v128 = vld [vmem:[%s1 + $0x104] sm:$0xf]
  %v129 = vld [vmem:[%s1 + $0x108] sm:$0xf]
  %v130 = vld [vmem:[%s1 + $0x10c] sm:$0xf]
  %v131 = vld [vmem:[%s1 + $0x110] sm:$0xf]
  %v132 = vld [vmem:[%s1 + $0x114] sm:$0xf]
  %v133 = vld [vmem:[%s1 + $0x118] sm:$0xf]
  %v134 = vld [vmem:[%s1 + $0x11c] sm:$0xf]
  %v135 = vld [vmem:[%s2] sm:$0x1]
  %v137 = vperm.slane %v135, 0
  %v187 = vunpack.c.l.b16 %v15
  %v188 = vunpack.c.h.b16 %v15
  %v189 = vunpack.c.l.b16 %v16
  %v190 = vunpack.c.h.b16 %v16
  %v191 = vunpack.c.l.b16 %v17
  %v192 = vunpack.c.l.b16 %v18
  %v193 = vunpack.c.h.b16 %v18
  %v194 = vunpack.c.l.b16 %v19
  %v195 = vunpack.c.h.b16 %v19
  %v196 = vunpack.c.l.b16 %v20
  %v197 = vunpack.c.l.b16 %v21
  %v198 = vunpack.c.h.b16 %v21
  %v199 = vunpack.c.l.b16 %v22
  %v200 = vunpack.c.h.b16 %v22
  %v201 = vunpack.c.l.b16 %v23
  %v202 = vunpack.c.l.b16 %v24
  %v203 = vunpack.c.h.b16 %v24
  %v204 = vunpack.c.l.b16 %v25
  %v205 = vunpack.c.h.b16 %v25
  %v206 = vunpack.c.l.b16 %v26
  %v207 = vunpack.c.l.b16 %v27
  %v208 = vunpack.c.h.b16 %v27
  %v209 = vunpack.c.l.b16 %v28
  %v210 = vunpack.c.h.b16 %v28
  %v211 = vunpack.c.l.b16 %v29
  %v212 = vunpack.c.l.b16 %v30
  %v213 = vunpack.c.h.b16 %v30
  %v214 = vunpack.c.l.b16 %v31
  %v215 = vunpack.c.h.b16 %v31
  %v216 = vunpack.c.l.b16 %v32
  %v217 = vunpack.c.l.b16 %v33
  %v218 = vunpack.c.h.b16 %v33
  %v219 = vunpack.c.l.b16 %v34
  %v220 = vunpack.c.h.b16 %v34
  %v221 = vunpack.c.l.b16 %v35
  %v222 = vunpack.c.l.b16 %v36
  %v223 = vunpack.c.h.b16 %v36
  %v224 = vunpack.c.l.b16 %v37
  %v225 = vunpack.c.h.b16 %v37
  %v226 = vunpack.c.l.b16 %v38
  %v227 = vunpack.c.l.b16 %v39
  %v228 = vunpack.c.h.b16 %v39
  %v229 = vunpack.c.l.b16 %v40
  %v230 = vunpack.c.h.b16 %v40
  %v231 = vunpack.c.l.b16 %v41
  %v232 = vunpack.c.l.b16 %v42
  %v233 = vunpack.c.h.b16 %v42
  %v234 = vunpack.c.l.b16 %v43
  %v235 = vunpack.c.h.b16 %v43
  %v236 = vunpack.c.l.b16 %v44
  %v237 = vunpack.c.l.b16 %v45
  %v238 = vunpack.c.h.b16 %v45
  %v239 = vunpack.c.l.b16 %v46
  %v240 = vunpack.c.h.b16 %v46
  %v241 = vunpack.c.l.b16 %v47
  %v242 = vunpack.c.l.b16 %v48
  %v243 = vunpack.c.h.b16 %v48
  %v244 = vunpack.c.l.b16 %v49
  %v245 = vunpack.c.h.b16 %v49
  %v246 = vunpack.c.l.b16 %v50
  %v247 = vunpack.c.l.b16 %v51
  %v248 = vunpack.c.h.b16 %v51
  %v249 = vunpack.c.l.b16 %v52
  %v250 = vunpack.c.h.b16 %v52
  %v251 = vunpack.c.l.b16 %v53
  %v252 = vunpack.c.l.b16 %v54
  %v253 = vunpack.c.h.b16 %v54
  %v254 = vunpack.c.l.b16 %v55
  %v255 = vunpack.c.h.b16 %v55
  %v256 = vunpack.c.l.b16 %v56
  %v257 = vunpack.c.l.b16 %v57
  %v258 = vunpack.c.h.b16 %v57
  %v259 = vunpack.c.l.b16 %v58
  %v260 = vunpack.c.h.b16 %v58
  %v261 = vunpack.c.l.b16 %v59
  %v262 = vunpack.c.l.b16 %v60
  %v263 = vunpack.c.h.b16 %v60
  %v264 = vunpack.c.l.b16 %v61
  %v265 = vunpack.c.h.b16 %v61
  %v266 = vunpack.c.l.b16 %v62
  %v267 = vpack.c.b16 %v192, %v187
  %v268 = vpack.c.b16 %v193, %v188
  %v269 = vpack.c.b16 %v194, %v189
  %v270 = vpack.c.b16 %v195, %v190
  %v271 = vpack.c.b16 %v196, %v191
  %v272 = vpack.c.b16 %v202, %v197
  %v273 = vpack.c.b16 %v203, %v198
  %v274 = vpack.c.b16 %v204, %v199
  %v275 = vpack.c.b16 %v205, %v200
  %v276 = vpack.c.b16 %v206, %v201
  %v277 = vpack.c.b16 %v212, %v207
  %v278 = vpack.c.b16 %v213, %v208
  %v279 = vpack.c.b16 %v214, %v209
  %v280 = vpack.c.b16 %v215, %v210
  %v281 = vpack.c.b16 %v216, %v211
  %v282 = vpack.c.b16 %v222, %v217
  %v283 = vpack.c.b16 %v223, %v218
  %v284 = vpack.c.b16 %v224, %v219
  %v285 = vpack.c.b16 %v225, %v220
  %v286 = vpack.c.b16 %v226, %v221
  %v287 = vpack.c.b16 %v232, %v227
  %v288 = vpack.c.b16 %v233, %v228
  %v289 = vpack.c.b16 %v234, %v229
  %v290 = vpack.c.b16 %v235, %v230
  %v291 = vpack.c.b16 %v236, %v231
  %v292 = vpack.c.b16 %v242, %v237
  %v293 = vpack.c.b16 %v243, %v238
  %v294 = vpack.c.b16 %v244, %v239
  %v295 = vpack.c.b16 %v245, %v240
  %v296 = vpack.c.b16 %v246, %v241
  %v297 = vpack.c.b16 %v252, %v247
  %v298 = vpack.c.b16 %v253, %v248
  %v299 = vpack.c.b16 %v254, %v249
  %v300 = vpack.c.b16 %v255, %v250
  %v301 = vpack.c.b16 %v256, %v251
  %v302 = vpack.c.b16 %v262, %v257
  %v303 = vpack.c.b16 %v263, %v258
  %v304 = vpack.c.b16 %v264, %v259
  %v305 = vpack.c.b16 %v265, %v260
  %v306 = vpack.c.b16 %v266, %v261
  %v411 = vunpack.c.l.b16 %v63
  %v412 = vunpack.c.l.b16 %v64
  %v413 = vunpack.c.l.b16 %v65
  %v414 = vunpack.c.l.b16 %v66
  %v415 = vunpack.c.l.b16 %v67
  %v416 = vunpack.c.l.b16 %v68
  %v417 = vunpack.c.l.b16 %v69
  %v418 = vunpack.c.l.b16 %v70
  %v419 = vunpack.c.l.b16 %v71
  %v420 = vunpack.c.l.b16 %v72
  %v421 = vunpack.c.l.b16 %v73
  %v422 = vunpack.c.l.b16 %v74
  %v423 = vunpack.c.l.b16 %v75
  %v424 = vunpack.c.l.b16 %v76
  %v425 = vunpack.c.l.b16 %v77
  %v426 = vunpack.c.l.b16 %v78
  %v427 = vunpack.c.l.b16 %v79
  %v428 = vunpack.c.l.b16 %v80
  %v429 = vunpack.c.l.b16 %v81
  %v430 = vunpack.c.l.b16 %v82
  %v431 = vunpack.c.l.b16 %v83
  %v432 = vunpack.c.l.b16 %v84
  %v433 = vunpack.c.l.b16 %v85
  %v434 = vunpack.c.l.b16 %v86
  %v435 = vunpack.c.l.b16 %v87
  %v436 = vunpack.c.l.b16 %v88
  %v437 = vunpack.c.l.b16 %v89
  %v438 = vunpack.c.l.b16 %v90
  %v439 = vunpack.c.l.b16 %v91
  %v440 = vunpack.c.l.b16 %v92
  %v441 = vunpack.c.l.b16 %v93
  %v442 = vunpack.c.l.b16 %v94
  %v443 = vunpack.c.l.b16 %v95
  %v444 = vunpack.c.l.b16 %v96
  %v445 = vunpack.c.l.b16 %v97
  %v446 = vunpack.c.l.b16 %v98
  %v447 = vunpack.c.l.b16 %v99
  %v448 = vunpack.c.l.b16 %v100
  %v449 = vunpack.c.l.b16 %v101
  %v450 = vunpack.c.l.b16 %v102
  %v451 = vunpack.c.l.b16 %v103
  %v452 = vunpack.c.l.b16 %v104
  %v453 = vunpack.c.l.b16 %v105
  %v454 = vunpack.c.l.b16 %v106
  %v455 = vunpack.c.l.b16 %v107
  %v456 = vunpack.c.l.b16 %v108
  %v457 = vunpack.c.l.b16 %v109
  %v458 = vunpack.c.l.b16 %v110
  %v459 = vunpack.c.l.b16 %v111
  %v460 = vunpack.c.l.b16 %v112
  %v461 = vunpack.c.l.b16 %v113
  %v462 = vunpack.c.l.b16 %v114
  %v463 = vunpack.c.l.b16 %v115
  %v464 = vunpack.c.l.b16 %v116
  %v465 = vunpack.c.l.b16 %v117
  %v466 = vunpack.c.l.b16 %v118
  %v467 = vunpack.c.l.b16 %v119
  %v468 = vunpack.c.l.b16 %v120
  %v469 = vunpack.c.l.b16 %v121
  %v470 = vunpack.c.l.b16 %v122
  %v471 = vunpack.c.l.b16 %v123
  %v472 = vunpack.c.l.b16 %v124
  %v473 = vunpack.c.l.b16 %v125
  %v474 = vunpack.c.l.b16 %v126
  %v475 = vunpack.c.l.b16 %v127
  %v476 = vunpack.c.l.b16 %v128
  %v477 = vunpack.c.l.b16 %v129
  %v478 = vunpack.c.l.b16 %v130
  %v479 = vunpack.c.l.b16 %v131
  %v480 = vunpack.c.l.b16 %v132
  %v481 = vunpack.c.l.b16 %v133
  %v482 = vunpack.c.l.b16 %v134
  %v483 = vpack.c.b16 %v412, %v411
  %v484 = vpack.c.b16 %v414, %v413
  %v485 = vpack.c.b16 %v416, %v415
  %v486 = vpack.c.b16 %v418, %v417
  %v487 = vpack.c.b16 %v420, %v419
  %v488 = vpack.c.b16 %v422, %v421
  %v489 = vpack.c.b16 %v424, %v423
  %v490 = vpack.c.b16 %v426, %v425
  %v491 = vpack.c.b16 %v428, %v427
  %v492 = vpack.c.b16 %v430, %v429
  %v493 = vpack.c.b16 %v432, %v431
  %v494 = vpack.c.b16 %v434, %v433
  %v495 = vpack.c.b16 %v436, %v435
  %v496 = vpack.c.b16 %v438, %v437
  %v497 = vpack.c.b16 %v440, %v439
  %v498 = vpack.c.b16 %v442, %v441
  %v499 = vpack.c.b16 %v444, %v443
  %v500 = vpack.c.b16 %v446, %v445
  %v501 = vpack.c.b16 %v448, %v447
  %v502 = vpack.c.b16 %v450, %v449
  %v503 = vpack.c.b16 %v452, %v451
  %v504 = vpack.c.b16 %v454, %v453
  %v505 = vpack.c.b16 %v456, %v455
  %v506 = vpack.c.b16 %v458, %v457
  %v507 = vpack.c.b16 %v460, %v459
  %v508 = vpack.c.b16 %v462, %v461
  %v509 = vpack.c.b16 %v464, %v463
  %v510 = vpack.c.b16 %v466, %v465
  %v511 = vpack.c.b16 %v468, %v467
  %v512 = vpack.c.b16 %v470, %v469
  %v513 = vpack.c.b16 %v472, %v471
  %v514 = vpack.c.b16 %v474, %v473
  %v515 = vpack.c.b16 %v476, %v475
  %v516 = vpack.c.b16 %v478, %v477
  %v517 = vpack.c.b16 %v480, %v479
  %v518 = vpack.c.b16 %v482, %v481
  %vm555 = vcmask 523264
  %v557 = vsel %vm555, %v271, 0
  %v560 = vsel %vm555, %v276, 0
  %v563 = vsel %vm555, %v281, 0
  %v566 = vsel %vm555, %v286, 0
  %v569 = vsel %vm555, %v291, 0
  %v572 = vsel %vm555, %v296, 0
  %v575 = vsel %vm555, %v301, 0
  %v578 = vsel %vm555, %v306, 0
  %580 = vmatpush.bf16.msra.mxu0 %v490
  %581 = vmatpush.bf16.msra.mxu0 %v489
  %582 = vmatpush.bf16.msra.mxu0 %v488
  %583 = vmatpush.bf16.msra.mxu0 %v487
  %584 = vmatpush.bf16.msra.mxu0 %v486
  %585 = vmatpush.bf16.msra.mxu0 %v485
  %586 = vmatpush.bf16.msra.mxu0 %v484
  %587 = vmatpush.bf16.msra.mxu0 %v483
  %588 = vmatmul.bf16.gmra.mxu0 %v267
  %v589 = vpop.f32.mrf.mxu0
  %v590 = vadd.f32 %v137, %v589
  %v591 = vpop.f32.mrf.mxu0
  %v592 = vadd.f32 %v137, %v591
  %593 = vmatmul.bf16.gmra.mxu0 %v272
  %v594 = vpop.f32.mrf.mxu0
  %v595 = vadd.f32 %v137, %v594
  %v596 = vpop.f32.mrf.mxu0
  %v597 = vadd.f32 %v137, %v596
  %598 = vmatmul.bf16.gmra.mxu0 %v277
  %v599 = vpop.f32.mrf.mxu0
  %v600 = vadd.f32 %v137, %v599
  %v601 = vpop.f32.mrf.mxu0
  %v602 = vadd.f32 %v137, %v601
  %603 = vmatmul.bf16.gmra.mxu0 %v282
  %v604 = vpop.f32.mrf.mxu0
  %v605 = vadd.f32 %v137, %v604
  %v606 = vpop.f32.mrf.mxu0
  %v607 = vadd.f32 %v137, %v606
  %608 = vmatmul.bf16.gmra.mxu0 %v287
  %v609 = vpop.f32.mrf.mxu0
  %v610 = vadd.f32 %v137, %v609
  %v611 = vpop.f32.mrf.mxu0
  %v612 = vadd.f32 %v137, %v611
  %613 = vmatmul.bf16.gmra.mxu0 %v292
  %v614 = vpop.f32.mrf.mxu0
  %v615 = vadd.f32 %v137, %v614
  %v616 = vpop.f32.mrf.mxu0
  %v617 = vadd.f32 %v137, %v616
  %618 = vmatmul.bf16.gmra.mxu0 %v297
  %v619 = vpop.f32.mrf.mxu0
  %v620 = vadd.f32 %v137, %v619
  %v621 = vpop.f32.mrf.mxu0
  %v622 = vadd.f32 %v137, %v621
  %623 = vmatmul.bf16.gmra.mxu0 %v302
  %v624 = vpop.f32.mrf.mxu0
  %v625 = vadd.f32 %v137, %v624
  %v626 = vpop.f32.mrf.mxu0
  %v627 = vadd.f32 %v137, %v626
  %628 = vdwg.mxu0
  %629 = vmatpush.bf16.msra.mxu0 %v498
  %630 = vmatpush.bf16.msra.mxu0 %v497
  %631 = vmatpush.bf16.msra.mxu0 %v496
  %632 = vmatpush.bf16.msra.mxu0 %v495
  %633 = vmatpush.bf16.msra.mxu0 %v494
  %634 = vmatpush.bf16.msra.mxu0 %v493
  %635 = vmatpush.bf16.msra.mxu0 %v492
  %636 = vmatpush.bf16.msra.mxu0 %v491
  %637 = vmatmul.bf16.gmra.mxu0 %v268
  %v638 = vpop.f32.mrf.mxu0
  %v639 = vadd.f32 %v590, %v638
  %v640 = vpop.f32.mrf.mxu0
  %v641 = vadd.f32 %v592, %v640
  %642 = vmatmul.bf16.gmra.mxu0 %v273
  %v643 = vpop.f32.mrf.mxu0
  %v644 = vadd.f32 %v595, %v643
  %v645 = vpop.f32.mrf.mxu0
  %v646 = vadd.f32 %v597, %v645
  %647 = vmatmul.bf16.gmra.mxu0 %v278
  %v648 = vpop.f32.mrf.mxu0
  %v649 = vadd.f32 %v600, %v648
  %v650 = vpop.f32.mrf.mxu0
  %v651 = vadd.f32 %v602, %v650
  %652 = vmatmul.bf16.gmra.mxu0 %v283
  %v653 = vpop.f32.mrf.mxu0
  %v654 = vadd.f32 %v605, %v653
  %v655 = vpop.f32.mrf.mxu0
  %v656 = vadd.f32 %v607, %v655
  %657 = vmatmul.bf16.gmra.mxu0 %v288
  %v658 = vpop.f32.mrf.mxu0
  %v659 = vadd.f32 %v610, %v658
  %v660 = vpop.f32.mrf.mxu0
  %v661 = vadd.f32 %v612, %v660
  %662 = vmatmul.bf16.gmra.mxu0 %v293
  %v663 = vpop.f32.mrf.mxu0
  %v664 = vadd.f32 %v615, %v663
  %v665 = vpop.f32.mrf.mxu0
  %v666 = vadd.f32 %v617, %v665
  %667 = vmatmul.bf16.gmra.mxu0 %v298
  %v668 = vpop.f32.mrf.mxu0
  %v669 = vadd.f32 %v620, %v668
  %v670 = vpop.f32.mrf.mxu0
  %v671 = vadd.f32 %v622, %v670
  %672 = vmatmul.bf16.gmra.mxu0 %v303
  %v673 = vpop.f32.mrf.mxu0
  %v674 = vadd.f32 %v625, %v673
  %v675 = vpop.f32.mrf.mxu0
  %v676 = vadd.f32 %v627, %v675
  %677 = vdwg.mxu0
  %678 = vmatpush.bf16.msra.mxu0 %v506
  %679 = vmatpush.bf16.msra.mxu0 %v505
  %680 = vmatpush.bf16.msra.mxu0 %v504
  %681 = vmatpush.bf16.msra.mxu0 %v503
  %682 = vmatpush.bf16.msra.mxu0 %v502
  %683 = vmatpush.bf16.msra.mxu0 %v501
  %684 = vmatpush.bf16.msra.mxu0 %v500
  %685 = vmatpush.bf16.msra.mxu0 %v499
  %686 = vmatmul.bf16.gmra.mxu0 %v269
  %v687 = vpop.f32.mrf.mxu0
  %v688 = vadd.f32 %v639, %v687
  %v689 = vpop.f32.mrf.mxu0
  %v690 = vadd.f32 %v641, %v689
  %691 = vmatmul.bf16.gmra.mxu0 %v274
  %v692 = vpop.f32.mrf.mxu0
  %v693 = vadd.f32 %v644, %v692
  %v694 = vpop.f32.mrf.mxu0
  %v695 = vadd.f32 %v646, %v694
  %696 = vmatmul.bf16.gmra.mxu0 %v279
  %v697 = vpop.f32.mrf.mxu0
  %v698 = vadd.f32 %v649, %v697
  %v699 = vpop.f32.mrf.mxu0
  %v700 = vadd.f32 %v651, %v699
  %701 = vmatmul.bf16.gmra.mxu0 %v284
  %v702 = vpop.f32.mrf.mxu0
  %v703 = vadd.f32 %v654, %v702
  %v704 = vpop.f32.mrf.mxu0
  %v705 = vadd.f32 %v656, %v704
  %706 = vmatmul.bf16.gmra.mxu0 %v289
  %v707 = vpop.f32.mrf.mxu0
  %v708 = vadd.f32 %v659, %v707
  %v709 = vpop.f32.mrf.mxu0
  %v710 = vadd.f32 %v661, %v709
  %711 = vmatmul.bf16.gmra.mxu0 %v294
  %v712 = vpop.f32.mrf.mxu0
  %v713 = vadd.f32 %v664, %v712
  %v714 = vpop.f32.mrf.mxu0
  %v715 = vadd.f32 %v666, %v714
  %716 = vmatmul.bf16.gmra.mxu0 %v299
  %v717 = vpop.f32.mrf.mxu0
  %v718 = vadd.f32 %v669, %v717
  %v719 = vpop.f32.mrf.mxu0
  %v720 = vadd.f32 %v671, %v719
  %721 = vmatmul.bf16.gmra.mxu0 %v304
  %v722 = vpop.f32.mrf.mxu0
  %v723 = vadd.f32 %v674, %v722
  %v724 = vpop.f32.mrf.mxu0
  %v725 = vadd.f32 %v676, %v724
  %726 = vdwg.mxu0
  %727 = vmatpush.bf16.msra.mxu0 %v514
  %728 = vmatpush.bf16.msra.mxu0 %v513
  %729 = vmatpush.bf16.msra.mxu0 %v512
  %730 = vmatpush.bf16.msra.mxu0 %v511
  %731 = vmatpush.bf16.msra.mxu0 %v510
  %732 = vmatpush.bf16.msra.mxu0 %v509
  %733 = vmatpush.bf16.msra.mxu0 %v508
  %734 = vmatpush.bf16.msra.mxu0 %v507
  %735 = vmatmul.bf16.gmra.mxu0 %v270
  %v736 = vpop.f32.mrf.mxu0
  %v737 = vadd.f32 %v688, %v736
  %v738 = vpop.f32.mrf.mxu0
  %v739 = vadd.f32 %v690, %v738
  %740 = vmatmul.bf16.gmra.mxu0 %v275
  %v741 = vpop.f32.mrf.mxu0
  %v742 = vadd.f32 %v693, %v741
  %v743 = vpop.f32.mrf.mxu0
  %v744 = vadd.f32 %v695, %v743
  %745 = vmatmul.bf16.gmra.mxu0 %v280
  %v746 = vpop.f32.mrf.mxu0
  %v747 = vadd.f32 %v698, %v746
  %v748 = vpop.f32.mrf.mxu0
  %v749 = vadd.f32 %v700, %v748
  %750 = vmatmul.bf16.gmra.mxu0 %v285
  %v751 = vpop.f32.mrf.mxu0
  %v752 = vadd.f32 %v703, %v751
  %v753 = vpop.f32.mrf.mxu0
  %v754 = vadd.f32 %v705, %v753
  %755 = vmatmul.bf16.gmra.mxu0 %v290
  %v756 = vpop.f32.mrf.mxu0
  %v757 = vadd.f32 %v708, %v756
  %v758 = vpop.f32.mrf.mxu0
  %v759 = vadd.f32 %v710, %v758
  %760 = vmatmul.bf16.gmra.mxu0 %v295
  %v761 = vpop.f32.mrf.mxu0
  %v762 = vadd.f32 %v713, %v761
  %v763 = vpop.f32.mrf.mxu0
  %v764 = vadd.f32 %v715, %v763
  %765 = vmatmul.bf16.gmra.mxu0 %v300
  %v766 = vpop.f32.mrf.mxu0
  %v767 = vadd.f32 %v718, %v766
  %v768 = vpop.f32.mrf.mxu0
  %v769 = vadd.f32 %v720, %v768
  %770 = vmatmul.bf16.gmra.mxu0 %v305
  %v771 = vpop.f32.mrf.mxu0
  %v772 = vadd.f32 %v723, %v771
  %v773 = vpop.f32.mrf.mxu0
  %v774 = vadd.f32 %v725, %v773
  %775 = vdwg.mxu0
  %776 = vmatpush.bf16.msra.mxu0 0
  %777 = vmatpush.bf16.msra.mxu0 0
  %778 = vmatpush.bf16.msra.mxu0 0
  %779 = vmatpush.bf16.msra.mxu0 0
  %780 = vmatpush.bf16.msra.mxu0 %v518
  %781 = vmatpush.bf16.msra.mxu0 %v517
  %782 = vmatpush.bf16.msra.mxu0 %v516
  %783 = vmatpush.bf16.msra.mxu0 %v515
  %784 = vmatmul.bf16.gmra.mxu0 %v557
  %v785 = vpop.f32.mrf.mxu0
  %v786 = vadd.f32 %v737, %v785
  %v787 = vpop.f32.mrf.mxu0
  %v788 = vadd.f32 %v739, %v787
  %789 = vmatmul.bf16.gmra.mxu0 %v560
  %v790 = vpop.f32.mrf.mxu0
  %v791 = vadd.f32 %v742, %v790
  %v792 = vpop.f32.mrf.mxu0
  %v793 = vadd.f32 %v744, %v792
  %794 = vmatmul.bf16.gmra.mxu0 %v563
  %v795 = vpop.f32.mrf.mxu0
  %v796 = vadd.f32 %v747, %v795
  %v797 = vpop.f32.mrf.mxu0
  %v798 = vadd.f32 %v749, %v797
  %799 = vmatmul.bf16.gmra.mxu0 %v566
  %v800 = vpop.f32.mrf.mxu0
  %v801 = vadd.f32 %v752, %v800
  %v802 = vpop.f32.mrf.mxu0
  %v803 = vadd.f32 %v754, %v802
  %804 = vmatmul.bf16.gmra.mxu0 %v569
  %v805 = vpop.f32.mrf.mxu0
  %v806 = vadd.f32 %v757, %v805
  %v807 = vpop.f32.mrf.mxu0
  %v808 = vadd.f32 %v759, %v807
  %809 = vmatmul.bf16.gmra.mxu0 %v572
  %v810 = vpop.f32.mrf.mxu0
  %v811 = vadd.f32 %v762, %v810
  %v812 = vpop.f32.mrf.mxu0
  %v813 = vadd.f32 %v764, %v812
  %814 = vmatmul.bf16.gmra.mxu0 %v575
  %v815 = vpop.f32.mrf.mxu0
  %v816 = vadd.f32 %v767, %v815
  %v817 = vpop.f32.mrf.mxu0
  %v818 = vadd.f32 %v769, %v817
  %819 = vmatmul.bf16.gmra.mxu0 %v578
  %v820 = vpop.f32.mrf.mxu0
  %v821 = vadd.f32 %v772, %v820
  %v822 = vpop.f32.mrf.mxu0
  %v823 = vadd.f32 %v774, %v822
  %824 = vdwg.mxu0
  %v825 = vmax.f32 %v786, 0.0
  %v826 = vmax.f32 %v788, 0.0
  %v827 = vmax.f32 %v791, 0.0
  %v828 = vmax.f32 %v793, 0.0
  %v829 = vmax.f32 %v796, 0.0
  %v830 = vmax.f32 %v798, 0.0
  %v831 = vmax.f32 %v801, 0.0
  %v832 = vmax.f32 %v803, 0.0
  %v833 = vmax.f32 %v806, 0.0
  %v834 = vmax.f32 %v808, 0.0
  %v835 = vmax.f32 %v811, 0.0
  %v836 = vmax.f32 %v813, 0.0
  %v837 = vmax.f32 %v816, 0.0
  %v838 = vmax.f32 %v818, 0.0
  %v839 = vmax.f32 %v821, 0.0
  %v840 = vmax.f32 %v823, 0.0
  %v841 = vpack.c.bf16 %v825, %v825
  %v842 = vpack.c.bf16 %v826, %v826
  %v843 = vpack.c.bf16 %v827, %v827
  %v844 = vpack.c.bf16 %v828, %v828
  %v845 = vpack.c.bf16 %v829, %v829
  %v846 = vpack.c.bf16 %v830, %v830
  %v847 = vpack.c.bf16 %v831, %v831
  %v848 = vpack.c.bf16 %v832, %v832
  %v849 = vpack.c.bf16 %v833, %v833
  %v850 = vpack.c.bf16 %v834, %v834
  %v851 = vpack.c.bf16 %v835, %v835
  %v852 = vpack.c.bf16 %v836, %v836
  %v853 = vpack.c.bf16 %v837, %v837
  %v854 = vpack.c.bf16 %v838, %v838
  %v855 = vpack.c.bf16 %v839, %v839
  %v856 = vpack.c.bf16 %v840, %v840
  %857 = vst [vmem:[%s3] sm:$0xf] %v841
  %858 = vst [vmem:[%s3 + $0x4] sm:$0xf] %v842
  %859 = vst [vmem:[%s3 + $0x8] sm:$0xf] %v843
  %860 = vst [vmem:[%s3 + $0xc] sm:$0xf] %v844
  %861 = vst [vmem:[%s3 + $0x10] sm:$0xf] %v845
  %862 = vst [vmem:[%s3 + $0x14] sm:$0xf] %v846
  %863 = vst [vmem:[%s3 + $0x18] sm:$0xf] %v847
  %864 = vst [vmem:[%s3 + $0x1c] sm:$0xf] %v848
  %865 = vst [vmem:[%s3 + $0x20] sm:$0xf] %v849
  %866 = vst [vmem:[%s3 + $0x24] sm:$0xf] %v850
  %867 = vst [vmem:[%s3 + $0x28] sm:$0xf] %v851
  %868 = vst [vmem:[%s3 + $0x2c] sm:$0xf] %v852
  %869 = vst [vmem:[%s3 + $0x30] sm:$0xf] %v853
  %870 = vst [vmem:[%s3 + $0x34] sm:$0xf] %v854
  %871 = vst [vmem:[%s3 + $0x38] sm:$0xf] %v855
  %872 = vst [vmem:[%s3 + $0x3c] sm:$0xf] %v856
  // Predicated region
  $region14: #{_lambda_.18} parent=0 // pred_check
    _
  $region15: #{_lambda_.18} parent=0 // pred_check_branch
    %874 = sbr.rel (0) target = $region17
  $region16: #{_lambda_.18} parent=0 // pred_region
    _
  $region17: #{_lambda_.18} parent=0 // pred_fallthru
    _
  // Predicated region
  $region18: #{_lambda_.18} parent=0 // pred_check
    _
  $region19: #{_lambda_.18} parent=0 // pred_check_branch
    %876 = sbr.rel (0) target = $region21
  $region20: #{_lambda_.18} parent=0 // pred_region
    _
  $region21: #{_lambda_.18} parent=0 // pred_fallthru
    _

// kernel: _lambda_.19
$region0: #{_lambda_.19}
  #allocation0 [shape = 'u32[]', space=smem, size = 0x4, offset = 0x4, fixed_abs, tag = 'smem constant byte address 0x4 - core index']
  #allocation1 [shape = 'u32[72,128]{1,0:T(1,128)}', space=vmem, size = 0x9000, scoped, tag = 'internal scratch']
  %s0 = inlined_call_operand.vmem [shape: bf16[512,288], index: 0, kind: input, shape index: {}]
  %s1 = inlined_call_operand.vmem [shape: bf16[288,128], index: 1, kind: input, shape index: {}]
  %s2 = inlined_call_operand.vmem [shape: f32[1,128], index: 2, kind: input, shape index: {}]
  %s3 = inlined_call_operand.vmem [shape: f32[512,128], index: 3, kind: output, shape index: {}]
  %s4 = sld [smem:[#allocation0]]
  $region45: #{_lambda_.19} parent=0
    _
  %s6 = ssub.s32 1, %s4
  %s7 = scalar_select 0, %s6, %s4
  loop: start=0, step=1, limit=4
  $region2: #{_lambda_.19} parent=0 // loop_pre_header
    _
  $region3: #{_lambda_.19} parent=0 // loop_header
    %s9 = sphi 0, %s13
    %p10 = scmp.ge.s32.totalorder %s9, 4
    %s19 = sphi 0, %s21
    %s22 = sphi 0, %s19
    %s23 = sphi 0, %s22
    %s39 = sphi 0, %s23
    %s43 = sphi 0, %s43
    %s45 = sphi 0, %s43
    %s46 = sphi 0, %s45
    %s60 = sphi 0, %s46
    %s64 = sphi 0, %s64
    %s66 = sphi 0, %s64
    %s67 = sphi 0, %s66
    %s81 = sphi 0, %s67
    %s87 = sphi 0, %s89
    %s90 = sphi 0, %s87
    %s91 = sphi 0, %s90
    %s107 = sphi 0, %s91
  $region4: #{_lambda_.19} parent=0 // loop_header_branch
    %12 = sbr.rel (%p10) target = $region8
  $region5: #{_lambda_.19} parent=0 // loop_body
    %s14 = ssub.s32 %s9, 1
    %s15 = ssub.s32 %s9, 2
    %s16 = sadd.s32 %s9, 1
    %s17 = ssub.s32 %s9, %s16
    %p18 = scmp.eq.s32.totalorder %s17, 0
    %s20 = sadd.s32 %s19, 1
    %s21 = scalar_select %p18, %s19, %s20
    %p24 = pneg %p18
    %p25 = scmp.eq.s32.totalorder %s9, 1
    %p26 = por %p24, %p25
    %p27 = scmp.ne.s32.totalorder %s19, %s22
    %p28 = scmp.eq.s32.totalorder %s9, 0
    %p29 = por %p27, %p28
    %p30 = scmp.ne.s32.totalorder %s19, %s22
    %p31 = scmp.eq.s32.totalorder %s14, 1
    %p32 = por %p30, %p31
    %p33 = scmp.ne.s32.totalorder %s22, %s23
    %p34 = scmp.eq.s32.totalorder %s14, 0
    %p35 = por %p33, %p34
    %p36 = scmp.ne.s32.totalorder %s22, %s23
    %p37 = scmp.eq.s32.totalorder %s15, 1
    %p38 = por %p36, %p37
    %p40 = scmp.ne.s32.totalorder %s23, %s39
    %p41 = scmp.eq.s32.totalorder %s15, 0
    %p42 = por %p40, %p41
    %s44 = sadd.s32 %s43, 1
    %p47 = scmp.eq.s32.totalorder %s9, 1
    %p48 = scmp.ne.s32.totalorder %s43, %s45
    %p49 = scmp.eq.s32.totalorder %s9, 0
    %p50 = por %p48, %p49
    %p51 = scmp.ne.s32.totalorder %s43, %s45
    %p52 = scmp.eq.s32.totalorder %s14, 1
    %p53 = por %p51, %p52
    %p54 = scmp.ne.s32.totalorder %s45, %s46
    %p55 = scmp.eq.s32.totalorder %s14, 0
    %p56 = por %p54, %p55
    %p57 = scmp.ne.s32.totalorder %s45, %s46
    %p58 = scmp.eq.s32.totalorder %s15, 1
    %p59 = por %p57, %p58
    %p61 = scmp.ne.s32.totalorder %s46, %s60
    %p62 = scmp.eq.s32.totalorder %s15, 0
    %p63 = por %p61, %p62
    %s65 = sadd.s32 %s64, 1
    %p68 = scmp.eq.s32.totalorder %s9, 1
    %p69 = scmp.ne.s32.totalorder %s64, %s66
    %p70 = scmp.eq.s32.totalorder %s9, 0
    %p71 = por %p69, %p70
    %p72 = scmp.ne.s32.totalorder %s64, %s66
    %p73 = scmp.eq.s32.totalorder %s14, 1
    %p74 = por %p72, %p73
    %p75 = scmp.ne.s32.totalorder %s66, %s67
    %p76 = scmp.eq.s32.totalorder %s14, 0
    %p77 = por %p75, %p76
    %p78 = scmp.ne.s32.totalorder %s66, %s67
    %p79 = scmp.eq.s32.totalorder %s15, 1
    %p80 = por %p78, %p79
    %p82 = scmp.ne.s32.totalorder %s67, %s81
    %p83 = scmp.eq.s32.totalorder %s15, 0
    %p84 = por %p82, %p83
    %s85 = ssub.s32 %s9, %s16
    %p86 = scmp.eq.s32.totalorder %s85, 0
    %s88 = sadd.s32 %s87, 1
    %s89 = scalar_select %p86, %s87, %s88
    %p92 = pneg %p86
    %p93 = scmp.eq.s32.totalorder %s9, 1
    %p94 = por %p92, %p93
    %p95 = scmp.ne.s32.totalorder %s87, %s90
    %p96 = scmp.eq.s32.totalorder %s9, 0
    %p97 = por %p95, %p96
    %p98 = scmp.ne.s32.totalorder %s87, %s90
    %p99 = scmp.eq.s32.totalorder %s14, 1
    %p100 = por %p98, %p99
    %p101 = scmp.ne.s32.totalorder %s90, %s91
    %p102 = scmp.eq.s32.totalorder %s14, 0
    %p103 = por %p101, %p102
    %p104 = scmp.ne.s32.totalorder %s90, %s91
    %p105 = scmp.eq.s32.totalorder %s15, 1
    %p106 = por %p104, %p105
    %p108 = scmp.ne.s32.totalorder %s91, %s107
    %p109 = scmp.eq.s32.totalorder %s15, 0
    %p110 = por %p108, %p109
    %p111 = scmp.le.s32.totalorder 1, %s9
    %p112 = scmp.lt.s32.totalorder %s9, 3
    %p113 = pnand %p111, %p112
    %p114 = pneg %p113
    // Predicated region
    $region9: #{_lambda_.19} parent=5 // pred_check
      _
    $region10: #{_lambda_.19} parent=5 // pred_check_branch
      %116 = sbr.rel (%p113) target = $region12
    $region11: #{_lambda_.19} parent=5 // pred_region
      %s117 = ssub.s32 %s9, 1
      // Predicated region
      $region13: #{_lambda_.19} parent=11 // pred_check
        %p118 = pneg %p56
      $region14: #{_lambda_.19} parent=11 // pred_check_branch
        %120 = sbr.rel (%p118) target = $region16
      $region15: #{_lambda_.19} parent=11 // pred_region
        _
      $region16: #{_lambda_.19} parent=11 // pred_fallthru
        _
      // Predicated region
      $region17: #{_lambda_.19} parent=11 // pred_check
        %p121 = pneg %p77
      $region18: #{_lambda_.19} parent=11 // pred_check_branch
        %123 = sbr.rel (%p121) target = $region20
      $region19: #{_lambda_.19} parent=11 // pred_region
        _
      $region20: #{_lambda_.19} parent=11 // pred_fallthru
        _
    $region12: #{_lambda_.19} parent=5 // pred_fallthru
      _
    %p124 = scmp.lt.s32.totalorder %s9, 2
    // Predicated region
    $region21: #{_lambda_.19} parent=5 // pred_check
      %p125 = pneg %p124
    $region22: #{_lambda_.19} parent=5 // pred_check_branch
      %127 = sbr.rel (%p125) target = $region24
    $region23: #{_lambda_.19} parent=5 // pred_region
      // Predicated region
      $region25: #{_lambda_.19} parent=23 // pred_check
        %p128 = pneg %p29
      $region26: #{_lambda_.19} parent=23 // pred_check_branch
        %130 = sbr.rel (%p128) target = $region28
      $region27: #{_lambda_.19} parent=23 // pred_region
        %s131 = smul.u32 32, %s9
        %p132 = scmp.lt.s32.totalorder %s131, 63
        %s133 = scalar_select %p132, %s131, 63
        %s134 = smul.addr %s133, 3
        %s135 = smul.addr %s134, 4
        %s136 = scalar_lea.vmem %s0, %s135
        %s137 = smul.u32 32, %s9
      $region28: #{_lambda_.19} parent=23 // pred_fallthru
        _
    $region24: #{_lambda_.19} parent=5 // pred_fallthru
      _
    %p138 = scmp.le.s32.totalorder 1, %s9
    %p139 = scmp.lt.s32.totalorder %s9, 3
    %p140 = pnand %p138, %p139
    %p141 = pneg %p140
    // Predicated region
    $region29: #{_lambda_.19} parent=5 // pred_check
      _
    $region30: #{_lambda_.19} parent=5 // pred_check_branch
      %143 = sbr.rel (%p140) target = $region32
    $region31: #{_lambda_.19} parent=5 // pred_region
      %s144 = ssub.s32 %s9, 1
      %s145 = smul.u32 32, %s14
      %p146 = scmp.lt.s32.totalorder %s145, 63
      %s147 = scalar_select %p146, %s145, 63
      %s148 = smul.addr %s147, 3
      %s149 = smul.addr %s148, 4
      %s150 = scalar_lea.vmem %s0, %s149
      %p151 = pneg %p35
      %p152 = pneg %p32
      %p153 = pneg %p56
      %p154 = pneg %p53
      %p155 = pneg %p77
      %p156 = pneg %p74
      %p157 = pneg %p103
      %p158 = pneg %p100
      %s159 = smul.u32 32, %s14
      %p160 = scmp.lt.s32.totalorder %s159, 63
      %s161 = scalar_select %p160, %s159, 63
      %s162 = smul.addr %s161, 8
      %s163 = scalar_lea.vmem %s3, %s162
      %s164 = smul.u32 32, %s14
      %p165 = scmp.lt.s32.totalorder %s164, 63
      %s166 = scalar_select %p165, %s164, 63
      %s167 = smul.addr %s166, 3
      %s168 = smul.addr %s167, 4
      %s169 = scalar_lea.vmem %s0, %s168
      %s170 = smul.u32 32, %s14
      %s171 = smul.u32 32, %s14
      %p172 = scmp.lt.s32.totalorder %s171, 63
      %s173 = scalar_select %p172, %s171, 63
      %s174 = smul.addr %s173, 8
      %s175 = scalar_lea.vmem %s3, %s174
      %s176 = smul.u32 32, %s14
      %v178 = vld [vmem:[%s169] sm:$0xff]
      %v179 = vld [vmem:[%s169 + $0x8] sm:$0xf]
      %v180 = vld [vmem:[%s169 + $0xc] sm:$0xff]
      %v181 = vld [vmem:[%s169 + $0x14] sm:$0xf]
      %v182 = vld [vmem:[%s169 + $0x18] sm:$0xff]
      %v183 = vld [vmem:[%s169 + $0x20] sm:$0xf]
      %v184 = vld [vmem:[%s169 + $0x24] sm:$0xff]
      %v185 = vld [vmem:[%s169 + $0x2c] sm:$0xf]
      %v186 = vld [vmem:[%s169 + $0x30] sm:$0xff]
      %v187 = vld [vmem:[%s169 + $0x38] sm:$0xf]
      %v188 = vld [vmem:[%s169 + $0x3c] sm:$0xff]
      %v189 = vld [vmem:[%s169 + $0x44] sm:$0xf]
      %v190 = vld [vmem:[%s169 + $0x48] sm:$0xff]
      %v191 = vld [vmem:[%s169 + $0x50] sm:$0xf]
      %v192 = vld [vmem:[%s169 + $0x54] sm:$0xff]
      %v193 = vld [vmem:[%s169 + $0x5c] sm:$0xf]
      %v194 = vld [vmem:[%s169 + $0x60] sm:$0xff]
      %v195 = vld [vmem:[%s169 + $0x68] sm:$0xf]
      %v196 = vld [vmem:[%s169 + $0x6c] sm:$0xff]
      %v197 = vld [vmem:[%s169 + $0x74] sm:$0xf]
      %v198 = vld [vmem:[%s169 + $0x78] sm:$0xff]
      %v199 = vld [vmem:[%s169 + $0x80] sm:$0xf]
      %v200 = vld [vmem:[%s169 + $0x84] sm:$0xff]
      %v201 = vld [vmem:[%s169 + $0x8c] sm:$0xf]
      %v202 = vld [vmem:[%s169 + $0x90] sm:$0xff]
      %v203 = vld [vmem:[%s169 + $0x98] sm:$0xf]
      %v204 = vld [vmem:[%s169 + $0x9c] sm:$0xff]
      %v205 = vld [vmem:[%s169 + $0xa4] sm:$0xf]
      %v206 = vld [vmem:[%s169 + $0xa8] sm:$0xff]
      %v207 = vld [vmem:[%s169 + $0xb0] sm:$0xf]
      %v208 = vld [vmem:[%s169 + $0xb4] sm:$0xff]
      %v209 = vld [vmem:[%s169 + $0xbc] sm:$0xf]
      %v210 = vld [vmem:[%s169 + $0xc0] sm:$0xff]
      %v211 = vld [vmem:[%s169 + $0xc8] sm:$0xf]
      %v212 = vld [vmem:[%s169 + $0xcc] sm:$0xff]
      %v213 = vld [vmem:[%s169 + $0xd4] sm:$0xf]
      %v214 = vld [vmem:[%s169 + $0xd8] sm:$0xff]
      %v215 = vld [vmem:[%s169 + $0xe0] sm:$0xf]
      %v216 = vld [vmem:[%s169 + $0xe4] sm:$0xff]
      %v217 = vld [vmem:[%s169 + $0xec] sm:$0xf]
      %v218 = vld [vmem:[%s169 + $0xf0] sm:$0xff]
      %v219 = vld [vmem:[%s169 + $0xf8] sm:$0xf]
      %v220 = vld [vmem:[%s169 + $0xfc] sm:$0xff]
      %v221 = vld [vmem:[%s169 + $0x104] sm:$0xf]
      %v222 = vld [vmem:[%s169 + $0x108] sm:$0xff]
      %v223 = vld [vmem:[%s169 + $0x110] sm:$0xf]
      %v224 = vld [vmem:[%s169 + $0x114] sm:$0xff]
      %v225 = vld [vmem:[%s169 + $0x11c] sm:$0xf]
      %v226 = vld [vmem:[%s169 + $0x120] sm:$0xff]
      %v227 = vld [vmem:[%s169 + $0x128] sm:$0xf]
      %v228 = vld [vmem:[%s169 + $0x12c] sm:$0xff]
      %v229 = vld [vmem:[%s169 + $0x134] sm:$0xf]
      %v230 = vld [vmem:[%s169 + $0x138] sm:$0xff]
      %v231 = vld [vmem:[%s169 + $0x140] sm:$0xf]
      %v232 = vld [vmem:[%s169 + $0x144] sm:$0xff]
      %v233 = vld [vmem:[%s169 + $0x14c] sm:$0xf]
      %v234 = vld [vmem:[%s169 + $0x150] sm:$0xff]
      %v235 = vld [vmem:[%s169 + $0x158] sm:$0xf]
      %v236 = vld [vmem:[%s169 + $0x15c] sm:$0xff]
      %v237 = vld [vmem:[%s169 + $0x164] sm:$0xf]
      %v238 = vld [vmem:[%s169 + $0x168] sm:$0xff]
      %v239 = vld [vmem:[%s169 + $0x170] sm:$0xf]
      %v240 = vld [vmem:[%s169 + $0x174] sm:$0xff]
      %v241 = vld [vmem:[%s169 + $0x17c] sm:$0xf]
      %v242 = vld [vmem:[%s1] sm:$0xf]
      %v243 = vld [vmem:[%s1 + $0x4] sm:$0xf]
      %v244 = vld [vmem:[%s1 + $0x8] sm:$0xf]
      %v245 = vld [vmem:[%s1 + $0xc] sm:$0xf]
      %v246 = vld [vmem:[%s1 + $0x10] sm:$0xf]
      %v247 = vld [vmem:[%s1 + $0x14] sm:$0xf]
      %v248 = vld [vmem:[%s1 + $0x18] sm:$0xf]
      %v249 = vld [vmem:[%s1 + $0x1c] sm:$0xf]
      %v250 = vld [vmem:[%s1 + $0x20] sm:$0xf]
      %v251 = vld [vmem:[%s1 + $0x24] sm:$0xf]
      %v252 = vld [vmem:[%s1 + $0x28] sm:$0xf]
      %v253 = vld [vmem:[%s1 + $0x2c] sm:$0xf]
      %v254 = vld [vmem:[%s1 + $0x30] sm:$0xf]
      %v255 = vld [vmem:[%s1 + $0x34] sm:$0xf]
      %v256 = vld [vmem:[%s1 + $0x38] sm:$0xf]
      %v257 = vld [vmem:[%s1 + $0x3c] sm:$0xf]
      %v258 = vld [vmem:[%s1 + $0x40] sm:$0xf]
      %v259 = vld [vmem:[%s1 + $0x44] sm:$0xf]
      %v260 = vld [vmem:[%s1 + $0x48] sm:$0xf]
      %v261 = vld [vmem:[%s1 + $0x4c] sm:$0xf]
      %v262 = vld [vmem:[%s1 + $0x50] sm:$0xf]
      %v263 = vld [vmem:[%s1 + $0x54] sm:$0xf]
      %v264 = vld [vmem:[%s1 + $0x58] sm:$0xf]
      %v265 = vld [vmem:[%s1 + $0x5c] sm:$0xf]
      %v266 = vld [vmem:[%s1 + $0x60] sm:$0xf]
      %v267 = vld [vmem:[%s1 + $0x64] sm:$0xf]
      %v268 = vld [vmem:[%s1 + $0x68] sm:$0xf]
      %v269 = vld [vmem:[%s1 + $0x6c] sm:$0xf]
      %v270 = vld [vmem:[%s1 + $0x70] sm:$0xf]
      %v271 = vld [vmem:[%s1 + $0x74] sm:$0xf]
      %v272 = vld [vmem:[%s1 + $0x78] sm:$0xf]
      %v273 = vld [vmem:[%s1 + $0x7c] sm:$0xf]
      %v274 = vld [vmem:[%s1 + $0x80] sm:$0xf]
      %v275 = vld [vmem:[%s1 + $0x84] sm:$0xf]
      %v276 = vld [vmem:[%s1 + $0x88] sm:$0xf]
      %v277 = vld [vmem:[%s1 + $0x8c] sm:$0xf]
      %v278 = vld [vmem:[%s2] sm:$0x1]
      %v280 = vperm.slane %v278, 0
      %v346 = vunpack.c.l.b16 %v178
      %v347 = vunpack.c.h.b16 %v178
      %v348 = vunpack.c.l.b16 %v179
      %v349 = vunpack.c.l.b16 %v180
      %v350 = vunpack.c.h.b16 %v180
      %v351 = vunpack.c.l.b16 %v181
      %v352 = vunpack.c.l.b16 %v182
      %v353 = vunpack.c.h.b16 %v182
      %v354 = vunpack.c.l.b16 %v183
      %v355 = vunpack.c.l.b16 %v184
      %v356 = vunpack.c.h.b16 %v184
      %v357 = vunpack.c.l.b16 %v185
      %v358 = vunpack.c.l.b16 %v186
      %v359 = vunpack.c.h.b16 %v186
      %v360 = vunpack.c.l.b16 %v187
      %v361 = vunpack.c.l.b16 %v188
      %v362 = vunpack.c.h.b16 %v188
      %v363 = vunpack.c.l.b16 %v189
      %v364 = vunpack.c.l.b16 %v190
      %v365 = vunpack.c.h.b16 %v190
      %v366 = vunpack.c.l.b16 %v191
      %v367 = vunpack.c.l.b16 %v192
      %v368 = vunpack.c.h.b16 %v192
      %v369 = vunpack.c.l.b16 %v193
      %v370 = vunpack.c.l.b16 %v194
      %v371 = vunpack.c.h.b16 %v194
      %v372 = vunpack.c.l.b16 %v195
      %v373 = vunpack.c.l.b16 %v196
      %v374 = vunpack.c.h.b16 %v196
      %v375 = vunpack.c.l.b16 %v197
      %v376 = vunpack.c.l.b16 %v198
      %v377 = vunpack.c.h.b16 %v198
      %v378 = vunpack.c.l.b16 %v199
      %v379 = vunpack.c.l.b16 %v200
      %v380 = vunpack.c.h.b16 %v200
      %v381 = vunpack.c.l.b16 %v201
      %v382 = vunpack.c.l.b16 %v202
      %v383 = vunpack.c.h.b16 %v202
      %v384 = vunpack.c.l.b16 %v203
      %v385 = vunpack.c.l.b16 %v204
      %v386 = vunpack.c.h.b16 %v204
      %v387 = vunpack.c.l.b16 %v205
      %v388 = vunpack.c.l.b16 %v206
      %v389 = vunpack.c.h.b16 %v206
      %v390 = vunpack.c.l.b16 %v207
      %v391 = vunpack.c.l.b16 %v208
      %v392 = vunpack.c.h.b16 %v208
      %v393 = vunpack.c.l.b16 %v209
      %v394 = vunpack.c.l.b16 %v210
      %v395 = vunpack.c.h.b16 %v210
      %v396 = vunpack.c.l.b16 %v211
      %v397 = vunpack.c.l.b16 %v212
      %v398 = vunpack.c.h.b16 %v212
      %v399 = vunpack.c.l.b16 %v213
      %v400 = vunpack.c.l.b16 %v214
      %v401 = vunpack.c.h.b16 %v214
      %v402 = vunpack.c.l.b16 %v215
      %v403 = vunpack.c.l.b16 %v216
      %v404 = vunpack.c.h.b16 %v216
      %v405 = vunpack.c.l.b16 %v217
      %v406 = vunpack.c.l.b16 %v218
      %v407 = vunpack.c.h.b16 %v218
      %v408 = vunpack.c.l.b16 %v219
      %v409 = vunpack.c.l.b16 %v220
      %v410 = vunpack.c.h.b16 %v220
      %v411 = vunpack.c.l.b16 %v221
      %v412 = vunpack.c.l.b16 %v222
      %v413 = vunpack.c.h.b16 %v222
      %v414 = vunpack.c.l.b16 %v223
      %v415 = vunpack.c.l.b16 %v224
      %v416 = vunpack.c.h.b16 %v224
      %v417 = vunpack.c.l.b16 %v225
      %v418 = vunpack.c.l.b16 %v226
      %v419 = vunpack.c.h.b16 %v226
      %v420 = vunpack.c.l.b16 %v227
      %v421 = vunpack.c.l.b16 %v228
      %v422 = vunpack.c.h.b16 %v228
      %v423 = vunpack.c.l.b16 %v229
      %v424 = vunpack.c.l.b16 %v230
      %v425 = vunpack.c.h.b16 %v230
      %v426 = vunpack.c.l.b16 %v231
      %v427 = vunpack.c.l.b16 %v232
      %v428 = vunpack.c.h.b16 %v232
      %v429 = vunpack.c.l.b16 %v233
      %v430 = vunpack.c.l.b16 %v234
      %v431 = vunpack.c.h.b16 %v234
      %v432 = vunpack.c.l.b16 %v235
      %v433 = vunpack.c.l.b16 %v236
      %v434 = vunpack.c.h.b16 %v236
      %v435 = vunpack.c.l.b16 %v237
      %v436 = vunpack.c.l.b16 %v238
      %v437 = vunpack.c.h.b16 %v238
      %v438 = vunpack.c.l.b16 %v239
      %v439 = vunpack.c.l.b16 %v240
      %v440 = vunpack.c.h.b16 %v240
      %v441 = vunpack.c.l.b16 %v241
      %v442 = vpack.c.b16 %v349, %v346
      %v443 = vpack.c.b16 %v350, %v347
      %v444 = vpack.c.b16 %v351, %v348
      %v445 = vpack.c.b16 %v355, %v352
      %v446 = vpack.c.b16 %v356, %v353
      %v447 = vpack.c.b16 %v357, %v354
      %v448 = vpack.c.b16 %v361, %v358
      %v449 = vpack.c.b16 %v362, %v359
      %v450 = vpack.c.b16 %v363, %v360
      %v451 = vpack.c.b16 %v367, %v364
      %v452 = vpack.c.b16 %v368, %v365
      %v453 = vpack.c.b16 %v369, %v366
      %v454 = vpack.c.b16 %v373, %v370
      %v455 = vpack.c.b16 %v374, %v371
      %v456 = vpack.c.b16 %v375, %v372
      %v457 = vpack.c.b16 %v379, %v376
      %v458 = vpack.c.b16 %v380, %v377
      %v459 = vpack.c.b16 %v381, %v378
      %v460 = vpack.c.b16 %v385, %v382
      %v461 = vpack.c.b16 %v386, %v383
      %v462 = vpack.c.b16 %v387, %v384
      %v463 = vpack.c.b16 %v391, %v388
      %v464 = vpack.c.b16 %v392, %v389
      %v465 = vpack.c.b16 %v393, %v390
      %v466 = vpack.c.b16 %v397, %v394
      %v467 = vpack.c.b16 %v398, %v395
      %v468 = vpack.c.b16 %v399, %v396
      %v469 = vpack.c.b16 %v403, %v400
      %v470 = vpack.c.b16 %v404, %v401
      %v471 = vpack.c.b16 %v405, %v402
      %v472 = vpack.c.b16 %v409, %v406
      %v473 = vpack.c.b16 %v410, %v407
      %v474 = vpack.c.b16 %v411, %v408
      %v475 = vpack.c.b16 %v415, %v412
      %v476 = vpack.c.b16 %v416, %v413
      %v477 = vpack.c.b16 %v417, %v414
      %v478 = vpack.c.b16 %v421, %v418
      %v479 = vpack.c.b16 %v422, %v419
      %v480 = vpack.c.b16 %v423, %v420
      %v481 = vpack.c.b16 %v427, %v424
      %v482 = vpack.c.b16 %v428, %v425
      %v483 = vpack.c.b16 %v429, %v426
      %v484 = vpack.c.b16 %v433, %v430
      %v485 = vpack.c.b16 %v434, %v431
      %v486 = vpack.c.b16 %v435, %v432
      %v487 = vpack.c.b16 %v439, %v436
      %v488 = vpack.c.b16 %v440, %v437
      %v489 = vpack.c.b16 %v441, %v438
      %v558 = vunpack.c.l.b16 %v242
      %v559 = vunpack.c.l.b16 %v243
      %v560 = vunpack.c.l.b16 %v244
      %v561 = vunpack.c.l.b16 %v245
      %v562 = vunpack.c.l.b16 %v246
      %v563 = vunpack.c.l.b16 %v247
      %v564 = vunpack.c.l.b16 %v248
      %v565 = vunpack.c.l.b16 %v249
      %v566 = vunpack.c.l.b16 %v250
      %v567 = vunpack.c.l.b16 %v251
      %v568 = vunpack.c.l.b16 %v252
      %v569 = vunpack.c.l.b16 %v253
      %v570 = vunpack.c.l.b16 %v254
      %v571 = vunpack.c.l.b16 %v255
      %v572 = vunpack.c.l.b16 %v256
      %v573 = vunpack.c.l.b16 %v257
      %v574 = vunpack.c.l.b16 %v258
      %v575 = vunpack.c.l.b16 %v259
      %v576 = vunpack.c.l.b16 %v260
      %v577 = vunpack.c.l.b16 %v261
      %v578 = vunpack.c.l.b16 %v262
      %v579 = vunpack.c.l.b16 %v263
      %v580 = vunpack.c.l.b16 %v264
      %v581 = vunpack.c.l.b16 %v265
      %v582 = vunpack.c.l.b16 %v266
      %v583 = vunpack.c.l.b16 %v267
      %v584 = vunpack.c.l.b16 %v268
      %v585 = vunpack.c.l.b16 %v269
      %v586 = vunpack.c.l.b16 %v270
      %v587 = vunpack.c.l.b16 %v271
      %v588 = vunpack.c.l.b16 %v272
      %v589 = vunpack.c.l.b16 %v273
      %v590 = vunpack.c.l.b16 %v274
      %v591 = vunpack.c.l.b16 %v275
      %v592 = vunpack.c.l.b16 %v276
      %v593 = vunpack.c.l.b16 %v277
      %v594 = vpack.c.b16 %v559, %v558
      %v595 = vpack.c.b16 %v561, %v560
      %v596 = vpack.c.b16 %v563, %v562
      %v597 = vpack.c.b16 %v565, %v564
      %v598 = vpack.c.b16 %v567, %v566
      %v599 = vpack.c.b16 %v569, %v568
      %v600 = vpack.c.b16 %v571, %v570
      %v601 = vpack.c.b16 %v573, %v572
      %v602 = vpack.c.b16 %v575, %v574
      %v603 = vpack.c.b16 %v577, %v576
      %v604 = vpack.c.b16 %v579, %v578
      %v605 = vpack.c.b16 %v581, %v580
      %v606 = vpack.c.b16 %v583, %v582
      %v607 = vpack.c.b16 %v585, %v584
      %v608 = vpack.c.b16 %v587, %v586
      %v609 = vpack.c.b16 %v589, %v588
      %v610 = vpack.c.b16 %v591, %v590
      %v611 = vpack.c.b16 %v593, %v592
      %vm630 = vcmask 261120
      %v632 = vsel %vm630, %v444, 0
      %v635 = vsel %vm630, %v447, 0
      %v638 = vsel %vm630, %v450, 0
      %v641 = vsel %vm630, %v453, 0
      %v644 = vsel %vm630, %v456, 0
      %v647 = vsel %vm630, %v459, 0
      %v650 = vsel %vm630, %v462, 0
      %v653 = vsel %vm630, %v465, 0
      %v656 = vsel %vm630, %v468, 0
      %v659 = vsel %vm630, %v471, 0
      %v662 = vsel %vm630, %v474, 0
      %v665 = vsel %vm630, %v477, 0
      %v668 = vsel %vm630, %v480, 0
      %v671 = vsel %vm630, %v483, 0
      %v674 = vsel %vm630, %v486, 0
      %v677 = vsel %vm630, %v489, 0
      %679 = vmatpush.bf16.msra.mxu0 %v601
      %680 = vmatpush.bf16.msra.mxu0 %v600
      %681 = vmatpush.bf16.msra.mxu0 %v599
      %682 = vmatpush.bf16.msra.mxu0 %v598
      %683 = vmatpush.bf16.msra.mxu0 %v597
      %684 = vmatpush.bf16.msra.mxu0 %v596
      %685 = vmatpush.bf16.msra.mxu0 %v595
      %686 = vmatpush.bf16.msra.mxu0 %v594
      %687 = vmatmul.bf16.gmra.mxu0 %v442
      %v688 = vpop.f32.mrf.mxu0
      %v689 = vadd.f32 %v280, %v688
      %v690 = vpop.f32.mrf.mxu0
      %v691 = vadd.f32 %v280, %v690
      %692 = vmatmul.bf16.gmra.mxu0 %v445
      %v693 = vpop.f32.mrf.mxu0
      %v694 = vadd.f32 %v280, %v693
      %v695 = vpop.f32.mrf.mxu0
      %v696 = vadd.f32 %v280, %v695
      %697 = vmatmul.bf16.gmra.mxu0 %v448
      %v698 = vpop.f32.mrf.mxu0
      %v699 = vadd.f32 %v280, %v698
      %v700 = vpop.f32.mrf.mxu0
      %v701 = vadd.f32 %v280, %v700
      %702 = vmatmul.bf16.gmra.mxu0 %v451
      %v703 = vpop.f32.mrf.mxu0
      %v704 = vadd.f32 %v280, %v703
      %v705 = vpop.f32.mrf.mxu0
      %v706 = vadd.f32 %v280, %v705
      %707 = vmatmul.bf16.gmra.mxu0 %v454
      %v708 = vpop.f32.mrf.mxu0
      %v709 = vadd.f32 %v280, %v708
      %v710 = vpop.f32.mrf.mxu0
      %v711 = vadd.f32 %v280, %v710
      %712 = vmatmul.bf16.gmra.mxu0 %v457
      %v713 = vpop.f32.mrf.mxu0
      %v714 = vadd.f32 %v280, %v713
      %v715 = vpop.f32.mrf.mxu0
      %v716 = vadd.f32 %v280, %v715
      %717 = vmatmul.bf16.gmra.mxu0 %v460
      %v718 = vpop.f32.mrf.mxu0
      %v719 = vadd.f32 %v280, %v718
      %v720 = vpop.f32.mrf.mxu0
      %v721 = vadd.f32 %v280, %v720
      %722 = vmatmul.bf16.gmra.mxu0 %v463
      %v723 = vpop.f32.mrf.mxu0
      %v724 = vadd.f32 %v280, %v723
      %v725 = vpop.f32.mrf.mxu0
      %v726 = vadd.f32 %v280, %v725
      %727 = vmatmul.bf16.gmra.mxu0 %v466
      %v728 = vpop.f32.mrf.mxu0
      %v729 = vadd.f32 %v280, %v728
      %v730 = vpop.f32.mrf.mxu0
      %v731 = vadd.f32 %v280, %v730
      %732 = vmatmul.bf16.gmra.mxu0 %v469
      %v733 = vpop.f32.mrf.mxu0
      %v734 = vadd.f32 %v280, %v733
      %v735 = vpop.f32.mrf.mxu0
      %v736 = vadd.f32 %v280, %v735
      %737 = vmatmul.bf16.gmra.mxu0 %v472
      %v738 = vpop.f32.mrf.mxu0
      %v739 = vadd.f32 %v280, %v738
      %v740 = vpop.f32.mrf.mxu0
      %v741 = vadd.f32 %v280, %v740
      %742 = vmatmul.bf16.gmra.mxu0 %v475
      %v743 = vpop.f32.mrf.mxu0
      %v744 = vadd.f32 %v280, %v743
      %v745 = vpop.f32.mrf.mxu0
      %v746 = vadd.f32 %v280, %v745
      %747 = vmatmul.bf16.gmra.mxu0 %v478
      %v748 = vpop.f32.mrf.mxu0
      %v749 = vadd.f32 %v280, %v748
      %v750 = vpop.f32.mrf.mxu0
      %v751 = vadd.f32 %v280, %v750
      %752 = vmatmul.bf16.gmra.mxu0 %v481
      %v753 = vpop.f32.mrf.mxu0
      %v754 = vadd.f32 %v280, %v753
      %v755 = vpop.f32.mrf.mxu0
      %v756 = vadd.f32 %v280, %v755
      %757 = vmatmul.bf16.gmra.mxu0 %v484
      %v758 = vpop.f32.mrf.mxu0
      %v759 = vadd.f32 %v280, %v758
      %v760 = vpop.f32.mrf.mxu0
      %v761 = vadd.f32 %v280, %v760
      %762 = vmatmul.bf16.gmra.mxu0 %v487
      %v763 = vpop.f32.mrf.mxu0
      %v764 = vadd.f32 %v280, %v763
      %v765 = vpop.f32.mrf.mxu0
      %v766 = vadd.f32 %v280, %v765
      %767 = vdwg.mxu0
      %768 = vmatpush.bf16.msra.mxu0 %v609
      %769 = vmatpush.bf16.msra.mxu0 %v608
      %770 = vmatpush.bf16.msra.mxu0 %v607
      %771 = vmatpush.bf16.msra.mxu0 %v606
      %772 = vmatpush.bf16.msra.mxu0 %v605
      %773 = vmatpush.bf16.msra.mxu0 %v604
      %774 = vmatpush.bf16.msra.mxu0 %v603
      %775 = vmatpush.bf16.msra.mxu0 %v602
      %776 = vmatmul.bf16.gmra.mxu0 %v443
      %v777 = vpop.f32.mrf.mxu0
      %v778 = vadd.f32 %v689, %v777
      %v779 = vpop.f32.mrf.mxu0
      %v780 = vadd.f32 %v691, %v779
      %781 = vmatmul.bf16.gmra.mxu0 %v446
      %v782 = vpop.f32.mrf.mxu0
      %v783 = vadd.f32 %v694, %v782
      %v784 = vpop.f32.mrf.mxu0
      %v785 = vadd.f32 %v696, %v784
      %786 = vmatmul.bf16.gmra.mxu0 %v449
      %v787 = vpop.f32.mrf.mxu0
      %v788 = vadd.f32 %v699, %v787
      %v789 = vpop.f32.mrf.mxu0
      %v790 = vadd.f32 %v701, %v789
      %791 = vmatmul.bf16.gmra.mxu0 %v452
      %v792 = vpop.f32.mrf.mxu0
      %v793 = vadd.f32 %v704, %v792
      %v794 = vpop.f32.mrf.mxu0
      %v795 = vadd.f32 %v706, %v794
      %796 = vmatmul.bf16.gmra.mxu0 %v455
      %v797 = vpop.f32.mrf.mxu0
      %v798 = vadd.f32 %v709, %v797
      %v799 = vpop.f32.mrf.mxu0
      %v800 = vadd.f32 %v711, %v799
      %801 = vmatmul.bf16.gmra.mxu0 %v458
      %v802 = vpop.f32.mrf.mxu0
      %v803 = vadd.f32 %v714, %v802
      %v804 = vpop.f32.mrf.mxu0
      %v805 = vadd.f32 %v716, %v804
      %806 = vmatmul.bf16.gmra.mxu0 %v461
      %v807 = vpop.f32.mrf.mxu0
      %v808 = vadd.f32 %v719, %v807
      %v809 = vpop.f32.mrf.mxu0
      %v810 = vadd.f32 %v721, %v809
      %811 = vmatmul.bf16.gmra.mxu0 %v464
      %v812 = vpop.f32.mrf.mxu0
      %v813 = vadd.f32 %v724, %v812
      %v814 = vpop.f32.mrf.mxu0
      %v815 = vadd.f32 %v726, %v814
      %816 = vmatmul.bf16.gmra.mxu0 %v467
      %v817 = vpop.f32.mrf.mxu0
      %v818 = vadd.f32 %v729, %v817
      %v819 = vpop.f32.mrf.mxu0
      %v820 = vadd.f32 %v731, %v819
      %821 = vmatmul.bf16.gmra.mxu0 %v470
      %v822 = vpop.f32.mrf.mxu0
      %v823 = vadd.f32 %v734, %v822
      %v824 = vpop.f32.mrf.mxu0
      %v825 = vadd.f32 %v736, %v824
      %826 = vmatmul.bf16.gmra.mxu0 %v473
      %v827 = vpop.f32.mrf.mxu0
      %v828 = vadd.f32 %v739, %v827
      %v829 = vpop.f32.mrf.mxu0
      %v830 = vadd.f32 %v741, %v829
      %831 = vmatmul.bf16.gmra.mxu0 %v476
      %v832 = vpop.f32.mrf.mxu0
      %v833 = vadd.f32 %v744, %v832
      %v834 = vpop.f32.mrf.mxu0
      %v835 = vadd.f32 %v746, %v834
      %836 = vmatmul.bf16.gmra.mxu0 %v479
      %v837 = vpop.f32.mrf.mxu0
      %v838 = vadd.f32 %v749, %v837
      %v839 = vpop.f32.mrf.mxu0
      %v840 = vadd.f32 %v751, %v839
      %841 = vmatmul.bf16.gmra.mxu0 %v482
      %v842 = vpop.f32.mrf.mxu0
      %v843 = vadd.f32 %v754, %v842
      %v844 = vpop.f32.mrf.mxu0
      %v845 = vadd.f32 %v756, %v844
      %846 = vmatmul.bf16.gmra.mxu0 %v485
      %v847 = vpop.f32.mrf.mxu0
      %v848 = vadd.f32 %v759, %v847
      %v849 = vpop.f32.mrf.mxu0
      %v850 = vadd.f32 %v761, %v849
      %851 = vmatmul.bf16.gmra.mxu0 %v488
      %v852 = vpop.f32.mrf.mxu0
      %v853 = vadd.f32 %v764, %v852
      %v854 = vpop.f32.mrf.mxu0
      %v855 = vadd.f32 %v766, %v854
      %856 = vdwg.mxu0
      %857 = vmatpush.bf16.msra.mxu0 0
      %858 = vmatpush.bf16.msra.mxu0 0
      %859 = vmatpush.bf16.msra.mxu0 0
      %860 = vmatpush.bf16.msra.mxu0 0
      %861 = vmatpush.bf16.msra.mxu0 0
      %862 = vmatpush.bf16.msra.mxu0 0
      %863 = vmatpush.bf16.msra.mxu0 %v611
      %864 = vmatpush.bf16.msra.mxu0 %v610
      %865 = vmatmul.bf16.gmra.mxu0 %v632
      %v866 = vpop.f32.mrf.mxu0
      %v867 = vadd.f32 %v778, %v866
      %v868 = vpop.f32.mrf.mxu0
      %v869 = vadd.f32 %v780, %v868
      %870 = vmatmul.bf16.gmra.mxu0 %v635
      %v871 = vpop.f32.mrf.mxu0
      %v872 = vadd.f32 %v783, %v871
      %v873 = vpop.f32.mrf.mxu0
      %v874 = vadd.f32 %v785, %v873
      %875 = vmatmul.bf16.gmra.mxu0 %v638
      %v876 = vpop.f32.mrf.mxu0
      %v877 = vadd.f32 %v788, %v876
      %v878 = vpop.f32.mrf.mxu0
      %v879 = vadd.f32 %v790, %v878
      %880 = vmatmul.bf16.gmra.mxu0 %v641
      %v881 = vpop.f32.mrf.mxu0
      %v882 = vadd.f32 %v793, %v881
      %v883 = vpop.f32.mrf.mxu0
      %v884 = vadd.f32 %v795, %v883
      %885 = vmatmul.bf16.gmra.mxu0 %v644
      %v886 = vpop.f32.mrf.mxu0
      %v887 = vadd.f32 %v798, %v886
      %v888 = vpop.f32.mrf.mxu0
      %v889 = vadd.f32 %v800, %v888
      %890 = vmatmul.bf16.gmra.mxu0 %v647
      %v891 = vpop.f32.mrf.mxu0
      %v892 = vadd.f32 %v803, %v891
      %v893 = vpop.f32.mrf.mxu0
      %v894 = vadd.f32 %v805, %v893
      %895 = vmatmul.bf16.gmra.mxu0 %v650
      %v896 = vpop.f32.mrf.mxu0
      %v897 = vadd.f32 %v808, %v896
      %v898 = vpop.f32.mrf.mxu0
      %v899 = vadd.f32 %v810, %v898
      %900 = vmatmul.bf16.gmra.mxu0 %v653
      %v901 = vpop.f32.mrf.mxu0
      %v902 = vadd.f32 %v813, %v901
      %v903 = vpop.f32.mrf.mxu0
      %v904 = vadd.f32 %v815, %v903
      %905 = vmatmul.bf16.gmra.mxu0 %v656
      %v906 = vpop.f32.mrf.mxu0
      %v907 = vadd.f32 %v818, %v906
      %v908 = vpop.f32.mrf.mxu0
      %v909 = vadd.f32 %v820, %v908
      %910 = vmatmul.bf16.gmra.mxu0 %v659
      %v911 = vpop.f32.mrf.mxu0
      %v912 = vadd.f32 %v823, %v911
      %v913 = vpop.f32.mrf.mxu0
      %v914 = vadd.f32 %v825, %v913
      %915 = vmatmul.bf16.gmra.mxu0 %v662
      %v916 = vpop.f32.mrf.mxu0
      %v917 = vadd.f32 %v828, %v916
      %v918 = vpop.f32.mrf.mxu0
      %v919 = vadd.f32 %v830, %v918
      %920 = vmatmul.bf16.gmra.mxu0 %v665
      %v921 = vpop.f32.mrf.mxu0
      %v922 = vadd.f32 %v833, %v921
      %v923 = vpop.f32.mrf.mxu0
      %v924 = vadd.f32 %v835, %v923
      %925 = vmatmul.bf16.gmra.mxu0 %v668
      %v926 = vpop.f32.mrf.mxu0
      %v927 = vadd.f32 %v838, %v926
      %v928 = vpop.f32.mrf.mxu0
      %v929 = vadd.f32 %v840, %v928
      %930 = vmatmul.bf16.gmra.mxu0 %v671
      %v931 = vpop.f32.mrf.mxu0
      %v932 = vadd.f32 %v843, %v931
      %v933 = vpop.f32.mrf.mxu0
      %v934 = vadd.f32 %v845, %v933
      %935 = vmatmul.bf16.gmra.mxu0 %v674
      %v936 = vpop.f32.mrf.mxu0
      %v937 = vadd.f32 %v848, %v936
      %v938 = vpop.f32.mrf.mxu0
      %v939 = vadd.f32 %v850, %v938
      %940 = vmatmul.bf16.gmra.mxu0 %v677
      %v941 = vpop.f32.mrf.mxu0
      %v942 = vadd.f32 %v853, %v941
      %v943 = vpop.f32.mrf.mxu0
      %v944 = vadd.f32 %v855, %v943
      %945 = vdwg.mxu0
      %v946 = vxor.u32 %v867, 2147483648
      %v947 = vxor.u32 %v869, 2147483648
      %v948 = vxor.u32 %v872, 2147483648
      %v949 = vxor.u32 %v874, 2147483648
      %v950 = vxor.u32 %v877, 2147483648
      %v951 = vxor.u32 %v879, 2147483648
      %v952 = vxor.u32 %v882, 2147483648
      %v953 = vxor.u32 %v884, 2147483648
      %v954 = vxor.u32 %v887, 2147483648
      %v955 = vxor.u32 %v889, 2147483648
      %v956 = vxor.u32 %v892, 2147483648
      %v957 = vxor.u32 %v894, 2147483648
      %v958 = vxor.u32 %v897, 2147483648
      %v959 = vxor.u32 %v899, 2147483648
      %v960 = vxor.u32 %v902, 2147483648
      %v961 = vxor.u32 %v904, 2147483648
      %v962 = vxor.u32 %v907, 2147483648
      %v963 = vxor.u32 %v909, 2147483648
      %v964 = vxor.u32 %v912, 2147483648
      %v965 = vxor.u32 %v914, 2147483648
      %v966 = vxor.u32 %v917, 2147483648
      %v967 = vxor.u32 %v919, 2147483648
      %v968 = vxor.u32 %v922, 2147483648
      %v969 = vxor.u32 %v924, 2147483648
      %v970 = vxor.u32 %v927, 2147483648
      %v971 = vxor.u32 %v929, 2147483648
      %v972 = vxor.u32 %v932, 2147483648
      %v973 = vxor.u32 %v934, 2147483648
      %v974 = vxor.u32 %v937, 2147483648
      %v975 = vxor.u32 %v939, 2147483648
      %v976 = vxor.u32 %v942, 2147483648
      %v977 = vxor.u32 %v944, 2147483648
      %v978 = vmul.f32 %v946, 1.442695
      %v979 = vpow.pop %v978
      %v980 = vmul.f32 %v947, 1.442695
      %v981 = vpow.pop %v980
      %v982 = vmul.f32 %v948, 1.442695
      %v983 = vpow.pop %v982
      %v984 = vmul.f32 %v949, 1.442695
      %v985 = vpow.pop %v984
      %v986 = vmul.f32 %v950, 1.442695
      %v987 = vpow.pop %v986
      %v988 = vmul.f32 %v951, 1.442695
      %v989 = vpow.pop %v988
      %v990 = vmul.f32 %v952, 1.442695
      %v991 = vpow.pop %v990
      %v992 = vmul.f32 %v953, 1.442695
      %v993 = vpow.pop %v992
      %v994 = vmul.f32 %v954, 1.442695
      %v995 = vpow.pop %v994
      %v996 = vmul.f32 %v955, 1.442695
      %v997 = vpow.pop %v996
      %v998 = vmul.f32 %v956, 1.442695
      %v999 = vpow.pop %v998
      %v1000 = vmul.f32 %v957, 1.442695
      %v1001 = vpow.pop %v1000
      %v1002 = vmul.f32 %v958, 1.442695
      %v1003 = vpow.pop %v1002
      %v1004 = vmul.f32 %v959, 1.442695
      %v1005 = vpow.pop %v1004
      %v1006 = vmul.f32 %v960, 1.442695
      %v1007 = vpow.pop %v1006
      %v1008 = vmul.f32 %v961, 1.442695
      %v1009 = vpow.pop %v1008
      %v1010 = vmul.f32 %v962, 1.442695
      %v1011 = vpow.pop %v1010
      %v1012 = vmul.f32 %v963, 1.442695
      %v1013 = vpow.pop %v1012
      %v1014 = vmul.f32 %v964, 1.442695
      %v1015 = vpow.pop %v1014
      %v1016 = vmul.f32 %v965, 1.442695
      %v1017 = vpow.pop %v1016
      %v1018 = vmul.f32 %v966, 1.442695
      %v1019 = vpow.pop %v1018
      %v1020 = vmul.f32 %v967, 1.442695
      %v1021 = vpow.pop %v1020
      %v1022 = vmul.f32 %v968, 1.442695
      %v1023 = vpow.pop %v1022
      %v1024 = vmul.f32 %v969, 1.442695
      %v1025 = vpow.pop %v1024
      %v1026 = vmul.f32 %v970, 1.442695
      %v1027 = vpow.pop %v1026
      %v1028 = vmul.f32 %v971, 1.442695
      %v1029 = vpow.pop %v1028
      %v1030 = vmul.f32 %v972, 1.442695
      %v1031 = vpow.pop %v1030
      %v1032 = vmul.f32 %v973, 1.442695
      %v1033 = vpow.pop %v1032
      %v1034 = vmul.f32 %v974, 1.442695
      %v1035 = vpow.pop %v1034
      %v1036 = vmul.f32 %v975, 1.442695
      %v1037 = vpow.pop %v1036
      %v1038 = vmul.f32 %v976, 1.442695
      %v1039 = vpow.pop %v1038
      %v1040 = vmul.f32 %v977, 1.442695
      %v1041 = vpow.pop %v1040
      %v1042 = vadd.f32 %v979, 1.0
      %v1043 = vadd.f32 %v981, 1.0
      %v1044 = vadd.f32 %v983, 1.0
      %v1045 = vadd.f32 %v985, 1.0
      %v1046 = vadd.f32 %v987, 1.0
      %v1047 = vadd.f32 %v989, 1.0
      %v1048 = vadd.f32 %v991, 1.0
      %v1049 = vadd.f32 %v993, 1.0
      %v1050 = vadd.f32 %v995, 1.0
      %v1051 = vadd.f32 %v997, 1.0
      %v1052 = vadd.f32 %v999, 1.0
      %v1053 = vadd.f32 %v1001, 1.0
      %v1054 = vadd.f32 %v1003, 1.0
      %v1055 = vadd.f32 %v1005, 1.0
      %v1056 = vadd.f32 %v1007, 1.0
      %v1057 = vadd.f32 %v1009, 1.0
      %v1058 = vadd.f32 %v1011, 1.0
      %v1059 = vadd.f32 %v1013, 1.0
      %v1060 = vadd.f32 %v1015, 1.0
      %v1061 = vadd.f32 %v1017, 1.0
      %v1062 = vadd.f32 %v1019, 1.0
      %v1063 = vadd.f32 %v1021, 1.0
      %v1064 = vadd.f32 %v1023, 1.0
      %v1065 = vadd.f32 %v1025, 1.0
      %v1066 = vadd.f32 %v1027, 1.0
      %v1067 = vadd.f32 %v1029, 1.0
      %v1068 = vadd.f32 %v1031, 1.0
      %v1069 = vadd.f32 %v1033, 1.0
      %v1070 = vadd.f32 %v1035, 1.0
      %v1071 = vadd.f32 %v1037, 1.0
      %v1072 = vadd.f32 %v1039, 1.0
      %v1073 = vadd.f32 %v1041, 1.0
      %v1074 = vrcp.pop %v1042
      %v1075 = vmul.f32 %v1042, %v1074
      %v1076 = vsub.f32 1.0, %v1075
      %v1077 = vmul.f32 %v1074, %v1076
      %v1078 = vadd.f32 %v1074, %v1077
      %vm1079 = vweird.f32 %v1042
      %vm1080 = vweird.f32 %v1074
      %vm1081 = vmor %vm1079, %vm1080
      %v1082 = vsel %vm1081, %v1074, %v1078
      %v1083 = vand.u32 2147483647, %v1042
      %vm1084 = vcmp.eq.f32.partialorder %v1083, 8.507059e+37
      %v1085 = vand.u32 %v1042, 2147483648
      %v1086 = vor.u32 1.1754944e-38, %v1085
      %v1087 = vsel %vm1084, %v1086, %v1082
      %v1088 = vmul.f32 1.0, %v1087
      %v1089 = vrcp.pop %v1043
      %v1090 = vmul.f32 %v1043, %v1089
      %v1091 = vsub.f32 1.0, %v1090
      %v1092 = vmul.f32 %v1089, %v1091
      %v1093 = vadd.f32 %v1089, %v1092
      %vm1094 = vweird.f32 %v1043
      %vm1095 = vweird.f32 %v1089
      %vm1096 = vmor %vm1094, %vm1095
      %v1097 = vsel %vm1096, %v1089, %v1093
      %v1098 = vand.u32 2147483647, %v1043
      %vm1099 = vcmp.eq.f32.partialorder %v1098, 8.507059e+37
      %v1100 = vand.u32 %v1043, 2147483648
      %v1101 = vor.u32 1.1754944e-38, %v1100
      %v1102 = vsel %vm1099, %v1101, %v1097
      %v1103 = vmul.f32 1.0, %v1102
      %v1104 = vrcp.pop %v1044
      %v1105 = vmul.f32 %v1044, %v1104
      %v1106 = vsub.f32 1.0, %v1105
      %v1107 = vmul.f32 %v1104, %v1106
      %v1108 = vadd.f32 %v1104, %v1107
      %vm1109 = vweird.f32 %v1044
      %vm1110 = vweird.f32 %v1104
      %vm1111 = vmor %vm1109, %vm1110
      %v1112 = vsel %vm1111, %v1104, %v1108
      %v1113 = vand.u32 2147483647, %v1044
      %vm1114 = vcmp.eq.f32.partialorder %v1113, 8.507059e+37
      %v1115 = vand.u32 %v1044, 2147483648
      %v1116 = vor.u32 1.1754944e-38, %v1115
      %v1117 = vsel %vm1114, %v1116, %v1112
      %v1118 = vmul.f32 1.0, %v1117
      %v1119 = vrcp.pop %v1045
      %v1120 = vmul.f32 %v1045, %v1119
      %v1121 = vsub.f32 1.0, %v1120
      %v1122 = vmul.f32 %v1119, %v1121
      %v1123 = vadd.f32 %v1119, %v1122
      %vm1124 = vweird.f32 %v1045
      %vm1125 = vweird.f32 %v1119
      %vm1126 = vmor %vm1124, %vm1125
      %v1127 = vsel %vm1126, %v1119, %v1123
      %v1128 = vand.u32 2147483647, %v1045
      %vm1129 = vcmp.eq.f32.partialorder %v1128, 8.507059e+37
      %v1130 = vand.u32 %v1045, 2147483648
      %v1131 = vor.u32 1.1754944e-38, %v1130
      %v1132 = vsel %vm1129, %v1131, %v1127
      %v1133 = vmul.f32 1.0, %v1132
      %v1134 = vrcp.pop %v1046
      %v1135 = vmul.f32 %v1046, %v1134
      %v1136 = vsub.f32 1.0, %v1135
      %v1137 = vmul.f32 %v1134, %v1136
      %v1138 = vadd.f32 %v1134, %v1137
      %vm1139 = vweird.f32 %v1046
      %vm1140 = vweird.f32 %v1134
      %vm1141 = vmor %vm1139, %vm1140
      %v1142 = vsel %vm1141, %v1134, %v1138
      %v1143 = vand.u32 2147483647, %v1046
      %vm1144 = vcmp.eq.f32.partialorder %v1143, 8.507059e+37
      %v1145 = vand.u32 %v1046, 2147483648
      %v1146 = vor.u32 1.1754944e-38, %v1145
      %v1147 = vsel %vm1144, %v1146, %v1142
      %v1148 = vmul.f32 1.0, %v1147
      %v1149 = vrcp.pop %v1047
      %v1150 = vmul.f32 %v1047, %v1149
      %v1151 = vsub.f32 1.0, %v1150
      %v1152 = vmul.f32 %v1149, %v1151
      %v1153 = vadd.f32 %v1149, %v1152
      %vm1154 = vweird.f32 %v1047
      %vm1155 = vweird.f32 %v1149
      %vm1156 = vmor %vm1154, %vm1155
      %v1157 = vsel %vm1156, %v1149, %v1153
      %v1158 = vand.u32 2147483647, %v1047
      %vm1159 = vcmp.eq.f32.partialorder %v1158, 8.507059e+37
      %v1160 = vand.u32 %v1047, 2147483648
      %v1161 = vor.u32 1.1754944e-38, %v1160
      %v1162 = vsel %vm1159, %v1161, %v1157
      %v1163 = vmul.f32 1.0, %v1162
      %v1164 = vrcp.pop %v1048
      %v1165 = vmul.f32 %v1048, %v1164
      %v1166 = vsub.f32 1.0, %v1165
      %v1167 = vmul.f32 %v1164, %v1166
      %v1168 = vadd.f32 %v1164, %v1167
      %vm1169 = vweird.f32 %v1048
      %vm1170 = vweird.f32 %v1164
      %vm1171 = vmor %vm1169, %vm1170
      %v1172 = vsel %vm1171, %v1164, %v1168
      %v1173 = vand.u32 2147483647, %v1048
      %vm1174 = vcmp.eq.f32.partialorder %v1173, 8.507059e+37
      %v1175 = vand.u32 %v1048, 2147483648
      %v1176 = vor.u32 1.1754944e-38, %v1175
      %v1177 = vsel %vm1174, %v1176, %v1172
      %v1178 = vmul.f32 1.0, %v1177
      %v1179 = vrcp.pop %v1049
      %v1180 = vmul.f32 %v1049, %v1179
      %v1181 = vsub.f32 1.0, %v1180
      %v1182 = vmul.f32 %v1179, %v1181
      %v1183 = vadd.f32 %v1179, %v1182
      %vm1184 = vweird.f32 %v1049
      %vm1185 = vweird.f32 %v1179
      %vm1186 = vmor %vm1184, %vm1185
      %v1187 = vsel %vm1186, %v1179, %v1183
      %v1188 = vand.u32 2147483647, %v1049
      %vm1189 = vcmp.eq.f32.partialorder %v1188, 8.507059e+37
      %v1190 = vand.u32 %v1049, 2147483648
      %v1191 = vor.u32 1.1754944e-38, %v1190
      %v1192 = vsel %vm1189, %v1191, %v1187
      %v1193 = vmul.f32 1.0, %v1192
      %v1194 = vrcp.pop %v1050
      %v1195 = vmul.f32 %v1050, %v1194
      %v1196 = vsub.f32 1.0, %v1195
      %v1197 = vmul.f32 %v1194, %v1196
      %v1198 = vadd.f32 %v1194, %v1197
      %vm1199 = vweird.f32 %v1050
      %vm1200 = vweird.f32 %v1194
      %vm1201 = vmor %vm1199, %vm1200
      %v1202 = vsel %vm1201, %v1194, %v1198
      %v1203 = vand.u32 2147483647, %v1050
      %vm1204 = vcmp.eq.f32.partialorder %v1203, 8.507059e+37
      %v1205 = vand.u32 %v1050, 2147483648
      %v1206 = vor.u32 1.1754944e-38, %v1205
      %v1207 = vsel %vm1204, %v1206, %v1202
      %v1208 = vmul.f32 1.0, %v1207
      %v1209 = vrcp.pop %v1051
      %v1210 = vmul.f32 %v1051, %v1209
      %v1211 = vsub.f32 1.0, %v1210
      %v1212 = vmul.f32 %v1209, %v1211
      %v1213 = vadd.f32 %v1209, %v1212
      %vm1214 = vweird.f32 %v1051
      %vm1215 = vweird.f32 %v1209
      %vm1216 = vmor %vm1214, %vm1215
      %v1217 = vsel %vm1216, %v1209, %v1213
      %v1218 = vand.u32 2147483647, %v1051
      %vm1219 = vcmp.eq.f32.partialorder %v1218, 8.507059e+37
      %v1220 = vand.u32 %v1051, 2147483648
      %v1221 = vor.u32 1.1754944e-38, %v1220
      %v1222 = vsel %vm1219, %v1221, %v1217
      %v1223 = vmul.f32 1.0, %v1222
      %v1224 = vrcp.pop %v1052
      %v1225 = vmul.f32 %v1052, %v1224
      %v1226 = vsub.f32 1.0, %v1225
      %v1227 = vmul.f32 %v1224, %v1226
      %v1228 = vadd.f32 %v1224, %v1227
      %vm1229 = vweird.f32 %v1052
      %vm1230 = vweird.f32 %v1224
      %vm1231 = vmor %vm1229, %vm1230
      %v1232 = vsel %vm1231, %v1224, %v1228
      %v1233 = vand.u32 2147483647, %v1052
      %vm1234 = vcmp.eq.f32.partialorder %v1233, 8.507059e+37
      %v1235 = vand.u32 %v1052, 2147483648
      %v1236 = vor.u32 1.1754944e-38, %v1235
      %v1237 = vsel %vm1234, %v1236, %v1232
      %v1238 = vmul.f32 1.0, %v1237
      %v1239 = vrcp.pop %v1053
      %v1240 = vmul.f32 %v1053, %v1239
      %v1241 = vsub.f32 1.0, %v1240
      %v1242 = vmul.f32 %v1239, %v1241
      %v1243 = vadd.f32 %v1239, %v1242
      %vm1244 = vweird.f32 %v1053
      %vm1245 = vweird.f32 %v1239
      %vm1246 = vmor %vm1244, %vm1245
      %v1247 = vsel %vm1246, %v1239, %v1243
      %v1248 = vand.u32 2147483647, %v1053
      %vm1249 = vcmp.eq.f32.partialorder %v1248, 8.507059e+37
      %v1250 = vand.u32 %v1053, 2147483648
      %v1251 = vor.u32 1.1754944e-38, %v1250
      %v1252 = vsel %vm1249, %v1251, %v1247
      %v1253 = vmul.f32 1.0, %v1252
      %v1254 = vrcp.pop %v1054
      %v1255 = vmul.f32 %v1054, %v1254
      %v1256 = vsub.f32 1.0, %v1255
      %v1257 = vmul.f32 %v1254, %v1256
      %v1258 = vadd.f32 %v1254, %v1257
      %vm1259 = vweird.f32 %v1054
      %vm1260 = vweird.f32 %v1254
      %vm1261 = vmor %vm1259, %vm1260
      %v1262 = vsel %vm1261, %v1254, %v1258
      %v1263 = vand.u32 2147483647, %v1054
      %vm1264 = vcmp.eq.f32.partialorder %v1263, 8.507059e+37
      %v1265 = vand.u32 %v1054, 2147483648
      %v1266 = vor.u32 1.1754944e-38, %v1265
      %v1267 = vsel %vm1264, %v1266, %v1262
      %v1268 = vmul.f32 1.0, %v1267
      %v1269 = vrcp.pop %v1055
      %v1270 = vmul.f32 %v1055, %v1269
      %v1271 = vsub.f32 1.0, %v1270
      %v1272 = vmul.f32 %v1269, %v1271
      %v1273 = vadd.f32 %v1269, %v1272
      %vm1274 = vweird.f32 %v1055
      %vm1275 = vweird.f32 %v1269
      %vm1276 = vmor %vm1274, %vm1275
      %v1277 = vsel %vm1276, %v1269, %v1273
      %v1278 = vand.u32 2147483647, %v1055
      %vm1279 = vcmp.eq.f32.partialorder %v1278, 8.507059e+37
      %v1280 = vand.u32 %v1055, 2147483648
      %v1281 = vor.u32 1.1754944e-38, %v1280
      %v1282 = vsel %vm1279, %v1281, %v1277
      %v1283 = vmul.f32 1.0, %v1282
      %v1284 = vrcp.pop %v1056
      %v1285 = vmul.f32 %v1056, %v1284
      %v1286 = vsub.f32 1.0, %v1285
      %v1287 = vmul.f32 %v1284, %v1286
      %v1288 = vadd.f32 %v1284, %v1287
      %vm1289 = vweird.f32 %v1056
      %vm1290 = vweird.f32 %v1284
      %vm1291 = vmor %vm1289, %vm1290
      %v1292 = vsel %vm1291, %v1284, %v1288
      %v1293 = vand.u32 2147483647, %v1056
      %vm1294 = vcmp.eq.f32.partialorder %v1293, 8.507059e+37
      %v1295 = vand.u32 %v1056, 2147483648
      %v1296 = vor.u32 1.1754944e-38, %v1295
      %v1297 = vsel %vm1294, %v1296, %v1292
      %v1298 = vmul.f32 1.0, %v1297
      %v1299 = vrcp.pop %v1057
      %v1300 = vmul.f32 %v1057, %v1299
      %v1301 = vsub.f32 1.0, %v1300
      %v1302 = vmul.f32 %v1299, %v1301
      %v1303 = vadd.f32 %v1299, %v1302
      %vm1304 = vweird.f32 %v1057
      %vm1305 = vweird.f32 %v1299
      %vm1306 = vmor %vm1304, %vm1305
      %v1307 = vsel %vm1306, %v1299, %v1303
      %v1308 = vand.u32 2147483647, %v1057
      %vm1309 = vcmp.eq.f32.partialorder %v1308, 8.507059e+37
      %v1310 = vand.u32 %v1057, 2147483648
      %v1311 = vor.u32 1.1754944e-38, %v1310
      %v1312 = vsel %vm1309, %v1311, %v1307
      %v1313 = vmul.f32 1.0, %v1312
      %v1314 = vrcp.pop %v1058
      %v1315 = vmul.f32 %v1058, %v1314
      %v1316 = vsub.f32 1.0, %v1315
      %v1317 = vmul.f32 %v1314, %v1316
      %v1318 = vadd.f32 %v1314, %v1317
      %vm1319 = vweird.f32 %v1058
      %vm1320 = vweird.f32 %v1314
      %vm1321 = vmor %vm1319, %vm1320
      %v1322 = vsel %vm1321, %v1314, %v1318
      %v1323 = vand.u32 2147483647, %v1058
      %vm1324 = vcmp.eq.f32.partialorder %v1323, 8.507059e+37
      %v1325 = vand.u32 %v1058, 2147483648
      %v1326 = vor.u32 1.1754944e-38, %v1325
      %v1327 = vsel %vm1324, %v1326, %v1322
      %v1328 = vmul.f32 1.0, %v1327
      %v1329 = vrcp.pop %v1059
      %v1330 = vmul.f32 %v1059, %v1329
      %v1331 = vsub.f32 1.0, %v1330
      %v1332 = vmul.f32 %v1329, %v1331
      %v1333 = vadd.f32 %v1329, %v1332
      %vm1334 = vweird.f32 %v1059
      %vm1335 = vweird.f32 %v1329
      %vm1336 = vmor %vm1334, %vm1335
      %v1337 = vsel %vm1336, %v1329, %v1333
      %v1338 = vand.u32 2147483647, %v1059
      %vm1339 = vcmp.eq.f32.partialorder %v1338, 8.507059e+37
      %v1340 = vand.u32 %v1059, 2147483648
      %v1341 = vor.u32 1.1754944e-38, %v1340
      %v1342 = vsel %vm1339, %v1341, %v1337
      %v1343 = vmul.f32 1.0, %v1342
      %v1344 = vrcp.pop %v1060
      %v1345 = vmul.f32 %v1060, %v1344
      %v1346 = vsub.f32 1.0, %v1345
      %v1347 = vmul.f32 %v1344, %v1346
      %v1348 = vadd.f32 %v1344, %v1347
      %vm1349 = vweird.f32 %v1060
      %vm1350 = vweird.f32 %v1344
      %vm1351 = vmor %vm1349, %vm1350
      %v1352 = vsel %vm1351, %v1344, %v1348
      %v1353 = vand.u32 2147483647, %v1060
      %vm1354 = vcmp.eq.f32.partialorder %v1353, 8.507059e+37
      %v1355 = vand.u32 %v1060, 2147483648
      %v1356 = vor.u32 1.1754944e-38, %v1355
      %v1357 = vsel %vm1354, %v1356, %v1352
      %v1358 = vmul.f32 1.0, %v1357
      %v1359 = vrcp.pop %v1061
      %v1360 = vmul.f32 %v1061, %v1359
      %v1361 = vsub.f32 1.0, %v1360
      %v1362 = vmul.f32 %v1359, %v1361
      %v1363 = vadd.f32 %v1359, %v1362
      %vm1364 = vweird.f32 %v1061
      %vm1365 = vweird.f32 %v1359
      %vm1366 = vmor %vm1364, %vm1365
      %v1367 = vsel %vm1366, %v1359, %v1363
      %v1368 = vand.u32 2147483647, %v1061
      %vm1369 = vcmp.eq.f32.partialorder %v1368, 8.507059e+37
      %v1370 = vand.u32 %v1061, 2147483648
      %v1371 = vor.u32 1.1754944e-38, %v1370
      %v1372 = vsel %vm1369, %v1371, %v1367
      %v1373 = vmul.f32 1.0, %v1372
      %v1374 = vrcp.pop %v1062
      %v1375 = vmul.f32 %v1062, %v1374
      %v1376 = vsub.f32 1.0, %v1375
      %v1377 = vmul.f32 %v1374, %v1376
      %v1378 = vadd.f32 %v1374, %v1377
      %vm1379 = vweird.f32 %v1062
      %vm1380 = vweird.f32 %v1374
      %vm1381 = vmor %vm1379, %vm1380
      %v1382 = vsel %vm1381, %v1374, %v1378
      %v1383 = vand.u32 2147483647, %v1062
      %vm1384 = vcmp.eq.f32.partialorder %v1383, 8.507059e+37
      %v1385 = vand.u32 %v1062, 2147483648
      %v1386 = vor.u32 1.1754944e-38, %v1385
      %v1387 = vsel %vm1384, %v1386, %v1382
      %v1388 = vmul.f32 1.0, %v1387
      %v1389 = vrcp.pop %v1063
      %v1390 = vmul.f32 %v1063, %v1389
      %v1391 = vsub.f32 1.0, %v1390
      %v1392 = vmul.f32 %v1389, %v1391
      %v1393 = vadd.f32 %v1389, %v1392
      %vm1394 = vweird.f32 %v1063
      %vm1395 = vweird.f32 %v1389
      %vm1396 = vmor %vm1394, %vm1395
      %v1397 = vsel %vm1396, %v1389, %v1393
      %v1398 = vand.u32 2147483647, %v1063
      %vm1399 = vcmp.eq.f32.partialorder %v1398, 8.507059e+37
      %v1400 = vand.u32 %v1063, 2147483648
      %v1401 = vor.u32 1.1754944e-38, %v1400
      %v1402 = vsel %vm1399, %v1401, %v1397
      %v1403 = vmul.f32 1.0, %v1402
      %v1404 = vrcp.pop %v1064
      %v1405 = vmul.f32 %v1064, %v1404
      %v1406 = vsub.f32 1.0, %v1405
      %v1407 = vmul.f32 %v1404, %v1406
      %v1408 = vadd.f32 %v1404, %v1407
      %vm1409 = vweird.f32 %v1064
      %vm1410 = vweird.f32 %v1404
      %vm1411 = vmor %vm1409, %vm1410
      %v1412 = vsel %vm1411, %v1404, %v1408
      %v1413 = vand.u32 2147483647, %v1064
      %vm1414 = vcmp.eq.f32.partialorder %v1413, 8.507059e+37
      %v1415 = vand.u32 %v1064, 2147483648
      %v1416 = vor.u32 1.1754944e-38, %v1415
      %v1417 = vsel %vm1414, %v1416, %v1412
      %v1418 = vmul.f32 1.0, %v1417
      %v1419 = vrcp.pop %v1065
      %v1420 = vmul.f32 %v1065, %v1419
      %v1421 = vsub.f32 1.0, %v1420
      %v1422 = vmul.f32 %v1419, %v1421
      %v1423 = vadd.f32 %v1419, %v1422
      %vm1424 = vweird.f32 %v1065
      %vm1425 = vweird.f32 %v1419
      %vm1426 = vmor %vm1424, %vm1425
      %v1427 = vsel %vm1426, %v1419, %v1423
      %v1428 = vand.u32 2147483647, %v1065
      %vm1429 = vcmp.eq.f32.partialorder %v1428, 8.507059e+37
      %v1430 = vand.u32 %v1065, 2147483648
      %v1431 = vor.u32 1.1754944e-38, %v1430
      %v1432 = vsel %vm1429, %v1431, %v1427
      %v1433 = vmul.f32 1.0, %v1432
      %v1434 = vrcp.pop %v1066
      %v1435 = vmul.f32 %v1066, %v1434
      %v1436 = vsub.f32 1.0, %v1435
      %v1437 = vmul.f32 %v1434, %v1436
      %v1438 = vadd.f32 %v1434, %v1437
      %vm1439 = vweird.f32 %v1066
      %vm1440 = vweird.f32 %v1434
      %vm1441 = vmor %vm1439, %vm1440
      %v1442 = vsel %vm1441, %v1434, %v1438
      %v1443 = vand.u32 2147483647, %v1066
      %vm1444 = vcmp.eq.f32.partialorder %v1443, 8.507059e+37
      %v1445 = vand.u32 %v1066, 2147483648
      %v1446 = vor.u32 1.1754944e-38, %v1445
      %v1447 = vsel %vm1444, %v1446, %v1442
      %v1448 = vmul.f32 1.0, %v1447
      %v1449 = vrcp.pop %v1067
      %v1450 = vmul.f32 %v1067, %v1449
      %v1451 = vsub.f32 1.0, %v1450
      %v1452 = vmul.f32 %v1449, %v1451
      %v1453 = vadd.f32 %v1449, %v1452
      %vm1454 = vweird.f32 %v1067
      %vm1455 = vweird.f32 %v1449
      %vm1456 = vmor %vm1454, %vm1455
      %v1457 = vsel %vm1456, %v1449, %v1453
      %v1458 = vand.u32 2147483647, %v1067
      %vm1459 = vcmp.eq.f32.partialorder %v1458, 8.507059e+37
      %v1460 = vand.u32 %v1067, 2147483648
      %v1461 = vor.u32 1.1754944e-38, %v1460
      %v1462 = vsel %vm1459, %v1461, %v1457
      %v1463 = vmul.f32 1.0, %v1462
      %v1464 = vrcp.pop %v1068
      %v1465 = vmul.f32 %v1068, %v1464
      %v1466 = vsub.f32 1.0, %v1465
      %v1467 = vmul.f32 %v1464, %v1466
      %v1468 = vadd.f32 %v1464, %v1467
      %vm1469 = vweird.f32 %v1068
      %vm1470 = vweird.f32 %v1464
      %vm1471 = vmor %vm1469, %vm1470
      %v1472 = vsel %vm1471, %v1464, %v1468
      %v1473 = vand.u32 2147483647, %v1068
      %vm1474 = vcmp.eq.f32.partialorder %v1473, 8.507059e+37
      %v1475 = vand.u32 %v1068, 2147483648
      %v1476 = vor.u32 1.1754944e-38, %v1475
      %v1477 = vsel %vm1474, %v1476, %v1472
      %v1478 = vmul.f32 1.0, %v1477
      %v1479 = vrcp.pop %v1069
      %v1480 = vmul.f32 %v1069, %v1479
      %v1481 = vsub.f32 1.0, %v1480
      %v1482 = vmul.f32 %v1479, %v1481
      %v1483 = vadd.f32 %v1479, %v1482
      %vm1484 = vweird.f32 %v1069
      %vm1485 = vweird.f32 %v1479
      %vm1486 = vmor %vm1484, %vm1485
      %v1487 = vsel %vm1486, %v1479, %v1483
      %v1488 = vand.u32 2147483647, %v1069
      %vm1489 = vcmp.eq.f32.partialorder %v1488, 8.507059e+37
      %v1490 = vand.u32 %v1069, 2147483648
      %v1491 = vor.u32 1.1754944e-38, %v1490
      %v1492 = vsel %vm1489, %v1491, %v1487
      %v1493 = vmul.f32 1.0, %v1492
      %v1494 = vrcp.pop %v1070
      %v1495 = vmul.f32 %v1070, %v1494
      %v1496 = vsub.f32 1.0, %v1495
      %v1497 = vmul.f32 %v1494, %v1496
      %v1498 = vadd.f32 %v1494, %v1497
      %vm1499 = vweird.f32 %v1070
      %vm1500 = vweird.f32 %v1494
      %vm1501 = vmor %vm1499, %vm1500
      %v1502 = vsel %vm1501, %v1494, %v1498
      %v1503 = vand.u32 2147483647, %v1070
      %vm1504 = vcmp.eq.f32.partialorder %v1503, 8.507059e+37
      %v1505 = vand.u32 %v1070, 2147483648
      %v1506 = vor.u32 1.1754944e-38, %v1505
      %v1507 = vsel %vm1504, %v1506, %v1502
      %v1508 = vmul.f32 1.0, %v1507
      %v1509 = vrcp.pop %v1071
      %v1510 = vmul.f32 %v1071, %v1509
      %v1511 = vsub.f32 1.0, %v1510
      %v1512 = vmul.f32 %v1509, %v1511
      %v1513 = vadd.f32 %v1509, %v1512
      %vm1514 = vweird.f32 %v1071
      %vm1515 = vweird.f32 %v1509
      %vm1516 = vmor %vm1514, %vm1515
      %v1517 = vsel %vm1516, %v1509, %v1513
      %v1518 = vand.u32 2147483647, %v1071
      %vm1519 = vcmp.eq.f32.partialorder %v1518, 8.507059e+37
      %v1520 = vand.u32 %v1071, 2147483648
      %v1521 = vor.u32 1.1754944e-38, %v1520
      %v1522 = vsel %vm1519, %v1521, %v1517
      %v1523 = vmul.f32 1.0, %v1522
      %v1524 = vrcp.pop %v1072
      %v1525 = vmul.f32 %v1072, %v1524
      %v1526 = vsub.f32 1.0, %v1525
      %v1527 = vmul.f32 %v1524, %v1526
      %v1528 = vadd.f32 %v1524, %v1527
      %vm1529 = vweird.f32 %v1072
      %vm1530 = vweird.f32 %v1524
      %vm1531 = vmor %vm1529, %vm1530
      %v1532 = vsel %vm1531, %v1524, %v1528
      %v1533 = vand.u32 2147483647, %v1072
      %vm1534 = vcmp.eq.f32.partialorder %v1533, 8.507059e+37
      %v1535 = vand.u32 %v1072, 2147483648
      %v1536 = vor.u32 1.1754944e-38, %v1535
      %v1537 = vsel %vm1534, %v1536, %v1532
      %v1538 = vmul.f32 1.0, %v1537
      %v1539 = vrcp.pop %v1073
      %v1540 = vmul.f32 %v1073, %v1539
      %v1541 = vsub.f32 1.0, %v1540
      %v1542 = vmul.f32 %v1539, %v1541
      %v1543 = vadd.f32 %v1539, %v1542
      %vm1544 = vweird.f32 %v1073
      %vm1545 = vweird.f32 %v1539
      %vm1546 = vmor %vm1544, %vm1545
      %v1547 = vsel %vm1546, %v1539, %v1543
      %v1548 = vand.u32 2147483647, %v1073
      %vm1549 = vcmp.eq.f32.partialorder %v1548, 8.507059e+37
      %v1550 = vand.u32 %v1073, 2147483648
      %v1551 = vor.u32 1.1754944e-38, %v1550
      %v1552 = vsel %vm1549, %v1551, %v1547
      %v1553 = vmul.f32 1.0, %v1552
      %1554 = vst [vmem:[%s175] sm:$0xff] %v1088
      %1555 = vst [vmem:[%s175 + $0x8] sm:$0xff] %v1103
      %1556 = vst [vmem:[%s175 + $0x10] sm:$0xff] %v1118
      %1557 = vst [vmem:[%s175 + $0x18] sm:$0xff] %v1133
      %1558 = vst [vmem:[%s175 + $0x20] sm:$0xff] %v1148
      %1559 = vst [vmem:[%s175 + $0x28] sm:$0xff] %v1163
      %1560 = vst [vmem:[%s175 + $0x30] sm:$0xff] %v1178
      %1561 = vst [vmem:[%s175 + $0x38] sm:$0xff] %v1193
      %1562 = vst [vmem:[%s175 + $0x40] sm:$0xff] %v1208
      %1563 = vst [vmem:[%s175 + $0x48] sm:$0xff] %v1223
      %1564 = vst [vmem:[%s175 + $0x50] sm:$0xff] %v1238
      %1565 = vst [vmem:[%s175 + $0x58] sm:$0xff] %v1253
      %1566 = vst [vmem:[%s175 + $0x60] sm:$0xff] %v1268
      %1567 = vst [vmem:[%s175 + $0x68] sm:$0xff] %v1283
      %1568 = vst [vmem:[%s175 + $0x70] sm:$0xff] %v1298
      %1569 = vst [vmem:[%s175 + $0x78] sm:$0xff] %v1313
      %1570 = vst [vmem:[%s175 + $0x80] sm:$0xff] %v1328
      %1571 = vst [vmem:[%s175 + $0x88] sm:$0xff] %v1343
      %1572 = vst [vmem:[%s175 + $0x90] sm:$0xff] %v1358
      %1573 = vst [vmem:[%s175 + $0x98] sm:$0xff] %v1373
      %1574 = vst [vmem:[%s175 + $0xa0] sm:$0xff] %v1388
      %1575 = vst [vmem:[%s175 + $0xa8] sm:$0xff] %v1403
      %1576 = vst [vmem:[%s175 + $0xb0] sm:$0xff] %v1418
      %1577 = vst [vmem:[%s175 + $0xb8] sm:$0xff] %v1433
      %1578 = vst [vmem:[%s175 + $0xc0] sm:$0xff] %v1448
      %1579 = vst [vmem:[%s175 + $0xc8] sm:$0xff] %v1463
      %1580 = vst [vmem:[%s175 + $0xd0] sm:$0xff] %v1478
      %1581 = vst [vmem:[%s175 + $0xd8] sm:$0xff] %v1493
      %1582 = vst [vmem:[%s175 + $0xe0] sm:$0xff] %v1508
      %1583 = vst [vmem:[%s175 + $0xe8] sm:$0xff] %v1523
      %1584 = vst [vmem:[%s175 + $0xf0] sm:$0xff] %v1538
      %1585 = vst [vmem:[%s175 + $0xf8] sm:$0xff] %v1553
      %s1586 = smul.u32 32, %s14
      %p1587 = scmp.lt.s32.totalorder %s1586, 63
      %s1588 = scalar_select %p1587, %s1586, 63
      %s1589 = smul.addr %s1588, 8
      %s1590 = scalar_lea.vmem %s3, %s1589
      // Predicated region
      $region33: #{_lambda_.19} parent=31 // pred_check
        %p1591 = pneg %p100
      $region34: #{_lambda_.19} parent=31 // pred_check_branch
        %1593 = sbr.rel (%p1591) target = $region36
      $region35: #{_lambda_.19} parent=31 // pred_region
        %s1594 = smul.u32 32, %s14
      $region36: #{_lambda_.19} parent=31 // pred_fallthru
        _
    $region32: #{_lambda_.19} parent=5 // pred_fallthru
      _
    %p1595 = scmp.le.s32.totalorder 2, %s9
    // Predicated region
    $region37: #{_lambda_.19} parent=5 // pred_check
      %p1596 = pneg %p1595
    $region38: #{_lambda_.19} parent=5 // pred_check_branch
      %1598 = sbr.rel (%p1596) target = $region40
    $region39: #{_lambda_.19} parent=5 // pred_region
      %s1599 = ssub.s32 %s9, 2
      // Predicated region
      $region41: #{_lambda_.19} parent=39 // pred_check
        %p1600 = pneg %p106
      $region42: #{_lambda_.19} parent=39 // pred_check_branch
        %1602 = sbr.rel (%p1600) target = $region44
      $region43: #{_lambda_.19} parent=39 // pred_region
        %s1603 = smul.u32 32, %s15
        %p1604 = scmp.lt.s32.totalorder %s1603, 63
        %s1605 = scalar_select %p1604, %s1603, 63
        %s1606 = smul.addr %s1605, 8
        %s1607 = scalar_lea.vmem %s3, %s1606
      $region44: #{_lambda_.19} parent=39 // pred_fallthru
        _
    $region40: #{_lambda_.19} parent=5 // pred_fallthru
      _
  $region6: #{_lambda_.19} parent=0 // loop_footer
    %s13 = sadd.s32 1, %s9
  $region7: #{_lambda_.19} parent=0 // loop_footer_branch
    %8 = sbr.rel target = $region3
  $region8: #{_lambda_.19} parent=0 // loop_exit
    _

</llo_original>
